<compile_context>
chip_gen: v5e
topology: v5e:2x2
jax: 0.10.0
libtpu: 0.0.40
codegen_flags: <defaults>
</compile_context>

<pallas_src>
import functools

import numpy as np
import jax
import jax.numpy as jnp
from jax import lax
from jax.experimental import pallas as pl
from jax.experimental.pallas import tpu as pltpu


# Tap order matches row-major flattening of the (kd, kh, kw) weight dims.
_TAPS = [(kd, kh, kw) for kd in range(3) for kh in range(3) for kw in range(3)]


def _make_tap_masks(D, H, W):
    """(27, 1, DHW) float32 validity masks for the 27 taps of a 3x3x3 conv, pad=1."""
    masks = np.zeros((27, 1, D * H * W), np.float32)
    dd = np.arange(D)[:, None, None]
    hh = np.arange(H)[None, :, None]
    ww = np.arange(W)[None, None, :]
    for t, (kd, kh, kw) in enumerate(_TAPS):
        od, oh, ow = kd - 1, kh - 1, kw - 1
        m = ((dd + od >= 0) & (dd + od < D) &
             (hh + oh >= 0) & (hh + oh < H) &
             (ww + ow >= 0) & (ww + ow < W))
        masks[t, 0] = m.reshape(-1).astype(np.float32)
    return masks


def _double_conv3d_kernel(x_ref, w1_ref, w2_ref, m_ref, o_ref,
                          xpad1_ref, xpad2_ref,
                          *, D, H, W, C1, C2, PAD, eps):
    """Fused DoubleConv3d for one batch element, channel-major (C, DHW) layout.

    x_ref    : (1, C1, DHW)            input block (free reshape of NCDHW)
    w1_ref   : (27, C2, C1)            conv1 tap weights, w1_ref[t] = W1[kd,kh,kw].T
    w2_ref   : (27, C2, C2)            conv2 tap weights
    m_ref    : (27, 1, DHW)            per-tap boundary masks (1.0 / 0.0)
    o_ref    : (1, C2, DHW)            lane-dense output (free reshape to NCDHW)
    xpad1_ref: (C1, PAD + DHW + PAD)   flat-padded layer-1 input (VMEM scratch)
    xpad2_ref: (C2, PAD + DHW + PAD)   flat-padded layer-2 input (VMEM scratch)
    """
    DHW = D * H * W
    HW = H * W

    # Zero only the halo strips (the interior is always fully overwritten below).
    # Out-of-volume taps are killed by the 0.0 mask anyway; zeroing just guarantees
    # every read is finite so the mask *multiply* can never see garbage bits.
    # Done every step unconditionally: 4 tiny lane-dense stores, and it stays correct
    # no matter how the parallel batch axis is split across TensorCores.
    xpad1_ref[:, :PAD] = jnp.zeros((C1, PAD), jnp.float32)
    xpad1_ref[:, PAD + DHW:] = jnp.zeros((C1, PAD), jnp.float32)
    xpad2_ref[:, :PAD] = jnp.zeros((C2, PAD), jnp.float32)
    xpad2_ref[:, PAD + DHW:] = jnp.zeros((C2, PAD), jnp.float32)

    def conv27(xpad_ref, w_ref):
        # 27 taps: static lane-offset slice of the flat-padded activations,
        # boundary-mask multiply (VPU), tiny (C2, Cin) x (Cin, DHW) MXU dot,
        # accumulated in f32 registers.  Conv bias omitted (cancels under IN).
        acc = jnp.zeros((C2, DHW), jnp.float32)
        for t, (kd, kh, kw) in enumerate(_TAPS):
            s = (kd - 1) * HW + (kh - 1) * W + (kw - 1)   # flat neighbour offset
            xt = xpad_ref[:, PAD + s:PAD + s + DHW] * m_ref[t]
            acc = acc + jnp.dot(w_ref[t], xt, preferred_element_type=jnp.float32)
        return acc

    def inorm_relu(y):
        # InstanceNorm3d(affine=False): per-channel biased variance over DHW; ReLU.
        mean = jnp.sum(y, axis=1, keepdims=True) * (1.0 / DHW)
        ex2 = jnp.sum(y * y, axis=1, keepdims=True) * (1.0 / DHW)
        var = jnp.maximum(ex2 - mean * mean, 0.0)
        return jnp.maximum((y - mean) * lax.rsqrt(var + eps), 0.0)

    # ---- layer 1: conv 3x3x3 -> InstanceNorm -> ReLU ----
    xpad1_ref[:, PAD:PAD + DHW] = x_ref[0]
    y1 = inorm_relu(conv27(xpad1_ref, w1_ref))

    # ---- layer 2: conv 3x3x3 -> InstanceNorm -> ReLU (y1 never leaves VMEM) ----
    xpad2_ref[:, PAD:PAD + DHW] = y1
    y2 = inorm_relu(conv27(xpad2_ref, w2_ref))

    o_ref[0] = y2.astype(o_ref.dtype)


def double_conv3d(x_ncdhw, params, *, eps=1e-5):
    """Forward pass of DoubleConv3d (act='relu', lipschitz=False).

    x_ncdhw: (N, Cin, D, H, W) — PyTorch layout.
    params : dict with w1 (3,3,3,Cin,Cout), b1 (Cout,), w2 (3,3,3,Cout,Cout), b2 (Cout,).
             (Biases cancel under InstanceNorm(affine=False) and are not used.)
    """
    N, C1, D, H, W = x_ncdhw.shape
    w1, w2 = params["w1"], params["w2"]
    C2 = w1.shape[-1]
    DHW = D * H * W
    # Halo width on the flattened axis: >= max |tap shift| = H*W + W + 1, rounded to
    # a lane multiple so the interior write stays 128-aligned.
    PAD = ((H * W + W + 1 + 127) // 128) * 128

    # Free reshapes / tiny one-time weight reshuffles only — no full-tensor transpose.
    x_flat = x_ncdhw.reshape(N, C1, DHW)                        # NCDHW -> (N, C1, DHW)
    w1t = jnp.transpose(w1.reshape(27, C1, C2), (0, 2, 1))      # (27, C2, C1)
    w2t = jnp.transpose(w2.reshape(27, C2, C2), (0, 2, 1))      # (27, C2, C2)
    masks = jnp.asarray(_make_tap_masks(D, H, W))               # (27, 1, DHW)

    kernel = functools.partial(_double_conv3d_kernel,
                               D=D, H=H, W=W, C1=C1, C2=C2, PAD=PAD, eps=eps)

    out_flat = pl.pallas_call(
        kernel,
        out_shape=jax.ShapeDtypeStruct((N, C2, DHW), jnp.float32),
        grid=(N,),
        in_specs=[
            pl.BlockSpec((1, C1, DHW), lambda n: (n, 0, 0)),
            pl.BlockSpec((27, C2, C1), lambda n: (0, 0, 0)),
            pl.BlockSpec((27, C2, C2), lambda n: (0, 0, 0)),
            pl.BlockSpec((27, 1, DHW), lambda n: (0, 0, 0)),
        ],
        out_specs=pl.BlockSpec((1, C2, DHW), lambda n: (n, 0, 0)),
        scratch_shapes=[
            pltpu.VMEM((C1, PAD + DHW + PAD), jnp.float32),
            pltpu.VMEM((C2, PAD + DHW + PAD), jnp.float32),
        ],
        compiler_params=pltpu.CompilerParams(
            dimension_semantics=("parallel",),
            # Actual footprint is well under 1 MiB; leave generous headroom but do
            # not request the whole physical VMEM (64 MiB == all of it on v7x).
            vmem_limit_bytes=16 * 1024 * 1024),
    )(x_flat, w1t, w2t, masks)

    # Output is already channel-major: NCDHW is a free reshape.
    return out_flat.reshape(N, C2, D, H, W)


# ------------------------- pure-JAX reference (for checking) -------------------------

def _ref_block(x, w_oidhw, b, eps=1e-5):
    y = lax.conv_general_dilated(
        x, w_oidhw, window_strides=(1, 1, 1),
        padding=[(1, 1), (1, 1), (1, 1)],
        dimension_numbers=("NCDHW", "OIDHW", "NCDHW"))
    y = y + b.reshape(1, -1, 1, 1, 1)
    mean = jnp.mean(y, axis=(2, 3, 4), keepdims=True)
    var = jnp.mean((y - mean) ** 2, axis=(2, 3, 4), keepdims=True)
    y = (y - mean) * lax.rsqrt(var + eps)
    return jnp.maximum(y, 0.0)


def double_conv3d_ref(x_ncdhw, params, *, eps=1e-5):
    w1 = jnp.transpose(params["w1"], (4, 3, 0, 1, 2))  # (kd,kh,kw,Ci,Co) -> (Co,Ci,kd,kh,kw)
    w2 = jnp.transpose(params["w2"], (4, 3, 0, 1, 2))
    y = _ref_block(x_ncdhw, w1, params["b1"], eps)
    return _ref_block(y, w2, params["b2"], eps)


# ------------------------------------ main -------------------------------------------

if __name__ == "__main__":
    # Small shapes consistent with the module: batch=2, in_ch=4, out_ch=8, spatial=8
    # (matches the in_size=8 default of DoubleConv3d).
    N, in_ch, out_ch = 2, 4, 8
    D = H = W = 8

    key = jax.random.PRNGKey(0)
    k_x, k_w1, k_b1, k_w2, k_b2 = jax.random.split(key, 5)

    x = jax.random.normal(k_x, (N, in_ch, D, H, W), dtype=jnp.float32)

    # PyTorch-style uniform init: bound = 1/sqrt(fan_in), fan_in = Cin*27.
    bound1 = 1.0 / jnp.sqrt(jnp.float32(in_ch * 27))
    bound2 = 1.0 / jnp.sqrt(jnp.float32(out_ch * 27))
    params = {
        "w1": jax.random.uniform(k_w1, (3, 3, 3, in_ch, out_ch), jnp.float32,
                                 -bound1, bound1),
        "b1": jax.random.uniform(k_b1, (out_ch,), jnp.float32, -bound1, bound1),
        "w2": jax.random.uniform(k_w2, (3, 3, 3, out_ch, out_ch), jnp.float32,
                                 -bound2, bound2),
        "b2": jax.random.uniform(k_b2, (out_ch,), jnp.float32, -bound2, bound2),
    }

    out = jax.block_until_ready(double_conv3d(x, params))
    ref = jax.block_until_ready(double_conv3d_ref(x, params))

    assert out.shape == (N, out_ch, D, H, W)
    assert jnp.allclose(out, ref, rtol=2e-4, atol=2e-4), (
        f"max abs diff = {jnp.max(jnp.abs(out - ref))}")

    print("KERNEL_OK")
</pallas_src>

<mosaic_0001>
module attributes {stable_mosaic.version = 11 : i64} {
  func.func @_double_conv3d_kernel(%arg0: i32, %arg1: memref<1x4x512xf32, #tpu.memory_space<vmem>>, %arg2: memref<27x8x4xf32, #tpu.memory_space<vmem>>, %arg3: memref<27x8x8xf32, #tpu.memory_space<vmem>>, %arg4: memref<27x1x512xf32, #tpu.memory_space<vmem>>, %arg5: memref<1x8x512xf32, #tpu.memory_space<vmem>>, %arg6: memref<4x768xf32, #tpu.memory_space<vmem>>, %arg7: memref<8x768xf32, #tpu.memory_space<vmem>>) attributes {dimension_semantics = [#tpu.dimension_semantics<parallel>], iteration_bounds = array<i64: 2>, scalar_prefetch = 0 : i64, scratch_operands = 2 : i64, tpu.core_type = #tpu.core_type<tc>, window_params = [{transform_indices = @transform_0, window_bounds = array<i64: 1, 4, 512>}, {pipeline_mode = #tpu.pipeline_mode<synchronous>, transform_indices = @transform_1, window_bounds = array<i64: 27, 8, 4>}, {pipeline_mode = #tpu.pipeline_mode<synchronous>, transform_indices = @transform_2, window_bounds = array<i64: 27, 8, 8>}, {pipeline_mode = #tpu.pipeline_mode<synchronous>, transform_indices = @transform_3, window_bounds = array<i64: 27, 1, 512>}, {transform_indices = @transform_4, window_bounds = array<i64: 1, 8, 512>}]} {
    %cst = arith.constant 0.000000e+00 : f32
    %0 = vector.broadcast %cst : f32 to vector<4x128xf32>
    %c0 = arith.constant 0 : index
    %c0_0 = arith.constant 0 : index
    %1 = vector.load %arg6[%c0, %c0_0] : memref<4x768xf32, #tpu.memory_space<vmem>>, vector<4x128xf32>
    tpu.vector_store %arg6[%c0, %c0_0], %0 {strides = array<i32>} : memref<4x768xf32, #tpu.memory_space<vmem>>, vector<4x128xf32>,
    %cst_1 = arith.constant 0.000000e+00 : f32
    %2 = vector.broadcast %cst_1 : f32 to vector<4x128xf32>
    %c0_2 = arith.constant 0 : index
    %c640 = arith.constant 640 : index
    %3 = vector.load %arg6[%c0_2, %c640] : memref<4x768xf32, #tpu.memory_space<vmem>>, vector<4x128xf32>
    tpu.vector_store %arg6[%c0_2, %c640], %2 {strides = array<i32>} : memref<4x768xf32, #tpu.memory_space<vmem>>, vector<4x128xf32>,
    %cst_3 = arith.constant 0.000000e+00 : f32
    %4 = vector.broadcast %cst_3 : f32 to vector<8x128xf32>
    %c0_4 = arith.constant 0 : index
    %c0_5 = arith.constant 0 : index
    %5 = vector.load %arg7[%c0_4, %c0_5] : memref<8x768xf32, #tpu.memory_space<vmem>>, vector<8x128xf32>
    tpu.vector_store %arg7[%c0_4, %c0_5], %4 {strides = array<i32>} : memref<8x768xf32, #tpu.memory_space<vmem>>, vector<8x128xf32>,
    %cst_6 = arith.constant 0.000000e+00 : f32
    %6 = vector.broadcast %cst_6 : f32 to vector<8x128xf32>
    %c0_7 = arith.constant 0 : index
    %c640_8 = arith.constant 640 : index
    %7 = vector.load %arg7[%c0_7, %c640_8] : memref<8x768xf32, #tpu.memory_space<vmem>>, vector<8x128xf32>
    tpu.vector_store %arg7[%c0_7, %c640_8], %6 {strides = array<i32>} : memref<8x768xf32, #tpu.memory_space<vmem>>, vector<8x128xf32>,
    %c0_9 = arith.constant 0 : index
    %c0_10 = arith.constant 0 : index
    %c0_11 = arith.constant 0 : index
    %8 = vector.load %arg1[%c0_9, %c0_10, %c0_11] : memref<1x4x512xf32, #tpu.memory_space<vmem>>, vector<1x4x512xf32>
    %9 = vector.shape_cast %8 : vector<1x4x512xf32> to vector<4x512xf32>
    %c0_12 = arith.constant 0 : index
    %c128 = arith.constant 128 : index
    %10 = vector.load %arg6[%c0_12, %c128] : memref<4x768xf32, #tpu.memory_space<vmem>>, vector<4x512xf32>
    tpu.vector_store %arg6[%c0_12, %c128], %9 {strides = array<i32>} : memref<4x768xf32, #tpu.memory_space<vmem>>, vector<4x512xf32>,
    %cst_13 = arith.constant 0.000000e+00 : f32
    %11 = vector.broadcast %cst_13 : f32 to vector<8x512xf32>
    %c0_14 = arith.constant 0 : index
    %c55 = arith.constant 55 : index
    %12 = vector.load %arg6[%c0_14, %c55] : memref<4x768xf32, #tpu.memory_space<vmem>>, vector<4x512xf32>
    %c0_15 = arith.constant 0 : index
    %c0_16 = arith.constant 0 : index
    %c0_17 = arith.constant 0 : index
    %13 = vector.load %arg4[%c0_15, %c0_16, %c0_17] : memref<27x1x512xf32, #tpu.memory_space<vmem>>, vector<1x1x512xf32>
    %14 = vector.shape_cast %13 : vector<1x1x512xf32> to vector<1x512xf32>
    %15 = vector.broadcast %14 : vector<1x512xf32> to vector<4x512xf32>
    %16 = arith.mulf %12, %15 : vector<4x512xf32>
    %c0_18 = arith.constant 0 : index
    %c0_19 = arith.constant 0 : index
    %c0_20 = arith.constant 0 : index
    %17 = vector.load %arg2[%c0_18, %c0_19, %c0_20] : memref<27x8x4xf32, #tpu.memory_space<vmem>>, vector<1x8x4xf32>
    %18 = vector.shape_cast %17 : vector<1x8x4xf32> to vector<8x4xf32>
    %cst_21 = arith.constant dense<0.000000e+00> : vector<8x512xf32>
    %19 = tpu.matmul %18, %16, %cst_21 {dimension_numbers = #tpu.dot_dimension_numbers<[1], [0], [0], [1], [0, 0, 1, 1], [], []>} : vector<8x4xf32>, vector<4x512xf32>, vector<8x512xf32> -> vector<8x512xf32>
    %20 = arith.addf %11, %19 : vector<8x512xf32>
    %c0_22 = arith.constant 0 : index
    %c56 = arith.constant 56 : index
    %21 = vector.load %arg6[%c0_22, %c56] : memref<4x768xf32, #tpu.memory_space<vmem>>, vector<4x512xf32>
    %c1 = arith.constant 1 : index
    %c0_23 = arith.constant 0 : index
    %c0_24 = arith.constant 0 : index
    %22 = vector.load %arg4[%c1, %c0_23, %c0_24] : memref<27x1x512xf32, #tpu.memory_space<vmem>>, vector<1x1x512xf32>
    %23 = vector.shape_cast %22 : vector<1x1x512xf32> to vector<1x512xf32>
    %24 = vector.broadcast %23 : vector<1x512xf32> to vector<4x512xf32>
    %25 = arith.mulf %21, %24 : vector<4x512xf32>
    %c1_25 = arith.constant 1 : index
    %c0_26 = arith.constant 0 : index
    %c0_27 = arith.constant 0 : index
    %26 = vector.load %arg2[%c1_25, %c0_26, %c0_27] : memref<27x8x4xf32, #tpu.memory_space<vmem>>, vector<1x8x4xf32>
    %27 = vector.shape_cast %26 : vector<1x8x4xf32> to vector<8x4xf32>
    %cst_28 = arith.constant dense<0.000000e+00> : vector<8x512xf32>
    %28 = tpu.matmul %27, %25, %cst_28 {dimension_numbers = #tpu.dot_dimension_numbers<[1], [0], [0], [1], [0, 0, 1, 1], [], []>} : vector<8x4xf32>, vector<4x512xf32>, vector<8x512xf32> -> vector<8x512xf32>
    %29 = arith.addf %20, %28 : vector<8x512xf32>
    %c0_29 = arith.constant 0 : index
    %c57 = arith.constant 57 : index
    %30 = vector.load %arg6[%c0_29, %c57] : memref<4x768xf32, #tpu.memory_space<vmem>>, vector<4x512xf32>
    %c2 = arith.constant 2 : index
    %c0_30 = arith.constant 0 : index
    %c0_31 = arith.constant 0 : index
    %31 = vector.load %arg4[%c2, %c0_30, %c0_31] : memref<27x1x512xf32, #tpu.memory_space<vmem>>, vector<1x1x512xf32>
    %32 = vector.shape_cast %31 : vector<1x1x512xf32> to vector<1x512xf32>
    %33 = vector.broadcast %32 : vector<1x512xf32> to vector<4x512xf32>
    %34 = arith.mulf %30, %33 : vector<4x512xf32>
    %c2_32 = arith.constant 2 : index
    %c0_33 = arith.constant 0 : index
    %c0_34 = arith.constant 0 : index
    %35 = vector.load %arg2[%c2_32, %c0_33, %c0_34] : memref<27x8x4xf32, #tpu.memory_space<vmem>>, vector<1x8x4xf32>
    %36 = vector.shape_cast %35 : vector<1x8x4xf32> to vector<8x4xf32>
    %cst_35 = arith.constant dense<0.000000e+00> : vector<8x512xf32>
    %37 = tpu.matmul %36, %34, %cst_35 {dimension_numbers = #tpu.dot_dimension_numbers<[1], [0], [0], [1], [0, 0, 1, 1], [], []>} : vector<8x4xf32>, vector<4x512xf32>, vector<8x512xf32> -> vector<8x512xf32>
    %38 = arith.addf %29, %37 : vector<8x512xf32>
    %c0_36 = arith.constant 0 : index
    %c63 = arith.constant 63 : index
    %39 = vector.load %arg6[%c0_36, %c63] : memref<4x768xf32, #tpu.memory_space<vmem>>, vector<4x512xf32>
    %c3 = arith.constant 3 : index
    %c0_37 = arith.constant 0 : index
    %c0_38 = arith.constant 0 : index
    %40 = vector.load %arg4[%c3, %c0_37, %c0_38] : memref<27x1x512xf32, #tpu.memory_space<vmem>>, vector<1x1x512xf32>
    %41 = vector.shape_cast %40 : vector<1x1x512xf32> to vector<1x512xf32>
    %42 = vector.broadcast %41 : vector<1x512xf32> to vector<4x512xf32>
    %43 = arith.mulf %39, %42 : vector<4x512xf32>
    %c3_39 = arith.constant 3 : index
    %c0_40 = arith.constant 0 : index
    %c0_41 = arith.constant 0 : index
    %44 = vector.load %arg2[%c3_39, %c0_40, %c0_41] : memref<27x8x4xf32, #tpu.memory_space<vmem>>, vector<1x8x4xf32>
    %45 = vector.shape_cast %44 : vector<1x8x4xf32> to vector<8x4xf32>
    %cst_42 = arith.constant dense<0.000000e+00> : vector<8x512xf32>
    %46 = tpu.matmul %45, %43, %cst_42 {dimension_numbers = #tpu.dot_dimension_numbers<[1], [0], [0], [1], [0, 0, 1, 1], [], []>} : vector<8x4xf32>, vector<4x512xf32>, vector<8x512xf32> -> vector<8x512xf32>
    %47 = arith.addf %38, %46 : vector<8x512xf32>
    %c0_43 = arith.constant 0 : index
    %c64 = arith.constant 64 : index
    %48 = vector.load %arg6[%c0_43, %c64] : memref<4x768xf32, #tpu.memory_space<vmem>>, vector<4x512xf32>
    %c4 = arith.constant 4 : index
    %c0_44 = arith.constant 0 : index
    %c0_45 = arith.constant 0 : index
    %49 = vector.load %arg4[%c4, %c0_44, %c0_45] : memref<27x1x512xf32, #tpu.memory_space<vmem>>, vector<1x1x512xf32>
    %50 = vector.shape_cast %49 : vector<1x1x512xf32> to vector<1x512xf32>
    %51 = vector.broadcast %50 : vector<1x512xf32> to vector<4x512xf32>
    %52 = arith.mulf %48, %51 : vector<4x512xf32>
    %c4_46 = arith.constant 4 : index
    %c0_47 = arith.constant 0 : index
    %c0_48 = arith.constant 0 : index
    %53 = vector.load %arg2[%c4_46, %c0_47, %c0_48] : memref<27x8x4xf32, #tpu.memory_space<vmem>>, vector<1x8x4xf32>
    %54 = vector.shape_cast %53 : vector<1x8x4xf32> to vector<8x4xf32>
    %cst_49 = arith.constant dense<0.000000e+00> : vector<8x512xf32>
    %55 = tpu.matmul %54, %52, %cst_49 {dimension_numbers = #tpu.dot_dimension_numbers<[1], [0], [0], [1], [0, 0, 1, 1], [], []>} : vector<8x4xf32>, vector<4x512xf32>, vector<8x512xf32> -> vector<8x512xf32>
    %56 = arith.addf %47, %55 : vector<8x512xf32>
    %c0_50 = arith.constant 0 : index
    %c65 = arith.constant 65 : index
    %57 = vector.load %arg6[%c0_50, %c65] : memref<4x768xf32, #tpu.memory_space<vmem>>, vector<4x512xf32>
    %c5 = arith.constant 5 : index
    %c0_51 = arith.constant 0 : index
    %c0_52 = arith.constant 0 : index
    %58 = vector.load %arg4[%c5, %c0_51, %c0_52] : memref<27x1x512xf32, #tpu.memory_space<vmem>>, vector<1x1x512xf32>
    %59 = vector.shape_cast %58 : vector<1x1x512xf32> to vector<1x512xf32>
    %60 = vector.broadcast %59 : vector<1x512xf32> to vector<4x512xf32>
    %61 = arith.mulf %57, %60 : vector<4x512xf32>
    %c5_53 = arith.constant 5 : index
    %c0_54 = arith.constant 0 : index
    %c0_55 = arith.constant 0 : index
    %62 = vector.load %arg2[%c5_53, %c0_54, %c0_55] : memref<27x8x4xf32, #tpu.memory_space<vmem>>, vector<1x8x4xf32>
    %63 = vector.shape_cast %62 : vector<1x8x4xf32> to vector<8x4xf32>
    %cst_56 = arith.constant dense<0.000000e+00> : vector<8x512xf32>
    %64 = tpu.matmul %63, %61, %cst_56 {dimension_numbers = #tpu.dot_dimension_numbers<[1], [0], [0], [1], [0, 0, 1, 1], [], []>} : vector<8x4xf32>, vector<4x512xf32>, vector<8x512xf32> -> vector<8x512xf32>
    %65 = arith.addf %56, %64 : vector<8x512xf32>
    %c0_57 = arith.constant 0 : index
    %c71 = arith.constant 71 : index
    %66 = vector.load %arg6[%c0_57, %c71] : memref<4x768xf32, #tpu.memory_space<vmem>>, vector<4x512xf32>
    %c6 = arith.constant 6 : index
    %c0_58 = arith.constant 0 : index
    %c0_59 = arith.constant 0 : index
    %67 = vector.load %arg4[%c6, %c0_58, %c0_59] : memref<27x1x512xf32, #tpu.memory_space<vmem>>, vector<1x1x512xf32>
    %68 = vector.shape_cast %67 : vector<1x1x512xf32> to vector<1x512xf32>
    %69 = vector.broadcast %68 : vector<1x512xf32> to vector<4x512xf32>
    %70 = arith.mulf %66, %69 : vector<4x512xf32>
    %c6_60 = arith.constant 6 : index
    %c0_61 = arith.constant 0 : index
    %c0_62 = arith.constant 0 : index
    %71 = vector.load %arg2[%c6_60, %c0_61, %c0_62] : memref<27x8x4xf32, #tpu.memory_space<vmem>>, vector<1x8x4xf32>
    %72 = vector.shape_cast %71 : vector<1x8x4xf32> to vector<8x4xf32>
    %cst_63 = arith.constant dense<0.000000e+00> : vector<8x512xf32>
    %73 = tpu.matmul %72, %70, %cst_63 {dimension_numbers = #tpu.dot_dimension_numbers<[1], [0], [0], [1], [0, 0, 1, 1], [], []>} : vector<8x4xf32>, vector<4x512xf32>, vector<8x512xf32> -> vector<8x512xf32>
    %74 = arith.addf %65, %73 : vector<8x512xf32>
    %c0_64 = arith.constant 0 : index
    %c72 = arith.constant 72 : index
    %75 = vector.load %arg6[%c0_64, %c72] : memref<4x768xf32, #tpu.memory_space<vmem>>, vector<4x512xf32>
    %c7 = arith.constant 7 : index
    %c0_65 = arith.constant 0 : index
    %c0_66 = arith.constant 0 : index
    %76 = vector.load %arg4[%c7, %c0_65, %c0_66] : memref<27x1x512xf32, #tpu.memory_space<vmem>>, vector<1x1x512xf32>
    %77 = vector.shape_cast %76 : vector<1x1x512xf32> to vector<1x512xf32>
    %78 = vector.broadcast %77 : vector<1x512xf32> to vector<4x512xf32>
    %79 = arith.mulf %75, %78 : vector<4x512xf32>
    %c7_67 = arith.constant 7 : index
    %c0_68 = arith.constant 0 : index
    %c0_69 = arith.constant 0 : index
    %80 = vector.load %arg2[%c7_67, %c0_68, %c0_69] : memref<27x8x4xf32, #tpu.memory_space<vmem>>, vector<1x8x4xf32>
    %81 = vector.shape_cast %80 : vector<1x8x4xf32> to vector<8x4xf32>
    %cst_70 = arith.constant dense<0.000000e+00> : vector<8x512xf32>
    %82 = tpu.matmul %81, %79, %cst_70 {dimension_numbers = #tpu.dot_dimension_numbers<[1], [0], [0], [1], [0, 0, 1, 1], [], []>} : vector<8x4xf32>, vector<4x512xf32>, vector<8x512xf32> -> vector<8x512xf32>
    %83 = arith.addf %74, %82 : vector<8x512xf32>
    %c0_71 = arith.constant 0 : index
    %c73 = arith.constant 73 : index
    %84 = vector.load %arg6[%c0_71, %c73] : memref<4x768xf32, #tpu.memory_space<vmem>>, vector<4x512xf32>
    %c8 = arith.constant 8 : index
    %c0_72 = arith.constant 0 : index
    %c0_73 = arith.constant 0 : index
    %85 = vector.load %arg4[%c8, %c0_72, %c0_73] : memref<27x1x512xf32, #tpu.memory_space<vmem>>, vector<1x1x512xf32>
    %86 = vector.shape_cast %85 : vector<1x1x512xf32> to vector<1x512xf32>
    %87 = vector.broadcast %86 : vector<1x512xf32> to vector<4x512xf32>
    %88 = arith.mulf %84, %87 : vector<4x512xf32>
    %c8_74 = arith.constant 8 : index
    %c0_75 = arith.constant 0 : index
    %c0_76 = arith.constant 0 : index
    %89 = vector.load %arg2[%c8_74, %c0_75, %c0_76] : memref<27x8x4xf32, #tpu.memory_space<vmem>>, vector<1x8x4xf32>
    %90 = vector.shape_cast %89 : vector<1x8x4xf32> to vector<8x4xf32>
    %cst_77 = arith.constant dense<0.000000e+00> : vector<8x512xf32>
    %91 = tpu.matmul %90, %88, %cst_77 {dimension_numbers = #tpu.dot_dimension_numbers<[1], [0], [0], [1], [0, 0, 1, 1], [], []>} : vector<8x4xf32>, vector<4x512xf32>, vector<8x512xf32> -> vector<8x512xf32>
    %92 = arith.addf %83, %91 : vector<8x512xf32>
    %c0_78 = arith.constant 0 : index
    %c119 = arith.constant 119 : index
    %93 = vector.load %arg6[%c0_78, %c119] : memref<4x768xf32, #tpu.memory_space<vmem>>, vector<4x512xf32>
    %c9 = arith.constant 9 : index
    %c0_79 = arith.constant 0 : index
    %c0_80 = arith.constant 0 : index
    %94 = vector.load %arg4[%c9, %c0_79, %c0_80] : memref<27x1x512xf32, #tpu.memory_space<vmem>>, vector<1x1x512xf32>
    %95 = vector.shape_cast %94 : vector<1x1x512xf32> to vector<1x512xf32>
    %96 = vector.broadcast %95 : vector<1x512xf32> to vector<4x512xf32>
    %97 = arith.mulf %93, %96 : vector<4x512xf32>
    %c9_81 = arith.constant 9 : index
    %c0_82 = arith.constant 0 : index
    %c0_83 = arith.constant 0 : index
    %98 = vector.load %arg2[%c9_81, %c0_82, %c0_83] : memref<27x8x4xf32, #tpu.memory_space<vmem>>, vector<1x8x4xf32>
    %99 = vector.shape_cast %98 : vector<1x8x4xf32> to vector<8x4xf32>
    %cst_84 = arith.constant dense<0.000000e+00> : vector<8x512xf32>
    %100 = tpu.matmul %99, %97, %cst_84 {dimension_numbers = #tpu.dot_dimension_numbers<[1], [0], [0], [1], [0, 0, 1, 1], [], []>} : vector<8x4xf32>, vector<4x512xf32>, vector<8x512xf32> -> vector<8x512xf32>
    %101 = arith.addf %92, %100 : vector<8x512xf32>
    %c0_85 = arith.constant 0 : index
    %c120 = arith.constant 120 : index
    %102 = vector.load %arg6[%c0_85, %c120] : memref<4x768xf32, #tpu.memory_space<vmem>>, vector<4x512xf32>
    %c10 = arith.constant 10 : index
    %c0_86 = arith.constant 0 : index
    %c0_87 = arith.constant 0 : index
    %103 = vector.load %arg4[%c10, %c0_86, %c0_87] : memref<27x1x512xf32, #tpu.memory_space<vmem>>, vector<1x1x512xf32>
    %104 = vector.shape_cast %103 : vector<1x1x512xf32> to vector<1x512xf32>
    %105 = vector.broadcast %104 : vector<1x512xf32> to vector<4x512xf32>
    %106 = arith.mulf %102, %105 : vector<4x512xf32>
    %c10_88 = arith.constant 10 : index
    %c0_89 = arith.constant 0 : index
    %c0_90 = arith.constant 0 : index
    %107 = vector.load %arg2[%c10_88, %c0_89, %c0_90] : memref<27x8x4xf32, #tpu.memory_space<vmem>>, vector<1x8x4xf32>
    %108 = vector.shape_cast %107 : vector<1x8x4xf32> to vector<8x4xf32>
    %cst_91 = arith.constant dense<0.000000e+00> : vector<8x512xf32>
    %109 = tpu.matmul %108, %106, %cst_91 {dimension_numbers = #tpu.dot_dimension_numbers<[1], [0], [0], [1], [0, 0, 1, 1], [], []>} : vector<8x4xf32>, vector<4x512xf32>, vector<8x512xf32> -> vector<8x512xf32>
    %110 = arith.addf %101, %109 : vector<8x512xf32>
    %c0_92 = arith.constant 0 : index
    %c121 = arith.constant 121 : index
    %111 = vector.load %arg6[%c0_92, %c121] : memref<4x768xf32, #tpu.memory_space<vmem>>, vector<4x512xf32>
    %c11 = arith.constant 11 : index
    %c0_93 = arith.constant 0 : index
    %c0_94 = arith.constant 0 : index
    %112 = vector.load %arg4[%c11, %c0_93, %c0_94] : memref<27x1x512xf32, #tpu.memory_space<vmem>>, vector<1x1x512xf32>
    %113 = vector.shape_cast %112 : vector<1x1x512xf32> to vector<1x512xf32>
    %114 = vector.broadcast %113 : vector<1x512xf32> to vector<4x512xf32>
    %115 = arith.mulf %111, %114 : vector<4x512xf32>
    %c11_95 = arith.constant 11 : index
    %c0_96 = arith.constant 0 : index
    %c0_97 = arith.constant 0 : index
    %116 = vector.load %arg2[%c11_95, %c0_96, %c0_97] : memref<27x8x4xf32, #tpu.memory_space<vmem>>, vector<1x8x4xf32>
    %117 = vector.shape_cast %116 : vector<1x8x4xf32> to vector<8x4xf32>
    %cst_98 = arith.constant dense<0.000000e+00> : vector<8x512xf32>
    %118 = tpu.matmul %117, %115, %cst_98 {dimension_numbers = #tpu.dot_dimension_numbers<[1], [0], [0], [1], [0, 0, 1, 1], [], []>} : vector<8x4xf32>, vector<4x512xf32>, vector<8x512xf32> -> vector<8x512xf32>
    %119 = arith.addf %110, %118 : vector<8x512xf32>
    %c0_99 = arith.constant 0 : index
    %c127 = arith.constant 127 : index
    %120 = vector.load %arg6[%c0_99, %c127] : memref<4x768xf32, #tpu.memory_space<vmem>>, vector<4x512xf32>
    %c12 = arith.constant 12 : index
    %c0_100 = arith.constant 0 : index
    %c0_101 = arith.constant 0 : index
    %121 = vector.load %arg4[%c12, %c0_100, %c0_101] : memref<27x1x512xf32, #tpu.memory_space<vmem>>, vector<1x1x512xf32>
    %122 = vector.shape_cast %121 : vector<1x1x512xf32> to vector<1x512xf32>
    %123 = vector.broadcast %122 : vector<1x512xf32> to vector<4x512xf32>
    %124 = arith.mulf %120, %123 : vector<4x512xf32>
    %c12_102 = arith.constant 12 : index
    %c0_103 = arith.constant 0 : index
    %c0_104 = arith.constant 0 : index
    %125 = vector.load %arg2[%c12_102, %c0_103, %c0_104] : memref<27x8x4xf32, #tpu.memory_space<vmem>>, vector<1x8x4xf32>
    %126 = vector.shape_cast %125 : vector<1x8x4xf32> to vector<8x4xf32>
    %cst_105 = arith.constant dense<0.000000e+00> : vector<8x512xf32>
    %127 = tpu.matmul %126, %124, %cst_105 {dimension_numbers = #tpu.dot_dimension_numbers<[1], [0], [0], [1], [0, 0, 1, 1], [], []>} : vector<8x4xf32>, vector<4x512xf32>, vector<8x512xf32> -> vector<8x512xf32>
    %128 = arith.addf %119, %127 : vector<8x512xf32>
    %c0_106 = arith.constant 0 : index
    %c128_107 = arith.constant 128 : index
    %129 = vector.load %arg6[%c0_106, %c128_107] : memref<4x768xf32, #tpu.memory_space<vmem>>, vector<4x512xf32>
    %c13 = arith.constant 13 : index
    %c0_108 = arith.constant 0 : index
    %c0_109 = arith.constant 0 : index
    %130 = vector.load %arg4[%c13, %c0_108, %c0_109] : memref<27x1x512xf32, #tpu.memory_space<vmem>>, vector<1x1x512xf32>
    %131 = vector.shape_cast %130 : vector<1x1x512xf32> to vector<1x512xf32>
    %132 = vector.broadcast %131 : vector<1x512xf32> to vector<4x512xf32>
    %133 = arith.mulf %129, %132 : vector<4x512xf32>
    %c13_110 = arith.constant 13 : index
    %c0_111 = arith.constant 0 : index
    %c0_112 = arith.constant 0 : index
    %134 = vector.load %arg2[%c13_110, %c0_111, %c0_112] : memref<27x8x4xf32, #tpu.memory_space<vmem>>, vector<1x8x4xf32>
    %135 = vector.shape_cast %134 : vector<1x8x4xf32> to vector<8x4xf32>
    %cst_113 = arith.constant dense<0.000000e+00> : vector<8x512xf32>
    %136 = tpu.matmul %135, %133, %cst_113 {dimension_numbers = #tpu.dot_dimension_numbers<[1], [0], [0], [1], [0, 0, 1, 1], [], []>} : vector<8x4xf32>, vector<4x512xf32>, vector<8x512xf32> -> vector<8x512xf32>
    %137 = arith.addf %128, %136 : vector<8x512xf32>
    %c0_114 = arith.constant 0 : index
    %c129 = arith.constant 129 : index
    %138 = vector.load %arg6[%c0_114, %c129] : memref<4x768xf32, #tpu.memory_space<vmem>>, vector<4x512xf32>
    %c14 = arith.constant 14 : index
    %c0_115 = arith.constant 0 : index
    %c0_116 = arith.constant 0 : index
    %139 = vector.load %arg4[%c14, %c0_115, %c0_116] : memref<27x1x512xf32, #tpu.memory_space<vmem>>, vector<1x1x512xf32>
    %140 = vector.shape_cast %139 : vector<1x1x512xf32> to vector<1x512xf32>
    %141 = vector.broadcast %140 : vector<1x512xf32> to vector<4x512xf32>
    %142 = arith.mulf %138, %141 : vector<4x512xf32>
    %c14_117 = arith.constant 14 : index
    %c0_118 = arith.constant 0 : index
    %c0_119 = arith.constant 0 : index
    %143 = vector.load %arg2[%c14_117, %c0_118, %c0_119] : memref<27x8x4xf32, #tpu.memory_space<vmem>>, vector<1x8x4xf32>
    %144 = vector.shape_cast %143 : vector<1x8x4xf32> to vector<8x4xf32>
    %cst_120 = arith.constant dense<0.000000e+00> : vector<8x512xf32>
    %145 = tpu.matmul %144, %142, %cst_120 {dimension_numbers = #tpu.dot_dimension_numbers<[1], [0], [0], [1], [0, 0, 1, 1], [], []>} : vector<8x4xf32>, vector<4x512xf32>, vector<8x512xf32> -> vector<8x512xf32>
    %146 = arith.addf %137, %145 : vector<8x512xf32>
    %c0_121 = arith.constant 0 : index
    %c135 = arith.constant 135 : index
    %147 = vector.load %arg6[%c0_121, %c135] : memref<4x768xf32, #tpu.memory_space<vmem>>, vector<4x512xf32>
    %c15 = arith.constant 15 : index
    %c0_122 = arith.constant 0 : index
    %c0_123 = arith.constant 0 : index
    %148 = vector.load %arg4[%c15, %c0_122, %c0_123] : memref<27x1x512xf32, #tpu.memory_space<vmem>>, vector<1x1x512xf32>
    %149 = vector.shape_cast %148 : vector<1x1x512xf32> to vector<1x512xf32>
    %150 = vector.broadcast %149 : vector<1x512xf32> to vector<4x512xf32>
    %151 = arith.mulf %147, %150 : vector<4x512xf32>
    %c15_124 = arith.constant 15 : index
    %c0_125 = arith.constant 0 : index
    %c0_126 = arith.constant 0 : index
    %152 = vector.load %arg2[%c15_124, %c0_125, %c0_126] : memref<27x8x4xf32, #tpu.memory_space<vmem>>, vector<1x8x4xf32>
    %153 = vector.shape_cast %152 : vector<1x8x4xf32> to vector<8x4xf32>
    %cst_127 = arith.constant dense<0.000000e+00> : vector<8x512xf32>
    %154 = tpu.matmul %153, %151, %cst_127 {dimension_numbers = #tpu.dot_dimension_numbers<[1], [0], [0], [1], [0, 0, 1, 1], [], []>} : vector<8x4xf32>, vector<4x512xf32>, vector<8x512xf32> -> vector<8x512xf32>
    %155 = arith.addf %146, %154 : vector<8x512xf32>
    %c0_128 = arith.constant 0 : index
    %c136 = arith.constant 136 : index
    %156 = vector.load %arg6[%c0_128, %c136] : memref<4x768xf32, #tpu.memory_space<vmem>>, vector<4x512xf32>
    %c16 = arith.constant 16 : index
    %c0_129 = arith.constant 0 : index
    %c0_130 = arith.constant 0 : index
    %157 = vector.load %arg4[%c16, %c0_129, %c0_130] : memref<27x1x512xf32, #tpu.memory_space<vmem>>, vector<1x1x512xf32>
    %158 = vector.shape_cast %157 : vector<1x1x512xf32> to vector<1x512xf32>
    %159 = vector.broadcast %158 : vector<1x512xf32> to vector<4x512xf32>
    %160 = arith.mulf %156, %159 : vector<4x512xf32>
    %c16_131 = arith.constant 16 : index
    %c0_132 = arith.constant 0 : index
    %c0_133 = arith.constant 0 : index
    %161 = vector.load %arg2[%c16_131, %c0_132, %c0_133] : memref<27x8x4xf32, #tpu.memory_space<vmem>>, vector<1x8x4xf32>
    %162 = vector.shape_cast %161 : vector<1x8x4xf32> to vector<8x4xf32>
    %cst_134 = arith.constant dense<0.000000e+00> : vector<8x512xf32>
    %163 = tpu.matmul %162, %160, %cst_134 {dimension_numbers = #tpu.dot_dimension_numbers<[1], [0], [0], [1], [0, 0, 1, 1], [], []>} : vector<8x4xf32>, vector<4x512xf32>, vector<8x512xf32> -> vector<8x512xf32>
    %164 = arith.addf %155, %163 : vector<8x512xf32>
    %c0_135 = arith.constant 0 : index
    %c137 = arith.constant 137 : index
    %165 = vector.load %arg6[%c0_135, %c137] : memref<4x768xf32, #tpu.memory_space<vmem>>, vector<4x512xf32>
    %c17 = arith.constant 17 : index
    %c0_136 = arith.constant 0 : index
    %c0_137 = arith.constant 0 : index
    %166 = vector.load %arg4[%c17, %c0_136, %c0_137] : memref<27x1x512xf32, #tpu.memory_space<vmem>>, vector<1x1x512xf32>
    %167 = vector.shape_cast %166 : vector<1x1x512xf32> to vector<1x512xf32>
    %168 = vector.broadcast %167 : vector<1x512xf32> to vector<4x512xf32>
    %169 = arith.mulf %165, %168 : vector<4x512xf32>
    %c17_138 = arith.constant 17 : index
    %c0_139 = arith.constant 0 : index
    %c0_140 = arith.constant 0 : index
    %170 = vector.load %arg2[%c17_138, %c0_139, %c0_140] : memref<27x8x4xf32, #tpu.memory_space<vmem>>, vector<1x8x4xf32>
    %171 = vector.shape_cast %170 : vector<1x8x4xf32> to vector<8x4xf32>
    %cst_141 = arith.constant dense<0.000000e+00> : vector<8x512xf32>
    %172 = tpu.matmul %171, %169, %cst_141 {dimension_numbers = #tpu.dot_dimension_numbers<[1], [0], [0], [1], [0, 0, 1, 1], [], []>} : vector<8x4xf32>, vector<4x512xf32>, vector<8x512xf32> -> vector<8x512xf32>
    %173 = arith.addf %164, %172 : vector<8x512xf32>
    %c0_142 = arith.constant 0 : index
    %c183 = arith.constant 183 : index
    %174 = vector.load %arg6[%c0_142, %c183] : memref<4x768xf32, #tpu.memory_space<vmem>>, vector<4x512xf32>
    %c18 = arith.constant 18 : index
    %c0_143 = arith.constant 0 : index
    %c0_144 = arith.constant 0 : index
    %175 = vector.load %arg4[%c18, %c0_143, %c0_144] : memref<27x1x512xf32, #tpu.memory_space<vmem>>, vector<1x1x512xf32>
    %176 = vector.shape_cast %175 : vector<1x1x512xf32> to vector<1x512xf32>
    %177 = vector.broadcast %176 : vector<1x512xf32> to vector<4x512xf32>
    %178 = arith.mulf %174, %177 : vector<4x512xf32>
    %c18_145 = arith.constant 18 : index
    %c0_146 = arith.constant 0 : index
    %c0_147 = arith.constant 0 : index
    %179 = vector.load %arg2[%c18_145, %c0_146, %c0_147] : memref<27x8x4xf32, #tpu.memory_space<vmem>>, vector<1x8x4xf32>
    %180 = vector.shape_cast %179 : vector<1x8x4xf32> to vector<8x4xf32>
    %cst_148 = arith.constant dense<0.000000e+00> : vector<8x512xf32>
    %181 = tpu.matmul %180, %178, %cst_148 {dimension_numbers = #tpu.dot_dimension_numbers<[1], [0], [0], [1], [0, 0, 1, 1], [], []>} : vector<8x4xf32>, vector<4x512xf32>, vector<8x512xf32> -> vector<8x512xf32>
    %182 = arith.addf %173, %181 : vector<8x512xf32>
    %c0_149 = arith.constant 0 : index
    %c184 = arith.constant 184 : index
    %183 = vector.load %arg6[%c0_149, %c184] : memref<4x768xf32, #tpu.memory_space<vmem>>, vector<4x512xf32>
    %c19 = arith.constant 19 : index
    %c0_150 = arith.constant 0 : index
    %c0_151 = arith.constant 0 : index
    %184 = vector.load %arg4[%c19, %c0_150, %c0_151] : memref<27x1x512xf32, #tpu.memory_space<vmem>>, vector<1x1x512xf32>
    %185 = vector.shape_cast %184 : vector<1x1x512xf32> to vector<1x512xf32>
    %186 = vector.broadcast %185 : vector<1x512xf32> to vector<4x512xf32>
    %187 = arith.mulf %183, %186 : vector<4x512xf32>
    %c19_152 = arith.constant 19 : index
    %c0_153 = arith.constant 0 : index
    %c0_154 = arith.constant 0 : index
    %188 = vector.load %arg2[%c19_152, %c0_153, %c0_154] : memref<27x8x4xf32, #tpu.memory_space<vmem>>, vector<1x8x4xf32>
    %189 = vector.shape_cast %188 : vector<1x8x4xf32> to vector<8x4xf32>
    %cst_155 = arith.constant dense<0.000000e+00> : vector<8x512xf32>
    %190 = tpu.matmul %189, %187, %cst_155 {dimension_numbers = #tpu.dot_dimension_numbers<[1], [0], [0], [1], [0, 0, 1, 1], [], []>} : vector<8x4xf32>, vector<4x512xf32>, vector<8x512xf32> -> vector<8x512xf32>
    %191 = arith.addf %182, %190 : vector<8x512xf32>
    %c0_156 = arith.constant 0 : index
    %c185 = arith.constant 185 : index
    %192 = vector.load %arg6[%c0_156, %c185] : memref<4x768xf32, #tpu.memory_space<vmem>>, vector<4x512xf32>
    %c20 = arith.constant 20 : index
    %c0_157 = arith.constant 0 : index
    %c0_158 = arith.constant 0 : index
    %193 = vector.load %arg4[%c20, %c0_157, %c0_158] : memref<27x1x512xf32, #tpu.memory_space<vmem>>, vector<1x1x512xf32>
    %194 = vector.shape_cast %193 : vector<1x1x512xf32> to vector<1x512xf32>
    %195 = vector.broadcast %194 : vector<1x512xf32> to vector<4x512xf32>
    %196 = arith.mulf %192, %195 : vector<4x512xf32>
    %c20_159 = arith.constant 20 : index
    %c0_160 = arith.constant 0 : index
    %c0_161 = arith.constant 0 : index
    %197 = vector.load %arg2[%c20_159, %c0_160, %c0_161] : memref<27x8x4xf32, #tpu.memory_space<vmem>>, vector<1x8x4xf32>
    %198 = vector.shape_cast %197 : vector<1x8x4xf32> to vector<8x4xf32>
    %cst_162 = arith.constant dense<0.000000e+00> : vector<8x512xf32>
    %199 = tpu.matmul %198, %196, %cst_162 {dimension_numbers = #tpu.dot_dimension_numbers<[1], [0], [0], [1], [0, 0, 1, 1], [], []>} : vector<8x4xf32>, vector<4x512xf32>, vector<8x512xf32> -> vector<8x512xf32>
    %200 = arith.addf %191, %199 : vector<8x512xf32>
    %c0_163 = arith.constant 0 : index
    %c191 = arith.constant 191 : index
    %201 = vector.load %arg6[%c0_163, %c191] : memref<4x768xf32, #tpu.memory_space<vmem>>, vector<4x512xf32>
    %c21 = arith.constant 21 : index
    %c0_164 = arith.constant 0 : index
    %c0_165 = arith.constant 0 : index
    %202 = vector.load %arg4[%c21, %c0_164, %c0_165] : memref<27x1x512xf32, #tpu.memory_space<vmem>>, vector<1x1x512xf32>
    %203 = vector.shape_cast %202 : vector<1x1x512xf32> to vector<1x512xf32>
    %204 = vector.broadcast %203 : vector<1x512xf32> to vector<4x512xf32>
    %205 = arith.mulf %201, %204 : vector<4x512xf32>
    %c21_166 = arith.constant 21 : index
    %c0_167 = arith.constant 0 : index
    %c0_168 = arith.constant 0 : index
    %206 = vector.load %arg2[%c21_166, %c0_167, %c0_168] : memref<27x8x4xf32, #tpu.memory_space<vmem>>, vector<1x8x4xf32>
    %207 = vector.shape_cast %206 : vector<1x8x4xf32> to vector<8x4xf32>
    %cst_169 = arith.constant dense<0.000000e+00> : vector<8x512xf32>
    %208 = tpu.matmul %207, %205, %cst_169 {dimension_numbers = #tpu.dot_dimension_numbers<[1], [0], [0], [1], [0, 0, 1, 1], [], []>} : vector<8x4xf32>, vector<4x512xf32>, vector<8x512xf32> -> vector<8x512xf32>
    %209 = arith.addf %200, %208 : vector<8x512xf32>
    %c0_170 = arith.constant 0 : index
    %c192 = arith.constant 192 : index
    %210 = vector.load %arg6[%c0_170, %c192] : memref<4x768xf32, #tpu.memory_space<vmem>>, vector<4x512xf32>
    %c22 = arith.constant 22 : index
    %c0_171 = arith.constant 0 : index
    %c0_172 = arith.constant 0 : index
    %211 = vector.load %arg4[%c22, %c0_171, %c0_172] : memref<27x1x512xf32, #tpu.memory_space<vmem>>, vector<1x1x512xf32>
    %212 = vector.shape_cast %211 : vector<1x1x512xf32> to vector<1x512xf32>
    %213 = vector.broadcast %212 : vector<1x512xf32> to vector<4x512xf32>
    %214 = arith.mulf %210, %213 : vector<4x512xf32>
    %c22_173 = arith.constant 22 : index
    %c0_174 = arith.constant 0 : index
    %c0_175 = arith.constant 0 : index
    %215 = vector.load %arg2[%c22_173, %c0_174, %c0_175] : memref<27x8x4xf32, #tpu.memory_space<vmem>>, vector<1x8x4xf32>
    %216 = vector.shape_cast %215 : vector<1x8x4xf32> to vector<8x4xf32>
    %cst_176 = arith.constant dense<0.000000e+00> : vector<8x512xf32>
    %217 = tpu.matmul %216, %214, %cst_176 {dimension_numbers = #tpu.dot_dimension_numbers<[1], [0], [0], [1], [0, 0, 1, 1], [], []>} : vector<8x4xf32>, vector<4x512xf32>, vector<8x512xf32> -> vector<8x512xf32>
    %218 = arith.addf %209, %217 : vector<8x512xf32>
    %c0_177 = arith.constant 0 : index
    %c193 = arith.constant 193 : index
    %219 = vector.load %arg6[%c0_177, %c193] : memref<4x768xf32, #tpu.memory_space<vmem>>, vector<4x512xf32>
    %c23 = arith.constant 23 : index
    %c0_178 = arith.constant 0 : index
    %c0_179 = arith.constant 0 : index
    %220 = vector.load %arg4[%c23, %c0_178, %c0_179] : memref<27x1x512xf32, #tpu.memory_space<vmem>>, vector<1x1x512xf32>
    %221 = vector.shape_cast %220 : vector<1x1x512xf32> to vector<1x512xf32>
    %222 = vector.broadcast %221 : vector<1x512xf32> to vector<4x512xf32>
    %223 = arith.mulf %219, %222 : vector<4x512xf32>
    %c23_180 = arith.constant 23 : index
    %c0_181 = arith.constant 0 : index
    %c0_182 = arith.constant 0 : index
    %224 = vector.load %arg2[%c23_180, %c0_181, %c0_182] : memref<27x8x4xf32, #tpu.memory_space<vmem>>, vector<1x8x4xf32>
    %225 = vector.shape_cast %224 : vector<1x8x4xf32> to vector<8x4xf32>
    %cst_183 = arith.constant dense<0.000000e+00> : vector<8x512xf32>
    %226 = tpu.matmul %225, %223, %cst_183 {dimension_numbers = #tpu.dot_dimension_numbers<[1], [0], [0], [1], [0, 0, 1, 1], [], []>} : vector<8x4xf32>, vector<4x512xf32>, vector<8x512xf32> -> vector<8x512xf32>
    %227 = arith.addf %218, %226 : vector<8x512xf32>
    %c0_184 = arith.constant 0 : index
    %c199 = arith.constant 199 : index
    %228 = vector.load %arg6[%c0_184, %c199] : memref<4x768xf32, #tpu.memory_space<vmem>>, vector<4x512xf32>
    %c24 = arith.constant 24 : index
    %c0_185 = arith.constant 0 : index
    %c0_186 = arith.constant 0 : index
    %229 = vector.load %arg4[%c24, %c0_185, %c0_186] : memref<27x1x512xf32, #tpu.memory_space<vmem>>, vector<1x1x512xf32>
    %230 = vector.shape_cast %229 : vector<1x1x512xf32> to vector<1x512xf32>
    %231 = vector.broadcast %230 : vector<1x512xf32> to vector<4x512xf32>
    %232 = arith.mulf %228, %231 : vector<4x512xf32>
    %c24_187 = arith.constant 24 : index
    %c0_188 = arith.constant 0 : index
    %c0_189 = arith.constant 0 : index
    %233 = vector.load %arg2[%c24_187, %c0_188, %c0_189] : memref<27x8x4xf32, #tpu.memory_space<vmem>>, vector<1x8x4xf32>
    %234 = vector.shape_cast %233 : vector<1x8x4xf32> to vector<8x4xf32>
    %cst_190 = arith.constant dense<0.000000e+00> : vector<8x512xf32>
    %235 = tpu.matmul %234, %232, %cst_190 {dimension_numbers = #tpu.dot_dimension_numbers<[1], [0], [0], [1], [0, 0, 1, 1], [], []>} : vector<8x4xf32>, vector<4x512xf32>, vector<8x512xf32> -> vector<8x512xf32>
    %236 = arith.addf %227, %235 : vector<8x512xf32>
    %c0_191 = arith.constant 0 : index
    %c200 = arith.constant 200 : index
    %237 = vector.load %arg6[%c0_191, %c200] : memref<4x768xf32, #tpu.memory_space<vmem>>, vector<4x512xf32>
    %c25 = arith.constant 25 : index
    %c0_192 = arith.constant 0 : index
    %c0_193 = arith.constant 0 : index
    %238 = vector.load %arg4[%c25, %c0_192, %c0_193] : memref<27x1x512xf32, #tpu.memory_space<vmem>>, vector<1x1x512xf32>
    %239 = vector.shape_cast %238 : vector<1x1x512xf32> to vector<1x512xf32>
    %240 = vector.broadcast %239 : vector<1x512xf32> to vector<4x512xf32>
    %241 = arith.mulf %237, %240 : vector<4x512xf32>
    %c25_194 = arith.constant 25 : index
    %c0_195 = arith.constant 0 : index
    %c0_196 = arith.constant 0 : index
    %242 = vector.load %arg2[%c25_194, %c0_195, %c0_196] : memref<27x8x4xf32, #tpu.memory_space<vmem>>, vector<1x8x4xf32>
    %243 = vector.shape_cast %242 : vector<1x8x4xf32> to vector<8x4xf32>
    %cst_197 = arith.constant dense<0.000000e+00> : vector<8x512xf32>
    %244 = tpu.matmul %243, %241, %cst_197 {dimension_numbers = #tpu.dot_dimension_numbers<[1], [0], [0], [1], [0, 0, 1, 1], [], []>} : vector<8x4xf32>, vector<4x512xf32>, vector<8x512xf32> -> vector<8x512xf32>
    %245 = arith.addf %236, %244 : vector<8x512xf32>
    %c0_198 = arith.constant 0 : index
    %c201 = arith.constant 201 : index
    %246 = vector.load %arg6[%c0_198, %c201] : memref<4x768xf32, #tpu.memory_space<vmem>>, vector<4x512xf32>
    %c26 = arith.constant 26 : index
    %c0_199 = arith.constant 0 : index
    %c0_200 = arith.constant 0 : index
    %247 = vector.load %arg4[%c26, %c0_199, %c0_200] : memref<27x1x512xf32, #tpu.memory_space<vmem>>, vector<1x1x512xf32>
    %248 = vector.shape_cast %247 : vector<1x1x512xf32> to vector<1x512xf32>
    %249 = vector.broadcast %248 : vector<1x512xf32> to vector<4x512xf32>
    %250 = arith.mulf %246, %249 : vector<4x512xf32>
    %c26_201 = arith.constant 26 : index
    %c0_202 = arith.constant 0 : index
    %c0_203 = arith.constant 0 : index
    %251 = vector.load %arg2[%c26_201, %c0_202, %c0_203] : memref<27x8x4xf32, #tpu.memory_space<vmem>>, vector<1x8x4xf32>
    %252 = vector.shape_cast %251 : vector<1x8x4xf32> to vector<8x4xf32>
    %cst_204 = arith.constant dense<0.000000e+00> : vector<8x512xf32>
    %253 = tpu.matmul %252, %250, %cst_204 {dimension_numbers = #tpu.dot_dimension_numbers<[1], [0], [0], [1], [0, 0, 1, 1], [], []>} : vector<8x4xf32>, vector<4x512xf32>, vector<8x512xf32> -> vector<8x512xf32>
    %254 = arith.addf %245, %253 : vector<8x512xf32>
    %cst_205 = arith.constant dense<0.000000e+00> : vector<8xf32>
    %255 = vector.multi_reduction <add>, %254, %cst_205 [1] : vector<8x512xf32> to vector<8xf32>
    %256 = vector.shape_cast %255 : vector<8xf32> to vector<8x1xf32>
    %cst_206 = arith.constant 0.001953125 : f32
    %257 = vector.broadcast %cst_206 : f32 to vector<8x1xf32>
    %258 = arith.mulf %256, %257 : vector<8x1xf32>
    %259 = arith.mulf %254, %254 : vector<8x512xf32>
    %cst_207 = arith.constant dense<0.000000e+00> : vector<8xf32>
    %260 = vector.multi_reduction <add>, %259, %cst_207 [1] : vector<8x512xf32> to vector<8xf32>
    %261 = vector.shape_cast %260 : vector<8xf32> to vector<8x1xf32>
    %cst_208 = arith.constant 0.001953125 : f32
    %262 = vector.broadcast %cst_208 : f32 to vector<8x1xf32>
    %263 = arith.mulf %261, %262 : vector<8x1xf32>
    %264 = arith.mulf %258, %258 : vector<8x1xf32>
    %265 = arith.subf %263, %264 : vector<8x1xf32>
    %cst_209 = arith.constant 0.000000e+00 : f32
    %266 = vector.broadcast %cst_209 : f32 to vector<8x1xf32>
    %267 = arith.maximumf %265, %266 : vector<8x1xf32>
    %268 = vector.broadcast %258 : vector<8x1xf32> to vector<8x512xf32>
    %269 = arith.subf %254, %268 : vector<8x512xf32>
    %cst_210 = arith.constant 9.99999974E-6 : f32
    %270 = vector.broadcast %cst_210 : f32 to vector<8x1xf32>
    %271 = arith.addf %267, %270 : vector<8x1xf32>
    %272 = math.rsqrt %271 : vector<8x1xf32>
    %273 = vector.broadcast %272 : vector<8x1xf32> to vector<8x512xf32>
    %274 = arith.mulf %269, %273 : vector<8x512xf32>
    %cst_211 = arith.constant 0.000000e+00 : f32
    %275 = vector.broadcast %cst_211 : f32 to vector<8x512xf32>
    %276 = arith.maximumf %274, %275 : vector<8x512xf32>
    %c0_212 = arith.constant 0 : index
    %c128_213 = arith.constant 128 : index
    %277 = vector.load %arg7[%c0_212, %c128_213] : memref<8x768xf32, #tpu.memory_space<vmem>>, vector<8x512xf32>
    tpu.vector_store %arg7[%c0_212, %c128_213], %276 {strides = array<i32>} : memref<8x768xf32, #tpu.memory_space<vmem>>, vector<8x512xf32>,
    %cst_214 = arith.constant 0.000000e+00 : f32
    %278 = vector.broadcast %cst_214 : f32 to vector<8x512xf32>
    %c0_215 = arith.constant 0 : index
    %c55_216 = arith.constant 55 : index
    %279 = vector.load %arg7[%c0_215, %c55_216] : memref<8x768xf32, #tpu.memory_space<vmem>>, vector<8x512xf32>
    %c0_217 = arith.constant 0 : index
    %c0_218 = arith.constant 0 : index
    %c0_219 = arith.constant 0 : index
    %280 = vector.load %arg4[%c0_217, %c0_218, %c0_219] : memref<27x1x512xf32, #tpu.memory_space<vmem>>, vector<1x1x512xf32>
    %281 = vector.shape_cast %280 : vector<1x1x512xf32> to vector<1x512xf32>
    %282 = vector.broadcast %281 : vector<1x512xf32> to vector<8x512xf32>
    %283 = arith.mulf %279, %282 : vector<8x512xf32>
    %c0_220 = arith.constant 0 : index
    %c0_221 = arith.constant 0 : index
    %c0_222 = arith.constant 0 : index
    %284 = vector.load %arg3[%c0_220, %c0_221, %c0_222] : memref<27x8x8xf32, #tpu.memory_space<vmem>>, vector<1x8x8xf32>
    %285 = vector.shape_cast %284 : vector<1x8x8xf32> to vector<8x8xf32>
    %cst_223 = arith.constant dense<0.000000e+00> : vector<8x512xf32>
    %286 = tpu.matmul %285, %283, %cst_223 {dimension_numbers = #tpu.dot_dimension_numbers<[1], [0], [0], [1], [0, 0, 1, 1], [], []>} : vector<8x8xf32>, vector<8x512xf32>, vector<8x512xf32> -> vector<8x512xf32>
    %287 = arith.addf %278, %286 : vector<8x512xf32>
    %c0_224 = arith.constant 0 : index
    %c56_225 = arith.constant 56 : index
    %288 = vector.load %arg7[%c0_224, %c56_225] : memref<8x768xf32, #tpu.memory_space<vmem>>, vector<8x512xf32>
    %c1_226 = arith.constant 1 : index
    %c0_227 = arith.constant 0 : index
    %c0_228 = arith.constant 0 : index
    %289 = vector.load %arg4[%c1_226, %c0_227, %c0_228] : memref<27x1x512xf32, #tpu.memory_space<vmem>>, vector<1x1x512xf32>
    %290 = vector.shape_cast %289 : vector<1x1x512xf32> to vector<1x512xf32>
    %291 = vector.broadcast %290 : vector<1x512xf32> to vector<8x512xf32>
    %292 = arith.mulf %288, %291 : vector<8x512xf32>
    %c1_229 = arith.constant 1 : index
    %c0_230 = arith.constant 0 : index
    %c0_231 = arith.constant 0 : index
    %293 = vector.load %arg3[%c1_229, %c0_230, %c0_231] : memref<27x8x8xf32, #tpu.memory_space<vmem>>, vector<1x8x8xf32>
    %294 = vector.shape_cast %293 : vector<1x8x8xf32> to vector<8x8xf32>
    %cst_232 = arith.constant dense<0.000000e+00> : vector<8x512xf32>
    %295 = tpu.matmul %294, %292, %cst_232 {dimension_numbers = #tpu.dot_dimension_numbers<[1], [0], [0], [1], [0, 0, 1, 1], [], []>} : vector<8x8xf32>, vector<8x512xf32>, vector<8x512xf32> -> vector<8x512xf32>
    %296 = arith.addf %287, %295 : vector<8x512xf32>
    %c0_233 = arith.constant 0 : index
    %c57_234 = arith.constant 57 : index
    %297 = vector.load %arg7[%c0_233, %c57_234] : memref<8x768xf32, #tpu.memory_space<vmem>>, vector<8x512xf32>
    %c2_235 = arith.constant 2 : index
    %c0_236 = arith.constant 0 : index
    %c0_237 = arith.constant 0 : index
    %298 = vector.load %arg4[%c2_235, %c0_236, %c0_237] : memref<27x1x512xf32, #tpu.memory_space<vmem>>, vector<1x1x512xf32>
    %299 = vector.shape_cast %298 : vector<1x1x512xf32> to vector<1x512xf32>
    %300 = vector.broadcast %299 : vector<1x512xf32> to vector<8x512xf32>
    %301 = arith.mulf %297, %300 : vector<8x512xf32>
    %c2_238 = arith.constant 2 : index
    %c0_239 = arith.constant 0 : index
    %c0_240 = arith.constant 0 : index
    %302 = vector.load %arg3[%c2_238, %c0_239, %c0_240] : memref<27x8x8xf32, #tpu.memory_space<vmem>>, vector<1x8x8xf32>
    %303 = vector.shape_cast %302 : vector<1x8x8xf32> to vector<8x8xf32>
    %cst_241 = arith.constant dense<0.000000e+00> : vector<8x512xf32>
    %304 = tpu.matmul %303, %301, %cst_241 {dimension_numbers = #tpu.dot_dimension_numbers<[1], [0], [0], [1], [0, 0, 1, 1], [], []>} : vector<8x8xf32>, vector<8x512xf32>, vector<8x512xf32> -> vector<8x512xf32>
    %305 = arith.addf %296, %304 : vector<8x512xf32>
    %c0_242 = arith.constant 0 : index
    %c63_243 = arith.constant 63 : index
    %306 = vector.load %arg7[%c0_242, %c63_243] : memref<8x768xf32, #tpu.memory_space<vmem>>, vector<8x512xf32>
    %c3_244 = arith.constant 3 : index
    %c0_245 = arith.constant 0 : index
    %c0_246 = arith.constant 0 : index
    %307 = vector.load %arg4[%c3_244, %c0_245, %c0_246] : memref<27x1x512xf32, #tpu.memory_space<vmem>>, vector<1x1x512xf32>
    %308 = vector.shape_cast %307 : vector<1x1x512xf32> to vector<1x512xf32>
    %309 = vector.broadcast %308 : vector<1x512xf32> to vector<8x512xf32>
    %310 = arith.mulf %306, %309 : vector<8x512xf32>
    %c3_247 = arith.constant 3 : index
    %c0_248 = arith.constant 0 : index
    %c0_249 = arith.constant 0 : index
    %311 = vector.load %arg3[%c3_247, %c0_248, %c0_249] : memref<27x8x8xf32, #tpu.memory_space<vmem>>, vector<1x8x8xf32>
    %312 = vector.shape_cast %311 : vector<1x8x8xf32> to vector<8x8xf32>
    %cst_250 = arith.constant dense<0.000000e+00> : vector<8x512xf32>
    %313 = tpu.matmul %312, %310, %cst_250 {dimension_numbers = #tpu.dot_dimension_numbers<[1], [0], [0], [1], [0, 0, 1, 1], [], []>} : vector<8x8xf32>, vector<8x512xf32>, vector<8x512xf32> -> vector<8x512xf32>
    %314 = arith.addf %305, %313 : vector<8x512xf32>
    %c0_251 = arith.constant 0 : index
    %c64_252 = arith.constant 64 : index
    %315 = vector.load %arg7[%c0_251, %c64_252] : memref<8x768xf32, #tpu.memory_space<vmem>>, vector<8x512xf32>
    %c4_253 = arith.constant 4 : index
    %c0_254 = arith.constant 0 : index
    %c0_255 = arith.constant 0 : index
    %316 = vector.load %arg4[%c4_253, %c0_254, %c0_255] : memref<27x1x512xf32, #tpu.memory_space<vmem>>, vector<1x1x512xf32>
    %317 = vector.shape_cast %316 : vector<1x1x512xf32> to vector<1x512xf32>
    %318 = vector.broadcast %317 : vector<1x512xf32> to vector<8x512xf32>
    %319 = arith.mulf %315, %318 : vector<8x512xf32>
    %c4_256 = arith.constant 4 : index
    %c0_257 = arith.constant 0 : index
    %c0_258 = arith.constant 0 : index
    %320 = vector.load %arg3[%c4_256, %c0_257, %c0_258] : memref<27x8x8xf32, #tpu.memory_space<vmem>>, vector<1x8x8xf32>
    %321 = vector.shape_cast %320 : vector<1x8x8xf32> to vector<8x8xf32>
    %cst_259 = arith.constant dense<0.000000e+00> : vector<8x512xf32>
    %322 = tpu.matmul %321, %319, %cst_259 {dimension_numbers = #tpu.dot_dimension_numbers<[1], [0], [0], [1], [0, 0, 1, 1], [], []>} : vector<8x8xf32>, vector<8x512xf32>, vector<8x512xf32> -> vector<8x512xf32>
    %323 = arith.addf %314, %322 : vector<8x512xf32>
    %c0_260 = arith.constant 0 : index
    %c65_261 = arith.constant 65 : index
    %324 = vector.load %arg7[%c0_260, %c65_261] : memref<8x768xf32, #tpu.memory_space<vmem>>, vector<8x512xf32>
    %c5_262 = arith.constant 5 : index
    %c0_263 = arith.constant 0 : index
    %c0_264 = arith.constant 0 : index
    %325 = vector.load %arg4[%c5_262, %c0_263, %c0_264] : memref<27x1x512xf32, #tpu.memory_space<vmem>>, vector<1x1x512xf32>
    %326 = vector.shape_cast %325 : vector<1x1x512xf32> to vector<1x512xf32>
    %327 = vector.broadcast %326 : vector<1x512xf32> to vector<8x512xf32>
    %328 = arith.mulf %324, %327 : vector<8x512xf32>
    %c5_265 = arith.constant 5 : index
    %c0_266 = arith.constant 0 : index
    %c0_267 = arith.constant 0 : index
    %329 = vector.load %arg3[%c5_265, %c0_266, %c0_267] : memref<27x8x8xf32, #tpu.memory_space<vmem>>, vector<1x8x8xf32>
    %330 = vector.shape_cast %329 : vector<1x8x8xf32> to vector<8x8xf32>
    %cst_268 = arith.constant dense<0.000000e+00> : vector<8x512xf32>
    %331 = tpu.matmul %330, %328, %cst_268 {dimension_numbers = #tpu.dot_dimension_numbers<[1], [0], [0], [1], [0, 0, 1, 1], [], []>} : vector<8x8xf32>, vector<8x512xf32>, vector<8x512xf32> -> vector<8x512xf32>
    %332 = arith.addf %323, %331 : vector<8x512xf32>
    %c0_269 = arith.constant 0 : index
    %c71_270 = arith.constant 71 : index
    %333 = vector.load %arg7[%c0_269, %c71_270] : memref<8x768xf32, #tpu.memory_space<vmem>>, vector<8x512xf32>
    %c6_271 = arith.constant 6 : index
    %c0_272 = arith.constant 0 : index
    %c0_273 = arith.constant 0 : index
    %334 = vector.load %arg4[%c6_271, %c0_272, %c0_273] : memref<27x1x512xf32, #tpu.memory_space<vmem>>, vector<1x1x512xf32>
    %335 = vector.shape_cast %334 : vector<1x1x512xf32> to vector<1x512xf32>
    %336 = vector.broadcast %335 : vector<1x512xf32> to vector<8x512xf32>
    %337 = arith.mulf %333, %336 : vector<8x512xf32>
    %c6_274 = arith.constant 6 : index
    %c0_275 = arith.constant 0 : index
    %c0_276 = arith.constant 0 : index
    %338 = vector.load %arg3[%c6_274, %c0_275, %c0_276] : memref<27x8x8xf32, #tpu.memory_space<vmem>>, vector<1x8x8xf32>
    %339 = vector.shape_cast %338 : vector<1x8x8xf32> to vector<8x8xf32>
    %cst_277 = arith.constant dense<0.000000e+00> : vector<8x512xf32>
    %340 = tpu.matmul %339, %337, %cst_277 {dimension_numbers = #tpu.dot_dimension_numbers<[1], [0], [0], [1], [0, 0, 1, 1], [], []>} : vector<8x8xf32>, vector<8x512xf32>, vector<8x512xf32> -> vector<8x512xf32>
    %341 = arith.addf %332, %340 : vector<8x512xf32>
    %c0_278 = arith.constant 0 : index
    %c72_279 = arith.constant 72 : index
    %342 = vector.load %arg7[%c0_278, %c72_279] : memref<8x768xf32, #tpu.memory_space<vmem>>, vector<8x512xf32>
    %c7_280 = arith.constant 7 : index
    %c0_281 = arith.constant 0 : index
    %c0_282 = arith.constant 0 : index
    %343 = vector.load %arg4[%c7_280, %c0_281, %c0_282] : memref<27x1x512xf32, #tpu.memory_space<vmem>>, vector<1x1x512xf32>
    %344 = vector.shape_cast %343 : vector<1x1x512xf32> to vector<1x512xf32>
    %345 = vector.broadcast %344 : vector<1x512xf32> to vector<8x512xf32>
    %346 = arith.mulf %342, %345 : vector<8x512xf32>
    %c7_283 = arith.constant 7 : index
    %c0_284 = arith.constant 0 : index
    %c0_285 = arith.constant 0 : index
    %347 = vector.load %arg3[%c7_283, %c0_284, %c0_285] : memref<27x8x8xf32, #tpu.memory_space<vmem>>, vector<1x8x8xf32>
    %348 = vector.shape_cast %347 : vector<1x8x8xf32> to vector<8x8xf32>
    %cst_286 = arith.constant dense<0.000000e+00> : vector<8x512xf32>
    %349 = tpu.matmul %348, %346, %cst_286 {dimension_numbers = #tpu.dot_dimension_numbers<[1], [0], [0], [1], [0, 0, 1, 1], [], []>} : vector<8x8xf32>, vector<8x512xf32>, vector<8x512xf32> -> vector<8x512xf32>
    %350 = arith.addf %341, %349 : vector<8x512xf32>
    %c0_287 = arith.constant 0 : index
    %c73_288 = arith.constant 73 : index
    %351 = vector.load %arg7[%c0_287, %c73_288] : memref<8x768xf32, #tpu.memory_space<vmem>>, vector<8x512xf32>
    %c8_289 = arith.constant 8 : index
    %c0_290 = arith.constant 0 : index
    %c0_291 = arith.constant 0 : index
    %352 = vector.load %arg4[%c8_289, %c0_290, %c0_291] : memref<27x1x512xf32, #tpu.memory_space<vmem>>, vector<1x1x512xf32>
    %353 = vector.shape_cast %352 : vector<1x1x512xf32> to vector<1x512xf32>
    %354 = vector.broadcast %353 : vector<1x512xf32> to vector<8x512xf32>
    %355 = arith.mulf %351, %354 : vector<8x512xf32>
    %c8_292 = arith.constant 8 : index
    %c0_293 = arith.constant 0 : index
    %c0_294 = arith.constant 0 : index
    %356 = vector.load %arg3[%c8_292, %c0_293, %c0_294] : memref<27x8x8xf32, #tpu.memory_space<vmem>>, vector<1x8x8xf32>
    %357 = vector.shape_cast %356 : vector<1x8x8xf32> to vector<8x8xf32>
    %cst_295 = arith.constant dense<0.000000e+00> : vector<8x512xf32>
    %358 = tpu.matmul %357, %355, %cst_295 {dimension_numbers = #tpu.dot_dimension_numbers<[1], [0], [0], [1], [0, 0, 1, 1], [], []>} : vector<8x8xf32>, vector<8x512xf32>, vector<8x512xf32> -> vector<8x512xf32>
    %359 = arith.addf %350, %358 : vector<8x512xf32>
    %c0_296 = arith.constant 0 : index
    %c119_297 = arith.constant 119 : index
    %360 = vector.load %arg7[%c0_296, %c119_297] : memref<8x768xf32, #tpu.memory_space<vmem>>, vector<8x512xf32>
    %c9_298 = arith.constant 9 : index
    %c0_299 = arith.constant 0 : index
    %c0_300 = arith.constant 0 : index
    %361 = vector.load %arg4[%c9_298, %c0_299, %c0_300] : memref<27x1x512xf32, #tpu.memory_space<vmem>>, vector<1x1x512xf32>
    %362 = vector.shape_cast %361 : vector<1x1x512xf32> to vector<1x512xf32>
    %363 = vector.broadcast %362 : vector<1x512xf32> to vector<8x512xf32>
    %364 = arith.mulf %360, %363 : vector<8x512xf32>
    %c9_301 = arith.constant 9 : index
    %c0_302 = arith.constant 0 : index
    %c0_303 = arith.constant 0 : index
    %365 = vector.load %arg3[%c9_301, %c0_302, %c0_303] : memref<27x8x8xf32, #tpu.memory_space<vmem>>, vector<1x8x8xf32>
    %366 = vector.shape_cast %365 : vector<1x8x8xf32> to vector<8x8xf32>
    %cst_304 = arith.constant dense<0.000000e+00> : vector<8x512xf32>
    %367 = tpu.matmul %366, %364, %cst_304 {dimension_numbers = #tpu.dot_dimension_numbers<[1], [0], [0], [1], [0, 0, 1, 1], [], []>} : vector<8x8xf32>, vector<8x512xf32>, vector<8x512xf32> -> vector<8x512xf32>
    %368 = arith.addf %359, %367 : vector<8x512xf32>
    %c0_305 = arith.constant 0 : index
    %c120_306 = arith.constant 120 : index
    %369 = vector.load %arg7[%c0_305, %c120_306] : memref<8x768xf32, #tpu.memory_space<vmem>>, vector<8x512xf32>
    %c10_307 = arith.constant 10 : index
    %c0_308 = arith.constant 0 : index
    %c0_309 = arith.constant 0 : index
    %370 = vector.load %arg4[%c10_307, %c0_308, %c0_309] : memref<27x1x512xf32, #tpu.memory_space<vmem>>, vector<1x1x512xf32>
    %371 = vector.shape_cast %370 : vector<1x1x512xf32> to vector<1x512xf32>
    %372 = vector.broadcast %371 : vector<1x512xf32> to vector<8x512xf32>
    %373 = arith.mulf %369, %372 : vector<8x512xf32>
    %c10_310 = arith.constant 10 : index
    %c0_311 = arith.constant 0 : index
    %c0_312 = arith.constant 0 : index
    %374 = vector.load %arg3[%c10_310, %c0_311, %c0_312] : memref<27x8x8xf32, #tpu.memory_space<vmem>>, vector<1x8x8xf32>
    %375 = vector.shape_cast %374 : vector<1x8x8xf32> to vector<8x8xf32>
    %cst_313 = arith.constant dense<0.000000e+00> : vector<8x512xf32>
    %376 = tpu.matmul %375, %373, %cst_313 {dimension_numbers = #tpu.dot_dimension_numbers<[1], [0], [0], [1], [0, 0, 1, 1], [], []>} : vector<8x8xf32>, vector<8x512xf32>, vector<8x512xf32> -> vector<8x512xf32>
    %377 = arith.addf %368, %376 : vector<8x512xf32>
    %c0_314 = arith.constant 0 : index
    %c121_315 = arith.constant 121 : index
    %378 = vector.load %arg7[%c0_314, %c121_315] : memref<8x768xf32, #tpu.memory_space<vmem>>, vector<8x512xf32>
    %c11_316 = arith.constant 11 : index
    %c0_317 = arith.constant 0 : index
    %c0_318 = arith.constant 0 : index
    %379 = vector.load %arg4[%c11_316, %c0_317, %c0_318] : memref<27x1x512xf32, #tpu.memory_space<vmem>>, vector<1x1x512xf32>
    %380 = vector.shape_cast %379 : vector<1x1x512xf32> to vector<1x512xf32>
    %381 = vector.broadcast %380 : vector<1x512xf32> to vector<8x512xf32>
    %382 = arith.mulf %378, %381 : vector<8x512xf32>
    %c11_319 = arith.constant 11 : index
    %c0_320 = arith.constant 0 : index
    %c0_321 = arith.constant 0 : index
    %383 = vector.load %arg3[%c11_319, %c0_320, %c0_321] : memref<27x8x8xf32, #tpu.memory_space<vmem>>, vector<1x8x8xf32>
    %384 = vector.shape_cast %383 : vector<1x8x8xf32> to vector<8x8xf32>
    %cst_322 = arith.constant dense<0.000000e+00> : vector<8x512xf32>
    %385 = tpu.matmul %384, %382, %cst_322 {dimension_numbers = #tpu.dot_dimension_numbers<[1], [0], [0], [1], [0, 0, 1, 1], [], []>} : vector<8x8xf32>, vector<8x512xf32>, vector<8x512xf32> -> vector<8x512xf32>
    %386 = arith.addf %377, %385 : vector<8x512xf32>
    %c0_323 = arith.constant 0 : index
    %c127_324 = arith.constant 127 : index
    %387 = vector.load %arg7[%c0_323, %c127_324] : memref<8x768xf32, #tpu.memory_space<vmem>>, vector<8x512xf32>
    %c12_325 = arith.constant 12 : index
    %c0_326 = arith.constant 0 : index
    %c0_327 = arith.constant 0 : index
    %388 = vector.load %arg4[%c12_325, %c0_326, %c0_327] : memref<27x1x512xf32, #tpu.memory_space<vmem>>, vector<1x1x512xf32>
    %389 = vector.shape_cast %388 : vector<1x1x512xf32> to vector<1x512xf32>
    %390 = vector.broadcast %389 : vector<1x512xf32> to vector<8x512xf32>
    %391 = arith.mulf %387, %390 : vector<8x512xf32>
    %c12_328 = arith.constant 12 : index
    %c0_329 = arith.constant 0 : index
    %c0_330 = arith.constant 0 : index
    %392 = vector.load %arg3[%c12_328, %c0_329, %c0_330] : memref<27x8x8xf32, #tpu.memory_space<vmem>>, vector<1x8x8xf32>
    %393 = vector.shape_cast %392 : vector<1x8x8xf32> to vector<8x8xf32>
    %cst_331 = arith.constant dense<0.000000e+00> : vector<8x512xf32>
    %394 = tpu.matmul %393, %391, %cst_331 {dimension_numbers = #tpu.dot_dimension_numbers<[1], [0], [0], [1], [0, 0, 1, 1], [], []>} : vector<8x8xf32>, vector<8x512xf32>, vector<8x512xf32> -> vector<8x512xf32>
    %395 = arith.addf %386, %394 : vector<8x512xf32>
    %c0_332 = arith.constant 0 : index
    %c128_333 = arith.constant 128 : index
    %396 = vector.load %arg7[%c0_332, %c128_333] : memref<8x768xf32, #tpu.memory_space<vmem>>, vector<8x512xf32>
    %c13_334 = arith.constant 13 : index
    %c0_335 = arith.constant 0 : index
    %c0_336 = arith.constant 0 : index
    %397 = vector.load %arg4[%c13_334, %c0_335, %c0_336] : memref<27x1x512xf32, #tpu.memory_space<vmem>>, vector<1x1x512xf32>
    %398 = vector.shape_cast %397 : vector<1x1x512xf32> to vector<1x512xf32>
    %399 = vector.broadcast %398 : vector<1x512xf32> to vector<8x512xf32>
    %400 = arith.mulf %396, %399 : vector<8x512xf32>
    %c13_337 = arith.constant 13 : index
    %c0_338 = arith.constant 0 : index
    %c0_339 = arith.constant 0 : index
    %401 = vector.load %arg3[%c13_337, %c0_338, %c0_339] : memref<27x8x8xf32, #tpu.memory_space<vmem>>, vector<1x8x8xf32>
    %402 = vector.shape_cast %401 : vector<1x8x8xf32> to vector<8x8xf32>
    %cst_340 = arith.constant dense<0.000000e+00> : vector<8x512xf32>
    %403 = tpu.matmul %402, %400, %cst_340 {dimension_numbers = #tpu.dot_dimension_numbers<[1], [0], [0], [1], [0, 0, 1, 1], [], []>} : vector<8x8xf32>, vector<8x512xf32>, vector<8x512xf32> -> vector<8x512xf32>
    %404 = arith.addf %395, %403 : vector<8x512xf32>
    %c0_341 = arith.constant 0 : index
    %c129_342 = arith.constant 129 : index
    %405 = vector.load %arg7[%c0_341, %c129_342] : memref<8x768xf32, #tpu.memory_space<vmem>>, vector<8x512xf32>
    %c14_343 = arith.constant 14 : index
    %c0_344 = arith.constant 0 : index
    %c0_345 = arith.constant 0 : index
    %406 = vector.load %arg4[%c14_343, %c0_344, %c0_345] : memref<27x1x512xf32, #tpu.memory_space<vmem>>, vector<1x1x512xf32>
    %407 = vector.shape_cast %406 : vector<1x1x512xf32> to vector<1x512xf32>
    %408 = vector.broadcast %407 : vector<1x512xf32> to vector<8x512xf32>
    %409 = arith.mulf %405, %408 : vector<8x512xf32>
    %c14_346 = arith.constant 14 : index
    %c0_347 = arith.constant 0 : index
    %c0_348 = arith.constant 0 : index
    %410 = vector.load %arg3[%c14_346, %c0_347, %c0_348] : memref<27x8x8xf32, #tpu.memory_space<vmem>>, vector<1x8x8xf32>
    %411 = vector.shape_cast %410 : vector<1x8x8xf32> to vector<8x8xf32>
    %cst_349 = arith.constant dense<0.000000e+00> : vector<8x512xf32>
    %412 = tpu.matmul %411, %409, %cst_349 {dimension_numbers = #tpu.dot_dimension_numbers<[1], [0], [0], [1], [0, 0, 1, 1], [], []>} : vector<8x8xf32>, vector<8x512xf32>, vector<8x512xf32> -> vector<8x512xf32>
    %413 = arith.addf %404, %412 : vector<8x512xf32>
    %c0_350 = arith.constant 0 : index
    %c135_351 = arith.constant 135 : index
    %414 = vector.load %arg7[%c0_350, %c135_351] : memref<8x768xf32, #tpu.memory_space<vmem>>, vector<8x512xf32>
    %c15_352 = arith.constant 15 : index
    %c0_353 = arith.constant 0 : index
    %c0_354 = arith.constant 0 : index
    %415 = vector.load %arg4[%c15_352, %c0_353, %c0_354] : memref<27x1x512xf32, #tpu.memory_space<vmem>>, vector<1x1x512xf32>
    %416 = vector.shape_cast %415 : vector<1x1x512xf32> to vector<1x512xf32>
    %417 = vector.broadcast %416 : vector<1x512xf32> to vector<8x512xf32>
    %418 = arith.mulf %414, %417 : vector<8x512xf32>
    %c15_355 = arith.constant 15 : index
    %c0_356 = arith.constant 0 : index
    %c0_357 = arith.constant 0 : index
    %419 = vector.load %arg3[%c15_355, %c0_356, %c0_357] : memref<27x8x8xf32, #tpu.memory_space<vmem>>, vector<1x8x8xf32>
    %420 = vector.shape_cast %419 : vector<1x8x8xf32> to vector<8x8xf32>
    %cst_358 = arith.constant dense<0.000000e+00> : vector<8x512xf32>
    %421 = tpu.matmul %420, %418, %cst_358 {dimension_numbers = #tpu.dot_dimension_numbers<[1], [0], [0], [1], [0, 0, 1, 1], [], []>} : vector<8x8xf32>, vector<8x512xf32>, vector<8x512xf32> -> vector<8x512xf32>
    %422 = arith.addf %413, %421 : vector<8x512xf32>
    %c0_359 = arith.constant 0 : index
    %c136_360 = arith.constant 136 : index
    %423 = vector.load %arg7[%c0_359, %c136_360] : memref<8x768xf32, #tpu.memory_space<vmem>>, vector<8x512xf32>
    %c16_361 = arith.constant 16 : index
    %c0_362 = arith.constant 0 : index
    %c0_363 = arith.constant 0 : index
    %424 = vector.load %arg4[%c16_361, %c0_362, %c0_363] : memref<27x1x512xf32, #tpu.memory_space<vmem>>, vector<1x1x512xf32>
    %425 = vector.shape_cast %424 : vector<1x1x512xf32> to vector<1x512xf32>
    %426 = vector.broadcast %425 : vector<1x512xf32> to vector<8x512xf32>
    %427 = arith.mulf %423, %426 : vector<8x512xf32>
    %c16_364 = arith.constant 16 : index
    %c0_365 = arith.constant 0 : index
    %c0_366 = arith.constant 0 : index
    %428 = vector.load %arg3[%c16_364, %c0_365, %c0_366] : memref<27x8x8xf32, #tpu.memory_space<vmem>>, vector<1x8x8xf32>
    %429 = vector.shape_cast %428 : vector<1x8x8xf32> to vector<8x8xf32>
    %cst_367 = arith.constant dense<0.000000e+00> : vector<8x512xf32>
    %430 = tpu.matmul %429, %427, %cst_367 {dimension_numbers = #tpu.dot_dimension_numbers<[1], [0], [0], [1], [0, 0, 1, 1], [], []>} : vector<8x8xf32>, vector<8x512xf32>, vector<8x512xf32> -> vector<8x512xf32>
    %431 = arith.addf %422, %430 : vector<8x512xf32>
    %c0_368 = arith.constant 0 : index
    %c137_369 = arith.constant 137 : index
    %432 = vector.load %arg7[%c0_368, %c137_369] : memref<8x768xf32, #tpu.memory_space<vmem>>, vector<8x512xf32>
    %c17_370 = arith.constant 17 : index
    %c0_371 = arith.constant 0 : index
    %c0_372 = arith.constant 0 : index
    %433 = vector.load %arg4[%c17_370, %c0_371, %c0_372] : memref<27x1x512xf32, #tpu.memory_space<vmem>>, vector<1x1x512xf32>
    %434 = vector.shape_cast %433 : vector<1x1x512xf32> to vector<1x512xf32>
    %435 = vector.broadcast %434 : vector<1x512xf32> to vector<8x512xf32>
    %436 = arith.mulf %432, %435 : vector<8x512xf32>
    %c17_373 = arith.constant 17 : index
    %c0_374 = arith.constant 0 : index
    %c0_375 = arith.constant 0 : index
    %437 = vector.load %arg3[%c17_373, %c0_374, %c0_375] : memref<27x8x8xf32, #tpu.memory_space<vmem>>, vector<1x8x8xf32>
    %438 = vector.shape_cast %437 : vector<1x8x8xf32> to vector<8x8xf32>
    %cst_376 = arith.constant dense<0.000000e+00> : vector<8x512xf32>
    %439 = tpu.matmul %438, %436, %cst_376 {dimension_numbers = #tpu.dot_dimension_numbers<[1], [0], [0], [1], [0, 0, 1, 1], [], []>} : vector<8x8xf32>, vector<8x512xf32>, vector<8x512xf32> -> vector<8x512xf32>
    %440 = arith.addf %431, %439 : vector<8x512xf32>
    %c0_377 = arith.constant 0 : index
    %c183_378 = arith.constant 183 : index
    %441 = vector.load %arg7[%c0_377, %c183_378] : memref<8x768xf32, #tpu.memory_space<vmem>>, vector<8x512xf32>
    %c18_379 = arith.constant 18 : index
    %c0_380 = arith.constant 0 : index
    %c0_381 = arith.constant 0 : index
    %442 = vector.load %arg4[%c18_379, %c0_380, %c0_381] : memref<27x1x512xf32, #tpu.memory_space<vmem>>, vector<1x1x512xf32>
    %443 = vector.shape_cast %442 : vector<1x1x512xf32> to vector<1x512xf32>
    %444 = vector.broadcast %443 : vector<1x512xf32> to vector<8x512xf32>
    %445 = arith.mulf %441, %444 : vector<8x512xf32>
    %c18_382 = arith.constant 18 : index
    %c0_383 = arith.constant 0 : index
    %c0_384 = arith.constant 0 : index
    %446 = vector.load %arg3[%c18_382, %c0_383, %c0_384] : memref<27x8x8xf32, #tpu.memory_space<vmem>>, vector<1x8x8xf32>
    %447 = vector.shape_cast %446 : vector<1x8x8xf32> to vector<8x8xf32>
    %cst_385 = arith.constant dense<0.000000e+00> : vector<8x512xf32>
    %448 = tpu.matmul %447, %445, %cst_385 {dimension_numbers = #tpu.dot_dimension_numbers<[1], [0], [0], [1], [0, 0, 1, 1], [], []>} : vector<8x8xf32>, vector<8x512xf32>, vector<8x512xf32> -> vector<8x512xf32>
    %449 = arith.addf %440, %448 : vector<8x512xf32>
    %c0_386 = arith.constant 0 : index
    %c184_387 = arith.constant 184 : index
    %450 = vector.load %arg7[%c0_386, %c184_387] : memref<8x768xf32, #tpu.memory_space<vmem>>, vector<8x512xf32>
    %c19_388 = arith.constant 19 : index
    %c0_389 = arith.constant 0 : index
    %c0_390 = arith.constant 0 : index
    %451 = vector.load %arg4[%c19_388, %c0_389, %c0_390] : memref<27x1x512xf32, #tpu.memory_space<vmem>>, vector<1x1x512xf32>
    %452 = vector.shape_cast %451 : vector<1x1x512xf32> to vector<1x512xf32>
    %453 = vector.broadcast %452 : vector<1x512xf32> to vector<8x512xf32>
    %454 = arith.mulf %450, %453 : vector<8x512xf32>
    %c19_391 = arith.constant 19 : index
    %c0_392 = arith.constant 0 : index
    %c0_393 = arith.constant 0 : index
    %455 = vector.load %arg3[%c19_391, %c0_392, %c0_393] : memref<27x8x8xf32, #tpu.memory_space<vmem>>, vector<1x8x8xf32>
    %456 = vector.shape_cast %455 : vector<1x8x8xf32> to vector<8x8xf32>
    %cst_394 = arith.constant dense<0.000000e+00> : vector<8x512xf32>
    %457 = tpu.matmul %456, %454, %cst_394 {dimension_numbers = #tpu.dot_dimension_numbers<[1], [0], [0], [1], [0, 0, 1, 1], [], []>} : vector<8x8xf32>, vector<8x512xf32>, vector<8x512xf32> -> vector<8x512xf32>
    %458 = arith.addf %449, %457 : vector<8x512xf32>
    %c0_395 = arith.constant 0 : index
    %c185_396 = arith.constant 185 : index
    %459 = vector.load %arg7[%c0_395, %c185_396] : memref<8x768xf32, #tpu.memory_space<vmem>>, vector<8x512xf32>
    %c20_397 = arith.constant 20 : index
    %c0_398 = arith.constant 0 : index
    %c0_399 = arith.constant 0 : index
    %460 = vector.load %arg4[%c20_397, %c0_398, %c0_399] : memref<27x1x512xf32, #tpu.memory_space<vmem>>, vector<1x1x512xf32>
    %461 = vector.shape_cast %460 : vector<1x1x512xf32> to vector<1x512xf32>
    %462 = vector.broadcast %461 : vector<1x512xf32> to vector<8x512xf32>
    %463 = arith.mulf %459, %462 : vector<8x512xf32>
    %c20_400 = arith.constant 20 : index
    %c0_401 = arith.constant 0 : index
    %c0_402 = arith.constant 0 : index
    %464 = vector.load %arg3[%c20_400, %c0_401, %c0_402] : memref<27x8x8xf32, #tpu.memory_space<vmem>>, vector<1x8x8xf32>
    %465 = vector.shape_cast %464 : vector<1x8x8xf32> to vector<8x8xf32>
    %cst_403 = arith.constant dense<0.000000e+00> : vector<8x512xf32>
    %466 = tpu.matmul %465, %463, %cst_403 {dimension_numbers = #tpu.dot_dimension_numbers<[1], [0], [0], [1], [0, 0, 1, 1], [], []>} : vector<8x8xf32>, vector<8x512xf32>, vector<8x512xf32> -> vector<8x512xf32>
    %467 = arith.addf %458, %466 : vector<8x512xf32>
    %c0_404 = arith.constant 0 : index
    %c191_405 = arith.constant 191 : index
    %468 = vector.load %arg7[%c0_404, %c191_405] : memref<8x768xf32, #tpu.memory_space<vmem>>, vector<8x512xf32>
    %c21_406 = arith.constant 21 : index
    %c0_407 = arith.constant 0 : index
    %c0_408 = arith.constant 0 : index
    %469 = vector.load %arg4[%c21_406, %c0_407, %c0_408] : memref<27x1x512xf32, #tpu.memory_space<vmem>>, vector<1x1x512xf32>
    %470 = vector.shape_cast %469 : vector<1x1x512xf32> to vector<1x512xf32>
    %471 = vector.broadcast %470 : vector<1x512xf32> to vector<8x512xf32>
    %472 = arith.mulf %468, %471 : vector<8x512xf32>
    %c21_409 = arith.constant 21 : index
    %c0_410 = arith.constant 0 : index
    %c0_411 = arith.constant 0 : index
    %473 = vector.load %arg3[%c21_409, %c0_410, %c0_411] : memref<27x8x8xf32, #tpu.memory_space<vmem>>, vector<1x8x8xf32>
    %474 = vector.shape_cast %473 : vector<1x8x8xf32> to vector<8x8xf32>
    %cst_412 = arith.constant dense<0.000000e+00> : vector<8x512xf32>
    %475 = tpu.matmul %474, %472, %cst_412 {dimension_numbers = #tpu.dot_dimension_numbers<[1], [0], [0], [1], [0, 0, 1, 1], [], []>} : vector<8x8xf32>, vector<8x512xf32>, vector<8x512xf32> -> vector<8x512xf32>
    %476 = arith.addf %467, %475 : vector<8x512xf32>
    %c0_413 = arith.constant 0 : index
    %c192_414 = arith.constant 192 : index
    %477 = vector.load %arg7[%c0_413, %c192_414] : memref<8x768xf32, #tpu.memory_space<vmem>>, vector<8x512xf32>
    %c22_415 = arith.constant 22 : index
    %c0_416 = arith.constant 0 : index
    %c0_417 = arith.constant 0 : index
    %478 = vector.load %arg4[%c22_415, %c0_416, %c0_417] : memref<27x1x512xf32, #tpu.memory_space<vmem>>, vector<1x1x512xf32>
    %479 = vector.shape_cast %478 : vector<1x1x512xf32> to vector<1x512xf32>
    %480 = vector.broadcast %479 : vector<1x512xf32> to vector<8x512xf32>
    %481 = arith.mulf %477, %480 : vector<8x512xf32>
    %c22_418 = arith.constant 22 : index
    %c0_419 = arith.constant 0 : index
    %c0_420 = arith.constant 0 : index
    %482 = vector.load %arg3[%c22_418, %c0_419, %c0_420] : memref<27x8x8xf32, #tpu.memory_space<vmem>>, vector<1x8x8xf32>
    %483 = vector.shape_cast %482 : vector<1x8x8xf32> to vector<8x8xf32>
    %cst_421 = arith.constant dense<0.000000e+00> : vector<8x512xf32>
    %484 = tpu.matmul %483, %481, %cst_421 {dimension_numbers = #tpu.dot_dimension_numbers<[1], [0], [0], [1], [0, 0, 1, 1], [], []>} : vector<8x8xf32>, vector<8x512xf32>, vector<8x512xf32> -> vector<8x512xf32>
    %485 = arith.addf %476, %484 : vector<8x512xf32>
    %c0_422 = arith.constant 0 : index
    %c193_423 = arith.constant 193 : index
    %486 = vector.load %arg7[%c0_422, %c193_423] : memref<8x768xf32, #tpu.memory_space<vmem>>, vector<8x512xf32>
    %c23_424 = arith.constant 23 : index
    %c0_425 = arith.constant 0 : index
    %c0_426 = arith.constant 0 : index
    %487 = vector.load %arg4[%c23_424, %c0_425, %c0_426] : memref<27x1x512xf32, #tpu.memory_space<vmem>>, vector<1x1x512xf32>
    %488 = vector.shape_cast %487 : vector<1x1x512xf32> to vector<1x512xf32>
    %489 = vector.broadcast %488 : vector<1x512xf32> to vector<8x512xf32>
    %490 = arith.mulf %486, %489 : vector<8x512xf32>
    %c23_427 = arith.constant 23 : index
    %c0_428 = arith.constant 0 : index
    %c0_429 = arith.constant 0 : index
    %491 = vector.load %arg3[%c23_427, %c0_428, %c0_429] : memref<27x8x8xf32, #tpu.memory_space<vmem>>, vector<1x8x8xf32>
    %492 = vector.shape_cast %491 : vector<1x8x8xf32> to vector<8x8xf32>
    %cst_430 = arith.constant dense<0.000000e+00> : vector<8x512xf32>
    %493 = tpu.matmul %492, %490, %cst_430 {dimension_numbers = #tpu.dot_dimension_numbers<[1], [0], [0], [1], [0, 0, 1, 1], [], []>} : vector<8x8xf32>, vector<8x512xf32>, vector<8x512xf32> -> vector<8x512xf32>
    %494 = arith.addf %485, %493 : vector<8x512xf32>
    %c0_431 = arith.constant 0 : index
    %c199_432 = arith.constant 199 : index
    %495 = vector.load %arg7[%c0_431, %c199_432] : memref<8x768xf32, #tpu.memory_space<vmem>>, vector<8x512xf32>
    %c24_433 = arith.constant 24 : index
    %c0_434 = arith.constant 0 : index
    %c0_435 = arith.constant 0 : index
    %496 = vector.load %arg4[%c24_433, %c0_434, %c0_435] : memref<27x1x512xf32, #tpu.memory_space<vmem>>, vector<1x1x512xf32>
    %497 = vector.shape_cast %496 : vector<1x1x512xf32> to vector<1x512xf32>
    %498 = vector.broadcast %497 : vector<1x512xf32> to vector<8x512xf32>
    %499 = arith.mulf %495, %498 : vector<8x512xf32>
    %c24_436 = arith.constant 24 : index
    %c0_437 = arith.constant 0 : index
    %c0_438 = arith.constant 0 : index
    %500 = vector.load %arg3[%c24_436, %c0_437, %c0_438] : memref<27x8x8xf32, #tpu.memory_space<vmem>>, vector<1x8x8xf32>
    %501 = vector.shape_cast %500 : vector<1x8x8xf32> to vector<8x8xf32>
    %cst_439 = arith.constant dense<0.000000e+00> : vector<8x512xf32>
    %502 = tpu.matmul %501, %499, %cst_439 {dimension_numbers = #tpu.dot_dimension_numbers<[1], [0], [0], [1], [0, 0, 1, 1], [], []>} : vector<8x8xf32>, vector<8x512xf32>, vector<8x512xf32> -> vector<8x512xf32>
    %503 = arith.addf %494, %502 : vector<8x512xf32>
    %c0_440 = arith.constant 0 : index
    %c200_441 = arith.constant 200 : index
    %504 = vector.load %arg7[%c0_440, %c200_441] : memref<8x768xf32, #tpu.memory_space<vmem>>, vector<8x512xf32>
    %c25_442 = arith.constant 25 : index
    %c0_443 = arith.constant 0 : index
    %c0_444 = arith.constant 0 : index
    %505 = vector.load %arg4[%c25_442, %c0_443, %c0_444] : memref<27x1x512xf32, #tpu.memory_space<vmem>>, vector<1x1x512xf32>
    %506 = vector.shape_cast %505 : vector<1x1x512xf32> to vector<1x512xf32>
    %507 = vector.broadcast %506 : vector<1x512xf32> to vector<8x512xf32>
    %508 = arith.mulf %504, %507 : vector<8x512xf32>
    %c25_445 = arith.constant 25 : index
    %c0_446 = arith.constant 0 : index
    %c0_447 = arith.constant 0 : index
    %509 = vector.load %arg3[%c25_445, %c0_446, %c0_447] : memref<27x8x8xf32, #tpu.memory_space<vmem>>, vector<1x8x8xf32>
    %510 = vector.shape_cast %509 : vector<1x8x8xf32> to vector<8x8xf32>
    %cst_448 = arith.constant dense<0.000000e+00> : vector<8x512xf32>
    %511 = tpu.matmul %510, %508, %cst_448 {dimension_numbers = #tpu.dot_dimension_numbers<[1], [0], [0], [1], [0, 0, 1, 1], [], []>} : vector<8x8xf32>, vector<8x512xf32>, vector<8x512xf32> -> vector<8x512xf32>
    %512 = arith.addf %503, %511 : vector<8x512xf32>
    %c0_449 = arith.constant 0 : index
    %c201_450 = arith.constant 201 : index
    %513 = vector.load %arg7[%c0_449, %c201_450] : memref<8x768xf32, #tpu.memory_space<vmem>>, vector<8x512xf32>
    %c26_451 = arith.constant 26 : index
    %c0_452 = arith.constant 0 : index
    %c0_453 = arith.constant 0 : index
    %514 = vector.load %arg4[%c26_451, %c0_452, %c0_453] : memref<27x1x512xf32, #tpu.memory_space<vmem>>, vector<1x1x512xf32>
    %515 = vector.shape_cast %514 : vector<1x1x512xf32> to vector<1x512xf32>
    %516 = vector.broadcast %515 : vector<1x512xf32> to vector<8x512xf32>
    %517 = arith.mulf %513, %516 : vector<8x512xf32>
    %c26_454 = arith.constant 26 : index
    %c0_455 = arith.constant 0 : index
    %c0_456 = arith.constant 0 : index
    %518 = vector.load %arg3[%c26_454, %c0_455, %c0_456] : memref<27x8x8xf32, #tpu.memory_space<vmem>>, vector<1x8x8xf32>
    %519 = vector.shape_cast %518 : vector<1x8x8xf32> to vector<8x8xf32>
    %cst_457 = arith.constant dense<0.000000e+00> : vector<8x512xf32>
    %520 = tpu.matmul %519, %517, %cst_457 {dimension_numbers = #tpu.dot_dimension_numbers<[1], [0], [0], [1], [0, 0, 1, 1], [], []>} : vector<8x8xf32>, vector<8x512xf32>, vector<8x512xf32> -> vector<8x512xf32>
    %521 = arith.addf %512, %520 : vector<8x512xf32>
    %cst_458 = arith.constant dense<0.000000e+00> : vector<8xf32>
    %522 = vector.multi_reduction <add>, %521, %cst_458 [1] : vector<8x512xf32> to vector<8xf32>
    %523 = vector.shape_cast %522 : vector<8xf32> to vector<8x1xf32>
    %cst_459 = arith.constant 0.001953125 : f32
    %524 = vector.broadcast %cst_459 : f32 to vector<8x1xf32>
    %525 = arith.mulf %523, %524 : vector<8x1xf32>
    %526 = arith.mulf %521, %521 : vector<8x512xf32>
    %cst_460 = arith.constant dense<0.000000e+00> : vector<8xf32>
    %527 = vector.multi_reduction <add>, %526, %cst_460 [1] : vector<8x512xf32> to vector<8xf32>
    %528 = vector.shape_cast %527 : vector<8xf32> to vector<8x1xf32>
    %cst_461 = arith.constant 0.001953125 : f32
    %529 = vector.broadcast %cst_461 : f32 to vector<8x1xf32>
    %530 = arith.mulf %528, %529 : vector<8x1xf32>
    %531 = arith.mulf %525, %525 : vector<8x1xf32>
    %532 = arith.subf %530, %531 : vector<8x1xf32>
    %cst_462 = arith.constant 0.000000e+00 : f32
    %533 = vector.broadcast %cst_462 : f32 to vector<8x1xf32>
    %534 = arith.maximumf %532, %533 : vector<8x1xf32>
    %535 = vector.broadcast %525 : vector<8x1xf32> to vector<8x512xf32>
    %536 = arith.subf %521, %535 : vector<8x512xf32>
    %cst_463 = arith.constant 9.99999974E-6 : f32
    %537 = vector.broadcast %cst_463 : f32 to vector<8x1xf32>
    %538 = arith.addf %534, %537 : vector<8x1xf32>
    %539 = math.rsqrt %538 : vector<8x1xf32>
    %540 = vector.broadcast %539 : vector<8x1xf32> to vector<8x512xf32>
    %541 = arith.mulf %536, %540 : vector<8x512xf32>
    %cst_464 = arith.constant 0.000000e+00 : f32
    %542 = vector.broadcast %cst_464 : f32 to vector<8x512xf32>
    %543 = arith.maximumf %541, %542 : vector<8x512xf32>
    %c0_465 = arith.constant 0 : index
    %c0_466 = arith.constant 0 : index
    %c0_467 = arith.constant 0 : index
    %544 = vector.load %arg5[%c0_465, %c0_466, %c0_467] : memref<1x8x512xf32, #tpu.memory_space<vmem>>, vector<1x8x512xf32>
    %545 = vector.shape_cast %544 : vector<1x8x512xf32> to vector<8x512xf32>
    %546 = vector.shape_cast %543 : vector<8x512xf32> to vector<1x8x512xf32>
    tpu.vector_store %arg5[%c0_465, %c0_466, %c0_467], %546 {strides = array<i32>} : memref<1x8x512xf32, #tpu.memory_space<vmem>>, vector<1x8x512xf32>,
    return
  }
  func.func @transform_0(%arg0: i32) -> (i32, i32, i32) {
    %c0_i32 = arith.constant 0 : i32
    %c0_i32_0 = arith.constant 0 : i32
    %c0_i32_1 = arith.constant 0 : i32
    return %arg0, %c0_i32, %c0_i32_0 : i32, i32, i32
  }
  func.func @transform_1(%arg0: i32) -> (i32, i32, i32) {
    %c0_i32 = arith.constant 0 : i32
    %c0_i32_0 = arith.constant 0 : i32
    %c0_i32_1 = arith.constant 0 : i32
    %c0_i32_2 = arith.constant 0 : i32
    return %c0_i32, %c0_i32_0, %c0_i32_1 : i32, i32, i32
  }
  func.func @transform_2(%arg0: i32) -> (i32, i32, i32) {
    %c0_i32 = arith.constant 0 : i32
    %c0_i32_0 = arith.constant 0 : i32
    %c0_i32_1 = arith.constant 0 : i32
    %c0_i32_2 = arith.constant 0 : i32
    return %c0_i32, %c0_i32_0, %c0_i32_1 : i32, i32, i32
  }
  func.func @transform_3(%arg0: i32) -> (i32, i32, i32) {
    %c0_i32 = arith.constant 0 : i32
    %c0_i32_0 = arith.constant 0 : i32
    %c0_i32_1 = arith.constant 0 : i32
    %c0_i32_2 = arith.constant 0 : i32
    return %c0_i32, %c0_i32_0, %c0_i32_1 : i32, i32, i32
  }
  func.func @transform_4(%arg0: i32) -> (i32, i32, i32) {
    %c0_i32 = arith.constant 0 : i32
    %c0_i32_0 = arith.constant 0 : i32
    %c0_i32_1 = arith.constant 0 : i32
    return %arg0, %c0_i32, %c0_i32_0 : i32, i32, i32
  }
}

</mosaic_0001>

<llo_original>
// kernel: tpu_custom_call.1
$region0: #{tpu_custom_call.1}
  #allocation0 [shape = 'u32[]', space=smem, size = 0x4, offset = 0x4, fixed_abs, tag = 'smem constant byte address 0x4 - core index']
  #allocation1 [shape = 'u32[72,128]{1,0:T(1,128)}', space=vmem, size = 0x9000, scoped, tag = 'internal scratch']
  #allocation2 [shape = 'f32[4,768]{1,0:T(4,128)}', space=vmem, size = 0x3000, scoped, tag = 'scratch operand']
  #allocation3 [shape = 'f32[8,768]{1,0:T(8,128)}', space=vmem, size = 0x6000, scoped, tag = 'scratch operand']
  %s0 = inlined_call_operand.vmem [shape: f32[2,4,512], index: 0, kind: input, shape index: {}]
  %s1 = inlined_call_operand.vmem [shape: f32[27,8,4], index: 1, kind: input, shape index: {}]
  %s2 = inlined_call_operand.vmem [shape: f32[27,8,8], index: 2, kind: input, shape index: {}]
  %s3 = inlined_call_operand.vmem [shape: f32[27,1,512], index: 3, kind: input, shape index: {}]
  %s4 = inlined_call_operand.hbm [shape: f32[2,8,512], index: 4, kind: output, shape index: {}]
  %s5 = sld [smem:[#allocation0]]
  $region49: #{tpu_custom_call.1} parent=0
    _
  %s7 = ssub.s32 1, %s5
  %s8 = scalar_select 0, %s7, %s5
  $region1: #{tpu_custom_call.1} parent=0
    #allocation4 [shape = 'u8[32768]{0}', space=vmem, size = 0x8000, scoped, tag = 'output window, operand 0']
    #allocation5 [shape = 's32[2]{0}', space=sflag, size = 0x8, scoped, tag = 'scoped memory for tpu_custom_call.1']
    %9 = vsyncpa [#allocation5], 0
    %s10 = scalar_lea.sflag [#allocation5], 1
    %11 = vsyncpa %s10, 0
    loop: start=0, step=1, limit=4
    $region2: #{tpu_custom_call.1} parent=1 // loop_pre_header
      _
    $region3: #{tpu_custom_call.1} parent=1 // loop_header
      %s13 = sphi 0, %s17
      %p14 = scmp.ge.s32.totalorder %s13, 4
      %s23 = sphi 0, %s25
      %s26 = sphi 0, %s23
      %s27 = sphi 0, %s26
      %s43 = sphi 0, %s27
      %s47 = sphi 0, %s47
      %s49 = sphi 0, %s47
      %s50 = sphi 0, %s49
      %s64 = sphi 0, %s50
      %s68 = sphi 0, %s68
      %s70 = sphi 0, %s68
      %s71 = sphi 0, %s70
      %s85 = sphi 0, %s71
      %s89 = sphi 0, %s89
      %s91 = sphi 0, %s89
      %s92 = sphi 0, %s91
      %s106 = sphi 0, %s92
      %s112 = sphi 0, %s114
      %s115 = sphi 0, %s112
      %s116 = sphi 0, %s115
      %s132 = sphi 0, %s116
    $region4: #{tpu_custom_call.1} parent=1 // loop_header_branch
      %16 = sbr.rel (%p14) target = $region8
    $region5: #{tpu_custom_call.1} parent=1 // loop_body
      %s18 = ssub.s32 %s13, 1
      %s19 = ssub.s32 %s13, 2
      %s20 = sadd.s32 %s13, 1
      %s21 = ssub.s32 %s13, %s20
      %p22 = scmp.eq.s32.totalorder %s21, 0
      %s24 = sadd.s32 %s23, 1
      %s25 = scalar_select %p22, %s23, %s24
      %p28 = pneg %p22
      %p29 = scmp.eq.s32.totalorder %s13, 1
      %p30 = por %p28, %p29
      %p31 = scmp.ne.s32.totalorder %s23, %s26
      %p32 = scmp.eq.s32.totalorder %s13, 0
      %p33 = por %p31, %p32
      %p34 = scmp.ne.s32.totalorder %s23, %s26
      %p35 = scmp.eq.s32.totalorder %s18, 1
      %p36 = por %p34, %p35
      %p37 = scmp.ne.s32.totalorder %s26, %s27
      %p38 = scmp.eq.s32.totalorder %s18, 0
      %p39 = por %p37, %p38
      %p40 = scmp.ne.s32.totalorder %s26, %s27
      %p41 = scmp.eq.s32.totalorder %s19, 1
      %p42 = por %p40, %p41
      %p44 = scmp.ne.s32.totalorder %s27, %s43
      %p45 = scmp.eq.s32.totalorder %s19, 0
      %p46 = por %p44, %p45
      %s48 = sadd.s32 %s47, 1
      %p51 = scmp.eq.s32.totalorder %s13, 1
      %p52 = scmp.ne.s32.totalorder %s47, %s49
      %p53 = scmp.eq.s32.totalorder %s13, 0
      %p54 = por %p52, %p53
      %p55 = scmp.ne.s32.totalorder %s47, %s49
      %p56 = scmp.eq.s32.totalorder %s18, 1
      %p57 = por %p55, %p56
      %p58 = scmp.ne.s32.totalorder %s49, %s50
      %p59 = scmp.eq.s32.totalorder %s18, 0
      %p60 = por %p58, %p59
      %p61 = scmp.ne.s32.totalorder %s49, %s50
      %p62 = scmp.eq.s32.totalorder %s19, 1
      %p63 = por %p61, %p62
      %p65 = scmp.ne.s32.totalorder %s50, %s64
      %p66 = scmp.eq.s32.totalorder %s19, 0
      %p67 = por %p65, %p66
      %s69 = sadd.s32 %s68, 1
      %p72 = scmp.eq.s32.totalorder %s13, 1
      %p73 = scmp.ne.s32.totalorder %s68, %s70
      %p74 = scmp.eq.s32.totalorder %s13, 0
      %p75 = por %p73, %p74
      %p76 = scmp.ne.s32.totalorder %s68, %s70
      %p77 = scmp.eq.s32.totalorder %s18, 1
      %p78 = por %p76, %p77
      %p79 = scmp.ne.s32.totalorder %s70, %s71
      %p80 = scmp.eq.s32.totalorder %s18, 0
      %p81 = por %p79, %p80
      %p82 = scmp.ne.s32.totalorder %s70, %s71
      %p83 = scmp.eq.s32.totalorder %s19, 1
      %p84 = por %p82, %p83
      %p86 = scmp.ne.s32.totalorder %s71, %s85
      %p87 = scmp.eq.s32.totalorder %s19, 0
      %p88 = por %p86, %p87
      %s90 = sadd.s32 %s89, 1
      %p93 = scmp.eq.s32.totalorder %s13, 1
      %p94 = scmp.ne.s32.totalorder %s89, %s91
      %p95 = scmp.eq.s32.totalorder %s13, 0
      %p96 = por %p94, %p95
      %p97 = scmp.ne.s32.totalorder %s89, %s91
      %p98 = scmp.eq.s32.totalorder %s18, 1
      %p99 = por %p97, %p98
      %p100 = scmp.ne.s32.totalorder %s91, %s92
      %p101 = scmp.eq.s32.totalorder %s18, 0
      %p102 = por %p100, %p101
      %p103 = scmp.ne.s32.totalorder %s91, %s92
      %p104 = scmp.eq.s32.totalorder %s19, 1
      %p105 = por %p103, %p104
      %p107 = scmp.ne.s32.totalorder %s92, %s106
      %p108 = scmp.eq.s32.totalorder %s19, 0
      %p109 = por %p107, %p108
      %s110 = ssub.s32 %s13, %s20
      %p111 = scmp.eq.s32.totalorder %s110, 0
      %s113 = sadd.s32 %s112, 1
      %s114 = scalar_select %p111, %s112, %s113
      %p117 = pneg %p111
      %p118 = scmp.eq.s32.totalorder %s13, 1
      %p119 = por %p117, %p118
      %p120 = scmp.ne.s32.totalorder %s112, %s115
      %p121 = scmp.eq.s32.totalorder %s13, 0
      %p122 = por %p120, %p121
      %p123 = scmp.ne.s32.totalorder %s112, %s115
      %p124 = scmp.eq.s32.totalorder %s18, 1
      %p125 = por %p123, %p124
      %p126 = scmp.ne.s32.totalorder %s115, %s116
      %p127 = scmp.eq.s32.totalorder %s18, 0
      %p128 = por %p126, %p127
      %p129 = scmp.ne.s32.totalorder %s115, %s116
      %p130 = scmp.eq.s32.totalorder %s19, 1
      %p131 = por %p129, %p130
      %p133 = scmp.ne.s32.totalorder %s116, %s132
      %p134 = scmp.eq.s32.totalorder %s19, 0
      %p135 = por %p133, %p134
      %p136 = scmp.le.s32.totalorder 1, %s13
      %p137 = scmp.lt.s32.totalorder %s13, 3
      %p138 = pnand %p136, %p137
      %p139 = pneg %p138
      // Predicated region
      $region9: #{tpu_custom_call.1} parent=5 // pred_check
        _
      $region10: #{tpu_custom_call.1} parent=5 // pred_check_branch
        %141 = sbr.rel (%p138) target = $region12
      $region11: #{tpu_custom_call.1} parent=5 // pred_region
        %s142 = ssub.s32 %s13, 1
        // Predicated region
        $region13: #{tpu_custom_call.1} parent=11 // pred_check
          %p143 = pneg %p60
        $region14: #{tpu_custom_call.1} parent=11 // pred_check_branch
          %145 = sbr.rel (%p143) target = $region16
        $region15: #{tpu_custom_call.1} parent=11 // pred_region
          _
        $region16: #{tpu_custom_call.1} parent=11 // pred_fallthru
          _
        // Predicated region
        $region17: #{tpu_custom_call.1} parent=11 // pred_check
          %p146 = pneg %p81
        $region18: #{tpu_custom_call.1} parent=11 // pred_check_branch
          %148 = sbr.rel (%p146) target = $region20
        $region19: #{tpu_custom_call.1} parent=11 // pred_region
          _
        $region20: #{tpu_custom_call.1} parent=11 // pred_fallthru
          _
        // Predicated region
        $region21: #{tpu_custom_call.1} parent=11 // pred_check
          %p149 = pneg %p102
        $region22: #{tpu_custom_call.1} parent=11 // pred_check_branch
          %151 = sbr.rel (%p149) target = $region24
        $region23: #{tpu_custom_call.1} parent=11 // pred_region
          _
        $region24: #{tpu_custom_call.1} parent=11 // pred_fallthru
          _
      $region12: #{tpu_custom_call.1} parent=5 // pred_fallthru
        _
      %p152 = scmp.lt.s32.totalorder %s13, 2
      // Predicated region
      $region25: #{tpu_custom_call.1} parent=5 // pred_check
        %p153 = pneg %p152
      $region26: #{tpu_custom_call.1} parent=5 // pred_check_branch
        %155 = sbr.rel (%p153) target = $region28
      $region27: #{tpu_custom_call.1} parent=5 // pred_region
        // Predicated region
        $region29: #{tpu_custom_call.1} parent=27 // pred_check
          %p156 = pneg %p33
        $region30: #{tpu_custom_call.1} parent=27 // pred_check_branch
          %158 = sbr.rel (%p156) target = $region32
        $region31: #{tpu_custom_call.1} parent=27 // pred_region
          %p159 = scmp.lt.s32.totalorder %s13, 1
          %s160 = scalar_select %p159, %s13, 1
          %s161 = smul.addr %s160, 4
          %s162 = smul.addr %s161, 4
          %s163 = scalar_lea.vmem %s0, %s162
        $region32: #{tpu_custom_call.1} parent=27 // pred_fallthru
          _
      $region28: #{tpu_custom_call.1} parent=5 // pred_fallthru
        _
      %p164 = scmp.le.s32.totalorder 1, %s13
      %p165 = scmp.lt.s32.totalorder %s13, 3
      %p166 = pnand %p164, %p165
      %p167 = pneg %p166
      // Predicated region
      $region33: #{tpu_custom_call.1} parent=5 // pred_check
        _
      $region34: #{tpu_custom_call.1} parent=5 // pred_check_branch
        %169 = sbr.rel (%p166) target = $region36
      $region35: #{tpu_custom_call.1} parent=5 // pred_region
        %s170 = ssub.s32 %s13, 1
        %p171 = scmp.lt.s32.totalorder %s18, 1
        %s172 = scalar_select %p171, %s18, 1
        %s173 = smul.addr %s172, 4
        %s174 = smul.addr %s173, 4
        %s175 = scalar_lea.vmem %s0, %s174
        %p176 = pneg %p39
        %p177 = pneg %p36
        %p178 = pneg %p60
        %p179 = pneg %p57
        %p180 = pneg %p81
        %p181 = pneg %p78
        %p182 = pneg %p102
        %p183 = pneg %p99
        %p184 = pneg %p128
        %p185 = pneg %p125
        %s186 = sand.u32 %s115, 1
        %s187 = scalar_lea.sflag [#allocation5], %s186
        %s188 = sand.u32 %s115, 1
        %s189 = smul.addr %s188, 32
        %s190 = scalar_lea.vmem [#allocation4], %s189
        %p191 = scmp.lt.s32.totalorder %s18, 1
        %s192 = scalar_select %p191, %s18, 1
        %s193 = smul.addr %s192, 4
        %s194 = smul.addr %s193, 4
        %s195 = scalar_lea.vmem %s0, %s194
        %196 = vst [vmem:[#allocation2] sm:$0xf] 0.0
        %197 = vst [vmem:[#allocation2 + $0x14] sm:$0xf] 0.0
        %198 = vst [vmem:[#allocation3] sm:$0xff] 0.0
        %199 = vst [vmem:[#allocation3 + $0x28] sm:$0xff] 0.0
        %v200 = vld [vmem:[%s195] sm:$0xff]
        %v201 = vld [vmem:[%s195 + $0x8] sm:$0xff]
        %202 = vst [vmem:[#allocation2 + $0x4] sm:$0xff] %v200
        %203 = vst [vmem:[#allocation2 + $0xc] sm:$0xff] %v201
        %v204 = vld [vmem:[#allocation2] sm:$0xff]
        %v205 = vld [vmem:[#allocation2 + $0x8] sm:$0xff]
        %v206 = vld [vmem:[#allocation2 + $0x10] sm:$0xf]
        %v207 = vld [vmem:[%s3] sm:$0xf]
        %v209 = vperm.slane %v207, 0
        %v210 = vperm.slane %v207, 1
        %v211 = vperm.slane %v207, 2
        %v212 = vperm.slane %v207, 3
        %v213 = vrot.slane %v210, 4
        %v214 = vrot.slane %v212, 4
        %vm215 = vcmask 1043456
        %v216 = vsel %vm215, %v209, %v213
        %v217 = vsel %vm215, %v211, %v214
        %218 = vrot.lane.b32.xlu0 %v216, 55
        %v219 = vpop.permute.xlu0 %218
        %220 = vrot.lane.b32.xlu0 %v217, 55
        %v221 = vpop.permute.xlu0 %220
        %v222 = vrot.slane %v219, 4
        %v223 = vrot.slane %v221, 4
        %vm224 = vcmask 449536
        %v225 = vsel %vm224, %v222, %v219
        %v226 = vsel %vm215, %v222, %v223
        %v227 = vsel %vm224, %v226, %v221
        %v231 = vmul.f32 %v204, %v225
        %v232 = vmul.f32 %v205, %v227
        %v233 = vmul.f32 %v206, %v223
        %v234 = vld [vmem:[%s1] sm:$0xff]
        %s235 = scalar_lea.vmem %s3, 4
        %v236 = vld [vmem:[%s235] sm:$0xf]
        %v238 = vperm.slane %v236, 0
        %v239 = vperm.slane %v236, 1
        %v240 = vperm.slane %v236, 2
        %v241 = vperm.slane %v236, 3
        %v242 = vrot.slane %v239, 4
        %v243 = vrot.slane %v241, 4
        %v244 = vsel %vm215, %v238, %v242
        %v245 = vsel %vm215, %v240, %v243
        %246 = vrot.lane.b32.xlu0 %v244, 56
        %v247 = vpop.permute.xlu0 %246
        %248 = vrot.lane.b32.xlu0 %v245, 56
        %v249 = vpop.permute.xlu0 %248
        %v250 = vrot.slane %v247, 4
        %v251 = vrot.slane %v249, 4
        %vm252 = vcmask 457728
        %v253 = vsel %vm252, %v250, %v247
        %v254 = vsel %vm215, %v250, %v251
        %v255 = vsel %vm252, %v254, %v249
        %v259 = vmul.f32 %v204, %v253
        %v260 = vmul.f32 %v205, %v255
        %v261 = vmul.f32 %v206, %v251
        %s262 = scalar_lea.vmem %s1, 8
        %v263 = vld [vmem:[%s262] sm:$0xff]
        %267 = vst [vmem:[#allocation1] ss:$2 sm:$0xff] %v259
        %s268 = scalar_lea.vmem [#allocation1], 16
        %269 = vst [vmem:[%s268] ss:$2 sm:$0xff] %v260
        %s270 = scalar_lea.vmem [#allocation1], 32
        %271 = vst [vmem:[%s270] ss:$2 sm:$0xff] %v261
        %v272 = vld.sshfl [vmem:[#allocation1] sm:$0xff pattern:$0x75316420]
        %v273 = vld.sshfl [vmem:[#allocation1 + $0x8] sm:$0xff pattern:$0x75316420]
        %v274 = vld.sshfl [vmem:[#allocation1 + $0x10] sm:$0xff pattern:$0x75316420]
        %v275 = vld.sshfl [vmem:[#allocation1 + $0x18] sm:$0xff pattern:$0x75316420]
        %v276 = vld.sshfl [vmem:[#allocation1 + $0x20] sm:$0xff pattern:$0x75316420]
        %277 = vrot.lane.b32.xlu0 %v272, 72
        %v278 = vpop.permute.xlu0 %277
        %279 = vrot.lane.b32.xlu0 %v273, 72
        %v280 = vpop.permute.xlu0 %279
        %281 = vrot.lane.b32.xlu0 %v274, 72
        %v282 = vpop.permute.xlu0 %281
        %283 = vrot.lane.b32.xlu0 %v275, 72
        %v284 = vpop.permute.xlu0 %283
        %285 = vrot.lane.b32.xlu0 %v276, 72
        %v286 = vpop.permute.xlu0 %285
        %vm287 = vcmask 588800
        %v288 = vsel %vm287, %v278, %v280
        %v289 = vsel %vm287, %v280, %v282
        %v290 = vsel %vm287, %v282, %v284
        %v291 = vsel %vm287, %v284, %v286
        %vm292 = vcmask 31744
        %v294 = vsel %vm292, %v263, 0
        %v296 = vsel %vm215, %v288, 0
        %v298 = vsel %vm215, %v289, 0
        %v300 = vsel %vm215, %v290, 0
        %v302 = vsel %vm215, %v291, 0
        %304 = vmatpush.msra.mxu0 0.0
        %305 = vmatpush.msra.mxu0 0.0
        %306 = vmatpush.msra.mxu0 0.0
        %307 = vmatpush.msra.mxu0 0.0
        %308 = vmatpush.msra.mxu0 0.0
        %309 = vmatpush.msra.mxu0 0.0
        %310 = vmatpush.msra.mxu0 0.0
        %311 = vmatpush.msra.mxu0 0.0
        %312 = vmatpush.msra.mxu0 0.0
        %313 = vmatpush.msra.mxu0 0.0
        %314 = vmatpush.msra.mxu0 0.0
        %315 = vmatpush.msra.mxu0 0.0
        %316 = vmatpush.msra.mxu0 0.0
        %317 = vmatpush.msra.mxu0 0.0
        %318 = vmatpush.msra.mxu0 0.0
        %319 = vmatpush.msra.mxu0 %v296
        %320 = vmatmul.f32.gmra.mxu0 %v294
        %v321 = vpop.f32.mrf.mxu0
        %v322 = vadd.f32 0.0, %v321
        %323 = vdwg.mxu0
        %324 = vmatpush.msra.mxu0 0.0
        %325 = vmatpush.msra.mxu0 0.0
        %326 = vmatpush.msra.mxu0 0.0
        %327 = vmatpush.msra.mxu0 0.0
        %328 = vmatpush.msra.mxu0 0.0
        %329 = vmatpush.msra.mxu0 0.0
        %330 = vmatpush.msra.mxu0 0.0
        %331 = vmatpush.msra.mxu0 0.0
        %332 = vmatpush.msra.mxu0 0.0
        %333 = vmatpush.msra.mxu0 0.0
        %334 = vmatpush.msra.mxu0 0.0
        %335 = vmatpush.msra.mxu0 0.0
        %336 = vmatpush.msra.mxu0 0.0
        %337 = vmatpush.msra.mxu0 0.0
        %338 = vmatpush.msra.mxu0 0.0
        %339 = vmatpush.msra.mxu0 %v298
        %340 = vmatmul.f32.gmra.mxu0 %v294
        %v341 = vpop.f32.mrf.mxu0
        %v342 = vadd.f32 0.0, %v341
        %343 = vdwg.mxu0
        %344 = vmatpush.msra.mxu0 0.0
        %345 = vmatpush.msra.mxu0 0.0
        %346 = vmatpush.msra.mxu0 0.0
        %347 = vmatpush.msra.mxu0 0.0
        %348 = vmatpush.msra.mxu0 0.0
        %349 = vmatpush.msra.mxu0 0.0
        %350 = vmatpush.msra.mxu0 0.0
        %351 = vmatpush.msra.mxu0 0.0
        %352 = vmatpush.msra.mxu0 0.0
        %353 = vmatpush.msra.mxu0 0.0
        %354 = vmatpush.msra.mxu0 0.0
        %355 = vmatpush.msra.mxu0 0.0
        %356 = vmatpush.msra.mxu0 0.0
        %357 = vmatpush.msra.mxu0 0.0
        %358 = vmatpush.msra.mxu0 0.0
        %359 = vmatpush.msra.mxu0 %v300
        %360 = vmatmul.f32.gmra.mxu0 %v294
        %v361 = vpop.f32.mrf.mxu0
        %v362 = vadd.f32 0.0, %v361
        %363 = vdwg.mxu0
        %364 = vmatpush.msra.mxu0 0.0
        %365 = vmatpush.msra.mxu0 0.0
        %366 = vmatpush.msra.mxu0 0.0
        %367 = vmatpush.msra.mxu0 0.0
        %368 = vmatpush.msra.mxu0 0.0
        %369 = vmatpush.msra.mxu0 0.0
        %370 = vmatpush.msra.mxu0 0.0
        %371 = vmatpush.msra.mxu0 0.0
        %372 = vmatpush.msra.mxu0 0.0
        %373 = vmatpush.msra.mxu0 0.0
        %374 = vmatpush.msra.mxu0 0.0
        %375 = vmatpush.msra.mxu0 0.0
        %376 = vmatpush.msra.mxu0 0.0
        %377 = vmatpush.msra.mxu0 0.0
        %378 = vmatpush.msra.mxu0 0.0
        %379 = vmatpush.msra.mxu0 %v302
        %380 = vmatmul.f32.gmra.mxu0 %v294
        %v381 = vpop.f32.mrf.mxu0
        %v382 = vadd.f32 0.0, %v381
        %383 = vdwg.mxu0
        %387 = vst [vmem:[#allocation1] ss:$2 sm:$0xff] %v231
        %s388 = scalar_lea.vmem [#allocation1], 16
        %389 = vst [vmem:[%s388] ss:$2 sm:$0xff] %v232
        %s390 = scalar_lea.vmem [#allocation1], 32
        %391 = vst [vmem:[%s390] ss:$2 sm:$0xff] %v233
        %v392 = vld.sshfl [vmem:[#allocation1] sm:$0xff pattern:$0x75316420]
        %v393 = vld.sshfl [vmem:[#allocation1 + $0x8] sm:$0xff pattern:$0x75316420]
        %v394 = vld.sshfl [vmem:[#allocation1 + $0x10] sm:$0xff pattern:$0x75316420]
        %v395 = vld.sshfl [vmem:[#allocation1 + $0x18] sm:$0xff pattern:$0x75316420]
        %v396 = vld.sshfl [vmem:[#allocation1 + $0x20] sm:$0xff pattern:$0x75316420]
        %397 = vrot.lane.b32.xlu0 %v392, 73
        %v398 = vpop.permute.xlu0 %397
        %399 = vrot.lane.b32.xlu0 %v393, 73
        %v400 = vpop.permute.xlu0 %399
        %401 = vrot.lane.b32.xlu0 %v394, 73
        %v402 = vpop.permute.xlu0 %401
        %403 = vrot.lane.b32.xlu0 %v395, 73
        %v404 = vpop.permute.xlu0 %403
        %405 = vrot.lane.b32.xlu0 %v396, 73
        %v406 = vpop.permute.xlu0 %405
        %vm407 = vcmask 596992
        %v408 = vsel %vm407, %v398, %v400
        %v409 = vsel %vm407, %v400, %v402
        %v410 = vsel %vm407, %v402, %v404
        %v411 = vsel %vm407, %v404, %v406
        %v413 = vsel %vm292, %v234, 0
        %v415 = vsel %vm215, %v408, 0
        %v417 = vsel %vm215, %v409, 0
        %v419 = vsel %vm215, %v410, 0
        %v421 = vsel %vm215, %v411, 0
        %423 = vmatpush.msra.mxu0 0.0
        %424 = vmatpush.msra.mxu0 0.0
        %425 = vmatpush.msra.mxu0 0.0
        %426 = vmatpush.msra.mxu0 0.0
        %427 = vmatpush.msra.mxu0 0.0
        %428 = vmatpush.msra.mxu0 0.0
        %429 = vmatpush.msra.mxu0 0.0
        %430 = vmatpush.msra.mxu0 0.0
        %431 = vmatpush.msra.mxu0 0.0
        %432 = vmatpush.msra.mxu0 0.0
        %433 = vmatpush.msra.mxu0 0.0
        %434 = vmatpush.msra.mxu0 0.0
        %435 = vmatpush.msra.mxu0 0.0
        %436 = vmatpush.msra.mxu0 0.0
        %437 = vmatpush.msra.mxu0 0.0
        %438 = vmatpush.msra.mxu0 %v415
        %439 = vmatmul.f32.gmra.mxu0 %v413
        %v440 = vpop.f32.mrf.mxu0
        %v441 = vadd.f32 %v322, %v440
        %442 = vdwg.mxu0
        %443 = vmatpush.msra.mxu0 0.0
        %444 = vmatpush.msra.mxu0 0.0
        %445 = vmatpush.msra.mxu0 0.0
        %446 = vmatpush.msra.mxu0 0.0
        %447 = vmatpush.msra.mxu0 0.0
        %448 = vmatpush.msra.mxu0 0.0
        %449 = vmatpush.msra.mxu0 0.0
        %450 = vmatpush.msra.mxu0 0.0
        %451 = vmatpush.msra.mxu0 0.0
        %452 = vmatpush.msra.mxu0 0.0
        %453 = vmatpush.msra.mxu0 0.0
        %454 = vmatpush.msra.mxu0 0.0
        %455 = vmatpush.msra.mxu0 0.0
        %456 = vmatpush.msra.mxu0 0.0
        %457 = vmatpush.msra.mxu0 0.0
        %458 = vmatpush.msra.mxu0 %v417
        %459 = vmatmul.f32.gmra.mxu0 %v413
        %v460 = vpop.f32.mrf.mxu0
        %v461 = vadd.f32 %v342, %v460
        %462 = vdwg.mxu0
        %463 = vmatpush.msra.mxu0 0.0
        %464 = vmatpush.msra.mxu0 0.0
        %465 = vmatpush.msra.mxu0 0.0
        %466 = vmatpush.msra.mxu0 0.0
        %467 = vmatpush.msra.mxu0 0.0
        %468 = vmatpush.msra.mxu0 0.0
        %469 = vmatpush.msra.mxu0 0.0
        %470 = vmatpush.msra.mxu0 0.0
        %471 = vmatpush.msra.mxu0 0.0
        %472 = vmatpush.msra.mxu0 0.0
        %473 = vmatpush.msra.mxu0 0.0
        %474 = vmatpush.msra.mxu0 0.0
        %475 = vmatpush.msra.mxu0 0.0
        %476 = vmatpush.msra.mxu0 0.0
        %477 = vmatpush.msra.mxu0 0.0
        %478 = vmatpush.msra.mxu0 %v419
        %479 = vmatmul.f32.gmra.mxu0 %v413
        %v480 = vpop.f32.mrf.mxu0
        %v481 = vadd.f32 %v362, %v480
        %482 = vdwg.mxu0
        %483 = vmatpush.msra.mxu0 0.0
        %484 = vmatpush.msra.mxu0 0.0
        %485 = vmatpush.msra.mxu0 0.0
        %486 = vmatpush.msra.mxu0 0.0
        %487 = vmatpush.msra.mxu0 0.0
        %488 = vmatpush.msra.mxu0 0.0
        %489 = vmatpush.msra.mxu0 0.0
        %490 = vmatpush.msra.mxu0 0.0
        %491 = vmatpush.msra.mxu0 0.0
        %492 = vmatpush.msra.mxu0 0.0
        %493 = vmatpush.msra.mxu0 0.0
        %494 = vmatpush.msra.mxu0 0.0
        %495 = vmatpush.msra.mxu0 0.0
        %496 = vmatpush.msra.mxu0 0.0
        %497 = vmatpush.msra.mxu0 0.0
        %498 = vmatpush.msra.mxu0 %v421
        %499 = vmatmul.f32.gmra.mxu0 %v413
        %v500 = vpop.f32.mrf.mxu0
        %v501 = vadd.f32 %v382, %v500
        %502 = vdwg.mxu0
        %v503 = vld [vmem:[#allocation2] sm:$0xff]
        %v504 = vld [vmem:[#allocation2 + $0x8] sm:$0xff]
        %v505 = vld [vmem:[#allocation2 + $0x10] sm:$0xf]
        %s506 = scalar_lea.vmem %s3, 8
        %v507 = vld [vmem:[%s506] sm:$0xf]
        %v509 = vperm.slane %v507, 0
        %v510 = vperm.slane %v507, 1
        %v511 = vperm.slane %v507, 2
        %v512 = vperm.slane %v507, 3
        %v513 = vrot.slane %v510, 4
        %v514 = vrot.slane %v512, 4
        %v515 = vsel %vm215, %v509, %v513
        %v516 = vsel %vm215, %v511, %v514
        %517 = vrot.lane.b32.xlu0 %v515, 57
        %v518 = vpop.permute.xlu0 %517
        %519 = vrot.lane.b32.xlu0 %v516, 57
        %v520 = vpop.permute.xlu0 %519
        %v521 = vrot.slane %v518, 4
        %v522 = vrot.slane %v520, 4
        %vm523 = vcmask 465920
        %v524 = vsel %vm523, %v521, %v518
        %v525 = vsel %vm215, %v521, %v522
        %v526 = vsel %vm523, %v525, %v520
        %v530 = vmul.f32 %v503, %v524
        %v531 = vmul.f32 %v504, %v526
        %v532 = vmul.f32 %v505, %v522
        %s533 = scalar_lea.vmem %s1, 16
        %v534 = vld [vmem:[%s533] sm:$0xff]
        %538 = vst [vmem:[#allocation1] ss:$2 sm:$0xff] %v530
        %s539 = scalar_lea.vmem [#allocation1], 16
        %540 = vst [vmem:[%s539] ss:$2 sm:$0xff] %v531
        %s541 = scalar_lea.vmem [#allocation1], 32
        %542 = vst [vmem:[%s541] ss:$2 sm:$0xff] %v532
        %v543 = vld.sshfl [vmem:[#allocation1] sm:$0xff pattern:$0x75316420]
        %v544 = vld.sshfl [vmem:[#allocation1 + $0x8] sm:$0xff pattern:$0x75316420]
        %v545 = vld.sshfl [vmem:[#allocation1 + $0x10] sm:$0xff pattern:$0x75316420]
        %v546 = vld.sshfl [vmem:[#allocation1 + $0x18] sm:$0xff pattern:$0x75316420]
        %v547 = vld.sshfl [vmem:[#allocation1 + $0x20] sm:$0xff pattern:$0x75316420]
        %548 = vrot.lane.b32.xlu0 %v543, 71
        %v549 = vpop.permute.xlu0 %548
        %550 = vrot.lane.b32.xlu0 %v544, 71
        %v551 = vpop.permute.xlu0 %550
        %552 = vrot.lane.b32.xlu0 %v545, 71
        %v553 = vpop.permute.xlu0 %552
        %554 = vrot.lane.b32.xlu0 %v546, 71
        %v555 = vpop.permute.xlu0 %554
        %556 = vrot.lane.b32.xlu0 %v547, 71
        %v557 = vpop.permute.xlu0 %556
        %vm558 = vcmask 580608
        %v559 = vsel %vm558, %v549, %v551
        %v560 = vsel %vm558, %v551, %v553
        %v561 = vsel %vm558, %v553, %v555
        %v562 = vsel %vm558, %v555, %v557
        %v564 = vsel %vm292, %v534, 0
        %v566 = vsel %vm215, %v559, 0
        %v568 = vsel %vm215, %v560, 0
        %v570 = vsel %vm215, %v561, 0
        %v572 = vsel %vm215, %v562, 0
        %574 = vmatpush.msra.mxu0 0.0
        %575 = vmatpush.msra.mxu0 0.0
        %576 = vmatpush.msra.mxu0 0.0
        %577 = vmatpush.msra.mxu0 0.0
        %578 = vmatpush.msra.mxu0 0.0
        %579 = vmatpush.msra.mxu0 0.0
        %580 = vmatpush.msra.mxu0 0.0
        %581 = vmatpush.msra.mxu0 0.0
        %582 = vmatpush.msra.mxu0 0.0
        %583 = vmatpush.msra.mxu0 0.0
        %584 = vmatpush.msra.mxu0 0.0
        %585 = vmatpush.msra.mxu0 0.0
        %586 = vmatpush.msra.mxu0 0.0
        %587 = vmatpush.msra.mxu0 0.0
        %588 = vmatpush.msra.mxu0 0.0
        %589 = vmatpush.msra.mxu0 %v566
        %590 = vmatmul.f32.gmra.mxu0 %v564
        %v591 = vpop.f32.mrf.mxu0
        %v592 = vadd.f32 0.0, %v591
        %593 = vdwg.mxu0
        %594 = vmatpush.msra.mxu0 0.0
        %595 = vmatpush.msra.mxu0 0.0
        %596 = vmatpush.msra.mxu0 0.0
        %597 = vmatpush.msra.mxu0 0.0
        %598 = vmatpush.msra.mxu0 0.0
        %599 = vmatpush.msra.mxu0 0.0
        %600 = vmatpush.msra.mxu0 0.0
        %601 = vmatpush.msra.mxu0 0.0
        %602 = vmatpush.msra.mxu0 0.0
        %603 = vmatpush.msra.mxu0 0.0
        %604 = vmatpush.msra.mxu0 0.0
        %605 = vmatpush.msra.mxu0 0.0
        %606 = vmatpush.msra.mxu0 0.0
        %607 = vmatpush.msra.mxu0 0.0
        %608 = vmatpush.msra.mxu0 0.0
        %609 = vmatpush.msra.mxu0 %v568
        %610 = vmatmul.f32.gmra.mxu0 %v564
        %v611 = vpop.f32.mrf.mxu0
        %v612 = vadd.f32 0.0, %v611
        %613 = vdwg.mxu0
        %614 = vmatpush.msra.mxu0 0.0
        %615 = vmatpush.msra.mxu0 0.0
        %616 = vmatpush.msra.mxu0 0.0
        %617 = vmatpush.msra.mxu0 0.0
        %618 = vmatpush.msra.mxu0 0.0
        %619 = vmatpush.msra.mxu0 0.0
        %620 = vmatpush.msra.mxu0 0.0
        %621 = vmatpush.msra.mxu0 0.0
        %622 = vmatpush.msra.mxu0 0.0
        %623 = vmatpush.msra.mxu0 0.0
        %624 = vmatpush.msra.mxu0 0.0
        %625 = vmatpush.msra.mxu0 0.0
        %626 = vmatpush.msra.mxu0 0.0
        %627 = vmatpush.msra.mxu0 0.0
        %628 = vmatpush.msra.mxu0 0.0
        %629 = vmatpush.msra.mxu0 %v570
        %630 = vmatmul.f32.gmra.mxu0 %v564
        %v631 = vpop.f32.mrf.mxu0
        %v632 = vadd.f32 0.0, %v631
        %633 = vdwg.mxu0
        %634 = vmatpush.msra.mxu0 0.0
        %635 = vmatpush.msra.mxu0 0.0
        %636 = vmatpush.msra.mxu0 0.0
        %637 = vmatpush.msra.mxu0 0.0
        %638 = vmatpush.msra.mxu0 0.0
        %639 = vmatpush.msra.mxu0 0.0
        %640 = vmatpush.msra.mxu0 0.0
        %641 = vmatpush.msra.mxu0 0.0
        %642 = vmatpush.msra.mxu0 0.0
        %643 = vmatpush.msra.mxu0 0.0
        %644 = vmatpush.msra.mxu0 0.0
        %645 = vmatpush.msra.mxu0 0.0
        %646 = vmatpush.msra.mxu0 0.0
        %647 = vmatpush.msra.mxu0 0.0
        %648 = vmatpush.msra.mxu0 0.0
        %649 = vmatpush.msra.mxu0 %v572
        %650 = vmatmul.f32.gmra.mxu0 %v564
        %v651 = vpop.f32.mrf.mxu0
        %v652 = vadd.f32 0.0, %v651
        %653 = vdwg.mxu0
        %v654 = vadd.f32 %v441, %v592
        %v655 = vadd.f32 %v461, %v612
        %v656 = vadd.f32 %v481, %v632
        %v657 = vadd.f32 %v501, %v652
        %v658 = vld [vmem:[#allocation2] sm:$0xff]
        %v659 = vld [vmem:[#allocation2 + $0x8] sm:$0xff]
        %v660 = vld [vmem:[#allocation2 + $0x10] sm:$0xf]
        %s661 = scalar_lea.vmem %s3, 12
        %v662 = vld [vmem:[%s661] sm:$0xf]
        %v664 = vperm.slane %v662, 0
        %v665 = vperm.slane %v662, 1
        %v666 = vperm.slane %v662, 2
        %v667 = vperm.slane %v662, 3
        %v668 = vrot.slane %v665, 4
        %v669 = vrot.slane %v667, 4
        %v670 = vsel %vm215, %v664, %v668
        %v671 = vsel %vm215, %v666, %v669
        %672 = vrot.lane.b32.xlu0 %v670, 63
        %v673 = vpop.permute.xlu0 %672
        %674 = vrot.lane.b32.xlu0 %v671, 63
        %v675 = vpop.permute.xlu0 %674
        %v676 = vrot.slane %v673, 4
        %v677 = vrot.slane %v675, 4
        %vm678 = vcmask 515072
        %v679 = vsel %vm678, %v676, %v673
        %v680 = vsel %vm215, %v676, %v677
        %v681 = vsel %vm678, %v680, %v675
        %v685 = vmul.f32 %v658, %v679
        %v686 = vmul.f32 %v659, %v681
        %v687 = vmul.f32 %v660, %v677
        %s688 = scalar_lea.vmem %s1, 24
        %v689 = vld [vmem:[%s688] sm:$0xff]
        %693 = vst [vmem:[#allocation1] ss:$2 sm:$0xff] %v685
        %s694 = scalar_lea.vmem [#allocation1], 16
        %695 = vst [vmem:[%s694] ss:$2 sm:$0xff] %v686
        %s696 = scalar_lea.vmem [#allocation1], 32
        %697 = vst [vmem:[%s696] ss:$2 sm:$0xff] %v687
        %v698 = vld.sshfl [vmem:[#allocation1] sm:$0xff pattern:$0x75316420]
        %v699 = vld.sshfl [vmem:[#allocation1 + $0x8] sm:$0xff pattern:$0x75316420]
        %v700 = vld.sshfl [vmem:[#allocation1 + $0x10] sm:$0xff pattern:$0x75316420]
        %v701 = vld.sshfl [vmem:[#allocation1 + $0x18] sm:$0xff pattern:$0x75316420]
        %v702 = vld.sshfl [vmem:[#allocation1 + $0x20] sm:$0xff pattern:$0x75316420]
        %703 = vrot.lane.b32.xlu0 %v698, 65
        %v704 = vpop.permute.xlu0 %703
        %705 = vrot.lane.b32.xlu0 %v699, 65
        %v706 = vpop.permute.xlu0 %705
        %707 = vrot.lane.b32.xlu0 %v700, 65
        %v708 = vpop.permute.xlu0 %707
        %709 = vrot.lane.b32.xlu0 %v701, 65
        %v710 = vpop.permute.xlu0 %709
        %711 = vrot.lane.b32.xlu0 %v702, 65
        %v712 = vpop.permute.xlu0 %711
        %vm713 = vcmask 531456
        %v714 = vsel %vm713, %v704, %v706
        %v715 = vsel %vm713, %v706, %v708
        %v716 = vsel %vm713, %v708, %v710
        %v717 = vsel %vm713, %v710, %v712
        %v719 = vsel %vm292, %v689, 0
        %v721 = vsel %vm215, %v714, 0
        %v723 = vsel %vm215, %v715, 0
        %v725 = vsel %vm215, %v716, 0
        %v727 = vsel %vm215, %v717, 0
        %729 = vmatpush.msra.mxu0 0.0
        %730 = vmatpush.msra.mxu0 0.0
        %731 = vmatpush.msra.mxu0 0.0
        %732 = vmatpush.msra.mxu0 0.0
        %733 = vmatpush.msra.mxu0 0.0
        %734 = vmatpush.msra.mxu0 0.0
        %735 = vmatpush.msra.mxu0 0.0
        %736 = vmatpush.msra.mxu0 0.0
        %737 = vmatpush.msra.mxu0 0.0
        %738 = vmatpush.msra.mxu0 0.0
        %739 = vmatpush.msra.mxu0 0.0
        %740 = vmatpush.msra.mxu0 0.0
        %741 = vmatpush.msra.mxu0 0.0
        %742 = vmatpush.msra.mxu0 0.0
        %743 = vmatpush.msra.mxu0 0.0
        %744 = vmatpush.msra.mxu0 %v721
        %745 = vmatmul.f32.gmra.mxu0 %v719
        %v746 = vpop.f32.mrf.mxu0
        %v747 = vadd.f32 0.0, %v746
        %748 = vdwg.mxu0
        %749 = vmatpush.msra.mxu0 0.0
        %750 = vmatpush.msra.mxu0 0.0
        %751 = vmatpush.msra.mxu0 0.0
        %752 = vmatpush.msra.mxu0 0.0
        %753 = vmatpush.msra.mxu0 0.0
        %754 = vmatpush.msra.mxu0 0.0
        %755 = vmatpush.msra.mxu0 0.0
        %756 = vmatpush.msra.mxu0 0.0
        %757 = vmatpush.msra.mxu0 0.0
        %758 = vmatpush.msra.mxu0 0.0
        %759 = vmatpush.msra.mxu0 0.0
        %760 = vmatpush.msra.mxu0 0.0
        %761 = vmatpush.msra.mxu0 0.0
        %762 = vmatpush.msra.mxu0 0.0
        %763 = vmatpush.msra.mxu0 0.0
        %764 = vmatpush.msra.mxu0 %v723
        %765 = vmatmul.f32.gmra.mxu0 %v719
        %v766 = vpop.f32.mrf.mxu0
        %v767 = vadd.f32 0.0, %v766
        %768 = vdwg.mxu0
        %769 = vmatpush.msra.mxu0 0.0
        %770 = vmatpush.msra.mxu0 0.0
        %771 = vmatpush.msra.mxu0 0.0
        %772 = vmatpush.msra.mxu0 0.0
        %773 = vmatpush.msra.mxu0 0.0
        %774 = vmatpush.msra.mxu0 0.0
        %775 = vmatpush.msra.mxu0 0.0
        %776 = vmatpush.msra.mxu0 0.0
        %777 = vmatpush.msra.mxu0 0.0
        %778 = vmatpush.msra.mxu0 0.0
        %779 = vmatpush.msra.mxu0 0.0
        %780 = vmatpush.msra.mxu0 0.0
        %781 = vmatpush.msra.mxu0 0.0
        %782 = vmatpush.msra.mxu0 0.0
        %783 = vmatpush.msra.mxu0 0.0
        %784 = vmatpush.msra.mxu0 %v725
        %785 = vmatmul.f32.gmra.mxu0 %v719
        %v786 = vpop.f32.mrf.mxu0
        %v787 = vadd.f32 0.0, %v786
        %788 = vdwg.mxu0
        %789 = vmatpush.msra.mxu0 0.0
        %790 = vmatpush.msra.mxu0 0.0
        %791 = vmatpush.msra.mxu0 0.0
        %792 = vmatpush.msra.mxu0 0.0
        %793 = vmatpush.msra.mxu0 0.0
        %794 = vmatpush.msra.mxu0 0.0
        %795 = vmatpush.msra.mxu0 0.0
        %796 = vmatpush.msra.mxu0 0.0
        %797 = vmatpush.msra.mxu0 0.0
        %798 = vmatpush.msra.mxu0 0.0
        %799 = vmatpush.msra.mxu0 0.0
        %800 = vmatpush.msra.mxu0 0.0
        %801 = vmatpush.msra.mxu0 0.0
        %802 = vmatpush.msra.mxu0 0.0
        %803 = vmatpush.msra.mxu0 0.0
        %804 = vmatpush.msra.mxu0 %v727
        %805 = vmatmul.f32.gmra.mxu0 %v719
        %v806 = vpop.f32.mrf.mxu0
        %v807 = vadd.f32 0.0, %v806
        %808 = vdwg.mxu0
        %v809 = vadd.f32 %v654, %v747
        %v810 = vadd.f32 %v655, %v767
        %v811 = vadd.f32 %v656, %v787
        %v812 = vadd.f32 %v657, %v807
        %v813 = vld [vmem:[#allocation2] sm:$0xff]
        %v814 = vld [vmem:[#allocation2 + $0x8] sm:$0xff]
        %v815 = vld [vmem:[#allocation2 + $0x10] sm:$0xf]
        %s816 = scalar_lea.vmem %s3, 16
        %v817 = vld [vmem:[%s816] sm:$0xf]
        %v819 = vperm.slane %v817, 0
        %v820 = vperm.slane %v817, 1
        %v821 = vperm.slane %v817, 2
        %v822 = vperm.slane %v817, 3
        %v823 = vrot.slane %v820, 4
        %v824 = vrot.slane %v822, 4
        %v825 = vsel %vm215, %v819, %v823
        %v826 = vsel %vm215, %v821, %v824
        %827 = vrot.lane.b32.xlu0 %v825, 64
        %v828 = vpop.permute.xlu0 %827
        %829 = vrot.lane.b32.xlu0 %v826, 64
        %v830 = vpop.permute.xlu0 %829
        %v831 = vrot.slane %v828, 4
        %v832 = vrot.slane %v830, 4
        %vm833 = vcmask 523264
        %v834 = vsel %vm833, %v831, %v828
        %v835 = vsel %vm215, %v831, %v832
        %v836 = vsel %vm833, %v835, %v830
        %v840 = vmul.f32 %v813, %v834
        %v841 = vmul.f32 %v814, %v836
        %v842 = vmul.f32 %v815, %v832
        %s843 = scalar_lea.vmem %s1, 32
        %v844 = vld [vmem:[%s843] sm:$0xff]
        %848 = vst [vmem:[#allocation1] ss:$2 sm:$0xff] %v840
        %s849 = scalar_lea.vmem [#allocation1], 16
        %850 = vst [vmem:[%s849] ss:$2 sm:$0xff] %v841
        %s851 = scalar_lea.vmem [#allocation1], 32
        %852 = vst [vmem:[%s851] ss:$2 sm:$0xff] %v842
        %v853 = vld.sshfl [vmem:[#allocation1] sm:$0xff pattern:$0x75316420]
        %v854 = vld.sshfl [vmem:[#allocation1 + $0x8] sm:$0xff pattern:$0x75316420]
        %v855 = vld.sshfl [vmem:[#allocation1 + $0x10] sm:$0xff pattern:$0x75316420]
        %v856 = vld.sshfl [vmem:[#allocation1 + $0x18] sm:$0xff pattern:$0x75316420]
        %v857 = vld.sshfl [vmem:[#allocation1 + $0x20] sm:$0xff pattern:$0x75316420]
        %858 = vrot.lane.b32.xlu0 %v853, 64
        %v859 = vpop.permute.xlu0 %858
        %860 = vrot.lane.b32.xlu0 %v854, 64
        %v861 = vpop.permute.xlu0 %860
        %862 = vrot.lane.b32.xlu0 %v855, 64
        %v863 = vpop.permute.xlu0 %862
        %864 = vrot.lane.b32.xlu0 %v856, 64
        %v865 = vpop.permute.xlu0 %864
        %866 = vrot.lane.b32.xlu0 %v857, 64
        %v867 = vpop.permute.xlu0 %866
        %v868 = vsel %vm833, %v859, %v861
        %v869 = vsel %vm833, %v861, %v863
        %v870 = vsel %vm833, %v863, %v865
        %v871 = vsel %vm833, %v865, %v867
        %v873 = vsel %vm292, %v844, 0
        %v875 = vsel %vm215, %v868, 0
        %v877 = vsel %vm215, %v869, 0
        %v879 = vsel %vm215, %v870, 0
        %v881 = vsel %vm215, %v871, 0
        %883 = vmatpush.msra.mxu0 0.0
        %884 = vmatpush.msra.mxu0 0.0
        %885 = vmatpush.msra.mxu0 0.0
        %886 = vmatpush.msra.mxu0 0.0
        %887 = vmatpush.msra.mxu0 0.0
        %888 = vmatpush.msra.mxu0 0.0
        %889 = vmatpush.msra.mxu0 0.0
        %890 = vmatpush.msra.mxu0 0.0
        %891 = vmatpush.msra.mxu0 0.0
        %892 = vmatpush.msra.mxu0 0.0
        %893 = vmatpush.msra.mxu0 0.0
        %894 = vmatpush.msra.mxu0 0.0
        %895 = vmatpush.msra.mxu0 0.0
        %896 = vmatpush.msra.mxu0 0.0
        %897 = vmatpush.msra.mxu0 0.0
        %898 = vmatpush.msra.mxu0 %v875
        %899 = vmatmul.f32.gmra.mxu0 %v873
        %v900 = vpop.f32.mrf.mxu0
        %v901 = vadd.f32 0.0, %v900
        %902 = vdwg.mxu0
        %903 = vmatpush.msra.mxu0 0.0
        %904 = vmatpush.msra.mxu0 0.0
        %905 = vmatpush.msra.mxu0 0.0
        %906 = vmatpush.msra.mxu0 0.0
        %907 = vmatpush.msra.mxu0 0.0
        %908 = vmatpush.msra.mxu0 0.0
        %909 = vmatpush.msra.mxu0 0.0
        %910 = vmatpush.msra.mxu0 0.0
        %911 = vmatpush.msra.mxu0 0.0
        %912 = vmatpush.msra.mxu0 0.0
        %913 = vmatpush.msra.mxu0 0.0
        %914 = vmatpush.msra.mxu0 0.0
        %915 = vmatpush.msra.mxu0 0.0
        %916 = vmatpush.msra.mxu0 0.0
        %917 = vmatpush.msra.mxu0 0.0
        %918 = vmatpush.msra.mxu0 %v877
        %919 = vmatmul.f32.gmra.mxu0 %v873
        %v920 = vpop.f32.mrf.mxu0
        %v921 = vadd.f32 0.0, %v920
        %922 = vdwg.mxu0
        %923 = vmatpush.msra.mxu0 0.0
        %924 = vmatpush.msra.mxu0 0.0
        %925 = vmatpush.msra.mxu0 0.0
        %926 = vmatpush.msra.mxu0 0.0
        %927 = vmatpush.msra.mxu0 0.0
        %928 = vmatpush.msra.mxu0 0.0
        %929 = vmatpush.msra.mxu0 0.0
        %930 = vmatpush.msra.mxu0 0.0
        %931 = vmatpush.msra.mxu0 0.0
        %932 = vmatpush.msra.mxu0 0.0
        %933 = vmatpush.msra.mxu0 0.0
        %934 = vmatpush.msra.mxu0 0.0
        %935 = vmatpush.msra.mxu0 0.0
        %936 = vmatpush.msra.mxu0 0.0
        %937 = vmatpush.msra.mxu0 0.0
        %938 = vmatpush.msra.mxu0 %v879
        %939 = vmatmul.f32.gmra.mxu0 %v873
        %v940 = vpop.f32.mrf.mxu0
        %v941 = vadd.f32 0.0, %v940
        %942 = vdwg.mxu0
        %943 = vmatpush.msra.mxu0 0.0
        %944 = vmatpush.msra.mxu0 0.0
        %945 = vmatpush.msra.mxu0 0.0
        %946 = vmatpush.msra.mxu0 0.0
        %947 = vmatpush.msra.mxu0 0.0
        %948 = vmatpush.msra.mxu0 0.0
        %949 = vmatpush.msra.mxu0 0.0
        %950 = vmatpush.msra.mxu0 0.0
        %951 = vmatpush.msra.mxu0 0.0
        %952 = vmatpush.msra.mxu0 0.0
        %953 = vmatpush.msra.mxu0 0.0
        %954 = vmatpush.msra.mxu0 0.0
        %955 = vmatpush.msra.mxu0 0.0
        %956 = vmatpush.msra.mxu0 0.0
        %957 = vmatpush.msra.mxu0 0.0
        %958 = vmatpush.msra.mxu0 %v881
        %959 = vmatmul.f32.gmra.mxu0 %v873
        %v960 = vpop.f32.mrf.mxu0
        %v961 = vadd.f32 0.0, %v960
        %962 = vdwg.mxu0
        %v963 = vadd.f32 %v809, %v901
        %v964 = vadd.f32 %v810, %v921
        %v965 = vadd.f32 %v811, %v941
        %v966 = vadd.f32 %v812, %v961
        %v967 = vld [vmem:[#allocation2] sm:$0xff]
        %v968 = vld [vmem:[#allocation2 + $0x8] sm:$0xff]
        %v969 = vld [vmem:[#allocation2 + $0x10] sm:$0xf]
        %s970 = scalar_lea.vmem %s3, 20
        %v971 = vld [vmem:[%s970] sm:$0xf]
        %v973 = vperm.slane %v971, 0
        %v974 = vperm.slane %v971, 1
        %v975 = vperm.slane %v971, 2
        %v976 = vperm.slane %v971, 3
        %v977 = vrot.slane %v974, 4
        %v978 = vrot.slane %v976, 4
        %v979 = vsel %vm215, %v973, %v977
        %v980 = vsel %vm215, %v975, %v978
        %981 = vrot.lane.b32.xlu0 %v979, 65
        %v982 = vpop.permute.xlu0 %981
        %983 = vrot.lane.b32.xlu0 %v980, 65
        %v984 = vpop.permute.xlu0 %983
        %v985 = vrot.slane %v982, 4
        %v986 = vrot.slane %v984, 4
        %v987 = vsel %vm713, %v985, %v982
        %v988 = vsel %vm215, %v985, %v986
        %v989 = vsel %vm713, %v988, %v984
        %v993 = vmul.f32 %v967, %v987
        %v994 = vmul.f32 %v968, %v989
        %v995 = vmul.f32 %v969, %v986
        %s996 = scalar_lea.vmem %s1, 40
        %v997 = vld [vmem:[%s996] sm:$0xff]
        %1001 = vst [vmem:[#allocation1] ss:$2 sm:$0xff] %v993
        %s1002 = scalar_lea.vmem [#allocation1], 16
        %1003 = vst [vmem:[%s1002] ss:$2 sm:$0xff] %v994
        %s1004 = scalar_lea.vmem [#allocation1], 32
        %1005 = vst [vmem:[%s1004] ss:$2 sm:$0xff] %v995
        %v1006 = vld.sshfl [vmem:[#allocation1] sm:$0xff pattern:$0x75316420]
        %v1007 = vld.sshfl [vmem:[#allocation1 + $0x8] sm:$0xff pattern:$0x75316420]
        %v1008 = vld.sshfl [vmem:[#allocation1 + $0x10] sm:$0xff pattern:$0x75316420]
        %v1009 = vld.sshfl [vmem:[#allocation1 + $0x18] sm:$0xff pattern:$0x75316420]
        %v1010 = vld.sshfl [vmem:[#allocation1 + $0x20] sm:$0xff pattern:$0x75316420]
        %1011 = vrot.lane.b32.xlu0 %v1006, 63
        %v1012 = vpop.permute.xlu0 %1011
        %1013 = vrot.lane.b32.xlu0 %v1007, 63
        %v1014 = vpop.permute.xlu0 %1013
        %1015 = vrot.lane.b32.xlu0 %v1008, 63
        %v1016 = vpop.permute.xlu0 %1015
        %1017 = vrot.lane.b32.xlu0 %v1009, 63
        %v1018 = vpop.permute.xlu0 %1017
        %1019 = vrot.lane.b32.xlu0 %v1010, 63
        %v1020 = vpop.permute.xlu0 %1019
        %v1021 = vsel %vm678, %v1012, %v1014
        %v1022 = vsel %vm678, %v1014, %v1016
        %v1023 = vsel %vm678, %v1016, %v1018
        %v1024 = vsel %vm678, %v1018, %v1020
        %v1026 = vsel %vm292, %v997, 0
        %v1028 = vsel %vm215, %v1021, 0
        %v1030 = vsel %vm215, %v1022, 0
        %v1032 = vsel %vm215, %v1023, 0
        %v1034 = vsel %vm215, %v1024, 0
        %1036 = vmatpush.msra.mxu0 0.0
        %1037 = vmatpush.msra.mxu0 0.0
        %1038 = vmatpush.msra.mxu0 0.0
        %1039 = vmatpush.msra.mxu0 0.0
        %1040 = vmatpush.msra.mxu0 0.0
        %1041 = vmatpush.msra.mxu0 0.0
        %1042 = vmatpush.msra.mxu0 0.0
        %1043 = vmatpush.msra.mxu0 0.0
        %1044 = vmatpush.msra.mxu0 0.0
        %1045 = vmatpush.msra.mxu0 0.0
        %1046 = vmatpush.msra.mxu0 0.0
        %1047 = vmatpush.msra.mxu0 0.0
        %1048 = vmatpush.msra.mxu0 0.0
        %1049 = vmatpush.msra.mxu0 0.0
        %1050 = vmatpush.msra.mxu0 0.0
        %1051 = vmatpush.msra.mxu0 %v1028
        %1052 = vmatmul.f32.gmra.mxu0 %v1026
        %v1053 = vpop.f32.mrf.mxu0
        %v1054 = vadd.f32 0.0, %v1053
        %1055 = vdwg.mxu0
        %1056 = vmatpush.msra.mxu0 0.0
        %1057 = vmatpush.msra.mxu0 0.0
        %1058 = vmatpush.msra.mxu0 0.0
        %1059 = vmatpush.msra.mxu0 0.0
        %1060 = vmatpush.msra.mxu0 0.0
        %1061 = vmatpush.msra.mxu0 0.0
        %1062 = vmatpush.msra.mxu0 0.0
        %1063 = vmatpush.msra.mxu0 0.0
        %1064 = vmatpush.msra.mxu0 0.0
        %1065 = vmatpush.msra.mxu0 0.0
        %1066 = vmatpush.msra.mxu0 0.0
        %1067 = vmatpush.msra.mxu0 0.0
        %1068 = vmatpush.msra.mxu0 0.0
        %1069 = vmatpush.msra.mxu0 0.0
        %1070 = vmatpush.msra.mxu0 0.0
        %1071 = vmatpush.msra.mxu0 %v1030
        %1072 = vmatmul.f32.gmra.mxu0 %v1026
        %v1073 = vpop.f32.mrf.mxu0
        %v1074 = vadd.f32 0.0, %v1073
        %1075 = vdwg.mxu0
        %1076 = vmatpush.msra.mxu0 0.0
        %1077 = vmatpush.msra.mxu0 0.0
        %1078 = vmatpush.msra.mxu0 0.0
        %1079 = vmatpush.msra.mxu0 0.0
        %1080 = vmatpush.msra.mxu0 0.0
        %1081 = vmatpush.msra.mxu0 0.0
        %1082 = vmatpush.msra.mxu0 0.0
        %1083 = vmatpush.msra.mxu0 0.0
        %1084 = vmatpush.msra.mxu0 0.0
        %1085 = vmatpush.msra.mxu0 0.0
        %1086 = vmatpush.msra.mxu0 0.0
        %1087 = vmatpush.msra.mxu0 0.0
        %1088 = vmatpush.msra.mxu0 0.0
        %1089 = vmatpush.msra.mxu0 0.0
        %1090 = vmatpush.msra.mxu0 0.0
        %1091 = vmatpush.msra.mxu0 %v1032
        %1092 = vmatmul.f32.gmra.mxu0 %v1026
        %v1093 = vpop.f32.mrf.mxu0
        %v1094 = vadd.f32 0.0, %v1093
        %1095 = vdwg.mxu0
        %1096 = vmatpush.msra.mxu0 0.0
        %1097 = vmatpush.msra.mxu0 0.0
        %1098 = vmatpush.msra.mxu0 0.0
        %1099 = vmatpush.msra.mxu0 0.0
        %1100 = vmatpush.msra.mxu0 0.0
        %1101 = vmatpush.msra.mxu0 0.0
        %1102 = vmatpush.msra.mxu0 0.0
        %1103 = vmatpush.msra.mxu0 0.0
        %1104 = vmatpush.msra.mxu0 0.0
        %1105 = vmatpush.msra.mxu0 0.0
        %1106 = vmatpush.msra.mxu0 0.0
        %1107 = vmatpush.msra.mxu0 0.0
        %1108 = vmatpush.msra.mxu0 0.0
        %1109 = vmatpush.msra.mxu0 0.0
        %1110 = vmatpush.msra.mxu0 0.0
        %1111 = vmatpush.msra.mxu0 %v1034
        %1112 = vmatmul.f32.gmra.mxu0 %v1026
        %v1113 = vpop.f32.mrf.mxu0
        %v1114 = vadd.f32 0.0, %v1113
        %1115 = vdwg.mxu0
        %v1116 = vadd.f32 %v963, %v1054
        %v1117 = vadd.f32 %v964, %v1074
        %v1118 = vadd.f32 %v965, %v1094
        %v1119 = vadd.f32 %v966, %v1114
        %v1120 = vld [vmem:[#allocation2] sm:$0xff]
        %v1121 = vld [vmem:[#allocation2 + $0x8] sm:$0xff]
        %v1122 = vld [vmem:[#allocation2 + $0x10] sm:$0xf]
        %s1123 = scalar_lea.vmem %s3, 24
        %v1124 = vld [vmem:[%s1123] sm:$0xf]
        %v1126 = vperm.slane %v1124, 0
        %v1127 = vperm.slane %v1124, 1
        %v1128 = vperm.slane %v1124, 2
        %v1129 = vperm.slane %v1124, 3
        %v1130 = vrot.slane %v1127, 4
        %v1131 = vrot.slane %v1129, 4
        %v1132 = vsel %vm215, %v1126, %v1130
        %v1133 = vsel %vm215, %v1128, %v1131
        %1134 = vrot.lane.b32.xlu0 %v1132, 71
        %v1135 = vpop.permute.xlu0 %1134
        %1136 = vrot.lane.b32.xlu0 %v1133, 71
        %v1137 = vpop.permute.xlu0 %1136
        %v1138 = vrot.slane %v1135, 4
        %v1139 = vrot.slane %v1137, 4
        %v1140 = vsel %vm558, %v1138, %v1135
        %v1141 = vsel %vm215, %v1138, %v1139
        %v1142 = vsel %vm558, %v1141, %v1137
        %v1146 = vmul.f32 %v1120, %v1140
        %v1147 = vmul.f32 %v1121, %v1142
        %v1148 = vmul.f32 %v1122, %v1139
        %s1149 = scalar_lea.vmem %s1, 48
        %v1150 = vld [vmem:[%s1149] sm:$0xff]
        %1154 = vst [vmem:[#allocation1] ss:$2 sm:$0xff] %v1146
        %s1155 = scalar_lea.vmem [#allocation1], 16
        %1156 = vst [vmem:[%s1155] ss:$2 sm:$0xff] %v1147
        %s1157 = scalar_lea.vmem [#allocation1], 32
        %1158 = vst [vmem:[%s1157] ss:$2 sm:$0xff] %v1148
        %v1159 = vld.sshfl [vmem:[#allocation1] sm:$0xff pattern:$0x75316420]
        %v1160 = vld.sshfl [vmem:[#allocation1 + $0x8] sm:$0xff pattern:$0x75316420]
        %v1161 = vld.sshfl [vmem:[#allocation1 + $0x10] sm:$0xff pattern:$0x75316420]
        %v1162 = vld.sshfl [vmem:[#allocation1 + $0x18] sm:$0xff pattern:$0x75316420]
        %v1163 = vld.sshfl [vmem:[#allocation1 + $0x20] sm:$0xff pattern:$0x75316420]
        %1164 = vrot.lane.b32.xlu0 %v1159, 57
        %v1165 = vpop.permute.xlu0 %1164
        %1166 = vrot.lane.b32.xlu0 %v1160, 57
        %v1167 = vpop.permute.xlu0 %1166
        %1168 = vrot.lane.b32.xlu0 %v1161, 57
        %v1169 = vpop.permute.xlu0 %1168
        %1170 = vrot.lane.b32.xlu0 %v1162, 57
        %v1171 = vpop.permute.xlu0 %1170
        %1172 = vrot.lane.b32.xlu0 %v1163, 57
        %v1173 = vpop.permute.xlu0 %1172
        %v1174 = vsel %vm523, %v1165, %v1167
        %v1175 = vsel %vm523, %v1167, %v1169
        %v1176 = vsel %vm523, %v1169, %v1171
        %v1177 = vsel %vm523, %v1171, %v1173
        %v1179 = vsel %vm292, %v1150, 0
        %v1181 = vsel %vm215, %v1174, 0
        %v1183 = vsel %vm215, %v1175, 0
        %v1185 = vsel %vm215, %v1176, 0
        %v1187 = vsel %vm215, %v1177, 0
        %1189 = vmatpush.msra.mxu0 0.0
        %1190 = vmatpush.msra.mxu0 0.0
        %1191 = vmatpush.msra.mxu0 0.0
        %1192 = vmatpush.msra.mxu0 0.0
        %1193 = vmatpush.msra.mxu0 0.0
        %1194 = vmatpush.msra.mxu0 0.0
        %1195 = vmatpush.msra.mxu0 0.0
        %1196 = vmatpush.msra.mxu0 0.0
        %1197 = vmatpush.msra.mxu0 0.0
        %1198 = vmatpush.msra.mxu0 0.0
        %1199 = vmatpush.msra.mxu0 0.0
        %1200 = vmatpush.msra.mxu0 0.0
        %1201 = vmatpush.msra.mxu0 0.0
        %1202 = vmatpush.msra.mxu0 0.0
        %1203 = vmatpush.msra.mxu0 0.0
        %1204 = vmatpush.msra.mxu0 %v1181
        %1205 = vmatmul.f32.gmra.mxu0 %v1179
        %v1206 = vpop.f32.mrf.mxu0
        %v1207 = vadd.f32 0.0, %v1206
        %1208 = vdwg.mxu0
        %1209 = vmatpush.msra.mxu0 0.0
        %1210 = vmatpush.msra.mxu0 0.0
        %1211 = vmatpush.msra.mxu0 0.0
        %1212 = vmatpush.msra.mxu0 0.0
        %1213 = vmatpush.msra.mxu0 0.0
        %1214 = vmatpush.msra.mxu0 0.0
        %1215 = vmatpush.msra.mxu0 0.0
        %1216 = vmatpush.msra.mxu0 0.0
        %1217 = vmatpush.msra.mxu0 0.0
        %1218 = vmatpush.msra.mxu0 0.0
        %1219 = vmatpush.msra.mxu0 0.0
        %1220 = vmatpush.msra.mxu0 0.0
        %1221 = vmatpush.msra.mxu0 0.0
        %1222 = vmatpush.msra.mxu0 0.0
        %1223 = vmatpush.msra.mxu0 0.0
        %1224 = vmatpush.msra.mxu0 %v1183
        %1225 = vmatmul.f32.gmra.mxu0 %v1179
        %v1226 = vpop.f32.mrf.mxu0
        %v1227 = vadd.f32 0.0, %v1226
        %1228 = vdwg.mxu0
        %1229 = vmatpush.msra.mxu0 0.0
        %1230 = vmatpush.msra.mxu0 0.0
        %1231 = vmatpush.msra.mxu0 0.0
        %1232 = vmatpush.msra.mxu0 0.0
        %1233 = vmatpush.msra.mxu0 0.0
        %1234 = vmatpush.msra.mxu0 0.0
        %1235 = vmatpush.msra.mxu0 0.0
        %1236 = vmatpush.msra.mxu0 0.0
        %1237 = vmatpush.msra.mxu0 0.0
        %1238 = vmatpush.msra.mxu0 0.0
        %1239 = vmatpush.msra.mxu0 0.0
        %1240 = vmatpush.msra.mxu0 0.0
        %1241 = vmatpush.msra.mxu0 0.0
        %1242 = vmatpush.msra.mxu0 0.0
        %1243 = vmatpush.msra.mxu0 0.0
        %1244 = vmatpush.msra.mxu0 %v1185
        %1245 = vmatmul.f32.gmra.mxu0 %v1179
        %v1246 = vpop.f32.mrf.mxu0
        %v1247 = vadd.f32 0.0, %v1246
        %1248 = vdwg.mxu0
        %1249 = vmatpush.msra.mxu0 0.0
        %1250 = vmatpush.msra.mxu0 0.0
        %1251 = vmatpush.msra.mxu0 0.0
        %1252 = vmatpush.msra.mxu0 0.0
        %1253 = vmatpush.msra.mxu0 0.0
        %1254 = vmatpush.msra.mxu0 0.0
        %1255 = vmatpush.msra.mxu0 0.0
        %1256 = vmatpush.msra.mxu0 0.0
        %1257 = vmatpush.msra.mxu0 0.0
        %1258 = vmatpush.msra.mxu0 0.0
        %1259 = vmatpush.msra.mxu0 0.0
        %1260 = vmatpush.msra.mxu0 0.0
        %1261 = vmatpush.msra.mxu0 0.0
        %1262 = vmatpush.msra.mxu0 0.0
        %1263 = vmatpush.msra.mxu0 0.0
        %1264 = vmatpush.msra.mxu0 %v1187
        %1265 = vmatmul.f32.gmra.mxu0 %v1179
        %v1266 = vpop.f32.mrf.mxu0
        %v1267 = vadd.f32 0.0, %v1266
        %1268 = vdwg.mxu0
        %v1269 = vadd.f32 %v1116, %v1207
        %v1270 = vadd.f32 %v1117, %v1227
        %v1271 = vadd.f32 %v1118, %v1247
        %v1272 = vadd.f32 %v1119, %v1267
        %v1273 = vld [vmem:[#allocation2] sm:$0xff]
        %v1274 = vld [vmem:[#allocation2 + $0x8] sm:$0xff]
        %v1275 = vld [vmem:[#allocation2 + $0x10] sm:$0xf]
        %s1276 = scalar_lea.vmem %s3, 28
        %v1277 = vld [vmem:[%s1276] sm:$0xf]
        %v1279 = vperm.slane %v1277, 0
        %v1280 = vperm.slane %v1277, 1
        %v1281 = vperm.slane %v1277, 2
        %v1282 = vperm.slane %v1277, 3
        %v1283 = vrot.slane %v1280, 4
        %v1284 = vrot.slane %v1282, 4
        %v1285 = vsel %vm215, %v1279, %v1283
        %v1286 = vsel %vm215, %v1281, %v1284
        %1287 = vrot.lane.b32.xlu0 %v1285, 72
        %v1288 = vpop.permute.xlu0 %1287
        %1289 = vrot.lane.b32.xlu0 %v1286, 72
        %v1290 = vpop.permute.xlu0 %1289
        %v1291 = vrot.slane %v1288, 4
        %v1292 = vrot.slane %v1290, 4
        %v1293 = vsel %vm287, %v1291, %v1288
        %v1294 = vsel %vm215, %v1291, %v1292
        %v1295 = vsel %vm287, %v1294, %v1290
        %v1299 = vmul.f32 %v1273, %v1293
        %v1300 = vmul.f32 %v1274, %v1295
        %v1301 = vmul.f32 %v1275, %v1292
        %s1302 = scalar_lea.vmem %s1, 56
        %v1303 = vld [vmem:[%s1302] sm:$0xff]
        %1307 = vst [vmem:[#allocation1] ss:$2 sm:$0xff] %v1299
        %s1308 = scalar_lea.vmem [#allocation1], 16
        %1309 = vst [vmem:[%s1308] ss:$2 sm:$0xff] %v1300
        %s1310 = scalar_lea.vmem [#allocation1], 32
        %1311 = vst [vmem:[%s1310] ss:$2 sm:$0xff] %v1301
        %v1312 = vld.sshfl [vmem:[#allocation1] sm:$0xff pattern:$0x75316420]
        %v1313 = vld.sshfl [vmem:[#allocation1 + $0x8] sm:$0xff pattern:$0x75316420]
        %v1314 = vld.sshfl [vmem:[#allocation1 + $0x10] sm:$0xff pattern:$0x75316420]
        %v1315 = vld.sshfl [vmem:[#allocation1 + $0x18] sm:$0xff pattern:$0x75316420]
        %v1316 = vld.sshfl [vmem:[#allocation1 + $0x20] sm:$0xff pattern:$0x75316420]
        %1317 = vrot.lane.b32.xlu0 %v1312, 56
        %v1318 = vpop.permute.xlu0 %1317
        %1319 = vrot.lane.b32.xlu0 %v1313, 56
        %v1320 = vpop.permute.xlu0 %1319
        %1321 = vrot.lane.b32.xlu0 %v1314, 56
        %v1322 = vpop.permute.xlu0 %1321
        %1323 = vrot.lane.b32.xlu0 %v1315, 56
        %v1324 = vpop.permute.xlu0 %1323
        %1325 = vrot.lane.b32.xlu0 %v1316, 56
        %v1326 = vpop.permute.xlu0 %1325
        %v1327 = vsel %vm252, %v1318, %v1320
        %v1328 = vsel %vm252, %v1320, %v1322
        %v1329 = vsel %vm252, %v1322, %v1324
        %v1330 = vsel %vm252, %v1324, %v1326
        %v1332 = vsel %vm292, %v1303, 0
        %v1334 = vsel %vm215, %v1327, 0
        %v1336 = vsel %vm215, %v1328, 0
        %v1338 = vsel %vm215, %v1329, 0
        %v1340 = vsel %vm215, %v1330, 0
        %1342 = vmatpush.msra.mxu0 0.0
        %1343 = vmatpush.msra.mxu0 0.0
        %1344 = vmatpush.msra.mxu0 0.0
        %1345 = vmatpush.msra.mxu0 0.0
        %1346 = vmatpush.msra.mxu0 0.0
        %1347 = vmatpush.msra.mxu0 0.0
        %1348 = vmatpush.msra.mxu0 0.0
        %1349 = vmatpush.msra.mxu0 0.0
        %1350 = vmatpush.msra.mxu0 0.0
        %1351 = vmatpush.msra.mxu0 0.0
        %1352 = vmatpush.msra.mxu0 0.0
        %1353 = vmatpush.msra.mxu0 0.0
        %1354 = vmatpush.msra.mxu0 0.0
        %1355 = vmatpush.msra.mxu0 0.0
        %1356 = vmatpush.msra.mxu0 0.0
        %1357 = vmatpush.msra.mxu0 %v1334
        %1358 = vmatmul.f32.gmra.mxu0 %v1332
        %v1359 = vpop.f32.mrf.mxu0
        %v1360 = vadd.f32 0.0, %v1359
        %1361 = vdwg.mxu0
        %1362 = vmatpush.msra.mxu0 0.0
        %1363 = vmatpush.msra.mxu0 0.0
        %1364 = vmatpush.msra.mxu0 0.0
        %1365 = vmatpush.msra.mxu0 0.0
        %1366 = vmatpush.msra.mxu0 0.0
        %1367 = vmatpush.msra.mxu0 0.0
        %1368 = vmatpush.msra.mxu0 0.0
        %1369 = vmatpush.msra.mxu0 0.0
        %1370 = vmatpush.msra.mxu0 0.0
        %1371 = vmatpush.msra.mxu0 0.0
        %1372 = vmatpush.msra.mxu0 0.0
        %1373 = vmatpush.msra.mxu0 0.0
        %1374 = vmatpush.msra.mxu0 0.0
        %1375 = vmatpush.msra.mxu0 0.0
        %1376 = vmatpush.msra.mxu0 0.0
        %1377 = vmatpush.msra.mxu0 %v1336
        %1378 = vmatmul.f32.gmra.mxu0 %v1332
        %v1379 = vpop.f32.mrf.mxu0
        %v1380 = vadd.f32 0.0, %v1379
        %1381 = vdwg.mxu0
        %1382 = vmatpush.msra.mxu0 0.0
        %1383 = vmatpush.msra.mxu0 0.0
        %1384 = vmatpush.msra.mxu0 0.0
        %1385 = vmatpush.msra.mxu0 0.0
        %1386 = vmatpush.msra.mxu0 0.0
        %1387 = vmatpush.msra.mxu0 0.0
        %1388 = vmatpush.msra.mxu0 0.0
        %1389 = vmatpush.msra.mxu0 0.0
        %1390 = vmatpush.msra.mxu0 0.0
        %1391 = vmatpush.msra.mxu0 0.0
        %1392 = vmatpush.msra.mxu0 0.0
        %1393 = vmatpush.msra.mxu0 0.0
        %1394 = vmatpush.msra.mxu0 0.0
        %1395 = vmatpush.msra.mxu0 0.0
        %1396 = vmatpush.msra.mxu0 0.0
        %1397 = vmatpush.msra.mxu0 %v1338
        %1398 = vmatmul.f32.gmra.mxu0 %v1332
        %v1399 = vpop.f32.mrf.mxu0
        %v1400 = vadd.f32 0.0, %v1399
        %1401 = vdwg.mxu0
        %1402 = vmatpush.msra.mxu0 0.0
        %1403 = vmatpush.msra.mxu0 0.0
        %1404 = vmatpush.msra.mxu0 0.0
        %1405 = vmatpush.msra.mxu0 0.0
        %1406 = vmatpush.msra.mxu0 0.0
        %1407 = vmatpush.msra.mxu0 0.0
        %1408 = vmatpush.msra.mxu0 0.0
        %1409 = vmatpush.msra.mxu0 0.0
        %1410 = vmatpush.msra.mxu0 0.0
        %1411 = vmatpush.msra.mxu0 0.0
        %1412 = vmatpush.msra.mxu0 0.0
        %1413 = vmatpush.msra.mxu0 0.0
        %1414 = vmatpush.msra.mxu0 0.0
        %1415 = vmatpush.msra.mxu0 0.0
        %1416 = vmatpush.msra.mxu0 0.0
        %1417 = vmatpush.msra.mxu0 %v1340
        %1418 = vmatmul.f32.gmra.mxu0 %v1332
        %v1419 = vpop.f32.mrf.mxu0
        %v1420 = vadd.f32 0.0, %v1419
        %1421 = vdwg.mxu0
        %v1422 = vadd.f32 %v1269, %v1360
        %v1423 = vadd.f32 %v1270, %v1380
        %v1424 = vadd.f32 %v1271, %v1400
        %v1425 = vadd.f32 %v1272, %v1420
        %v1426 = vld [vmem:[#allocation2] sm:$0xff]
        %v1427 = vld [vmem:[#allocation2 + $0x8] sm:$0xff]
        %v1428 = vld [vmem:[#allocation2 + $0x10] sm:$0xf]
        %s1429 = scalar_lea.vmem %s3, 32
        %v1430 = vld [vmem:[%s1429] sm:$0xf]
        %v1432 = vperm.slane %v1430, 0
        %v1433 = vperm.slane %v1430, 1
        %v1434 = vperm.slane %v1430, 2
        %v1435 = vperm.slane %v1430, 3
        %v1436 = vrot.slane %v1433, 4
        %v1437 = vrot.slane %v1435, 4
        %v1438 = vsel %vm215, %v1432, %v1436
        %v1439 = vsel %vm215, %v1434, %v1437
        %1440 = vrot.lane.b32.xlu0 %v1438, 73
        %v1441 = vpop.permute.xlu0 %1440
        %1442 = vrot.lane.b32.xlu0 %v1439, 73
        %v1443 = vpop.permute.xlu0 %1442
        %v1444 = vrot.slane %v1441, 4
        %v1445 = vrot.slane %v1443, 4
        %v1446 = vsel %vm407, %v1444, %v1441
        %v1447 = vsel %vm215, %v1444, %v1445
        %v1448 = vsel %vm407, %v1447, %v1443
        %v1452 = vmul.f32 %v1426, %v1446
        %v1453 = vmul.f32 %v1427, %v1448
        %v1454 = vmul.f32 %v1428, %v1445
        %s1455 = scalar_lea.vmem %s1, 64
        %v1456 = vld [vmem:[%s1455] sm:$0xff]
        %1460 = vst [vmem:[#allocation1] ss:$2 sm:$0xff] %v1452
        %s1461 = scalar_lea.vmem [#allocation1], 16
        %1462 = vst [vmem:[%s1461] ss:$2 sm:$0xff] %v1453
        %s1463 = scalar_lea.vmem [#allocation1], 32
        %1464 = vst [vmem:[%s1463] ss:$2 sm:$0xff] %v1454
        %v1465 = vld.sshfl [vmem:[#allocation1] sm:$0xff pattern:$0x75316420]
        %v1466 = vld.sshfl [vmem:[#allocation1 + $0x8] sm:$0xff pattern:$0x75316420]
        %v1467 = vld.sshfl [vmem:[#allocation1 + $0x10] sm:$0xff pattern:$0x75316420]
        %v1468 = vld.sshfl [vmem:[#allocation1 + $0x18] sm:$0xff pattern:$0x75316420]
        %v1469 = vld.sshfl [vmem:[#allocation1 + $0x20] sm:$0xff pattern:$0x75316420]
        %1470 = vrot.lane.b32.xlu0 %v1465, 55
        %v1471 = vpop.permute.xlu0 %1470
        %1472 = vrot.lane.b32.xlu0 %v1466, 55
        %v1473 = vpop.permute.xlu0 %1472
        %1474 = vrot.lane.b32.xlu0 %v1467, 55
        %v1475 = vpop.permute.xlu0 %1474
        %1476 = vrot.lane.b32.xlu0 %v1468, 55
        %v1477 = vpop.permute.xlu0 %1476
        %1478 = vrot.lane.b32.xlu0 %v1469, 55
        %v1479 = vpop.permute.xlu0 %1478
        %v1480 = vsel %vm224, %v1471, %v1473
        %v1481 = vsel %vm224, %v1473, %v1475
        %v1482 = vsel %vm224, %v1475, %v1477
        %v1483 = vsel %vm224, %v1477, %v1479
        %v1485 = vsel %vm292, %v1456, 0
        %v1487 = vsel %vm215, %v1480, 0
        %v1489 = vsel %vm215, %v1481, 0
        %v1491 = vsel %vm215, %v1482, 0
        %v1493 = vsel %vm215, %v1483, 0
        %1495 = vmatpush.msra.mxu0 0.0
        %1496 = vmatpush.msra.mxu0 0.0
        %1497 = vmatpush.msra.mxu0 0.0
        %1498 = vmatpush.msra.mxu0 0.0
        %1499 = vmatpush.msra.mxu0 0.0
        %1500 = vmatpush.msra.mxu0 0.0
        %1501 = vmatpush.msra.mxu0 0.0
        %1502 = vmatpush.msra.mxu0 0.0
        %1503 = vmatpush.msra.mxu0 0.0
        %1504 = vmatpush.msra.mxu0 0.0
        %1505 = vmatpush.msra.mxu0 0.0
        %1506 = vmatpush.msra.mxu0 0.0
        %1507 = vmatpush.msra.mxu0 0.0
        %1508 = vmatpush.msra.mxu0 0.0
        %1509 = vmatpush.msra.mxu0 0.0
        %1510 = vmatpush.msra.mxu0 %v1487
        %1511 = vmatmul.f32.gmra.mxu0 %v1485
        %v1512 = vpop.f32.mrf.mxu0
        %v1513 = vadd.f32 0.0, %v1512
        %1514 = vdwg.mxu0
        %1515 = vmatpush.msra.mxu0 0.0
        %1516 = vmatpush.msra.mxu0 0.0
        %1517 = vmatpush.msra.mxu0 0.0
        %1518 = vmatpush.msra.mxu0 0.0
        %1519 = vmatpush.msra.mxu0 0.0
        %1520 = vmatpush.msra.mxu0 0.0
        %1521 = vmatpush.msra.mxu0 0.0
        %1522 = vmatpush.msra.mxu0 0.0
        %1523 = vmatpush.msra.mxu0 0.0
        %1524 = vmatpush.msra.mxu0 0.0
        %1525 = vmatpush.msra.mxu0 0.0
        %1526 = vmatpush.msra.mxu0 0.0
        %1527 = vmatpush.msra.mxu0 0.0
        %1528 = vmatpush.msra.mxu0 0.0
        %1529 = vmatpush.msra.mxu0 0.0
        %1530 = vmatpush.msra.mxu0 %v1489
        %1531 = vmatmul.f32.gmra.mxu0 %v1485
        %v1532 = vpop.f32.mrf.mxu0
        %v1533 = vadd.f32 0.0, %v1532
        %1534 = vdwg.mxu0
        %1535 = vmatpush.msra.mxu0 0.0
        %1536 = vmatpush.msra.mxu0 0.0
        %1537 = vmatpush.msra.mxu0 0.0
        %1538 = vmatpush.msra.mxu0 0.0
        %1539 = vmatpush.msra.mxu0 0.0
        %1540 = vmatpush.msra.mxu0 0.0
        %1541 = vmatpush.msra.mxu0 0.0
        %1542 = vmatpush.msra.mxu0 0.0
        %1543 = vmatpush.msra.mxu0 0.0
        %1544 = vmatpush.msra.mxu0 0.0
        %1545 = vmatpush.msra.mxu0 0.0
        %1546 = vmatpush.msra.mxu0 0.0
        %1547 = vmatpush.msra.mxu0 0.0
        %1548 = vmatpush.msra.mxu0 0.0
        %1549 = vmatpush.msra.mxu0 0.0
        %1550 = vmatpush.msra.mxu0 %v1491
        %1551 = vmatmul.f32.gmra.mxu0 %v1485
        %v1552 = vpop.f32.mrf.mxu0
        %v1553 = vadd.f32 0.0, %v1552
        %1554 = vdwg.mxu0
        %1555 = vmatpush.msra.mxu0 0.0
        %1556 = vmatpush.msra.mxu0 0.0
        %1557 = vmatpush.msra.mxu0 0.0
        %1558 = vmatpush.msra.mxu0 0.0
        %1559 = vmatpush.msra.mxu0 0.0
        %1560 = vmatpush.msra.mxu0 0.0
        %1561 = vmatpush.msra.mxu0 0.0
        %1562 = vmatpush.msra.mxu0 0.0
        %1563 = vmatpush.msra.mxu0 0.0
        %1564 = vmatpush.msra.mxu0 0.0
        %1565 = vmatpush.msra.mxu0 0.0
        %1566 = vmatpush.msra.mxu0 0.0
        %1567 = vmatpush.msra.mxu0 0.0
        %1568 = vmatpush.msra.mxu0 0.0
        %1569 = vmatpush.msra.mxu0 0.0
        %1570 = vmatpush.msra.mxu0 %v1493
        %1571 = vmatmul.f32.gmra.mxu0 %v1485
        %v1572 = vpop.f32.mrf.mxu0
        %v1573 = vadd.f32 0.0, %v1572
        %1574 = vdwg.mxu0
        %v1575 = vadd.f32 %v1422, %v1513
        %v1576 = vadd.f32 %v1423, %v1533
        %v1577 = vadd.f32 %v1424, %v1553
        %v1578 = vadd.f32 %v1425, %v1573
        %v1579 = vld [vmem:[#allocation2] sm:$0xff]
        %v1580 = vld [vmem:[#allocation2 + $0x8] sm:$0xff]
        %v1581 = vld [vmem:[#allocation2 + $0x10] sm:$0xf]
        %s1582 = scalar_lea.vmem %s3, 36
        %v1583 = vld [vmem:[%s1582] sm:$0xf]
        %v1585 = vperm.slane %v1583, 0
        %v1586 = vperm.slane %v1583, 1
        %v1587 = vperm.slane %v1583, 2
        %v1588 = vperm.slane %v1583, 3
        %v1589 = vrot.slane %v1586, 4
        %v1590 = vrot.slane %v1588, 4
        %v1591 = vsel %vm215, %v1585, %v1589
        %v1592 = vsel %vm215, %v1587, %v1590
        %1593 = vrot.lane.b32.xlu0 %v1591, 119
        %v1594 = vpop.permute.xlu0 %1593
        %1595 = vrot.lane.b32.xlu0 %v1592, 119
        %v1596 = vpop.permute.xlu0 %1595
        %v1597 = vrot.slane %v1594, 4
        %v1598 = vrot.slane %v1596, 4
        %vm1599 = vcmask 973824
        %v1600 = vsel %vm1599, %v1597, %v1594
        %v1601 = vsel %vm215, %v1597, %v1598
        %v1602 = vsel %vm1599, %v1601, %v1596
        %v1606 = vmul.f32 %v1579, %v1600
        %v1607 = vmul.f32 %v1580, %v1602
        %v1608 = vmul.f32 %v1581, %v1598
        %s1609 = scalar_lea.vmem %s1, 72
        %v1610 = vld [vmem:[%s1609] sm:$0xff]
        %1614 = vst [vmem:[#allocation1] ss:$2 sm:$0xff] %v1606
        %s1615 = scalar_lea.vmem [#allocation1], 16
        %1616 = vst [vmem:[%s1615] ss:$2 sm:$0xff] %v1607
        %s1617 = scalar_lea.vmem [#allocation1], 32
        %1618 = vst [vmem:[%s1617] ss:$2 sm:$0xff] %v1608
        %v1619 = vld.sshfl [vmem:[#allocation1] sm:$0xff pattern:$0x75316420]
        %v1620 = vld.sshfl [vmem:[#allocation1 + $0x8] sm:$0xff pattern:$0x75316420]
        %v1621 = vld.sshfl [vmem:[#allocation1 + $0x10] sm:$0xff pattern:$0x75316420]
        %v1622 = vld.sshfl [vmem:[#allocation1 + $0x18] sm:$0xff pattern:$0x75316420]
        %v1623 = vld.sshfl [vmem:[#allocation1 + $0x20] sm:$0xff pattern:$0x75316420]
        %1624 = vrot.lane.b32.xlu0 %v1619, 9
        %v1625 = vpop.permute.xlu0 %1624
        %1626 = vrot.lane.b32.xlu0 %v1620, 9
        %v1627 = vpop.permute.xlu0 %1626
        %1628 = vrot.lane.b32.xlu0 %v1621, 9
        %v1629 = vpop.permute.xlu0 %1628
        %1630 = vrot.lane.b32.xlu0 %v1622, 9
        %v1631 = vpop.permute.xlu0 %1630
        %1632 = vrot.lane.b32.xlu0 %v1623, 9
        %v1633 = vpop.permute.xlu0 %1632
        %vm1634 = vcmask 72704
        %v1635 = vsel %vm1634, %v1625, %v1627
        %v1636 = vsel %vm1634, %v1627, %v1629
        %v1637 = vsel %vm1634, %v1629, %v1631
        %v1638 = vsel %vm1634, %v1631, %v1633
        %v1640 = vsel %vm292, %v1610, 0
        %v1642 = vsel %vm215, %v1635, 0
        %v1644 = vsel %vm215, %v1636, 0
        %v1646 = vsel %vm215, %v1637, 0
        %v1648 = vsel %vm215, %v1638, 0
        %1650 = vmatpush.msra.mxu0 0.0
        %1651 = vmatpush.msra.mxu0 0.0
        %1652 = vmatpush.msra.mxu0 0.0
        %1653 = vmatpush.msra.mxu0 0.0
        %1654 = vmatpush.msra.mxu0 0.0
        %1655 = vmatpush.msra.mxu0 0.0
        %1656 = vmatpush.msra.mxu0 0.0
        %1657 = vmatpush.msra.mxu0 0.0
        %1658 = vmatpush.msra.mxu0 0.0
        %1659 = vmatpush.msra.mxu0 0.0
        %1660 = vmatpush.msra.mxu0 0.0
        %1661 = vmatpush.msra.mxu0 0.0
        %1662 = vmatpush.msra.mxu0 0.0
        %1663 = vmatpush.msra.mxu0 0.0
        %1664 = vmatpush.msra.mxu0 0.0
        %1665 = vmatpush.msra.mxu0 %v1642
        %1666 = vmatmul.f32.gmra.mxu0 %v1640
        %v1667 = vpop.f32.mrf.mxu0
        %v1668 = vadd.f32 0.0, %v1667
        %1669 = vdwg.mxu0
        %1670 = vmatpush.msra.mxu0 0.0
        %1671 = vmatpush.msra.mxu0 0.0
        %1672 = vmatpush.msra.mxu0 0.0
        %1673 = vmatpush.msra.mxu0 0.0
        %1674 = vmatpush.msra.mxu0 0.0
        %1675 = vmatpush.msra.mxu0 0.0
        %1676 = vmatpush.msra.mxu0 0.0
        %1677 = vmatpush.msra.mxu0 0.0
        %1678 = vmatpush.msra.mxu0 0.0
        %1679 = vmatpush.msra.mxu0 0.0
        %1680 = vmatpush.msra.mxu0 0.0
        %1681 = vmatpush.msra.mxu0 0.0
        %1682 = vmatpush.msra.mxu0 0.0
        %1683 = vmatpush.msra.mxu0 0.0
        %1684 = vmatpush.msra.mxu0 0.0
        %1685 = vmatpush.msra.mxu0 %v1644
        %1686 = vmatmul.f32.gmra.mxu0 %v1640
        %v1687 = vpop.f32.mrf.mxu0
        %v1688 = vadd.f32 0.0, %v1687
        %1689 = vdwg.mxu0
        %1690 = vmatpush.msra.mxu0 0.0
        %1691 = vmatpush.msra.mxu0 0.0
        %1692 = vmatpush.msra.mxu0 0.0
        %1693 = vmatpush.msra.mxu0 0.0
        %1694 = vmatpush.msra.mxu0 0.0
        %1695 = vmatpush.msra.mxu0 0.0
        %1696 = vmatpush.msra.mxu0 0.0
        %1697 = vmatpush.msra.mxu0 0.0
        %1698 = vmatpush.msra.mxu0 0.0
        %1699 = vmatpush.msra.mxu0 0.0
        %1700 = vmatpush.msra.mxu0 0.0
        %1701 = vmatpush.msra.mxu0 0.0
        %1702 = vmatpush.msra.mxu0 0.0
        %1703 = vmatpush.msra.mxu0 0.0
        %1704 = vmatpush.msra.mxu0 0.0
        %1705 = vmatpush.msra.mxu0 %v1646
        %1706 = vmatmul.f32.gmra.mxu0 %v1640
        %v1707 = vpop.f32.mrf.mxu0
        %v1708 = vadd.f32 0.0, %v1707
        %1709 = vdwg.mxu0
        %1710 = vmatpush.msra.mxu0 0.0
        %1711 = vmatpush.msra.mxu0 0.0
        %1712 = vmatpush.msra.mxu0 0.0
        %1713 = vmatpush.msra.mxu0 0.0
        %1714 = vmatpush.msra.mxu0 0.0
        %1715 = vmatpush.msra.mxu0 0.0
        %1716 = vmatpush.msra.mxu0 0.0
        %1717 = vmatpush.msra.mxu0 0.0
        %1718 = vmatpush.msra.mxu0 0.0
        %1719 = vmatpush.msra.mxu0 0.0
        %1720 = vmatpush.msra.mxu0 0.0
        %1721 = vmatpush.msra.mxu0 0.0
        %1722 = vmatpush.msra.mxu0 0.0
        %1723 = vmatpush.msra.mxu0 0.0
        %1724 = vmatpush.msra.mxu0 0.0
        %1725 = vmatpush.msra.mxu0 %v1648
        %1726 = vmatmul.f32.gmra.mxu0 %v1640
        %v1727 = vpop.f32.mrf.mxu0
        %v1728 = vadd.f32 0.0, %v1727
        %1729 = vdwg.mxu0
        %v1730 = vadd.f32 %v1575, %v1668
        %v1731 = vadd.f32 %v1576, %v1688
        %v1732 = vadd.f32 %v1577, %v1708
        %v1733 = vadd.f32 %v1578, %v1728
        %v1734 = vld [vmem:[#allocation2] sm:$0xff]
        %v1735 = vld [vmem:[#allocation2 + $0x8] sm:$0xff]
        %v1736 = vld [vmem:[#allocation2 + $0x10] sm:$0xf]
        %s1737 = scalar_lea.vmem %s3, 40
        %v1738 = vld [vmem:[%s1737] sm:$0xf]
        %v1740 = vperm.slane %v1738, 0
        %v1741 = vperm.slane %v1738, 1
        %v1742 = vperm.slane %v1738, 2
        %v1743 = vperm.slane %v1738, 3
        %v1744 = vrot.slane %v1741, 4
        %v1745 = vrot.slane %v1743, 4
        %v1746 = vsel %vm215, %v1740, %v1744
        %v1747 = vsel %vm215, %v1742, %v1745
        %1748 = vrot.lane.b32.xlu0 %v1746, 120
        %v1749 = vpop.permute.xlu0 %1748
        %1750 = vrot.lane.b32.xlu0 %v1747, 120
        %v1751 = vpop.permute.xlu0 %1750
        %v1752 = vrot.slane %v1749, 4
        %v1753 = vrot.slane %v1751, 4
        %vm1754 = vcmask 982016
        %v1755 = vsel %vm1754, %v1752, %v1749
        %v1756 = vsel %vm215, %v1752, %v1753
        %v1757 = vsel %vm1754, %v1756, %v1751
        %v1761 = vmul.f32 %v1734, %v1755
        %v1762 = vmul.f32 %v1735, %v1757
        %v1763 = vmul.f32 %v1736, %v1753
        %s1764 = scalar_lea.vmem %s1, 80
        %v1765 = vld [vmem:[%s1764] sm:$0xff]
        %1769 = vst [vmem:[#allocation1] ss:$2 sm:$0xff] %v1761
        %s1770 = scalar_lea.vmem [#allocation1], 16
        %1771 = vst [vmem:[%s1770] ss:$2 sm:$0xff] %v1762
        %s1772 = scalar_lea.vmem [#allocation1], 32
        %1773 = vst [vmem:[%s1772] ss:$2 sm:$0xff] %v1763
        %v1774 = vld.sshfl [vmem:[#allocation1] sm:$0xff pattern:$0x75316420]
        %v1775 = vld.sshfl [vmem:[#allocation1 + $0x8] sm:$0xff pattern:$0x75316420]
        %v1776 = vld.sshfl [vmem:[#allocation1 + $0x10] sm:$0xff pattern:$0x75316420]
        %v1777 = vld.sshfl [vmem:[#allocation1 + $0x18] sm:$0xff pattern:$0x75316420]
        %v1778 = vld.sshfl [vmem:[#allocation1 + $0x20] sm:$0xff pattern:$0x75316420]
        %1779 = vrot.lane.b32.xlu0 %v1774, 8
        %v1780 = vpop.permute.xlu0 %1779
        %1781 = vrot.lane.b32.xlu0 %v1775, 8
        %v1782 = vpop.permute.xlu0 %1781
        %1783 = vrot.lane.b32.xlu0 %v1776, 8
        %v1784 = vpop.permute.xlu0 %1783
        %1785 = vrot.lane.b32.xlu0 %v1777, 8
        %v1786 = vpop.permute.xlu0 %1785
        %1787 = vrot.lane.b32.xlu0 %v1778, 8
        %v1788 = vpop.permute.xlu0 %1787
        %vm1789 = vcmask 64512
        %v1790 = vsel %vm1789, %v1780, %v1782
        %v1791 = vsel %vm1789, %v1782, %v1784
        %v1792 = vsel %vm1789, %v1784, %v1786
        %v1793 = vsel %vm1789, %v1786, %v1788
        %v1795 = vsel %vm292, %v1765, 0
        %v1797 = vsel %vm215, %v1790, 0
        %v1799 = vsel %vm215, %v1791, 0
        %v1801 = vsel %vm215, %v1792, 0
        %v1803 = vsel %vm215, %v1793, 0
        %1805 = vmatpush.msra.mxu0 0.0
        %1806 = vmatpush.msra.mxu0 0.0
        %1807 = vmatpush.msra.mxu0 0.0
        %1808 = vmatpush.msra.mxu0 0.0
        %1809 = vmatpush.msra.mxu0 0.0
        %1810 = vmatpush.msra.mxu0 0.0
        %1811 = vmatpush.msra.mxu0 0.0
        %1812 = vmatpush.msra.mxu0 0.0
        %1813 = vmatpush.msra.mxu0 0.0
        %1814 = vmatpush.msra.mxu0 0.0
        %1815 = vmatpush.msra.mxu0 0.0
        %1816 = vmatpush.msra.mxu0 0.0
        %1817 = vmatpush.msra.mxu0 0.0
        %1818 = vmatpush.msra.mxu0 0.0
        %1819 = vmatpush.msra.mxu0 0.0
        %1820 = vmatpush.msra.mxu0 %v1797
        %1821 = vmatmul.f32.gmra.mxu0 %v1795
        %v1822 = vpop.f32.mrf.mxu0
        %v1823 = vadd.f32 0.0, %v1822
        %1824 = vdwg.mxu0
        %1825 = vmatpush.msra.mxu0 0.0
        %1826 = vmatpush.msra.mxu0 0.0
        %1827 = vmatpush.msra.mxu0 0.0
        %1828 = vmatpush.msra.mxu0 0.0
        %1829 = vmatpush.msra.mxu0 0.0
        %1830 = vmatpush.msra.mxu0 0.0
        %1831 = vmatpush.msra.mxu0 0.0
        %1832 = vmatpush.msra.mxu0 0.0
        %1833 = vmatpush.msra.mxu0 0.0
        %1834 = vmatpush.msra.mxu0 0.0
        %1835 = vmatpush.msra.mxu0 0.0
        %1836 = vmatpush.msra.mxu0 0.0
        %1837 = vmatpush.msra.mxu0 0.0
        %1838 = vmatpush.msra.mxu0 0.0
        %1839 = vmatpush.msra.mxu0 0.0
        %1840 = vmatpush.msra.mxu0 %v1799
        %1841 = vmatmul.f32.gmra.mxu0 %v1795
        %v1842 = vpop.f32.mrf.mxu0
        %v1843 = vadd.f32 0.0, %v1842
        %1844 = vdwg.mxu0
        %1845 = vmatpush.msra.mxu0 0.0
        %1846 = vmatpush.msra.mxu0 0.0
        %1847 = vmatpush.msra.mxu0 0.0
        %1848 = vmatpush.msra.mxu0 0.0
        %1849 = vmatpush.msra.mxu0 0.0
        %1850 = vmatpush.msra.mxu0 0.0
        %1851 = vmatpush.msra.mxu0 0.0
        %1852 = vmatpush.msra.mxu0 0.0
        %1853 = vmatpush.msra.mxu0 0.0
        %1854 = vmatpush.msra.mxu0 0.0
        %1855 = vmatpush.msra.mxu0 0.0
        %1856 = vmatpush.msra.mxu0 0.0
        %1857 = vmatpush.msra.mxu0 0.0
        %1858 = vmatpush.msra.mxu0 0.0
        %1859 = vmatpush.msra.mxu0 0.0
        %1860 = vmatpush.msra.mxu0 %v1801
        %1861 = vmatmul.f32.gmra.mxu0 %v1795
        %v1862 = vpop.f32.mrf.mxu0
        %v1863 = vadd.f32 0.0, %v1862
        %1864 = vdwg.mxu0
        %1865 = vmatpush.msra.mxu0 0.0
        %1866 = vmatpush.msra.mxu0 0.0
        %1867 = vmatpush.msra.mxu0 0.0
        %1868 = vmatpush.msra.mxu0 0.0
        %1869 = vmatpush.msra.mxu0 0.0
        %1870 = vmatpush.msra.mxu0 0.0
        %1871 = vmatpush.msra.mxu0 0.0
        %1872 = vmatpush.msra.mxu0 0.0
        %1873 = vmatpush.msra.mxu0 0.0
        %1874 = vmatpush.msra.mxu0 0.0
        %1875 = vmatpush.msra.mxu0 0.0
        %1876 = vmatpush.msra.mxu0 0.0
        %1877 = vmatpush.msra.mxu0 0.0
        %1878 = vmatpush.msra.mxu0 0.0
        %1879 = vmatpush.msra.mxu0 0.0
        %1880 = vmatpush.msra.mxu0 %v1803
        %1881 = vmatmul.f32.gmra.mxu0 %v1795
        %v1882 = vpop.f32.mrf.mxu0
        %v1883 = vadd.f32 0.0, %v1882
        %1884 = vdwg.mxu0
        %v1885 = vadd.f32 %v1730, %v1823
        %v1886 = vadd.f32 %v1731, %v1843
        %v1887 = vadd.f32 %v1732, %v1863
        %v1888 = vadd.f32 %v1733, %v1883
        %v1889 = vld [vmem:[#allocation2] sm:$0xff]
        %v1890 = vld [vmem:[#allocation2 + $0x8] sm:$0xff]
        %v1891 = vld [vmem:[#allocation2 + $0x10] sm:$0xf]
        %s1892 = scalar_lea.vmem %s3, 44
        %v1893 = vld [vmem:[%s1892] sm:$0xf]
        %v1895 = vperm.slane %v1893, 0
        %v1896 = vperm.slane %v1893, 1
        %v1897 = vperm.slane %v1893, 2
        %v1898 = vperm.slane %v1893, 3
        %v1899 = vrot.slane %v1896, 4
        %v1900 = vrot.slane %v1898, 4
        %v1901 = vsel %vm215, %v1895, %v1899
        %v1902 = vsel %vm215, %v1897, %v1900
        %1903 = vrot.lane.b32.xlu0 %v1901, 121
        %v1904 = vpop.permute.xlu0 %1903
        %1905 = vrot.lane.b32.xlu0 %v1902, 121
        %v1906 = vpop.permute.xlu0 %1905
        %v1907 = vrot.slane %v1904, 4
        %v1908 = vrot.slane %v1906, 4
        %vm1909 = vcmask 990208
        %v1910 = vsel %vm1909, %v1907, %v1904
        %v1911 = vsel %vm215, %v1907, %v1908
        %v1912 = vsel %vm1909, %v1911, %v1906
        %v1916 = vmul.f32 %v1889, %v1910
        %v1917 = vmul.f32 %v1890, %v1912
        %v1918 = vmul.f32 %v1891, %v1908
        %s1919 = scalar_lea.vmem %s1, 88
        %v1920 = vld [vmem:[%s1919] sm:$0xff]
        %1924 = vst [vmem:[#allocation1] ss:$2 sm:$0xff] %v1916
        %s1925 = scalar_lea.vmem [#allocation1], 16
        %1926 = vst [vmem:[%s1925] ss:$2 sm:$0xff] %v1917
        %s1927 = scalar_lea.vmem [#allocation1], 32
        %1928 = vst [vmem:[%s1927] ss:$2 sm:$0xff] %v1918
        %v1929 = vld.sshfl [vmem:[#allocation1] sm:$0xff pattern:$0x75316420]
        %v1930 = vld.sshfl [vmem:[#allocation1 + $0x8] sm:$0xff pattern:$0x75316420]
        %v1931 = vld.sshfl [vmem:[#allocation1 + $0x10] sm:$0xff pattern:$0x75316420]
        %v1932 = vld.sshfl [vmem:[#allocation1 + $0x18] sm:$0xff pattern:$0x75316420]
        %v1933 = vld.sshfl [vmem:[#allocation1 + $0x20] sm:$0xff pattern:$0x75316420]
        %1934 = vrot.lane.b32.xlu0 %v1929, 7
        %v1935 = vpop.permute.xlu0 %1934
        %1936 = vrot.lane.b32.xlu0 %v1930, 7
        %v1937 = vpop.permute.xlu0 %1936
        %1938 = vrot.lane.b32.xlu0 %v1931, 7
        %v1939 = vpop.permute.xlu0 %1938
        %1940 = vrot.lane.b32.xlu0 %v1932, 7
        %v1941 = vpop.permute.xlu0 %1940
        %1942 = vrot.lane.b32.xlu0 %v1933, 7
        %v1943 = vpop.permute.xlu0 %1942
        %vm1944 = vcmask 56320
        %v1945 = vsel %vm1944, %v1935, %v1937
        %v1946 = vsel %vm1944, %v1937, %v1939
        %v1947 = vsel %vm1944, %v1939, %v1941
        %v1948 = vsel %vm1944, %v1941, %v1943
        %v1950 = vsel %vm292, %v1920, 0
        %v1952 = vsel %vm215, %v1945, 0
        %v1954 = vsel %vm215, %v1946, 0
        %v1956 = vsel %vm215, %v1947, 0
        %v1958 = vsel %vm215, %v1948, 0
        %1960 = vmatpush.msra.mxu0 0.0
        %1961 = vmatpush.msra.mxu0 0.0
        %1962 = vmatpush.msra.mxu0 0.0
        %1963 = vmatpush.msra.mxu0 0.0
        %1964 = vmatpush.msra.mxu0 0.0
        %1965 = vmatpush.msra.mxu0 0.0
        %1966 = vmatpush.msra.mxu0 0.0
        %1967 = vmatpush.msra.mxu0 0.0
        %1968 = vmatpush.msra.mxu0 0.0
        %1969 = vmatpush.msra.mxu0 0.0
        %1970 = vmatpush.msra.mxu0 0.0
        %1971 = vmatpush.msra.mxu0 0.0
        %1972 = vmatpush.msra.mxu0 0.0
        %1973 = vmatpush.msra.mxu0 0.0
        %1974 = vmatpush.msra.mxu0 0.0
        %1975 = vmatpush.msra.mxu0 %v1952
        %1976 = vmatmul.f32.gmra.mxu0 %v1950
        %v1977 = vpop.f32.mrf.mxu0
        %v1978 = vadd.f32 0.0, %v1977
        %1979 = vdwg.mxu0
        %1980 = vmatpush.msra.mxu0 0.0
        %1981 = vmatpush.msra.mxu0 0.0
        %1982 = vmatpush.msra.mxu0 0.0
        %1983 = vmatpush.msra.mxu0 0.0
        %1984 = vmatpush.msra.mxu0 0.0
        %1985 = vmatpush.msra.mxu0 0.0
        %1986 = vmatpush.msra.mxu0 0.0
        %1987 = vmatpush.msra.mxu0 0.0
        %1988 = vmatpush.msra.mxu0 0.0
        %1989 = vmatpush.msra.mxu0 0.0
        %1990 = vmatpush.msra.mxu0 0.0
        %1991 = vmatpush.msra.mxu0 0.0
        %1992 = vmatpush.msra.mxu0 0.0
        %1993 = vmatpush.msra.mxu0 0.0
        %1994 = vmatpush.msra.mxu0 0.0
        %1995 = vmatpush.msra.mxu0 %v1954
        %1996 = vmatmul.f32.gmra.mxu0 %v1950
        %v1997 = vpop.f32.mrf.mxu0
        %v1998 = vadd.f32 0.0, %v1997
        %1999 = vdwg.mxu0
        %2000 = vmatpush.msra.mxu0 0.0
        %2001 = vmatpush.msra.mxu0 0.0
        %2002 = vmatpush.msra.mxu0 0.0
        %2003 = vmatpush.msra.mxu0 0.0
        %2004 = vmatpush.msra.mxu0 0.0
        %2005 = vmatpush.msra.mxu0 0.0
        %2006 = vmatpush.msra.mxu0 0.0
        %2007 = vmatpush.msra.mxu0 0.0
        %2008 = vmatpush.msra.mxu0 0.0
        %2009 = vmatpush.msra.mxu0 0.0
        %2010 = vmatpush.msra.mxu0 0.0
        %2011 = vmatpush.msra.mxu0 0.0
        %2012 = vmatpush.msra.mxu0 0.0
        %2013 = vmatpush.msra.mxu0 0.0
        %2014 = vmatpush.msra.mxu0 0.0
        %2015 = vmatpush.msra.mxu0 %v1956
        %2016 = vmatmul.f32.gmra.mxu0 %v1950
        %v2017 = vpop.f32.mrf.mxu0
        %v2018 = vadd.f32 0.0, %v2017
        %2019 = vdwg.mxu0
        %2020 = vmatpush.msra.mxu0 0.0
        %2021 = vmatpush.msra.mxu0 0.0
        %2022 = vmatpush.msra.mxu0 0.0
        %2023 = vmatpush.msra.mxu0 0.0
        %2024 = vmatpush.msra.mxu0 0.0
        %2025 = vmatpush.msra.mxu0 0.0
        %2026 = vmatpush.msra.mxu0 0.0
        %2027 = vmatpush.msra.mxu0 0.0
        %2028 = vmatpush.msra.mxu0 0.0
        %2029 = vmatpush.msra.mxu0 0.0
        %2030 = vmatpush.msra.mxu0 0.0
        %2031 = vmatpush.msra.mxu0 0.0
        %2032 = vmatpush.msra.mxu0 0.0
        %2033 = vmatpush.msra.mxu0 0.0
        %2034 = vmatpush.msra.mxu0 0.0
        %2035 = vmatpush.msra.mxu0 %v1958
        %2036 = vmatmul.f32.gmra.mxu0 %v1950
        %v2037 = vpop.f32.mrf.mxu0
        %v2038 = vadd.f32 0.0, %v2037
        %2039 = vdwg.mxu0
        %v2040 = vadd.f32 %v1885, %v1978
        %v2041 = vadd.f32 %v1886, %v1998
        %v2042 = vadd.f32 %v1887, %v2018
        %v2043 = vadd.f32 %v1888, %v2038
        %v2044 = vld [vmem:[#allocation2] sm:$0xff]
        %v2045 = vld [vmem:[#allocation2 + $0x8] sm:$0xff]
        %v2046 = vld [vmem:[#allocation2 + $0x10] sm:$0xf]
        %s2047 = scalar_lea.vmem %s3, 48
        %v2048 = vld [vmem:[%s2047] sm:$0xf]
        %v2050 = vperm.slane %v2048, 0
        %v2051 = vperm.slane %v2048, 1
        %v2052 = vperm.slane %v2048, 2
        %v2053 = vperm.slane %v2048, 3
        %v2054 = vrot.slane %v2051, 4
        %v2055 = vrot.slane %v2053, 4
        %v2056 = vsel %vm215, %v2050, %v2054
        %v2057 = vsel %vm215, %v2052, %v2055
        %2058 = vrot.lane.b32.xlu0 %v2056, 127
        %v2059 = vpop.permute.xlu0 %2058
        %2060 = vrot.lane.b32.xlu0 %v2057, 127
        %v2061 = vpop.permute.xlu0 %2060
        %v2062 = vrot.slane %v2059, 4
        %v2063 = vrot.slane %v2061, 4
        %vm2064 = vcmask 1039360
        %v2065 = vsel %vm2064, %v2062, %v2059
        %v2066 = vsel %vm215, %v2062, %v2063
        %v2067 = vsel %vm2064, %v2066, %v2061
        %v2071 = vmul.f32 %v2044, %v2065
        %v2072 = vmul.f32 %v2045, %v2067
        %v2073 = vmul.f32 %v2046, %v2063
        %s2074 = scalar_lea.vmem %s1, 96
        %v2075 = vld [vmem:[%s2074] sm:$0xff]
        %2079 = vst [vmem:[#allocation1] ss:$2 sm:$0xff] %v2071
        %s2080 = scalar_lea.vmem [#allocation1], 16
        %2081 = vst [vmem:[%s2080] ss:$2 sm:$0xff] %v2072
        %s2082 = scalar_lea.vmem [#allocation1], 32
        %2083 = vst [vmem:[%s2082] ss:$2 sm:$0xff] %v2073
        %v2084 = vld.sshfl [vmem:[#allocation1] sm:$0xff pattern:$0x75316420]
        %v2085 = vld.sshfl [vmem:[#allocation1 + $0x8] sm:$0xff pattern:$0x75316420]
        %v2086 = vld.sshfl [vmem:[#allocation1 + $0x10] sm:$0xff pattern:$0x75316420]
        %v2087 = vld.sshfl [vmem:[#allocation1 + $0x18] sm:$0xff pattern:$0x75316420]
        %v2088 = vld.sshfl [vmem:[#allocation1 + $0x20] sm:$0xff pattern:$0x75316420]
        %2089 = vrot.lane.b32.xlu0 %v2084, 1
        %v2090 = vpop.permute.xlu0 %2089
        %2091 = vrot.lane.b32.xlu0 %v2085, 1
        %v2092 = vpop.permute.xlu0 %2091
        %2093 = vrot.lane.b32.xlu0 %v2086, 1
        %v2094 = vpop.permute.xlu0 %2093
        %2095 = vrot.lane.b32.xlu0 %v2087, 1
        %v2096 = vpop.permute.xlu0 %2095
        %2097 = vrot.lane.b32.xlu0 %v2088, 1
        %v2098 = vpop.permute.xlu0 %2097
        %vm2099 = vcmask 7168
        %v2100 = vsel %vm2099, %v2090, %v2092
        %v2101 = vsel %vm2099, %v2092, %v2094
        %v2102 = vsel %vm2099, %v2094, %v2096
        %v2103 = vsel %vm2099, %v2096, %v2098
        %v2105 = vsel %vm292, %v2075, 0
        %v2107 = vsel %vm215, %v2100, 0
        %v2109 = vsel %vm215, %v2101, 0
        %v2111 = vsel %vm215, %v2102, 0
        %v2113 = vsel %vm215, %v2103, 0
        %2115 = vmatpush.msra.mxu0 0.0
        %2116 = vmatpush.msra.mxu0 0.0
        %2117 = vmatpush.msra.mxu0 0.0
        %2118 = vmatpush.msra.mxu0 0.0
        %2119 = vmatpush.msra.mxu0 0.0
        %2120 = vmatpush.msra.mxu0 0.0
        %2121 = vmatpush.msra.mxu0 0.0
        %2122 = vmatpush.msra.mxu0 0.0
        %2123 = vmatpush.msra.mxu0 0.0
        %2124 = vmatpush.msra.mxu0 0.0
        %2125 = vmatpush.msra.mxu0 0.0
        %2126 = vmatpush.msra.mxu0 0.0
        %2127 = vmatpush.msra.mxu0 0.0
        %2128 = vmatpush.msra.mxu0 0.0
        %2129 = vmatpush.msra.mxu0 0.0
        %2130 = vmatpush.msra.mxu0 %v2107
        %2131 = vmatmul.f32.gmra.mxu0 %v2105
        %v2132 = vpop.f32.mrf.mxu0
        %v2133 = vadd.f32 0.0, %v2132
        %2134 = vdwg.mxu0
        %2135 = vmatpush.msra.mxu0 0.0
        %2136 = vmatpush.msra.mxu0 0.0
        %2137 = vmatpush.msra.mxu0 0.0
        %2138 = vmatpush.msra.mxu0 0.0
        %2139 = vmatpush.msra.mxu0 0.0
        %2140 = vmatpush.msra.mxu0 0.0
        %2141 = vmatpush.msra.mxu0 0.0
        %2142 = vmatpush.msra.mxu0 0.0
        %2143 = vmatpush.msra.mxu0 0.0
        %2144 = vmatpush.msra.mxu0 0.0
        %2145 = vmatpush.msra.mxu0 0.0
        %2146 = vmatpush.msra.mxu0 0.0
        %2147 = vmatpush.msra.mxu0 0.0
        %2148 = vmatpush.msra.mxu0 0.0
        %2149 = vmatpush.msra.mxu0 0.0
        %2150 = vmatpush.msra.mxu0 %v2109
        %2151 = vmatmul.f32.gmra.mxu0 %v2105
        %v2152 = vpop.f32.mrf.mxu0
        %v2153 = vadd.f32 0.0, %v2152
        %2154 = vdwg.mxu0
        %2155 = vmatpush.msra.mxu0 0.0
        %2156 = vmatpush.msra.mxu0 0.0
        %2157 = vmatpush.msra.mxu0 0.0
        %2158 = vmatpush.msra.mxu0 0.0
        %2159 = vmatpush.msra.mxu0 0.0
        %2160 = vmatpush.msra.mxu0 0.0
        %2161 = vmatpush.msra.mxu0 0.0
        %2162 = vmatpush.msra.mxu0 0.0
        %2163 = vmatpush.msra.mxu0 0.0
        %2164 = vmatpush.msra.mxu0 0.0
        %2165 = vmatpush.msra.mxu0 0.0
        %2166 = vmatpush.msra.mxu0 0.0
        %2167 = vmatpush.msra.mxu0 0.0
        %2168 = vmatpush.msra.mxu0 0.0
        %2169 = vmatpush.msra.mxu0 0.0
        %2170 = vmatpush.msra.mxu0 %v2111
        %2171 = vmatmul.f32.gmra.mxu0 %v2105
        %v2172 = vpop.f32.mrf.mxu0
        %v2173 = vadd.f32 0.0, %v2172
        %2174 = vdwg.mxu0
        %2175 = vmatpush.msra.mxu0 0.0
        %2176 = vmatpush.msra.mxu0 0.0
        %2177 = vmatpush.msra.mxu0 0.0
        %2178 = vmatpush.msra.mxu0 0.0
        %2179 = vmatpush.msra.mxu0 0.0
        %2180 = vmatpush.msra.mxu0 0.0
        %2181 = vmatpush.msra.mxu0 0.0
        %2182 = vmatpush.msra.mxu0 0.0
        %2183 = vmatpush.msra.mxu0 0.0
        %2184 = vmatpush.msra.mxu0 0.0
        %2185 = vmatpush.msra.mxu0 0.0
        %2186 = vmatpush.msra.mxu0 0.0
        %2187 = vmatpush.msra.mxu0 0.0
        %2188 = vmatpush.msra.mxu0 0.0
        %2189 = vmatpush.msra.mxu0 0.0
        %2190 = vmatpush.msra.mxu0 %v2113
        %2191 = vmatmul.f32.gmra.mxu0 %v2105
        %v2192 = vpop.f32.mrf.mxu0
        %v2193 = vadd.f32 0.0, %v2192
        %2194 = vdwg.mxu0
        %v2195 = vadd.f32 %v2040, %v2133
        %v2196 = vadd.f32 %v2041, %v2153
        %v2197 = vadd.f32 %v2042, %v2173
        %v2198 = vadd.f32 %v2043, %v2193
        %v2199 = vld [vmem:[#allocation2 + $0x4] sm:$0xff]
        %v2200 = vld [vmem:[#allocation2 + $0xc] sm:$0xff]
        %s2201 = scalar_lea.vmem %s3, 52
        %v2202 = vld [vmem:[%s2201] sm:$0xf]
        %v2204 = vperm.slane %v2202, 0
        %v2205 = vperm.slane %v2202, 1
        %v2206 = vperm.slane %v2202, 2
        %v2207 = vperm.slane %v2202, 3
        %v2208 = vrot.slane %v2205, 4
        %v2209 = vrot.slane %v2207, 4
        %v2210 = vsel %vm215, %v2204, %v2208
        %v2211 = vsel %vm215, %v2206, %v2209
        %v2214 = vmul.f32 %v2199, %v2210
        %v2215 = vmul.f32 %v2200, %v2211
        %s2216 = scalar_lea.vmem %s1, 104
        %v2217 = vld [vmem:[%s2216] sm:$0xff]
        %2220 = vst [vmem:[#allocation1] ss:$2 sm:$0xff] %v2214
        %s2221 = scalar_lea.vmem [#allocation1], 16
        %2222 = vst [vmem:[%s2221] ss:$2 sm:$0xff] %v2215
        %v2223 = vld.sshfl [vmem:[#allocation1] sm:$0xff pattern:$0x75316420]
        %v2224 = vld.sshfl [vmem:[#allocation1 + $0x8] sm:$0xff pattern:$0x75316420]
        %v2225 = vld.sshfl [vmem:[#allocation1 + $0x10] sm:$0xff pattern:$0x75316420]
        %v2226 = vld.sshfl [vmem:[#allocation1 + $0x18] sm:$0xff pattern:$0x75316420]
        %v2228 = vsel %vm292, %v2217, 0
        %v2230 = vsel %vm215, %v2223, 0
        %v2232 = vsel %vm215, %v2224, 0
        %v2234 = vsel %vm215, %v2225, 0
        %v2236 = vsel %vm215, %v2226, 0
        %2238 = vmatpush.msra.mxu0 0.0
        %2239 = vmatpush.msra.mxu0 0.0
        %2240 = vmatpush.msra.mxu0 0.0
        %2241 = vmatpush.msra.mxu0 0.0
        %2242 = vmatpush.msra.mxu0 0.0
        %2243 = vmatpush.msra.mxu0 0.0
        %2244 = vmatpush.msra.mxu0 0.0
        %2245 = vmatpush.msra.mxu0 0.0
        %2246 = vmatpush.msra.mxu0 0.0
        %2247 = vmatpush.msra.mxu0 0.0
        %2248 = vmatpush.msra.mxu0 0.0
        %2249 = vmatpush.msra.mxu0 0.0
        %2250 = vmatpush.msra.mxu0 0.0
        %2251 = vmatpush.msra.mxu0 0.0
        %2252 = vmatpush.msra.mxu0 0.0
        %2253 = vmatpush.msra.mxu0 %v2230
        %2254 = vmatmul.f32.gmra.mxu0 %v2228
        %v2255 = vpop.f32.mrf.mxu0
        %v2256 = vadd.f32 0.0, %v2255
        %2257 = vdwg.mxu0
        %2258 = vmatpush.msra.mxu0 0.0
        %2259 = vmatpush.msra.mxu0 0.0
        %2260 = vmatpush.msra.mxu0 0.0
        %2261 = vmatpush.msra.mxu0 0.0
        %2262 = vmatpush.msra.mxu0 0.0
        %2263 = vmatpush.msra.mxu0 0.0
        %2264 = vmatpush.msra.mxu0 0.0
        %2265 = vmatpush.msra.mxu0 0.0
        %2266 = vmatpush.msra.mxu0 0.0
        %2267 = vmatpush.msra.mxu0 0.0
        %2268 = vmatpush.msra.mxu0 0.0
        %2269 = vmatpush.msra.mxu0 0.0
        %2270 = vmatpush.msra.mxu0 0.0
        %2271 = vmatpush.msra.mxu0 0.0
        %2272 = vmatpush.msra.mxu0 0.0
        %2273 = vmatpush.msra.mxu0 %v2232
        %2274 = vmatmul.f32.gmra.mxu0 %v2228
        %v2275 = vpop.f32.mrf.mxu0
        %v2276 = vadd.f32 0.0, %v2275
        %2277 = vdwg.mxu0
        %2278 = vmatpush.msra.mxu0 0.0
        %2279 = vmatpush.msra.mxu0 0.0
        %2280 = vmatpush.msra.mxu0 0.0
        %2281 = vmatpush.msra.mxu0 0.0
        %2282 = vmatpush.msra.mxu0 0.0
        %2283 = vmatpush.msra.mxu0 0.0
        %2284 = vmatpush.msra.mxu0 0.0
        %2285 = vmatpush.msra.mxu0 0.0
        %2286 = vmatpush.msra.mxu0 0.0
        %2287 = vmatpush.msra.mxu0 0.0
        %2288 = vmatpush.msra.mxu0 0.0
        %2289 = vmatpush.msra.mxu0 0.0
        %2290 = vmatpush.msra.mxu0 0.0
        %2291 = vmatpush.msra.mxu0 0.0
        %2292 = vmatpush.msra.mxu0 0.0
        %2293 = vmatpush.msra.mxu0 %v2234
        %2294 = vmatmul.f32.gmra.mxu0 %v2228
        %v2295 = vpop.f32.mrf.mxu0
        %v2296 = vadd.f32 0.0, %v2295
        %2297 = vdwg.mxu0
        %2298 = vmatpush.msra.mxu0 0.0
        %2299 = vmatpush.msra.mxu0 0.0
        %2300 = vmatpush.msra.mxu0 0.0
        %2301 = vmatpush.msra.mxu0 0.0
        %2302 = vmatpush.msra.mxu0 0.0
        %2303 = vmatpush.msra.mxu0 0.0
        %2304 = vmatpush.msra.mxu0 0.0
        %2305 = vmatpush.msra.mxu0 0.0
        %2306 = vmatpush.msra.mxu0 0.0
        %2307 = vmatpush.msra.mxu0 0.0
        %2308 = vmatpush.msra.mxu0 0.0
        %2309 = vmatpush.msra.mxu0 0.0
        %2310 = vmatpush.msra.mxu0 0.0
        %2311 = vmatpush.msra.mxu0 0.0
        %2312 = vmatpush.msra.mxu0 0.0
        %2313 = vmatpush.msra.mxu0 %v2236
        %2314 = vmatmul.f32.gmra.mxu0 %v2228
        %v2315 = vpop.f32.mrf.mxu0
        %v2316 = vadd.f32 0.0, %v2315
        %2317 = vdwg.mxu0
        %v2318 = vadd.f32 %v2195, %v2256
        %v2319 = vadd.f32 %v2196, %v2276
        %v2320 = vadd.f32 %v2197, %v2296
        %v2321 = vadd.f32 %v2198, %v2316
        %v2322 = vld [vmem:[#allocation2 + $0x4] sm:$0xff]
        %v2323 = vld [vmem:[#allocation2 + $0xc] sm:$0xff]
        %v2324 = vld [vmem:[#allocation2 + $0x14] sm:$0xf]
        %s2325 = scalar_lea.vmem %s3, 56
        %v2326 = vld [vmem:[%s2325] sm:$0xf]
        %v2328 = vperm.slane %v2326, 0
        %v2329 = vperm.slane %v2326, 1
        %v2330 = vperm.slane %v2326, 2
        %v2331 = vperm.slane %v2326, 3
        %v2332 = vrot.slane %v2329, 4
        %v2333 = vrot.slane %v2331, 4
        %v2334 = vsel %vm215, %v2328, %v2332
        %v2335 = vsel %vm215, %v2330, %v2333
        %2336 = vrot.lane.b32.xlu0 %v2334, 1
        %v2337 = vpop.permute.xlu0 %2336
        %2338 = vrot.lane.b32.xlu0 %v2335, 1
        %v2339 = vpop.permute.xlu0 %2338
        %v2340 = vrot.slane %v2337, 4
        %v2341 = vrot.slane %v2339, 4
        %v2342 = vsel %vm2099, %v2340, %v2337
        %v2343 = vsel %vm215, %v2340, %v2341
        %v2344 = vsel %vm2099, %v2343, %v2339
        %v2348 = vmul.f32 %v2322, %v2342
        %v2349 = vmul.f32 %v2323, %v2344
        %v2350 = vmul.f32 %v2324, %v2341
        %s2351 = scalar_lea.vmem %s1, 112
        %v2352 = vld [vmem:[%s2351] sm:$0xff]
        %2356 = vst [vmem:[#allocation1] ss:$2 sm:$0xff] %v2348
        %s2357 = scalar_lea.vmem [#allocation1], 16
        %2358 = vst [vmem:[%s2357] ss:$2 sm:$0xff] %v2349
        %s2359 = scalar_lea.vmem [#allocation1], 32
        %2360 = vst [vmem:[%s2359] ss:$2 sm:$0xff] %v2350
        %v2361 = vld.sshfl [vmem:[#allocation1] sm:$0xff pattern:$0x75316420]
        %v2362 = vld.sshfl [vmem:[#allocation1 + $0x8] sm:$0xff pattern:$0x75316420]
        %v2363 = vld.sshfl [vmem:[#allocation1 + $0x10] sm:$0xff pattern:$0x75316420]
        %v2364 = vld.sshfl [vmem:[#allocation1 + $0x18] sm:$0xff pattern:$0x75316420]
        %v2365 = vld.sshfl [vmem:[#allocation1 + $0x20] sm:$0xff pattern:$0x75316420]
        %2366 = vrot.lane.b32.xlu0 %v2361, 127
        %v2367 = vpop.permute.xlu0 %2366
        %2368 = vrot.lane.b32.xlu0 %v2362, 127
        %v2369 = vpop.permute.xlu0 %2368
        %2370 = vrot.lane.b32.xlu0 %v2363, 127
        %v2371 = vpop.permute.xlu0 %2370
        %2372 = vrot.lane.b32.xlu0 %v2364, 127
        %v2373 = vpop.permute.xlu0 %2372
        %2374 = vrot.lane.b32.xlu0 %v2365, 127
        %v2375 = vpop.permute.xlu0 %2374
        %v2376 = vsel %vm2064, %v2367, %v2369
        %v2377 = vsel %vm2064, %v2369, %v2371
        %v2378 = vsel %vm2064, %v2371, %v2373
        %v2379 = vsel %vm2064, %v2373, %v2375
        %v2381 = vsel %vm292, %v2352, 0
        %v2383 = vsel %vm215, %v2376, 0
        %v2385 = vsel %vm215, %v2377, 0
        %v2387 = vsel %vm215, %v2378, 0
        %v2389 = vsel %vm215, %v2379, 0
        %2391 = vmatpush.msra.mxu0 0.0
        %2392 = vmatpush.msra.mxu0 0.0
        %2393 = vmatpush.msra.mxu0 0.0
        %2394 = vmatpush.msra.mxu0 0.0
        %2395 = vmatpush.msra.mxu0 0.0
        %2396 = vmatpush.msra.mxu0 0.0
        %2397 = vmatpush.msra.mxu0 0.0
        %2398 = vmatpush.msra.mxu0 0.0
        %2399 = vmatpush.msra.mxu0 0.0
        %2400 = vmatpush.msra.mxu0 0.0
        %2401 = vmatpush.msra.mxu0 0.0
        %2402 = vmatpush.msra.mxu0 0.0
        %2403 = vmatpush.msra.mxu0 0.0
        %2404 = vmatpush.msra.mxu0 0.0
        %2405 = vmatpush.msra.mxu0 0.0
        %2406 = vmatpush.msra.mxu0 %v2383
        %2407 = vmatmul.f32.gmra.mxu0 %v2381
        %v2408 = vpop.f32.mrf.mxu0
        %v2409 = vadd.f32 0.0, %v2408
        %2410 = vdwg.mxu0
        %2411 = vmatpush.msra.mxu0 0.0
        %2412 = vmatpush.msra.mxu0 0.0
        %2413 = vmatpush.msra.mxu0 0.0
        %2414 = vmatpush.msra.mxu0 0.0
        %2415 = vmatpush.msra.mxu0 0.0
        %2416 = vmatpush.msra.mxu0 0.0
        %2417 = vmatpush.msra.mxu0 0.0
        %2418 = vmatpush.msra.mxu0 0.0
        %2419 = vmatpush.msra.mxu0 0.0
        %2420 = vmatpush.msra.mxu0 0.0
        %2421 = vmatpush.msra.mxu0 0.0
        %2422 = vmatpush.msra.mxu0 0.0
        %2423 = vmatpush.msra.mxu0 0.0
        %2424 = vmatpush.msra.mxu0 0.0
        %2425 = vmatpush.msra.mxu0 0.0
        %2426 = vmatpush.msra.mxu0 %v2385
        %2427 = vmatmul.f32.gmra.mxu0 %v2381
        %v2428 = vpop.f32.mrf.mxu0
        %v2429 = vadd.f32 0.0, %v2428
        %2430 = vdwg.mxu0
        %2431 = vmatpush.msra.mxu0 0.0
        %2432 = vmatpush.msra.mxu0 0.0
        %2433 = vmatpush.msra.mxu0 0.0
        %2434 = vmatpush.msra.mxu0 0.0
        %2435 = vmatpush.msra.mxu0 0.0
        %2436 = vmatpush.msra.mxu0 0.0
        %2437 = vmatpush.msra.mxu0 0.0
        %2438 = vmatpush.msra.mxu0 0.0
        %2439 = vmatpush.msra.mxu0 0.0
        %2440 = vmatpush.msra.mxu0 0.0
        %2441 = vmatpush.msra.mxu0 0.0
        %2442 = vmatpush.msra.mxu0 0.0
        %2443 = vmatpush.msra.mxu0 0.0
        %2444 = vmatpush.msra.mxu0 0.0
        %2445 = vmatpush.msra.mxu0 0.0
        %2446 = vmatpush.msra.mxu0 %v2387
        %2447 = vmatmul.f32.gmra.mxu0 %v2381
        %v2448 = vpop.f32.mrf.mxu0
        %v2449 = vadd.f32 0.0, %v2448
        %2450 = vdwg.mxu0
        %2451 = vmatpush.msra.mxu0 0.0
        %2452 = vmatpush.msra.mxu0 0.0
        %2453 = vmatpush.msra.mxu0 0.0
        %2454 = vmatpush.msra.mxu0 0.0
        %2455 = vmatpush.msra.mxu0 0.0
        %2456 = vmatpush.msra.mxu0 0.0
        %2457 = vmatpush.msra.mxu0 0.0
        %2458 = vmatpush.msra.mxu0 0.0
        %2459 = vmatpush.msra.mxu0 0.0
        %2460 = vmatpush.msra.mxu0 0.0
        %2461 = vmatpush.msra.mxu0 0.0
        %2462 = vmatpush.msra.mxu0 0.0
        %2463 = vmatpush.msra.mxu0 0.0
        %2464 = vmatpush.msra.mxu0 0.0
        %2465 = vmatpush.msra.mxu0 0.0
        %2466 = vmatpush.msra.mxu0 %v2389
        %2467 = vmatmul.f32.gmra.mxu0 %v2381
        %v2468 = vpop.f32.mrf.mxu0
        %v2469 = vadd.f32 0.0, %v2468
        %2470 = vdwg.mxu0
        %v2471 = vadd.f32 %v2318, %v2409
        %v2472 = vadd.f32 %v2319, %v2429
        %v2473 = vadd.f32 %v2320, %v2449
        %v2474 = vadd.f32 %v2321, %v2469
        %v2475 = vld [vmem:[#allocation2 + $0x4] sm:$0xff]
        %v2476 = vld [vmem:[#allocation2 + $0xc] sm:$0xff]
        %v2477 = vld [vmem:[#allocation2 + $0x14] sm:$0xf]
        %s2478 = scalar_lea.vmem %s3, 60
        %v2479 = vld [vmem:[%s2478] sm:$0xf]
        %v2481 = vperm.slane %v2479, 0
        %v2482 = vperm.slane %v2479, 1
        %v2483 = vperm.slane %v2479, 2
        %v2484 = vperm.slane %v2479, 3
        %v2485 = vrot.slane %v2482, 4
        %v2486 = vrot.slane %v2484, 4
        %v2487 = vsel %vm215, %v2481, %v2485
        %v2488 = vsel %vm215, %v2483, %v2486
        %2489 = vrot.lane.b32.xlu0 %v2487, 7
        %v2490 = vpop.permute.xlu0 %2489
        %2491 = vrot.lane.b32.xlu0 %v2488, 7
        %v2492 = vpop.permute.xlu0 %2491
        %v2493 = vrot.slane %v2490, 4
        %v2494 = vrot.slane %v2492, 4
        %v2495 = vsel %vm1944, %v2493, %v2490
        %v2496 = vsel %vm215, %v2493, %v2494
        %v2497 = vsel %vm1944, %v2496, %v2492
        %v2501 = vmul.f32 %v2475, %v2495
        %v2502 = vmul.f32 %v2476, %v2497
        %v2503 = vmul.f32 %v2477, %v2494
        %s2504 = scalar_lea.vmem %s1, 120
        %v2505 = vld [vmem:[%s2504] sm:$0xff]
        %2509 = vst [vmem:[#allocation1] ss:$2 sm:$0xff] %v2501
        %s2510 = scalar_lea.vmem [#allocation1], 16
        %2511 = vst [vmem:[%s2510] ss:$2 sm:$0xff] %v2502
        %s2512 = scalar_lea.vmem [#allocation1], 32
        %2513 = vst [vmem:[%s2512] ss:$2 sm:$0xff] %v2503
        %v2514 = vld.sshfl [vmem:[#allocation1] sm:$0xff pattern:$0x75316420]
        %v2515 = vld.sshfl [vmem:[#allocation1 + $0x8] sm:$0xff pattern:$0x75316420]
        %v2516 = vld.sshfl [vmem:[#allocation1 + $0x10] sm:$0xff pattern:$0x75316420]
        %v2517 = vld.sshfl [vmem:[#allocation1 + $0x18] sm:$0xff pattern:$0x75316420]
        %v2518 = vld.sshfl [vmem:[#allocation1 + $0x20] sm:$0xff pattern:$0x75316420]
        %2519 = vrot.lane.b32.xlu0 %v2514, 121
        %v2520 = vpop.permute.xlu0 %2519
        %2521 = vrot.lane.b32.xlu0 %v2515, 121
        %v2522 = vpop.permute.xlu0 %2521
        %2523 = vrot.lane.b32.xlu0 %v2516, 121
        %v2524 = vpop.permute.xlu0 %2523
        %2525 = vrot.lane.b32.xlu0 %v2517, 121
        %v2526 = vpop.permute.xlu0 %2525
        %2527 = vrot.lane.b32.xlu0 %v2518, 121
        %v2528 = vpop.permute.xlu0 %2527
        %v2529 = vsel %vm1909, %v2520, %v2522
        %v2530 = vsel %vm1909, %v2522, %v2524
        %v2531 = vsel %vm1909, %v2524, %v2526
        %v2532 = vsel %vm1909, %v2526, %v2528
        %v2534 = vsel %vm292, %v2505, 0
        %v2536 = vsel %vm215, %v2529, 0
        %v2538 = vsel %vm215, %v2530, 0
        %v2540 = vsel %vm215, %v2531, 0
        %v2542 = vsel %vm215, %v2532, 0
        %2544 = vmatpush.msra.mxu0 0.0
        %2545 = vmatpush.msra.mxu0 0.0
        %2546 = vmatpush.msra.mxu0 0.0
        %2547 = vmatpush.msra.mxu0 0.0
        %2548 = vmatpush.msra.mxu0 0.0
        %2549 = vmatpush.msra.mxu0 0.0
        %2550 = vmatpush.msra.mxu0 0.0
        %2551 = vmatpush.msra.mxu0 0.0
        %2552 = vmatpush.msra.mxu0 0.0
        %2553 = vmatpush.msra.mxu0 0.0
        %2554 = vmatpush.msra.mxu0 0.0
        %2555 = vmatpush.msra.mxu0 0.0
        %2556 = vmatpush.msra.mxu0 0.0
        %2557 = vmatpush.msra.mxu0 0.0
        %2558 = vmatpush.msra.mxu0 0.0
        %2559 = vmatpush.msra.mxu0 %v2536
        %2560 = vmatmul.f32.gmra.mxu0 %v2534
        %v2561 = vpop.f32.mrf.mxu0
        %v2562 = vadd.f32 0.0, %v2561
        %2563 = vdwg.mxu0
        %2564 = vmatpush.msra.mxu0 0.0
        %2565 = vmatpush.msra.mxu0 0.0
        %2566 = vmatpush.msra.mxu0 0.0
        %2567 = vmatpush.msra.mxu0 0.0
        %2568 = vmatpush.msra.mxu0 0.0
        %2569 = vmatpush.msra.mxu0 0.0
        %2570 = vmatpush.msra.mxu0 0.0
        %2571 = vmatpush.msra.mxu0 0.0
        %2572 = vmatpush.msra.mxu0 0.0
        %2573 = vmatpush.msra.mxu0 0.0
        %2574 = vmatpush.msra.mxu0 0.0
        %2575 = vmatpush.msra.mxu0 0.0
        %2576 = vmatpush.msra.mxu0 0.0
        %2577 = vmatpush.msra.mxu0 0.0
        %2578 = vmatpush.msra.mxu0 0.0
        %2579 = vmatpush.msra.mxu0 %v2538
        %2580 = vmatmul.f32.gmra.mxu0 %v2534
        %v2581 = vpop.f32.mrf.mxu0
        %v2582 = vadd.f32 0.0, %v2581
        %2583 = vdwg.mxu0
        %2584 = vmatpush.msra.mxu0 0.0
        %2585 = vmatpush.msra.mxu0 0.0
        %2586 = vmatpush.msra.mxu0 0.0
        %2587 = vmatpush.msra.mxu0 0.0
        %2588 = vmatpush.msra.mxu0 0.0
        %2589 = vmatpush.msra.mxu0 0.0
        %2590 = vmatpush.msra.mxu0 0.0
        %2591 = vmatpush.msra.mxu0 0.0
        %2592 = vmatpush.msra.mxu0 0.0
        %2593 = vmatpush.msra.mxu0 0.0
        %2594 = vmatpush.msra.mxu0 0.0
        %2595 = vmatpush.msra.mxu0 0.0
        %2596 = vmatpush.msra.mxu0 0.0
        %2597 = vmatpush.msra.mxu0 0.0
        %2598 = vmatpush.msra.mxu0 0.0
        %2599 = vmatpush.msra.mxu0 %v2540
        %2600 = vmatmul.f32.gmra.mxu0 %v2534
        %v2601 = vpop.f32.mrf.mxu0
        %v2602 = vadd.f32 0.0, %v2601
        %2603 = vdwg.mxu0
        %2604 = vmatpush.msra.mxu0 0.0
        %2605 = vmatpush.msra.mxu0 0.0
        %2606 = vmatpush.msra.mxu0 0.0
        %2607 = vmatpush.msra.mxu0 0.0
        %2608 = vmatpush.msra.mxu0 0.0
        %2609 = vmatpush.msra.mxu0 0.0
        %2610 = vmatpush.msra.mxu0 0.0
        %2611 = vmatpush.msra.mxu0 0.0
        %2612 = vmatpush.msra.mxu0 0.0
        %2613 = vmatpush.msra.mxu0 0.0
        %2614 = vmatpush.msra.mxu0 0.0
        %2615 = vmatpush.msra.mxu0 0.0
        %2616 = vmatpush.msra.mxu0 0.0
        %2617 = vmatpush.msra.mxu0 0.0
        %2618 = vmatpush.msra.mxu0 0.0
        %2619 = vmatpush.msra.mxu0 %v2542
        %2620 = vmatmul.f32.gmra.mxu0 %v2534
        %v2621 = vpop.f32.mrf.mxu0
        %v2622 = vadd.f32 0.0, %v2621
        %2623 = vdwg.mxu0
        %v2624 = vadd.f32 %v2471, %v2562
        %v2625 = vadd.f32 %v2472, %v2582
        %v2626 = vadd.f32 %v2473, %v2602
        %v2627 = vadd.f32 %v2474, %v2622
        %v2628 = vld [vmem:[#allocation2 + $0x4] sm:$0xff]
        %v2629 = vld [vmem:[#allocation2 + $0xc] sm:$0xff]
        %v2630 = vld [vmem:[#allocation2 + $0x14] sm:$0xf]
        %s2631 = scalar_lea.vmem %s3, 64
        %v2632 = vld [vmem:[%s2631] sm:$0xf]
        %v2634 = vperm.slane %v2632, 0
        %v2635 = vperm.slane %v2632, 1
        %v2636 = vperm.slane %v2632, 2
        %v2637 = vperm.slane %v2632, 3
        %v2638 = vrot.slane %v2635, 4
        %v2639 = vrot.slane %v2637, 4
        %v2640 = vsel %vm215, %v2634, %v2638
        %v2641 = vsel %vm215, %v2636, %v2639
        %2642 = vrot.lane.b32.xlu0 %v2640, 8
        %v2643 = vpop.permute.xlu0 %2642
        %2644 = vrot.lane.b32.xlu0 %v2641, 8
        %v2645 = vpop.permute.xlu0 %2644
        %v2646 = vrot.slane %v2643, 4
        %v2647 = vrot.slane %v2645, 4
        %v2648 = vsel %vm1789, %v2646, %v2643
        %v2649 = vsel %vm215, %v2646, %v2647
        %v2650 = vsel %vm1789, %v2649, %v2645
        %v2654 = vmul.f32 %v2628, %v2648
        %v2655 = vmul.f32 %v2629, %v2650
        %v2656 = vmul.f32 %v2630, %v2647
        %s2657 = scalar_lea.vmem %s1, 128
        %v2658 = vld [vmem:[%s2657] sm:$0xff]
        %2662 = vst [vmem:[#allocation1] ss:$2 sm:$0xff] %v2654
        %s2663 = scalar_lea.vmem [#allocation1], 16
        %2664 = vst [vmem:[%s2663] ss:$2 sm:$0xff] %v2655
        %s2665 = scalar_lea.vmem [#allocation1], 32
        %2666 = vst [vmem:[%s2665] ss:$2 sm:$0xff] %v2656
        %v2667 = vld.sshfl [vmem:[#allocation1] sm:$0xff pattern:$0x75316420]
        %v2668 = vld.sshfl [vmem:[#allocation1 + $0x8] sm:$0xff pattern:$0x75316420]
        %v2669 = vld.sshfl [vmem:[#allocation1 + $0x10] sm:$0xff pattern:$0x75316420]
        %v2670 = vld.sshfl [vmem:[#allocation1 + $0x18] sm:$0xff pattern:$0x75316420]
        %v2671 = vld.sshfl [vmem:[#allocation1 + $0x20] sm:$0xff pattern:$0x75316420]
        %2672 = vrot.lane.b32.xlu0 %v2667, 120
        %v2673 = vpop.permute.xlu0 %2672
        %2674 = vrot.lane.b32.xlu0 %v2668, 120
        %v2675 = vpop.permute.xlu0 %2674
        %2676 = vrot.lane.b32.xlu0 %v2669, 120
        %v2677 = vpop.permute.xlu0 %2676
        %2678 = vrot.lane.b32.xlu0 %v2670, 120
        %v2679 = vpop.permute.xlu0 %2678
        %2680 = vrot.lane.b32.xlu0 %v2671, 120
        %v2681 = vpop.permute.xlu0 %2680
        %v2682 = vsel %vm1754, %v2673, %v2675
        %v2683 = vsel %vm1754, %v2675, %v2677
        %v2684 = vsel %vm1754, %v2677, %v2679
        %v2685 = vsel %vm1754, %v2679, %v2681
        %v2687 = vsel %vm292, %v2658, 0
        %v2689 = vsel %vm215, %v2682, 0
        %v2691 = vsel %vm215, %v2683, 0
        %v2693 = vsel %vm215, %v2684, 0
        %v2695 = vsel %vm215, %v2685, 0
        %2697 = vmatpush.msra.mxu0 0.0
        %2698 = vmatpush.msra.mxu0 0.0
        %2699 = vmatpush.msra.mxu0 0.0
        %2700 = vmatpush.msra.mxu0 0.0
        %2701 = vmatpush.msra.mxu0 0.0
        %2702 = vmatpush.msra.mxu0 0.0
        %2703 = vmatpush.msra.mxu0 0.0
        %2704 = vmatpush.msra.mxu0 0.0
        %2705 = vmatpush.msra.mxu0 0.0
        %2706 = vmatpush.msra.mxu0 0.0
        %2707 = vmatpush.msra.mxu0 0.0
        %2708 = vmatpush.msra.mxu0 0.0
        %2709 = vmatpush.msra.mxu0 0.0
        %2710 = vmatpush.msra.mxu0 0.0
        %2711 = vmatpush.msra.mxu0 0.0
        %2712 = vmatpush.msra.mxu0 %v2689
        %2713 = vmatmul.f32.gmra.mxu0 %v2687
        %v2714 = vpop.f32.mrf.mxu0
        %v2715 = vadd.f32 0.0, %v2714
        %2716 = vdwg.mxu0
        %2717 = vmatpush.msra.mxu0 0.0
        %2718 = vmatpush.msra.mxu0 0.0
        %2719 = vmatpush.msra.mxu0 0.0
        %2720 = vmatpush.msra.mxu0 0.0
        %2721 = vmatpush.msra.mxu0 0.0
        %2722 = vmatpush.msra.mxu0 0.0
        %2723 = vmatpush.msra.mxu0 0.0
        %2724 = vmatpush.msra.mxu0 0.0
        %2725 = vmatpush.msra.mxu0 0.0
        %2726 = vmatpush.msra.mxu0 0.0
        %2727 = vmatpush.msra.mxu0 0.0
        %2728 = vmatpush.msra.mxu0 0.0
        %2729 = vmatpush.msra.mxu0 0.0
        %2730 = vmatpush.msra.mxu0 0.0
        %2731 = vmatpush.msra.mxu0 0.0
        %2732 = vmatpush.msra.mxu0 %v2691
        %2733 = vmatmul.f32.gmra.mxu0 %v2687
        %v2734 = vpop.f32.mrf.mxu0
        %v2735 = vadd.f32 0.0, %v2734
        %2736 = vdwg.mxu0
        %2737 = vmatpush.msra.mxu0 0.0
        %2738 = vmatpush.msra.mxu0 0.0
        %2739 = vmatpush.msra.mxu0 0.0
        %2740 = vmatpush.msra.mxu0 0.0
        %2741 = vmatpush.msra.mxu0 0.0
        %2742 = vmatpush.msra.mxu0 0.0
        %2743 = vmatpush.msra.mxu0 0.0
        %2744 = vmatpush.msra.mxu0 0.0
        %2745 = vmatpush.msra.mxu0 0.0
        %2746 = vmatpush.msra.mxu0 0.0
        %2747 = vmatpush.msra.mxu0 0.0
        %2748 = vmatpush.msra.mxu0 0.0
        %2749 = vmatpush.msra.mxu0 0.0
        %2750 = vmatpush.msra.mxu0 0.0
        %2751 = vmatpush.msra.mxu0 0.0
        %2752 = vmatpush.msra.mxu0 %v2693
        %2753 = vmatmul.f32.gmra.mxu0 %v2687
        %v2754 = vpop.f32.mrf.mxu0
        %v2755 = vadd.f32 0.0, %v2754
        %2756 = vdwg.mxu0
        %2757 = vmatpush.msra.mxu0 0.0
        %2758 = vmatpush.msra.mxu0 0.0
        %2759 = vmatpush.msra.mxu0 0.0
        %2760 = vmatpush.msra.mxu0 0.0
        %2761 = vmatpush.msra.mxu0 0.0
        %2762 = vmatpush.msra.mxu0 0.0
        %2763 = vmatpush.msra.mxu0 0.0
        %2764 = vmatpush.msra.mxu0 0.0
        %2765 = vmatpush.msra.mxu0 0.0
        %2766 = vmatpush.msra.mxu0 0.0
        %2767 = vmatpush.msra.mxu0 0.0
        %2768 = vmatpush.msra.mxu0 0.0
        %2769 = vmatpush.msra.mxu0 0.0
        %2770 = vmatpush.msra.mxu0 0.0
        %2771 = vmatpush.msra.mxu0 0.0
        %2772 = vmatpush.msra.mxu0 %v2695
        %2773 = vmatmul.f32.gmra.mxu0 %v2687
        %v2774 = vpop.f32.mrf.mxu0
        %v2775 = vadd.f32 0.0, %v2774
        %2776 = vdwg.mxu0
        %v2777 = vadd.f32 %v2624, %v2715
        %v2778 = vadd.f32 %v2625, %v2735
        %v2779 = vadd.f32 %v2626, %v2755
        %v2780 = vadd.f32 %v2627, %v2775
        %v2781 = vld [vmem:[#allocation2 + $0x4] sm:$0xff]
        %v2782 = vld [vmem:[#allocation2 + $0xc] sm:$0xff]
        %v2783 = vld [vmem:[#allocation2 + $0x14] sm:$0xf]
        %s2784 = scalar_lea.vmem %s3, 68
        %v2785 = vld [vmem:[%s2784] sm:$0xf]
        %v2787 = vperm.slane %v2785, 0
        %v2788 = vperm.slane %v2785, 1
        %v2789 = vperm.slane %v2785, 2
        %v2790 = vperm.slane %v2785, 3
        %v2791 = vrot.slane %v2788, 4
        %v2792 = vrot.slane %v2790, 4
        %v2793 = vsel %vm215, %v2787, %v2791
        %v2794 = vsel %vm215, %v2789, %v2792
        %2795 = vrot.lane.b32.xlu0 %v2793, 9
        %v2796 = vpop.permute.xlu0 %2795
        %2797 = vrot.lane.b32.xlu0 %v2794, 9
        %v2798 = vpop.permute.xlu0 %2797
        %v2799 = vrot.slane %v2796, 4
        %v2800 = vrot.slane %v2798, 4
        %v2801 = vsel %vm1634, %v2799, %v2796
        %v2802 = vsel %vm215, %v2799, %v2800
        %v2803 = vsel %vm1634, %v2802, %v2798
        %v2807 = vmul.f32 %v2781, %v2801
        %v2808 = vmul.f32 %v2782, %v2803
        %v2809 = vmul.f32 %v2783, %v2800
        %s2810 = scalar_lea.vmem %s1, 136
        %v2811 = vld [vmem:[%s2810] sm:$0xff]
        %2815 = vst [vmem:[#allocation1] ss:$2 sm:$0xff] %v2807
        %s2816 = scalar_lea.vmem [#allocation1], 16
        %2817 = vst [vmem:[%s2816] ss:$2 sm:$0xff] %v2808
        %s2818 = scalar_lea.vmem [#allocation1], 32
        %2819 = vst [vmem:[%s2818] ss:$2 sm:$0xff] %v2809
        %v2820 = vld.sshfl [vmem:[#allocation1] sm:$0xff pattern:$0x75316420]
        %v2821 = vld.sshfl [vmem:[#allocation1 + $0x8] sm:$0xff pattern:$0x75316420]
        %v2822 = vld.sshfl [vmem:[#allocation1 + $0x10] sm:$0xff pattern:$0x75316420]
        %v2823 = vld.sshfl [vmem:[#allocation1 + $0x18] sm:$0xff pattern:$0x75316420]
        %v2824 = vld.sshfl [vmem:[#allocation1 + $0x20] sm:$0xff pattern:$0x75316420]
        %2825 = vrot.lane.b32.xlu0 %v2820, 119
        %v2826 = vpop.permute.xlu0 %2825
        %2827 = vrot.lane.b32.xlu0 %v2821, 119
        %v2828 = vpop.permute.xlu0 %2827
        %2829 = vrot.lane.b32.xlu0 %v2822, 119
        %v2830 = vpop.permute.xlu0 %2829
        %2831 = vrot.lane.b32.xlu0 %v2823, 119
        %v2832 = vpop.permute.xlu0 %2831
        %2833 = vrot.lane.b32.xlu0 %v2824, 119
        %v2834 = vpop.permute.xlu0 %2833
        %v2835 = vsel %vm1599, %v2826, %v2828
        %v2836 = vsel %vm1599, %v2828, %v2830
        %v2837 = vsel %vm1599, %v2830, %v2832
        %v2838 = vsel %vm1599, %v2832, %v2834
        %v2840 = vsel %vm292, %v2811, 0
        %v2842 = vsel %vm215, %v2835, 0
        %v2844 = vsel %vm215, %v2836, 0
        %v2846 = vsel %vm215, %v2837, 0
        %v2848 = vsel %vm215, %v2838, 0
        %2850 = vmatpush.msra.mxu0 0.0
        %2851 = vmatpush.msra.mxu0 0.0
        %2852 = vmatpush.msra.mxu0 0.0
        %2853 = vmatpush.msra.mxu0 0.0
        %2854 = vmatpush.msra.mxu0 0.0
        %2855 = vmatpush.msra.mxu0 0.0
        %2856 = vmatpush.msra.mxu0 0.0
        %2857 = vmatpush.msra.mxu0 0.0
        %2858 = vmatpush.msra.mxu0 0.0
        %2859 = vmatpush.msra.mxu0 0.0
        %2860 = vmatpush.msra.mxu0 0.0
        %2861 = vmatpush.msra.mxu0 0.0
        %2862 = vmatpush.msra.mxu0 0.0
        %2863 = vmatpush.msra.mxu0 0.0
        %2864 = vmatpush.msra.mxu0 0.0
        %2865 = vmatpush.msra.mxu0 %v2842
        %2866 = vmatmul.f32.gmra.mxu0 %v2840
        %v2867 = vpop.f32.mrf.mxu0
        %v2868 = vadd.f32 0.0, %v2867
        %2869 = vdwg.mxu0
        %2870 = vmatpush.msra.mxu0 0.0
        %2871 = vmatpush.msra.mxu0 0.0
        %2872 = vmatpush.msra.mxu0 0.0
        %2873 = vmatpush.msra.mxu0 0.0
        %2874 = vmatpush.msra.mxu0 0.0
        %2875 = vmatpush.msra.mxu0 0.0
        %2876 = vmatpush.msra.mxu0 0.0
        %2877 = vmatpush.msra.mxu0 0.0
        %2878 = vmatpush.msra.mxu0 0.0
        %2879 = vmatpush.msra.mxu0 0.0
        %2880 = vmatpush.msra.mxu0 0.0
        %2881 = vmatpush.msra.mxu0 0.0
        %2882 = vmatpush.msra.mxu0 0.0
        %2883 = vmatpush.msra.mxu0 0.0
        %2884 = vmatpush.msra.mxu0 0.0
        %2885 = vmatpush.msra.mxu0 %v2844
        %2886 = vmatmul.f32.gmra.mxu0 %v2840
        %v2887 = vpop.f32.mrf.mxu0
        %v2888 = vadd.f32 0.0, %v2887
        %2889 = vdwg.mxu0
        %2890 = vmatpush.msra.mxu0 0.0
        %2891 = vmatpush.msra.mxu0 0.0
        %2892 = vmatpush.msra.mxu0 0.0
        %2893 = vmatpush.msra.mxu0 0.0
        %2894 = vmatpush.msra.mxu0 0.0
        %2895 = vmatpush.msra.mxu0 0.0
        %2896 = vmatpush.msra.mxu0 0.0
        %2897 = vmatpush.msra.mxu0 0.0
        %2898 = vmatpush.msra.mxu0 0.0
        %2899 = vmatpush.msra.mxu0 0.0
        %2900 = vmatpush.msra.mxu0 0.0
        %2901 = vmatpush.msra.mxu0 0.0
        %2902 = vmatpush.msra.mxu0 0.0
        %2903 = vmatpush.msra.mxu0 0.0
        %2904 = vmatpush.msra.mxu0 0.0
        %2905 = vmatpush.msra.mxu0 %v2846
        %2906 = vmatmul.f32.gmra.mxu0 %v2840
        %v2907 = vpop.f32.mrf.mxu0
        %v2908 = vadd.f32 0.0, %v2907
        %2909 = vdwg.mxu0
        %2910 = vmatpush.msra.mxu0 0.0
        %2911 = vmatpush.msra.mxu0 0.0
        %2912 = vmatpush.msra.mxu0 0.0
        %2913 = vmatpush.msra.mxu0 0.0
        %2914 = vmatpush.msra.mxu0 0.0
        %2915 = vmatpush.msra.mxu0 0.0
        %2916 = vmatpush.msra.mxu0 0.0
        %2917 = vmatpush.msra.mxu0 0.0
        %2918 = vmatpush.msra.mxu0 0.0
        %2919 = vmatpush.msra.mxu0 0.0
        %2920 = vmatpush.msra.mxu0 0.0
        %2921 = vmatpush.msra.mxu0 0.0
        %2922 = vmatpush.msra.mxu0 0.0
        %2923 = vmatpush.msra.mxu0 0.0
        %2924 = vmatpush.msra.mxu0 0.0
        %2925 = vmatpush.msra.mxu0 %v2848
        %2926 = vmatmul.f32.gmra.mxu0 %v2840
        %v2927 = vpop.f32.mrf.mxu0
        %v2928 = vadd.f32 0.0, %v2927
        %2929 = vdwg.mxu0
        %v2930 = vadd.f32 %v2777, %v2868
        %v2931 = vadd.f32 %v2778, %v2888
        %v2932 = vadd.f32 %v2779, %v2908
        %v2933 = vadd.f32 %v2780, %v2928
        %v2934 = vld [vmem:[#allocation2 + $0x4] sm:$0xff]
        %v2935 = vld [vmem:[#allocation2 + $0xc] sm:$0xff]
        %v2936 = vld [vmem:[#allocation2 + $0x14] sm:$0xf]
        %s2937 = scalar_lea.vmem %s3, 72
        %v2938 = vld [vmem:[%s2937] sm:$0xf]
        %v2940 = vperm.slane %v2938, 0
        %v2941 = vperm.slane %v2938, 1
        %v2942 = vperm.slane %v2938, 2
        %v2943 = vperm.slane %v2938, 3
        %v2944 = vrot.slane %v2941, 4
        %v2945 = vrot.slane %v2943, 4
        %v2946 = vsel %vm215, %v2940, %v2944
        %v2947 = vsel %vm215, %v2942, %v2945
        %2948 = vrot.lane.b32.xlu0 %v2946, 55
        %v2949 = vpop.permute.xlu0 %2948
        %2950 = vrot.lane.b32.xlu0 %v2947, 55
        %v2951 = vpop.permute.xlu0 %2950
        %v2952 = vrot.slane %v2949, 4
        %v2953 = vrot.slane %v2951, 4
        %v2954 = vsel %vm224, %v2952, %v2949
        %v2955 = vsel %vm215, %v2952, %v2953
        %v2956 = vsel %vm224, %v2955, %v2951
        %v2960 = vmul.f32 %v2934, %v2954
        %v2961 = vmul.f32 %v2935, %v2956
        %v2962 = vmul.f32 %v2936, %v2953
        %s2963 = scalar_lea.vmem %s1, 144
        %v2964 = vld [vmem:[%s2963] sm:$0xff]
        %2968 = vst [vmem:[#allocation1] ss:$2 sm:$0xff] %v2960
        %s2969 = scalar_lea.vmem [#allocation1], 16
        %2970 = vst [vmem:[%s2969] ss:$2 sm:$0xff] %v2961
        %s2971 = scalar_lea.vmem [#allocation1], 32
        %2972 = vst [vmem:[%s2971] ss:$2 sm:$0xff] %v2962
        %v2973 = vld.sshfl [vmem:[#allocation1] sm:$0xff pattern:$0x75316420]
        %v2974 = vld.sshfl [vmem:[#allocation1 + $0x8] sm:$0xff pattern:$0x75316420]
        %v2975 = vld.sshfl [vmem:[#allocation1 + $0x10] sm:$0xff pattern:$0x75316420]
        %v2976 = vld.sshfl [vmem:[#allocation1 + $0x18] sm:$0xff pattern:$0x75316420]
        %v2977 = vld.sshfl [vmem:[#allocation1 + $0x20] sm:$0xff pattern:$0x75316420]
        %2978 = vrot.lane.b32.xlu0 %v2973, 73
        %v2979 = vpop.permute.xlu0 %2978
        %2980 = vrot.lane.b32.xlu0 %v2974, 73
        %v2981 = vpop.permute.xlu0 %2980
        %2982 = vrot.lane.b32.xlu0 %v2975, 73
        %v2983 = vpop.permute.xlu0 %2982
        %2984 = vrot.lane.b32.xlu0 %v2976, 73
        %v2985 = vpop.permute.xlu0 %2984
        %2986 = vrot.lane.b32.xlu0 %v2977, 73
        %v2987 = vpop.permute.xlu0 %2986
        %v2988 = vsel %vm407, %v2979, %v2981
        %v2989 = vsel %vm407, %v2981, %v2983
        %v2990 = vsel %vm407, %v2983, %v2985
        %v2991 = vsel %vm407, %v2985, %v2987
        %v2993 = vsel %vm292, %v2964, 0
        %v2995 = vsel %vm215, %v2988, 0
        %v2997 = vsel %vm215, %v2989, 0
        %v2999 = vsel %vm215, %v2990, 0
        %v3001 = vsel %vm215, %v2991, 0
        %3003 = vmatpush.msra.mxu0 0.0
        %3004 = vmatpush.msra.mxu0 0.0
        %3005 = vmatpush.msra.mxu0 0.0
        %3006 = vmatpush.msra.mxu0 0.0
        %3007 = vmatpush.msra.mxu0 0.0
        %3008 = vmatpush.msra.mxu0 0.0
        %3009 = vmatpush.msra.mxu0 0.0
        %3010 = vmatpush.msra.mxu0 0.0
        %3011 = vmatpush.msra.mxu0 0.0
        %3012 = vmatpush.msra.mxu0 0.0
        %3013 = vmatpush.msra.mxu0 0.0
        %3014 = vmatpush.msra.mxu0 0.0
        %3015 = vmatpush.msra.mxu0 0.0
        %3016 = vmatpush.msra.mxu0 0.0
        %3017 = vmatpush.msra.mxu0 0.0
        %3018 = vmatpush.msra.mxu0 %v2995
        %3019 = vmatmul.f32.gmra.mxu0 %v2993
        %v3020 = vpop.f32.mrf.mxu0
        %v3021 = vadd.f32 0.0, %v3020
        %3022 = vdwg.mxu0
        %3023 = vmatpush.msra.mxu0 0.0
        %3024 = vmatpush.msra.mxu0 0.0
        %3025 = vmatpush.msra.mxu0 0.0
        %3026 = vmatpush.msra.mxu0 0.0
        %3027 = vmatpush.msra.mxu0 0.0
        %3028 = vmatpush.msra.mxu0 0.0
        %3029 = vmatpush.msra.mxu0 0.0
        %3030 = vmatpush.msra.mxu0 0.0
        %3031 = vmatpush.msra.mxu0 0.0
        %3032 = vmatpush.msra.mxu0 0.0
        %3033 = vmatpush.msra.mxu0 0.0
        %3034 = vmatpush.msra.mxu0 0.0
        %3035 = vmatpush.msra.mxu0 0.0
        %3036 = vmatpush.msra.mxu0 0.0
        %3037 = vmatpush.msra.mxu0 0.0
        %3038 = vmatpush.msra.mxu0 %v2997
        %3039 = vmatmul.f32.gmra.mxu0 %v2993
        %v3040 = vpop.f32.mrf.mxu0
        %v3041 = vadd.f32 0.0, %v3040
        %3042 = vdwg.mxu0
        %3043 = vmatpush.msra.mxu0 0.0
        %3044 = vmatpush.msra.mxu0 0.0
        %3045 = vmatpush.msra.mxu0 0.0
        %3046 = vmatpush.msra.mxu0 0.0
        %3047 = vmatpush.msra.mxu0 0.0
        %3048 = vmatpush.msra.mxu0 0.0
        %3049 = vmatpush.msra.mxu0 0.0
        %3050 = vmatpush.msra.mxu0 0.0
        %3051 = vmatpush.msra.mxu0 0.0
        %3052 = vmatpush.msra.mxu0 0.0
        %3053 = vmatpush.msra.mxu0 0.0
        %3054 = vmatpush.msra.mxu0 0.0
        %3055 = vmatpush.msra.mxu0 0.0
        %3056 = vmatpush.msra.mxu0 0.0
        %3057 = vmatpush.msra.mxu0 0.0
        %3058 = vmatpush.msra.mxu0 %v2999
        %3059 = vmatmul.f32.gmra.mxu0 %v2993
        %v3060 = vpop.f32.mrf.mxu0
        %v3061 = vadd.f32 0.0, %v3060
        %3062 = vdwg.mxu0
        %3063 = vmatpush.msra.mxu0 0.0
        %3064 = vmatpush.msra.mxu0 0.0
        %3065 = vmatpush.msra.mxu0 0.0
        %3066 = vmatpush.msra.mxu0 0.0
        %3067 = vmatpush.msra.mxu0 0.0
        %3068 = vmatpush.msra.mxu0 0.0
        %3069 = vmatpush.msra.mxu0 0.0
        %3070 = vmatpush.msra.mxu0 0.0
        %3071 = vmatpush.msra.mxu0 0.0
        %3072 = vmatpush.msra.mxu0 0.0
        %3073 = vmatpush.msra.mxu0 0.0
        %3074 = vmatpush.msra.mxu0 0.0
        %3075 = vmatpush.msra.mxu0 0.0
        %3076 = vmatpush.msra.mxu0 0.0
        %3077 = vmatpush.msra.mxu0 0.0
        %3078 = vmatpush.msra.mxu0 %v3001
        %3079 = vmatmul.f32.gmra.mxu0 %v2993
        %v3080 = vpop.f32.mrf.mxu0
        %v3081 = vadd.f32 0.0, %v3080
        %3082 = vdwg.mxu0
        %v3083 = vadd.f32 %v2930, %v3021
        %v3084 = vadd.f32 %v2931, %v3041
        %v3085 = vadd.f32 %v2932, %v3061
        %v3086 = vadd.f32 %v2933, %v3081
        %v3087 = vld [vmem:[#allocation2 + $0x4] sm:$0xff]
        %v3088 = vld [vmem:[#allocation2 + $0xc] sm:$0xff]
        %v3089 = vld [vmem:[#allocation2 + $0x14] sm:$0xf]
        %s3090 = scalar_lea.vmem %s3, 76
        %v3091 = vld [vmem:[%s3090] sm:$0xf]
        %v3093 = vperm.slane %v3091, 0
        %v3094 = vperm.slane %v3091, 1
        %v3095 = vperm.slane %v3091, 2
        %v3096 = vperm.slane %v3091, 3
        %v3097 = vrot.slane %v3094, 4
        %v3098 = vrot.slane %v3096, 4
        %v3099 = vsel %vm215, %v3093, %v3097
        %v3100 = vsel %vm215, %v3095, %v3098
        %3101 = vrot.lane.b32.xlu0 %v3099, 56
        %v3102 = vpop.permute.xlu0 %3101
        %3103 = vrot.lane.b32.xlu0 %v3100, 56
        %v3104 = vpop.permute.xlu0 %3103
        %v3105 = vrot.slane %v3102, 4
        %v3106 = vrot.slane %v3104, 4
        %v3107 = vsel %vm252, %v3105, %v3102
        %v3108 = vsel %vm215, %v3105, %v3106
        %v3109 = vsel %vm252, %v3108, %v3104
        %v3113 = vmul.f32 %v3087, %v3107
        %v3114 = vmul.f32 %v3088, %v3109
        %v3115 = vmul.f32 %v3089, %v3106
        %s3116 = scalar_lea.vmem %s1, 152
        %v3117 = vld [vmem:[%s3116] sm:$0xff]
        %3121 = vst [vmem:[#allocation1] ss:$2 sm:$0xff] %v3113
        %s3122 = scalar_lea.vmem [#allocation1], 16
        %3123 = vst [vmem:[%s3122] ss:$2 sm:$0xff] %v3114
        %s3124 = scalar_lea.vmem [#allocation1], 32
        %3125 = vst [vmem:[%s3124] ss:$2 sm:$0xff] %v3115
        %v3126 = vld.sshfl [vmem:[#allocation1] sm:$0xff pattern:$0x75316420]
        %v3127 = vld.sshfl [vmem:[#allocation1 + $0x8] sm:$0xff pattern:$0x75316420]
        %v3128 = vld.sshfl [vmem:[#allocation1 + $0x10] sm:$0xff pattern:$0x75316420]
        %v3129 = vld.sshfl [vmem:[#allocation1 + $0x18] sm:$0xff pattern:$0x75316420]
        %v3130 = vld.sshfl [vmem:[#allocation1 + $0x20] sm:$0xff pattern:$0x75316420]
        %3131 = vrot.lane.b32.xlu0 %v3126, 72
        %v3132 = vpop.permute.xlu0 %3131
        %3133 = vrot.lane.b32.xlu0 %v3127, 72
        %v3134 = vpop.permute.xlu0 %3133
        %3135 = vrot.lane.b32.xlu0 %v3128, 72
        %v3136 = vpop.permute.xlu0 %3135
        %3137 = vrot.lane.b32.xlu0 %v3129, 72
        %v3138 = vpop.permute.xlu0 %3137
        %3139 = vrot.lane.b32.xlu0 %v3130, 72
        %v3140 = vpop.permute.xlu0 %3139
        %v3141 = vsel %vm287, %v3132, %v3134
        %v3142 = vsel %vm287, %v3134, %v3136
        %v3143 = vsel %vm287, %v3136, %v3138
        %v3144 = vsel %vm287, %v3138, %v3140
        %v3146 = vsel %vm292, %v3117, 0
        %v3148 = vsel %vm215, %v3141, 0
        %v3150 = vsel %vm215, %v3142, 0
        %v3152 = vsel %vm215, %v3143, 0
        %v3154 = vsel %vm215, %v3144, 0
        %3156 = vmatpush.msra.mxu0 0.0
        %3157 = vmatpush.msra.mxu0 0.0
        %3158 = vmatpush.msra.mxu0 0.0
        %3159 = vmatpush.msra.mxu0 0.0
        %3160 = vmatpush.msra.mxu0 0.0
        %3161 = vmatpush.msra.mxu0 0.0
        %3162 = vmatpush.msra.mxu0 0.0
        %3163 = vmatpush.msra.mxu0 0.0
        %3164 = vmatpush.msra.mxu0 0.0
        %3165 = vmatpush.msra.mxu0 0.0
        %3166 = vmatpush.msra.mxu0 0.0
        %3167 = vmatpush.msra.mxu0 0.0
        %3168 = vmatpush.msra.mxu0 0.0
        %3169 = vmatpush.msra.mxu0 0.0
        %3170 = vmatpush.msra.mxu0 0.0
        %3171 = vmatpush.msra.mxu0 %v3148
        %3172 = vmatmul.f32.gmra.mxu0 %v3146
        %v3173 = vpop.f32.mrf.mxu0
        %v3174 = vadd.f32 0.0, %v3173
        %3175 = vdwg.mxu0
        %3176 = vmatpush.msra.mxu0 0.0
        %3177 = vmatpush.msra.mxu0 0.0
        %3178 = vmatpush.msra.mxu0 0.0
        %3179 = vmatpush.msra.mxu0 0.0
        %3180 = vmatpush.msra.mxu0 0.0
        %3181 = vmatpush.msra.mxu0 0.0
        %3182 = vmatpush.msra.mxu0 0.0
        %3183 = vmatpush.msra.mxu0 0.0
        %3184 = vmatpush.msra.mxu0 0.0
        %3185 = vmatpush.msra.mxu0 0.0
        %3186 = vmatpush.msra.mxu0 0.0
        %3187 = vmatpush.msra.mxu0 0.0
        %3188 = vmatpush.msra.mxu0 0.0
        %3189 = vmatpush.msra.mxu0 0.0
        %3190 = vmatpush.msra.mxu0 0.0
        %3191 = vmatpush.msra.mxu0 %v3150
        %3192 = vmatmul.f32.gmra.mxu0 %v3146
        %v3193 = vpop.f32.mrf.mxu0
        %v3194 = vadd.f32 0.0, %v3193
        %3195 = vdwg.mxu0
        %3196 = vmatpush.msra.mxu0 0.0
        %3197 = vmatpush.msra.mxu0 0.0
        %3198 = vmatpush.msra.mxu0 0.0
        %3199 = vmatpush.msra.mxu0 0.0
        %3200 = vmatpush.msra.mxu0 0.0
        %3201 = vmatpush.msra.mxu0 0.0
        %3202 = vmatpush.msra.mxu0 0.0
        %3203 = vmatpush.msra.mxu0 0.0
        %3204 = vmatpush.msra.mxu0 0.0
        %3205 = vmatpush.msra.mxu0 0.0
        %3206 = vmatpush.msra.mxu0 0.0
        %3207 = vmatpush.msra.mxu0 0.0
        %3208 = vmatpush.msra.mxu0 0.0
        %3209 = vmatpush.msra.mxu0 0.0
        %3210 = vmatpush.msra.mxu0 0.0
        %3211 = vmatpush.msra.mxu0 %v3152
        %3212 = vmatmul.f32.gmra.mxu0 %v3146
        %v3213 = vpop.f32.mrf.mxu0
        %v3214 = vadd.f32 0.0, %v3213
        %3215 = vdwg.mxu0
        %3216 = vmatpush.msra.mxu0 0.0
        %3217 = vmatpush.msra.mxu0 0.0
        %3218 = vmatpush.msra.mxu0 0.0
        %3219 = vmatpush.msra.mxu0 0.0
        %3220 = vmatpush.msra.mxu0 0.0
        %3221 = vmatpush.msra.mxu0 0.0
        %3222 = vmatpush.msra.mxu0 0.0
        %3223 = vmatpush.msra.mxu0 0.0
        %3224 = vmatpush.msra.mxu0 0.0
        %3225 = vmatpush.msra.mxu0 0.0
        %3226 = vmatpush.msra.mxu0 0.0
        %3227 = vmatpush.msra.mxu0 0.0
        %3228 = vmatpush.msra.mxu0 0.0
        %3229 = vmatpush.msra.mxu0 0.0
        %3230 = vmatpush.msra.mxu0 0.0
        %3231 = vmatpush.msra.mxu0 %v3154
        %3232 = vmatmul.f32.gmra.mxu0 %v3146
        %v3233 = vpop.f32.mrf.mxu0
        %v3234 = vadd.f32 0.0, %v3233
        %3235 = vdwg.mxu0
        %v3236 = vadd.f32 %v3083, %v3174
        %v3237 = vadd.f32 %v3084, %v3194
        %v3238 = vadd.f32 %v3085, %v3214
        %v3239 = vadd.f32 %v3086, %v3234
        %v3240 = vld [vmem:[#allocation2 + $0x4] sm:$0xff]
        %v3241 = vld [vmem:[#allocation2 + $0xc] sm:$0xff]
        %v3242 = vld [vmem:[#allocation2 + $0x14] sm:$0xf]
        %s3243 = scalar_lea.vmem %s3, 80
        %v3244 = vld [vmem:[%s3243] sm:$0xf]
        %v3246 = vperm.slane %v3244, 0
        %v3247 = vperm.slane %v3244, 1
        %v3248 = vperm.slane %v3244, 2
        %v3249 = vperm.slane %v3244, 3
        %v3250 = vrot.slane %v3247, 4
        %v3251 = vrot.slane %v3249, 4
        %v3252 = vsel %vm215, %v3246, %v3250
        %v3253 = vsel %vm215, %v3248, %v3251
        %3254 = vrot.lane.b32.xlu0 %v3252, 57
        %v3255 = vpop.permute.xlu0 %3254
        %3256 = vrot.lane.b32.xlu0 %v3253, 57
        %v3257 = vpop.permute.xlu0 %3256
        %v3258 = vrot.slane %v3255, 4
        %v3259 = vrot.slane %v3257, 4
        %v3260 = vsel %vm523, %v3258, %v3255
        %v3261 = vsel %vm215, %v3258, %v3259
        %v3262 = vsel %vm523, %v3261, %v3257
        %v3266 = vmul.f32 %v3240, %v3260
        %v3267 = vmul.f32 %v3241, %v3262
        %v3268 = vmul.f32 %v3242, %v3259
        %s3269 = scalar_lea.vmem %s1, 160
        %v3270 = vld [vmem:[%s3269] sm:$0xff]
        %3274 = vst [vmem:[#allocation1] ss:$2 sm:$0xff] %v3266
        %s3275 = scalar_lea.vmem [#allocation1], 16
        %3276 = vst [vmem:[%s3275] ss:$2 sm:$0xff] %v3267
        %s3277 = scalar_lea.vmem [#allocation1], 32
        %3278 = vst [vmem:[%s3277] ss:$2 sm:$0xff] %v3268
        %v3279 = vld.sshfl [vmem:[#allocation1] sm:$0xff pattern:$0x75316420]
        %v3280 = vld.sshfl [vmem:[#allocation1 + $0x8] sm:$0xff pattern:$0x75316420]
        %v3281 = vld.sshfl [vmem:[#allocation1 + $0x10] sm:$0xff pattern:$0x75316420]
        %v3282 = vld.sshfl [vmem:[#allocation1 + $0x18] sm:$0xff pattern:$0x75316420]
        %v3283 = vld.sshfl [vmem:[#allocation1 + $0x20] sm:$0xff pattern:$0x75316420]
        %3284 = vrot.lane.b32.xlu0 %v3279, 71
        %v3285 = vpop.permute.xlu0 %3284
        %3286 = vrot.lane.b32.xlu0 %v3280, 71
        %v3287 = vpop.permute.xlu0 %3286
        %3288 = vrot.lane.b32.xlu0 %v3281, 71
        %v3289 = vpop.permute.xlu0 %3288
        %3290 = vrot.lane.b32.xlu0 %v3282, 71
        %v3291 = vpop.permute.xlu0 %3290
        %3292 = vrot.lane.b32.xlu0 %v3283, 71
        %v3293 = vpop.permute.xlu0 %3292
        %v3294 = vsel %vm558, %v3285, %v3287
        %v3295 = vsel %vm558, %v3287, %v3289
        %v3296 = vsel %vm558, %v3289, %v3291
        %v3297 = vsel %vm558, %v3291, %v3293
        %v3299 = vsel %vm292, %v3270, 0
        %v3301 = vsel %vm215, %v3294, 0
        %v3303 = vsel %vm215, %v3295, 0
        %v3305 = vsel %vm215, %v3296, 0
        %v3307 = vsel %vm215, %v3297, 0
        %3309 = vmatpush.msra.mxu0 0.0
        %3310 = vmatpush.msra.mxu0 0.0
        %3311 = vmatpush.msra.mxu0 0.0
        %3312 = vmatpush.msra.mxu0 0.0
        %3313 = vmatpush.msra.mxu0 0.0
        %3314 = vmatpush.msra.mxu0 0.0
        %3315 = vmatpush.msra.mxu0 0.0
        %3316 = vmatpush.msra.mxu0 0.0
        %3317 = vmatpush.msra.mxu0 0.0
        %3318 = vmatpush.msra.mxu0 0.0
        %3319 = vmatpush.msra.mxu0 0.0
        %3320 = vmatpush.msra.mxu0 0.0
        %3321 = vmatpush.msra.mxu0 0.0
        %3322 = vmatpush.msra.mxu0 0.0
        %3323 = vmatpush.msra.mxu0 0.0
        %3324 = vmatpush.msra.mxu0 %v3301
        %3325 = vmatmul.f32.gmra.mxu0 %v3299
        %v3326 = vpop.f32.mrf.mxu0
        %v3327 = vadd.f32 0.0, %v3326
        %3328 = vdwg.mxu0
        %3329 = vmatpush.msra.mxu0 0.0
        %3330 = vmatpush.msra.mxu0 0.0
        %3331 = vmatpush.msra.mxu0 0.0
        %3332 = vmatpush.msra.mxu0 0.0
        %3333 = vmatpush.msra.mxu0 0.0
        %3334 = vmatpush.msra.mxu0 0.0
        %3335 = vmatpush.msra.mxu0 0.0
        %3336 = vmatpush.msra.mxu0 0.0
        %3337 = vmatpush.msra.mxu0 0.0
        %3338 = vmatpush.msra.mxu0 0.0
        %3339 = vmatpush.msra.mxu0 0.0
        %3340 = vmatpush.msra.mxu0 0.0
        %3341 = vmatpush.msra.mxu0 0.0
        %3342 = vmatpush.msra.mxu0 0.0
        %3343 = vmatpush.msra.mxu0 0.0
        %3344 = vmatpush.msra.mxu0 %v3303
        %3345 = vmatmul.f32.gmra.mxu0 %v3299
        %v3346 = vpop.f32.mrf.mxu0
        %v3347 = vadd.f32 0.0, %v3346
        %3348 = vdwg.mxu0
        %3349 = vmatpush.msra.mxu0 0.0
        %3350 = vmatpush.msra.mxu0 0.0
        %3351 = vmatpush.msra.mxu0 0.0
        %3352 = vmatpush.msra.mxu0 0.0
        %3353 = vmatpush.msra.mxu0 0.0
        %3354 = vmatpush.msra.mxu0 0.0
        %3355 = vmatpush.msra.mxu0 0.0
        %3356 = vmatpush.msra.mxu0 0.0
        %3357 = vmatpush.msra.mxu0 0.0
        %3358 = vmatpush.msra.mxu0 0.0
        %3359 = vmatpush.msra.mxu0 0.0
        %3360 = vmatpush.msra.mxu0 0.0
        %3361 = vmatpush.msra.mxu0 0.0
        %3362 = vmatpush.msra.mxu0 0.0
        %3363 = vmatpush.msra.mxu0 0.0
        %3364 = vmatpush.msra.mxu0 %v3305
        %3365 = vmatmul.f32.gmra.mxu0 %v3299
        %v3366 = vpop.f32.mrf.mxu0
        %v3367 = vadd.f32 0.0, %v3366
        %3368 = vdwg.mxu0
        %3369 = vmatpush.msra.mxu0 0.0
        %3370 = vmatpush.msra.mxu0 0.0
        %3371 = vmatpush.msra.mxu0 0.0
        %3372 = vmatpush.msra.mxu0 0.0
        %3373 = vmatpush.msra.mxu0 0.0
        %3374 = vmatpush.msra.mxu0 0.0
        %3375 = vmatpush.msra.mxu0 0.0
        %3376 = vmatpush.msra.mxu0 0.0
        %3377 = vmatpush.msra.mxu0 0.0
        %3378 = vmatpush.msra.mxu0 0.0
        %3379 = vmatpush.msra.mxu0 0.0
        %3380 = vmatpush.msra.mxu0 0.0
        %3381 = vmatpush.msra.mxu0 0.0
        %3382 = vmatpush.msra.mxu0 0.0
        %3383 = vmatpush.msra.mxu0 0.0
        %3384 = vmatpush.msra.mxu0 %v3307
        %3385 = vmatmul.f32.gmra.mxu0 %v3299
        %v3386 = vpop.f32.mrf.mxu0
        %v3387 = vadd.f32 0.0, %v3386
        %3388 = vdwg.mxu0
        %v3389 = vadd.f32 %v3236, %v3327
        %v3390 = vadd.f32 %v3237, %v3347
        %v3391 = vadd.f32 %v3238, %v3367
        %v3392 = vadd.f32 %v3239, %v3387
        %v3393 = vld [vmem:[#allocation2 + $0x4] sm:$0xff]
        %v3394 = vld [vmem:[#allocation2 + $0xc] sm:$0xff]
        %v3395 = vld [vmem:[#allocation2 + $0x14] sm:$0xf]
        %s3396 = scalar_lea.vmem %s3, 84
        %v3397 = vld [vmem:[%s3396] sm:$0xf]
        %v3399 = vperm.slane %v3397, 0
        %v3400 = vperm.slane %v3397, 1
        %v3401 = vperm.slane %v3397, 2
        %v3402 = vperm.slane %v3397, 3
        %v3403 = vrot.slane %v3400, 4
        %v3404 = vrot.slane %v3402, 4
        %v3405 = vsel %vm215, %v3399, %v3403
        %v3406 = vsel %vm215, %v3401, %v3404
        %3407 = vrot.lane.b32.xlu0 %v3405, 63
        %v3408 = vpop.permute.xlu0 %3407
        %3409 = vrot.lane.b32.xlu0 %v3406, 63
        %v3410 = vpop.permute.xlu0 %3409
        %v3411 = vrot.slane %v3408, 4
        %v3412 = vrot.slane %v3410, 4
        %v3413 = vsel %vm678, %v3411, %v3408
        %v3414 = vsel %vm215, %v3411, %v3412
        %v3415 = vsel %vm678, %v3414, %v3410
        %v3419 = vmul.f32 %v3393, %v3413
        %v3420 = vmul.f32 %v3394, %v3415
        %v3421 = vmul.f32 %v3395, %v3412
        %s3422 = scalar_lea.vmem %s1, 168
        %v3423 = vld [vmem:[%s3422] sm:$0xff]
        %3427 = vst [vmem:[#allocation1] ss:$2 sm:$0xff] %v3419
        %s3428 = scalar_lea.vmem [#allocation1], 16
        %3429 = vst [vmem:[%s3428] ss:$2 sm:$0xff] %v3420
        %s3430 = scalar_lea.vmem [#allocation1], 32
        %3431 = vst [vmem:[%s3430] ss:$2 sm:$0xff] %v3421
        %v3432 = vld.sshfl [vmem:[#allocation1] sm:$0xff pattern:$0x75316420]
        %v3433 = vld.sshfl [vmem:[#allocation1 + $0x8] sm:$0xff pattern:$0x75316420]
        %v3434 = vld.sshfl [vmem:[#allocation1 + $0x10] sm:$0xff pattern:$0x75316420]
        %v3435 = vld.sshfl [vmem:[#allocation1 + $0x18] sm:$0xff pattern:$0x75316420]
        %v3436 = vld.sshfl [vmem:[#allocation1 + $0x20] sm:$0xff pattern:$0x75316420]
        %3437 = vrot.lane.b32.xlu0 %v3432, 65
        %v3438 = vpop.permute.xlu0 %3437
        %3439 = vrot.lane.b32.xlu0 %v3433, 65
        %v3440 = vpop.permute.xlu0 %3439
        %3441 = vrot.lane.b32.xlu0 %v3434, 65
        %v3442 = vpop.permute.xlu0 %3441
        %3443 = vrot.lane.b32.xlu0 %v3435, 65
        %v3444 = vpop.permute.xlu0 %3443
        %3445 = vrot.lane.b32.xlu0 %v3436, 65
        %v3446 = vpop.permute.xlu0 %3445
        %v3447 = vsel %vm713, %v3438, %v3440
        %v3448 = vsel %vm713, %v3440, %v3442
        %v3449 = vsel %vm713, %v3442, %v3444
        %v3450 = vsel %vm713, %v3444, %v3446
        %v3452 = vsel %vm292, %v3423, 0
        %v3454 = vsel %vm215, %v3447, 0
        %v3456 = vsel %vm215, %v3448, 0
        %v3458 = vsel %vm215, %v3449, 0
        %v3460 = vsel %vm215, %v3450, 0
        %3462 = vmatpush.msra.mxu0 0.0
        %3463 = vmatpush.msra.mxu0 0.0
        %3464 = vmatpush.msra.mxu0 0.0
        %3465 = vmatpush.msra.mxu0 0.0
        %3466 = vmatpush.msra.mxu0 0.0
        %3467 = vmatpush.msra.mxu0 0.0
        %3468 = vmatpush.msra.mxu0 0.0
        %3469 = vmatpush.msra.mxu0 0.0
        %3470 = vmatpush.msra.mxu0 0.0
        %3471 = vmatpush.msra.mxu0 0.0
        %3472 = vmatpush.msra.mxu0 0.0
        %3473 = vmatpush.msra.mxu0 0.0
        %3474 = vmatpush.msra.mxu0 0.0
        %3475 = vmatpush.msra.mxu0 0.0
        %3476 = vmatpush.msra.mxu0 0.0
        %3477 = vmatpush.msra.mxu0 %v3454
        %3478 = vmatmul.f32.gmra.mxu0 %v3452
        %v3479 = vpop.f32.mrf.mxu0
        %v3480 = vadd.f32 0.0, %v3479
        %3481 = vdwg.mxu0
        %3482 = vmatpush.msra.mxu0 0.0
        %3483 = vmatpush.msra.mxu0 0.0
        %3484 = vmatpush.msra.mxu0 0.0
        %3485 = vmatpush.msra.mxu0 0.0
        %3486 = vmatpush.msra.mxu0 0.0
        %3487 = vmatpush.msra.mxu0 0.0
        %3488 = vmatpush.msra.mxu0 0.0
        %3489 = vmatpush.msra.mxu0 0.0
        %3490 = vmatpush.msra.mxu0 0.0
        %3491 = vmatpush.msra.mxu0 0.0
        %3492 = vmatpush.msra.mxu0 0.0
        %3493 = vmatpush.msra.mxu0 0.0
        %3494 = vmatpush.msra.mxu0 0.0
        %3495 = vmatpush.msra.mxu0 0.0
        %3496 = vmatpush.msra.mxu0 0.0
        %3497 = vmatpush.msra.mxu0 %v3456
        %3498 = vmatmul.f32.gmra.mxu0 %v3452
        %v3499 = vpop.f32.mrf.mxu0
        %v3500 = vadd.f32 0.0, %v3499
        %3501 = vdwg.mxu0
        %3502 = vmatpush.msra.mxu0 0.0
        %3503 = vmatpush.msra.mxu0 0.0
        %3504 = vmatpush.msra.mxu0 0.0
        %3505 = vmatpush.msra.mxu0 0.0
        %3506 = vmatpush.msra.mxu0 0.0
        %3507 = vmatpush.msra.mxu0 0.0
        %3508 = vmatpush.msra.mxu0 0.0
        %3509 = vmatpush.msra.mxu0 0.0
        %3510 = vmatpush.msra.mxu0 0.0
        %3511 = vmatpush.msra.mxu0 0.0
        %3512 = vmatpush.msra.mxu0 0.0
        %3513 = vmatpush.msra.mxu0 0.0
        %3514 = vmatpush.msra.mxu0 0.0
        %3515 = vmatpush.msra.mxu0 0.0
        %3516 = vmatpush.msra.mxu0 0.0
        %3517 = vmatpush.msra.mxu0 %v3458
        %3518 = vmatmul.f32.gmra.mxu0 %v3452
        %v3519 = vpop.f32.mrf.mxu0
        %v3520 = vadd.f32 0.0, %v3519
        %3521 = vdwg.mxu0
        %3522 = vmatpush.msra.mxu0 0.0
        %3523 = vmatpush.msra.mxu0 0.0
        %3524 = vmatpush.msra.mxu0 0.0
        %3525 = vmatpush.msra.mxu0 0.0
        %3526 = vmatpush.msra.mxu0 0.0
        %3527 = vmatpush.msra.mxu0 0.0
        %3528 = vmatpush.msra.mxu0 0.0
        %3529 = vmatpush.msra.mxu0 0.0
        %3530 = vmatpush.msra.mxu0 0.0
        %3531 = vmatpush.msra.mxu0 0.0
        %3532 = vmatpush.msra.mxu0 0.0
        %3533 = vmatpush.msra.mxu0 0.0
        %3534 = vmatpush.msra.mxu0 0.0
        %3535 = vmatpush.msra.mxu0 0.0
        %3536 = vmatpush.msra.mxu0 0.0
        %3537 = vmatpush.msra.mxu0 %v3460
        %3538 = vmatmul.f32.gmra.mxu0 %v3452
        %v3539 = vpop.f32.mrf.mxu0
        %v3540 = vadd.f32 0.0, %v3539
        %3541 = vdwg.mxu0
        %v3542 = vadd.f32 %v3389, %v3480
        %v3543 = vadd.f32 %v3390, %v3500
        %v3544 = vadd.f32 %v3391, %v3520
        %v3545 = vadd.f32 %v3392, %v3540
        %v3546 = vld [vmem:[#allocation2 + $0x4] sm:$0xff]
        %v3547 = vld [vmem:[#allocation2 + $0xc] sm:$0xff]
        %v3548 = vld [vmem:[#allocation2 + $0x14] sm:$0xf]
        %s3549 = scalar_lea.vmem %s3, 88
        %v3550 = vld [vmem:[%s3549] sm:$0xf]
        %v3552 = vperm.slane %v3550, 0
        %v3553 = vperm.slane %v3550, 1
        %v3554 = vperm.slane %v3550, 2
        %v3555 = vperm.slane %v3550, 3
        %v3556 = vrot.slane %v3553, 4
        %v3557 = vrot.slane %v3555, 4
        %v3558 = vsel %vm215, %v3552, %v3556
        %v3559 = vsel %vm215, %v3554, %v3557
        %3560 = vrot.lane.b32.xlu0 %v3558, 64
        %v3561 = vpop.permute.xlu0 %3560
        %3562 = vrot.lane.b32.xlu0 %v3559, 64
        %v3563 = vpop.permute.xlu0 %3562
        %v3564 = vrot.slane %v3561, 4
        %v3565 = vrot.slane %v3563, 4
        %v3566 = vsel %vm833, %v3564, %v3561
        %v3567 = vsel %vm215, %v3564, %v3565
        %v3568 = vsel %vm833, %v3567, %v3563
        %v3572 = vmul.f32 %v3546, %v3566
        %v3573 = vmul.f32 %v3547, %v3568
        %v3574 = vmul.f32 %v3548, %v3565
        %s3575 = scalar_lea.vmem %s1, 176
        %v3576 = vld [vmem:[%s3575] sm:$0xff]
        %3580 = vst [vmem:[#allocation1] ss:$2 sm:$0xff] %v3572
        %s3581 = scalar_lea.vmem [#allocation1], 16
        %3582 = vst [vmem:[%s3581] ss:$2 sm:$0xff] %v3573
        %s3583 = scalar_lea.vmem [#allocation1], 32
        %3584 = vst [vmem:[%s3583] ss:$2 sm:$0xff] %v3574
        %v3585 = vld.sshfl [vmem:[#allocation1] sm:$0xff pattern:$0x75316420]
        %v3586 = vld.sshfl [vmem:[#allocation1 + $0x8] sm:$0xff pattern:$0x75316420]
        %v3587 = vld.sshfl [vmem:[#allocation1 + $0x10] sm:$0xff pattern:$0x75316420]
        %v3588 = vld.sshfl [vmem:[#allocation1 + $0x18] sm:$0xff pattern:$0x75316420]
        %v3589 = vld.sshfl [vmem:[#allocation1 + $0x20] sm:$0xff pattern:$0x75316420]
        %3590 = vrot.lane.b32.xlu0 %v3585, 64
        %v3591 = vpop.permute.xlu0 %3590
        %3592 = vrot.lane.b32.xlu0 %v3586, 64
        %v3593 = vpop.permute.xlu0 %3592
        %3594 = vrot.lane.b32.xlu0 %v3587, 64
        %v3595 = vpop.permute.xlu0 %3594
        %3596 = vrot.lane.b32.xlu0 %v3588, 64
        %v3597 = vpop.permute.xlu0 %3596
        %3598 = vrot.lane.b32.xlu0 %v3589, 64
        %v3599 = vpop.permute.xlu0 %3598
        %v3600 = vsel %vm833, %v3591, %v3593
        %v3601 = vsel %vm833, %v3593, %v3595
        %v3602 = vsel %vm833, %v3595, %v3597
        %v3603 = vsel %vm833, %v3597, %v3599
        %v3605 = vsel %vm292, %v3576, 0
        %v3607 = vsel %vm215, %v3600, 0
        %v3609 = vsel %vm215, %v3601, 0
        %v3611 = vsel %vm215, %v3602, 0
        %v3613 = vsel %vm215, %v3603, 0
        %3615 = vmatpush.msra.mxu0 0.0
        %3616 = vmatpush.msra.mxu0 0.0
        %3617 = vmatpush.msra.mxu0 0.0
        %3618 = vmatpush.msra.mxu0 0.0
        %3619 = vmatpush.msra.mxu0 0.0
        %3620 = vmatpush.msra.mxu0 0.0
        %3621 = vmatpush.msra.mxu0 0.0
        %3622 = vmatpush.msra.mxu0 0.0
        %3623 = vmatpush.msra.mxu0 0.0
        %3624 = vmatpush.msra.mxu0 0.0
        %3625 = vmatpush.msra.mxu0 0.0
        %3626 = vmatpush.msra.mxu0 0.0
        %3627 = vmatpush.msra.mxu0 0.0
        %3628 = vmatpush.msra.mxu0 0.0
        %3629 = vmatpush.msra.mxu0 0.0
        %3630 = vmatpush.msra.mxu0 %v3607
        %3631 = vmatmul.f32.gmra.mxu0 %v3605
        %v3632 = vpop.f32.mrf.mxu0
        %v3633 = vadd.f32 0.0, %v3632
        %3634 = vdwg.mxu0
        %3635 = vmatpush.msra.mxu0 0.0
        %3636 = vmatpush.msra.mxu0 0.0
        %3637 = vmatpush.msra.mxu0 0.0
        %3638 = vmatpush.msra.mxu0 0.0
        %3639 = vmatpush.msra.mxu0 0.0
        %3640 = vmatpush.msra.mxu0 0.0
        %3641 = vmatpush.msra.mxu0 0.0
        %3642 = vmatpush.msra.mxu0 0.0
        %3643 = vmatpush.msra.mxu0 0.0
        %3644 = vmatpush.msra.mxu0 0.0
        %3645 = vmatpush.msra.mxu0 0.0
        %3646 = vmatpush.msra.mxu0 0.0
        %3647 = vmatpush.msra.mxu0 0.0
        %3648 = vmatpush.msra.mxu0 0.0
        %3649 = vmatpush.msra.mxu0 0.0
        %3650 = vmatpush.msra.mxu0 %v3609
        %3651 = vmatmul.f32.gmra.mxu0 %v3605
        %v3652 = vpop.f32.mrf.mxu0
        %v3653 = vadd.f32 0.0, %v3652
        %3654 = vdwg.mxu0
        %3655 = vmatpush.msra.mxu0 0.0
        %3656 = vmatpush.msra.mxu0 0.0
        %3657 = vmatpush.msra.mxu0 0.0
        %3658 = vmatpush.msra.mxu0 0.0
        %3659 = vmatpush.msra.mxu0 0.0
        %3660 = vmatpush.msra.mxu0 0.0
        %3661 = vmatpush.msra.mxu0 0.0
        %3662 = vmatpush.msra.mxu0 0.0
        %3663 = vmatpush.msra.mxu0 0.0
        %3664 = vmatpush.msra.mxu0 0.0
        %3665 = vmatpush.msra.mxu0 0.0
        %3666 = vmatpush.msra.mxu0 0.0
        %3667 = vmatpush.msra.mxu0 0.0
        %3668 = vmatpush.msra.mxu0 0.0
        %3669 = vmatpush.msra.mxu0 0.0
        %3670 = vmatpush.msra.mxu0 %v3611
        %3671 = vmatmul.f32.gmra.mxu0 %v3605
        %v3672 = vpop.f32.mrf.mxu0
        %v3673 = vadd.f32 0.0, %v3672
        %3674 = vdwg.mxu0
        %3675 = vmatpush.msra.mxu0 0.0
        %3676 = vmatpush.msra.mxu0 0.0
        %3677 = vmatpush.msra.mxu0 0.0
        %3678 = vmatpush.msra.mxu0 0.0
        %3679 = vmatpush.msra.mxu0 0.0
        %3680 = vmatpush.msra.mxu0 0.0
        %3681 = vmatpush.msra.mxu0 0.0
        %3682 = vmatpush.msra.mxu0 0.0
        %3683 = vmatpush.msra.mxu0 0.0
        %3684 = vmatpush.msra.mxu0 0.0
        %3685 = vmatpush.msra.mxu0 0.0
        %3686 = vmatpush.msra.mxu0 0.0
        %3687 = vmatpush.msra.mxu0 0.0
        %3688 = vmatpush.msra.mxu0 0.0
        %3689 = vmatpush.msra.mxu0 0.0
        %3690 = vmatpush.msra.mxu0 %v3613
        %3691 = vmatmul.f32.gmra.mxu0 %v3605
        %v3692 = vpop.f32.mrf.mxu0
        %v3693 = vadd.f32 0.0, %v3692
        %3694 = vdwg.mxu0
        %v3695 = vadd.f32 %v3542, %v3633
        %v3696 = vadd.f32 %v3543, %v3653
        %v3697 = vadd.f32 %v3544, %v3673
        %v3698 = vadd.f32 %v3545, %v3693
        %v3699 = vld [vmem:[#allocation2 + $0x4] sm:$0xff]
        %v3700 = vld [vmem:[#allocation2 + $0xc] sm:$0xff]
        %v3701 = vld [vmem:[#allocation2 + $0x14] sm:$0xf]
        %s3702 = scalar_lea.vmem %s3, 92
        %v3703 = vld [vmem:[%s3702] sm:$0xf]
        %v3705 = vperm.slane %v3703, 0
        %v3706 = vperm.slane %v3703, 1
        %v3707 = vperm.slane %v3703, 2
        %v3708 = vperm.slane %v3703, 3
        %v3709 = vrot.slane %v3706, 4
        %v3710 = vrot.slane %v3708, 4
        %v3711 = vsel %vm215, %v3705, %v3709
        %v3712 = vsel %vm215, %v3707, %v3710
        %3713 = vrot.lane.b32.xlu0 %v3711, 65
        %v3714 = vpop.permute.xlu0 %3713
        %3715 = vrot.lane.b32.xlu0 %v3712, 65
        %v3716 = vpop.permute.xlu0 %3715
        %v3717 = vrot.slane %v3714, 4
        %v3718 = vrot.slane %v3716, 4
        %v3719 = vsel %vm713, %v3717, %v3714
        %v3720 = vsel %vm215, %v3717, %v3718
        %v3721 = vsel %vm713, %v3720, %v3716
        %v3725 = vmul.f32 %v3699, %v3719
        %v3726 = vmul.f32 %v3700, %v3721
        %v3727 = vmul.f32 %v3701, %v3718
        %s3728 = scalar_lea.vmem %s1, 184
        %v3729 = vld [vmem:[%s3728] sm:$0xff]
        %3733 = vst [vmem:[#allocation1] ss:$2 sm:$0xff] %v3725
        %s3734 = scalar_lea.vmem [#allocation1], 16
        %3735 = vst [vmem:[%s3734] ss:$2 sm:$0xff] %v3726
        %s3736 = scalar_lea.vmem [#allocation1], 32
        %3737 = vst [vmem:[%s3736] ss:$2 sm:$0xff] %v3727
        %v3738 = vld.sshfl [vmem:[#allocation1] sm:$0xff pattern:$0x75316420]
        %v3739 = vld.sshfl [vmem:[#allocation1 + $0x8] sm:$0xff pattern:$0x75316420]
        %v3740 = vld.sshfl [vmem:[#allocation1 + $0x10] sm:$0xff pattern:$0x75316420]
        %v3741 = vld.sshfl [vmem:[#allocation1 + $0x18] sm:$0xff pattern:$0x75316420]
        %v3742 = vld.sshfl [vmem:[#allocation1 + $0x20] sm:$0xff pattern:$0x75316420]
        %3743 = vrot.lane.b32.xlu0 %v3738, 63
        %v3744 = vpop.permute.xlu0 %3743
        %3745 = vrot.lane.b32.xlu0 %v3739, 63
        %v3746 = vpop.permute.xlu0 %3745
        %3747 = vrot.lane.b32.xlu0 %v3740, 63
        %v3748 = vpop.permute.xlu0 %3747
        %3749 = vrot.lane.b32.xlu0 %v3741, 63
        %v3750 = vpop.permute.xlu0 %3749
        %3751 = vrot.lane.b32.xlu0 %v3742, 63
        %v3752 = vpop.permute.xlu0 %3751
        %v3753 = vsel %vm678, %v3744, %v3746
        %v3754 = vsel %vm678, %v3746, %v3748
        %v3755 = vsel %vm678, %v3748, %v3750
        %v3756 = vsel %vm678, %v3750, %v3752
        %v3758 = vsel %vm292, %v3729, 0
        %v3760 = vsel %vm215, %v3753, 0
        %v3762 = vsel %vm215, %v3754, 0
        %v3764 = vsel %vm215, %v3755, 0
        %v3766 = vsel %vm215, %v3756, 0
        %3768 = vmatpush.msra.mxu0 0.0
        %3769 = vmatpush.msra.mxu0 0.0
        %3770 = vmatpush.msra.mxu0 0.0
        %3771 = vmatpush.msra.mxu0 0.0
        %3772 = vmatpush.msra.mxu0 0.0
        %3773 = vmatpush.msra.mxu0 0.0
        %3774 = vmatpush.msra.mxu0 0.0
        %3775 = vmatpush.msra.mxu0 0.0
        %3776 = vmatpush.msra.mxu0 0.0
        %3777 = vmatpush.msra.mxu0 0.0
        %3778 = vmatpush.msra.mxu0 0.0
        %3779 = vmatpush.msra.mxu0 0.0
        %3780 = vmatpush.msra.mxu0 0.0
        %3781 = vmatpush.msra.mxu0 0.0
        %3782 = vmatpush.msra.mxu0 0.0
        %3783 = vmatpush.msra.mxu0 %v3760
        %3784 = vmatmul.f32.gmra.mxu0 %v3758
        %v3785 = vpop.f32.mrf.mxu0
        %v3786 = vadd.f32 0.0, %v3785
        %3787 = vdwg.mxu0
        %3788 = vmatpush.msra.mxu0 0.0
        %3789 = vmatpush.msra.mxu0 0.0
        %3790 = vmatpush.msra.mxu0 0.0
        %3791 = vmatpush.msra.mxu0 0.0
        %3792 = vmatpush.msra.mxu0 0.0
        %3793 = vmatpush.msra.mxu0 0.0
        %3794 = vmatpush.msra.mxu0 0.0
        %3795 = vmatpush.msra.mxu0 0.0
        %3796 = vmatpush.msra.mxu0 0.0
        %3797 = vmatpush.msra.mxu0 0.0
        %3798 = vmatpush.msra.mxu0 0.0
        %3799 = vmatpush.msra.mxu0 0.0
        %3800 = vmatpush.msra.mxu0 0.0
        %3801 = vmatpush.msra.mxu0 0.0
        %3802 = vmatpush.msra.mxu0 0.0
        %3803 = vmatpush.msra.mxu0 %v3762
        %3804 = vmatmul.f32.gmra.mxu0 %v3758
        %v3805 = vpop.f32.mrf.mxu0
        %v3806 = vadd.f32 0.0, %v3805
        %3807 = vdwg.mxu0
        %3808 = vmatpush.msra.mxu0 0.0
        %3809 = vmatpush.msra.mxu0 0.0
        %3810 = vmatpush.msra.mxu0 0.0
        %3811 = vmatpush.msra.mxu0 0.0
        %3812 = vmatpush.msra.mxu0 0.0
        %3813 = vmatpush.msra.mxu0 0.0
        %3814 = vmatpush.msra.mxu0 0.0
        %3815 = vmatpush.msra.mxu0 0.0
        %3816 = vmatpush.msra.mxu0 0.0
        %3817 = vmatpush.msra.mxu0 0.0
        %3818 = vmatpush.msra.mxu0 0.0
        %3819 = vmatpush.msra.mxu0 0.0
        %3820 = vmatpush.msra.mxu0 0.0
        %3821 = vmatpush.msra.mxu0 0.0
        %3822 = vmatpush.msra.mxu0 0.0
        %3823 = vmatpush.msra.mxu0 %v3764
        %3824 = vmatmul.f32.gmra.mxu0 %v3758
        %v3825 = vpop.f32.mrf.mxu0
        %v3826 = vadd.f32 0.0, %v3825
        %3827 = vdwg.mxu0
        %3828 = vmatpush.msra.mxu0 0.0
        %3829 = vmatpush.msra.mxu0 0.0
        %3830 = vmatpush.msra.mxu0 0.0
        %3831 = vmatpush.msra.mxu0 0.0
        %3832 = vmatpush.msra.mxu0 0.0
        %3833 = vmatpush.msra.mxu0 0.0
        %3834 = vmatpush.msra.mxu0 0.0
        %3835 = vmatpush.msra.mxu0 0.0
        %3836 = vmatpush.msra.mxu0 0.0
        %3837 = vmatpush.msra.mxu0 0.0
        %3838 = vmatpush.msra.mxu0 0.0
        %3839 = vmatpush.msra.mxu0 0.0
        %3840 = vmatpush.msra.mxu0 0.0
        %3841 = vmatpush.msra.mxu0 0.0
        %3842 = vmatpush.msra.mxu0 0.0
        %3843 = vmatpush.msra.mxu0 %v3766
        %3844 = vmatmul.f32.gmra.mxu0 %v3758
        %v3845 = vpop.f32.mrf.mxu0
        %v3846 = vadd.f32 0.0, %v3845
        %3847 = vdwg.mxu0
        %v3848 = vadd.f32 %v3695, %v3786
        %v3849 = vadd.f32 %v3696, %v3806
        %v3850 = vadd.f32 %v3697, %v3826
        %v3851 = vadd.f32 %v3698, %v3846
        %v3852 = vld [vmem:[#allocation2 + $0x4] sm:$0xff]
        %v3853 = vld [vmem:[#allocation2 + $0xc] sm:$0xff]
        %v3854 = vld [vmem:[#allocation2 + $0x14] sm:$0xf]
        %s3855 = scalar_lea.vmem %s3, 96
        %v3856 = vld [vmem:[%s3855] sm:$0xf]
        %v3858 = vperm.slane %v3856, 0
        %v3859 = vperm.slane %v3856, 1
        %v3860 = vperm.slane %v3856, 2
        %v3861 = vperm.slane %v3856, 3
        %v3862 = vrot.slane %v3859, 4
        %v3863 = vrot.slane %v3861, 4
        %v3864 = vsel %vm215, %v3858, %v3862
        %v3865 = vsel %vm215, %v3860, %v3863
        %3866 = vrot.lane.b32.xlu0 %v3864, 71
        %v3867 = vpop.permute.xlu0 %3866
        %3868 = vrot.lane.b32.xlu0 %v3865, 71
        %v3869 = vpop.permute.xlu0 %3868
        %v3870 = vrot.slane %v3867, 4
        %v3871 = vrot.slane %v3869, 4
        %v3872 = vsel %vm558, %v3870, %v3867
        %v3873 = vsel %vm215, %v3870, %v3871
        %v3874 = vsel %vm558, %v3873, %v3869
        %v3878 = vmul.f32 %v3852, %v3872
        %v3879 = vmul.f32 %v3853, %v3874
        %v3880 = vmul.f32 %v3854, %v3871
        %s3881 = scalar_lea.vmem %s1, 192
        %v3882 = vld [vmem:[%s3881] sm:$0xff]
        %3886 = vst [vmem:[#allocation1] ss:$2 sm:$0xff] %v3878
        %s3887 = scalar_lea.vmem [#allocation1], 16
        %3888 = vst [vmem:[%s3887] ss:$2 sm:$0xff] %v3879
        %s3889 = scalar_lea.vmem [#allocation1], 32
        %3890 = vst [vmem:[%s3889] ss:$2 sm:$0xff] %v3880
        %v3891 = vld.sshfl [vmem:[#allocation1] sm:$0xff pattern:$0x75316420]
        %v3892 = vld.sshfl [vmem:[#allocation1 + $0x8] sm:$0xff pattern:$0x75316420]
        %v3893 = vld.sshfl [vmem:[#allocation1 + $0x10] sm:$0xff pattern:$0x75316420]
        %v3894 = vld.sshfl [vmem:[#allocation1 + $0x18] sm:$0xff pattern:$0x75316420]
        %v3895 = vld.sshfl [vmem:[#allocation1 + $0x20] sm:$0xff pattern:$0x75316420]
        %3896 = vrot.lane.b32.xlu0 %v3891, 57
        %v3897 = vpop.permute.xlu0 %3896
        %3898 = vrot.lane.b32.xlu0 %v3892, 57
        %v3899 = vpop.permute.xlu0 %3898
        %3900 = vrot.lane.b32.xlu0 %v3893, 57
        %v3901 = vpop.permute.xlu0 %3900
        %3902 = vrot.lane.b32.xlu0 %v3894, 57
        %v3903 = vpop.permute.xlu0 %3902
        %3904 = vrot.lane.b32.xlu0 %v3895, 57
        %v3905 = vpop.permute.xlu0 %3904
        %v3906 = vsel %vm523, %v3897, %v3899
        %v3907 = vsel %vm523, %v3899, %v3901
        %v3908 = vsel %vm523, %v3901, %v3903
        %v3909 = vsel %vm523, %v3903, %v3905
        %v3911 = vsel %vm292, %v3882, 0
        %v3913 = vsel %vm215, %v3906, 0
        %v3915 = vsel %vm215, %v3907, 0
        %v3917 = vsel %vm215, %v3908, 0
        %v3919 = vsel %vm215, %v3909, 0
        %3921 = vmatpush.msra.mxu0 0.0
        %3922 = vmatpush.msra.mxu0 0.0
        %3923 = vmatpush.msra.mxu0 0.0
        %3924 = vmatpush.msra.mxu0 0.0
        %3925 = vmatpush.msra.mxu0 0.0
        %3926 = vmatpush.msra.mxu0 0.0
        %3927 = vmatpush.msra.mxu0 0.0
        %3928 = vmatpush.msra.mxu0 0.0
        %3929 = vmatpush.msra.mxu0 0.0
        %3930 = vmatpush.msra.mxu0 0.0
        %3931 = vmatpush.msra.mxu0 0.0
        %3932 = vmatpush.msra.mxu0 0.0
        %3933 = vmatpush.msra.mxu0 0.0
        %3934 = vmatpush.msra.mxu0 0.0
        %3935 = vmatpush.msra.mxu0 0.0
        %3936 = vmatpush.msra.mxu0 %v3913
        %3937 = vmatmul.f32.gmra.mxu0 %v3911
        %v3938 = vpop.f32.mrf.mxu0
        %v3939 = vadd.f32 0.0, %v3938
        %3940 = vdwg.mxu0
        %3941 = vmatpush.msra.mxu0 0.0
        %3942 = vmatpush.msra.mxu0 0.0
        %3943 = vmatpush.msra.mxu0 0.0
        %3944 = vmatpush.msra.mxu0 0.0
        %3945 = vmatpush.msra.mxu0 0.0
        %3946 = vmatpush.msra.mxu0 0.0
        %3947 = vmatpush.msra.mxu0 0.0
        %3948 = vmatpush.msra.mxu0 0.0
        %3949 = vmatpush.msra.mxu0 0.0
        %3950 = vmatpush.msra.mxu0 0.0
        %3951 = vmatpush.msra.mxu0 0.0
        %3952 = vmatpush.msra.mxu0 0.0
        %3953 = vmatpush.msra.mxu0 0.0
        %3954 = vmatpush.msra.mxu0 0.0
        %3955 = vmatpush.msra.mxu0 0.0
        %3956 = vmatpush.msra.mxu0 %v3915
        %3957 = vmatmul.f32.gmra.mxu0 %v3911
        %v3958 = vpop.f32.mrf.mxu0
        %v3959 = vadd.f32 0.0, %v3958
        %3960 = vdwg.mxu0
        %3961 = vmatpush.msra.mxu0 0.0
        %3962 = vmatpush.msra.mxu0 0.0
        %3963 = vmatpush.msra.mxu0 0.0
        %3964 = vmatpush.msra.mxu0 0.0
        %3965 = vmatpush.msra.mxu0 0.0
        %3966 = vmatpush.msra.mxu0 0.0
        %3967 = vmatpush.msra.mxu0 0.0
        %3968 = vmatpush.msra.mxu0 0.0
        %3969 = vmatpush.msra.mxu0 0.0
        %3970 = vmatpush.msra.mxu0 0.0
        %3971 = vmatpush.msra.mxu0 0.0
        %3972 = vmatpush.msra.mxu0 0.0
        %3973 = vmatpush.msra.mxu0 0.0
        %3974 = vmatpush.msra.mxu0 0.0
        %3975 = vmatpush.msra.mxu0 0.0
        %3976 = vmatpush.msra.mxu0 %v3917
        %3977 = vmatmul.f32.gmra.mxu0 %v3911
        %v3978 = vpop.f32.mrf.mxu0
        %v3979 = vadd.f32 0.0, %v3978
        %3980 = vdwg.mxu0
        %3981 = vmatpush.msra.mxu0 0.0
        %3982 = vmatpush.msra.mxu0 0.0
        %3983 = vmatpush.msra.mxu0 0.0
        %3984 = vmatpush.msra.mxu0 0.0
        %3985 = vmatpush.msra.mxu0 0.0
        %3986 = vmatpush.msra.mxu0 0.0
        %3987 = vmatpush.msra.mxu0 0.0
        %3988 = vmatpush.msra.mxu0 0.0
        %3989 = vmatpush.msra.mxu0 0.0
        %3990 = vmatpush.msra.mxu0 0.0
        %3991 = vmatpush.msra.mxu0 0.0
        %3992 = vmatpush.msra.mxu0 0.0
        %3993 = vmatpush.msra.mxu0 0.0
        %3994 = vmatpush.msra.mxu0 0.0
        %3995 = vmatpush.msra.mxu0 0.0
        %3996 = vmatpush.msra.mxu0 %v3919
        %3997 = vmatmul.f32.gmra.mxu0 %v3911
        %v3998 = vpop.f32.mrf.mxu0
        %v3999 = vadd.f32 0.0, %v3998
        %4000 = vdwg.mxu0
        %v4001 = vadd.f32 %v3848, %v3939
        %v4002 = vadd.f32 %v3849, %v3959
        %v4003 = vadd.f32 %v3850, %v3979
        %v4004 = vadd.f32 %v3851, %v3999
        %v4005 = vld [vmem:[#allocation2 + $0x4] sm:$0xff]
        %v4006 = vld [vmem:[#allocation2 + $0xc] sm:$0xff]
        %v4007 = vld [vmem:[#allocation2 + $0x14] sm:$0xf]
        %s4008 = scalar_lea.vmem %s3, 100
        %v4009 = vld [vmem:[%s4008] sm:$0xf]
        %v4011 = vperm.slane %v4009, 0
        %v4012 = vperm.slane %v4009, 1
        %v4013 = vperm.slane %v4009, 2
        %v4014 = vperm.slane %v4009, 3
        %v4015 = vrot.slane %v4012, 4
        %v4016 = vrot.slane %v4014, 4
        %v4017 = vsel %vm215, %v4011, %v4015
        %v4018 = vsel %vm215, %v4013, %v4016
        %4019 = vrot.lane.b32.xlu0 %v4017, 72
        %v4020 = vpop.permute.xlu0 %4019
        %4021 = vrot.lane.b32.xlu0 %v4018, 72
        %v4022 = vpop.permute.xlu0 %4021
        %v4023 = vrot.slane %v4020, 4
        %v4024 = vrot.slane %v4022, 4
        %v4025 = vsel %vm287, %v4023, %v4020
        %v4026 = vsel %vm215, %v4023, %v4024
        %v4027 = vsel %vm287, %v4026, %v4022
        %v4031 = vmul.f32 %v4005, %v4025
        %v4032 = vmul.f32 %v4006, %v4027
        %v4033 = vmul.f32 %v4007, %v4024
        %s4034 = scalar_lea.vmem %s1, 200
        %v4035 = vld [vmem:[%s4034] sm:$0xff]
        %4039 = vst [vmem:[#allocation1] ss:$2 sm:$0xff] %v4031
        %s4040 = scalar_lea.vmem [#allocation1], 16
        %4041 = vst [vmem:[%s4040] ss:$2 sm:$0xff] %v4032
        %s4042 = scalar_lea.vmem [#allocation1], 32
        %4043 = vst [vmem:[%s4042] ss:$2 sm:$0xff] %v4033
        %v4044 = vld.sshfl [vmem:[#allocation1] sm:$0xff pattern:$0x75316420]
        %v4045 = vld.sshfl [vmem:[#allocation1 + $0x8] sm:$0xff pattern:$0x75316420]
        %v4046 = vld.sshfl [vmem:[#allocation1 + $0x10] sm:$0xff pattern:$0x75316420]
        %v4047 = vld.sshfl [vmem:[#allocation1 + $0x18] sm:$0xff pattern:$0x75316420]
        %v4048 = vld.sshfl [vmem:[#allocation1 + $0x20] sm:$0xff pattern:$0x75316420]
        %4049 = vrot.lane.b32.xlu0 %v4044, 56
        %v4050 = vpop.permute.xlu0 %4049
        %4051 = vrot.lane.b32.xlu0 %v4045, 56
        %v4052 = vpop.permute.xlu0 %4051
        %4053 = vrot.lane.b32.xlu0 %v4046, 56
        %v4054 = vpop.permute.xlu0 %4053
        %4055 = vrot.lane.b32.xlu0 %v4047, 56
        %v4056 = vpop.permute.xlu0 %4055
        %4057 = vrot.lane.b32.xlu0 %v4048, 56
        %v4058 = vpop.permute.xlu0 %4057
        %v4059 = vsel %vm252, %v4050, %v4052
        %v4060 = vsel %vm252, %v4052, %v4054
        %v4061 = vsel %vm252, %v4054, %v4056
        %v4062 = vsel %vm252, %v4056, %v4058
        %v4064 = vsel %vm292, %v4035, 0
        %v4066 = vsel %vm215, %v4059, 0
        %v4068 = vsel %vm215, %v4060, 0
        %v4070 = vsel %vm215, %v4061, 0
        %v4072 = vsel %vm215, %v4062, 0
        %4074 = vmatpush.msra.mxu0 0.0
        %4075 = vmatpush.msra.mxu0 0.0
        %4076 = vmatpush.msra.mxu0 0.0
        %4077 = vmatpush.msra.mxu0 0.0
        %4078 = vmatpush.msra.mxu0 0.0
        %4079 = vmatpush.msra.mxu0 0.0
        %4080 = vmatpush.msra.mxu0 0.0
        %4081 = vmatpush.msra.mxu0 0.0
        %4082 = vmatpush.msra.mxu0 0.0
        %4083 = vmatpush.msra.mxu0 0.0
        %4084 = vmatpush.msra.mxu0 0.0
        %4085 = vmatpush.msra.mxu0 0.0
        %4086 = vmatpush.msra.mxu0 0.0
        %4087 = vmatpush.msra.mxu0 0.0
        %4088 = vmatpush.msra.mxu0 0.0
        %4089 = vmatpush.msra.mxu0 %v4066
        %4090 = vmatmul.f32.gmra.mxu0 %v4064
        %v4091 = vpop.f32.mrf.mxu0
        %v4092 = vadd.f32 0.0, %v4091
        %4093 = vdwg.mxu0
        %4094 = vmatpush.msra.mxu0 0.0
        %4095 = vmatpush.msra.mxu0 0.0
        %4096 = vmatpush.msra.mxu0 0.0
        %4097 = vmatpush.msra.mxu0 0.0
        %4098 = vmatpush.msra.mxu0 0.0
        %4099 = vmatpush.msra.mxu0 0.0
        %4100 = vmatpush.msra.mxu0 0.0
        %4101 = vmatpush.msra.mxu0 0.0
        %4102 = vmatpush.msra.mxu0 0.0
        %4103 = vmatpush.msra.mxu0 0.0
        %4104 = vmatpush.msra.mxu0 0.0
        %4105 = vmatpush.msra.mxu0 0.0
        %4106 = vmatpush.msra.mxu0 0.0
        %4107 = vmatpush.msra.mxu0 0.0
        %4108 = vmatpush.msra.mxu0 0.0
        %4109 = vmatpush.msra.mxu0 %v4068
        %4110 = vmatmul.f32.gmra.mxu0 %v4064
        %v4111 = vpop.f32.mrf.mxu0
        %v4112 = vadd.f32 0.0, %v4111
        %4113 = vdwg.mxu0
        %4114 = vmatpush.msra.mxu0 0.0
        %4115 = vmatpush.msra.mxu0 0.0
        %4116 = vmatpush.msra.mxu0 0.0
        %4117 = vmatpush.msra.mxu0 0.0
        %4118 = vmatpush.msra.mxu0 0.0
        %4119 = vmatpush.msra.mxu0 0.0
        %4120 = vmatpush.msra.mxu0 0.0
        %4121 = vmatpush.msra.mxu0 0.0
        %4122 = vmatpush.msra.mxu0 0.0
        %4123 = vmatpush.msra.mxu0 0.0
        %4124 = vmatpush.msra.mxu0 0.0
        %4125 = vmatpush.msra.mxu0 0.0
        %4126 = vmatpush.msra.mxu0 0.0
        %4127 = vmatpush.msra.mxu0 0.0
        %4128 = vmatpush.msra.mxu0 0.0
        %4129 = vmatpush.msra.mxu0 %v4070
        %4130 = vmatmul.f32.gmra.mxu0 %v4064
        %v4131 = vpop.f32.mrf.mxu0
        %v4132 = vadd.f32 0.0, %v4131
        %4133 = vdwg.mxu0
        %4134 = vmatpush.msra.mxu0 0.0
        %4135 = vmatpush.msra.mxu0 0.0
        %4136 = vmatpush.msra.mxu0 0.0
        %4137 = vmatpush.msra.mxu0 0.0
        %4138 = vmatpush.msra.mxu0 0.0
        %4139 = vmatpush.msra.mxu0 0.0
        %4140 = vmatpush.msra.mxu0 0.0
        %4141 = vmatpush.msra.mxu0 0.0
        %4142 = vmatpush.msra.mxu0 0.0
        %4143 = vmatpush.msra.mxu0 0.0
        %4144 = vmatpush.msra.mxu0 0.0
        %4145 = vmatpush.msra.mxu0 0.0
        %4146 = vmatpush.msra.mxu0 0.0
        %4147 = vmatpush.msra.mxu0 0.0
        %4148 = vmatpush.msra.mxu0 0.0
        %4149 = vmatpush.msra.mxu0 %v4072
        %4150 = vmatmul.f32.gmra.mxu0 %v4064
        %v4151 = vpop.f32.mrf.mxu0
        %v4152 = vadd.f32 0.0, %v4151
        %4153 = vdwg.mxu0
        %v4154 = vadd.f32 %v4001, %v4092
        %v4155 = vadd.f32 %v4002, %v4112
        %v4156 = vadd.f32 %v4003, %v4132
        %v4157 = vadd.f32 %v4004, %v4152
        %v4158 = vld [vmem:[#allocation2 + $0x4] sm:$0xff]
        %v4159 = vld [vmem:[#allocation2 + $0xc] sm:$0xff]
        %v4160 = vld [vmem:[#allocation2 + $0x14] sm:$0xf]
        %s4161 = scalar_lea.vmem %s3, 104
        %v4162 = vld [vmem:[%s4161] sm:$0xf]
        %v4164 = vperm.slane %v4162, 0
        %v4165 = vperm.slane %v4162, 1
        %v4166 = vperm.slane %v4162, 2
        %v4167 = vperm.slane %v4162, 3
        %v4168 = vrot.slane %v4165, 4
        %v4169 = vrot.slane %v4167, 4
        %v4170 = vsel %vm215, %v4164, %v4168
        %v4171 = vsel %vm215, %v4166, %v4169
        %4172 = vrot.lane.b32.xlu0 %v4170, 73
        %v4173 = vpop.permute.xlu0 %4172
        %4174 = vrot.lane.b32.xlu0 %v4171, 73
        %v4175 = vpop.permute.xlu0 %4174
        %v4176 = vrot.slane %v4173, 4
        %v4177 = vrot.slane %v4175, 4
        %v4178 = vsel %vm407, %v4176, %v4173
        %v4179 = vsel %vm215, %v4176, %v4177
        %v4180 = vsel %vm407, %v4179, %v4175
        %v4184 = vmul.f32 %v4158, %v4178
        %v4185 = vmul.f32 %v4159, %v4180
        %v4186 = vmul.f32 %v4160, %v4177
        %s4187 = scalar_lea.vmem %s1, 208
        %v4188 = vld [vmem:[%s4187] sm:$0xff]
        %4192 = vst [vmem:[#allocation1] ss:$2 sm:$0xff] %v4184
        %s4193 = scalar_lea.vmem [#allocation1], 16
        %4194 = vst [vmem:[%s4193] ss:$2 sm:$0xff] %v4185
        %s4195 = scalar_lea.vmem [#allocation1], 32
        %4196 = vst [vmem:[%s4195] ss:$2 sm:$0xff] %v4186
        %v4197 = vld.sshfl [vmem:[#allocation1] sm:$0xff pattern:$0x75316420]
        %v4198 = vld.sshfl [vmem:[#allocation1 + $0x8] sm:$0xff pattern:$0x75316420]
        %v4199 = vld.sshfl [vmem:[#allocation1 + $0x10] sm:$0xff pattern:$0x75316420]
        %v4200 = vld.sshfl [vmem:[#allocation1 + $0x18] sm:$0xff pattern:$0x75316420]
        %v4201 = vld.sshfl [vmem:[#allocation1 + $0x20] sm:$0xff pattern:$0x75316420]
        %4202 = vrot.lane.b32.xlu0 %v4197, 55
        %v4203 = vpop.permute.xlu0 %4202
        %4204 = vrot.lane.b32.xlu0 %v4198, 55
        %v4205 = vpop.permute.xlu0 %4204
        %4206 = vrot.lane.b32.xlu0 %v4199, 55
        %v4207 = vpop.permute.xlu0 %4206
        %4208 = vrot.lane.b32.xlu0 %v4200, 55
        %v4209 = vpop.permute.xlu0 %4208
        %4210 = vrot.lane.b32.xlu0 %v4201, 55
        %v4211 = vpop.permute.xlu0 %4210
        %v4212 = vsel %vm224, %v4203, %v4205
        %v4213 = vsel %vm224, %v4205, %v4207
        %v4214 = vsel %vm224, %v4207, %v4209
        %v4215 = vsel %vm224, %v4209, %v4211
        %v4217 = vsel %vm292, %v4188, 0
        %v4219 = vsel %vm215, %v4212, 0
        %v4221 = vsel %vm215, %v4213, 0
        %v4223 = vsel %vm215, %v4214, 0
        %v4225 = vsel %vm215, %v4215, 0
        %4227 = vmatpush.msra.mxu0 0.0
        %4228 = vmatpush.msra.mxu0 0.0
        %4229 = vmatpush.msra.mxu0 0.0
        %4230 = vmatpush.msra.mxu0 0.0
        %4231 = vmatpush.msra.mxu0 0.0
        %4232 = vmatpush.msra.mxu0 0.0
        %4233 = vmatpush.msra.mxu0 0.0
        %4234 = vmatpush.msra.mxu0 0.0
        %4235 = vmatpush.msra.mxu0 0.0
        %4236 = vmatpush.msra.mxu0 0.0
        %4237 = vmatpush.msra.mxu0 0.0
        %4238 = vmatpush.msra.mxu0 0.0
        %4239 = vmatpush.msra.mxu0 0.0
        %4240 = vmatpush.msra.mxu0 0.0
        %4241 = vmatpush.msra.mxu0 0.0
        %4242 = vmatpush.msra.mxu0 %v4219
        %4243 = vmatmul.f32.gmra.mxu0 %v4217
        %v4244 = vpop.f32.mrf.mxu0
        %v4245 = vadd.f32 0.0, %v4244
        %4246 = vdwg.mxu0
        %4247 = vmatpush.msra.mxu0 0.0
        %4248 = vmatpush.msra.mxu0 0.0
        %4249 = vmatpush.msra.mxu0 0.0
        %4250 = vmatpush.msra.mxu0 0.0
        %4251 = vmatpush.msra.mxu0 0.0
        %4252 = vmatpush.msra.mxu0 0.0
        %4253 = vmatpush.msra.mxu0 0.0
        %4254 = vmatpush.msra.mxu0 0.0
        %4255 = vmatpush.msra.mxu0 0.0
        %4256 = vmatpush.msra.mxu0 0.0
        %4257 = vmatpush.msra.mxu0 0.0
        %4258 = vmatpush.msra.mxu0 0.0
        %4259 = vmatpush.msra.mxu0 0.0
        %4260 = vmatpush.msra.mxu0 0.0
        %4261 = vmatpush.msra.mxu0 0.0
        %4262 = vmatpush.msra.mxu0 %v4221
        %4263 = vmatmul.f32.gmra.mxu0 %v4217
        %v4264 = vpop.f32.mrf.mxu0
        %v4265 = vadd.f32 0.0, %v4264
        %4266 = vdwg.mxu0
        %4267 = vmatpush.msra.mxu0 0.0
        %4268 = vmatpush.msra.mxu0 0.0
        %4269 = vmatpush.msra.mxu0 0.0
        %4270 = vmatpush.msra.mxu0 0.0
        %4271 = vmatpush.msra.mxu0 0.0
        %4272 = vmatpush.msra.mxu0 0.0
        %4273 = vmatpush.msra.mxu0 0.0
        %4274 = vmatpush.msra.mxu0 0.0
        %4275 = vmatpush.msra.mxu0 0.0
        %4276 = vmatpush.msra.mxu0 0.0
        %4277 = vmatpush.msra.mxu0 0.0
        %4278 = vmatpush.msra.mxu0 0.0
        %4279 = vmatpush.msra.mxu0 0.0
        %4280 = vmatpush.msra.mxu0 0.0
        %4281 = vmatpush.msra.mxu0 0.0
        %4282 = vmatpush.msra.mxu0 %v4223
        %4283 = vmatmul.f32.gmra.mxu0 %v4217
        %v4284 = vpop.f32.mrf.mxu0
        %v4285 = vadd.f32 0.0, %v4284
        %4286 = vdwg.mxu0
        %4287 = vmatpush.msra.mxu0 0.0
        %4288 = vmatpush.msra.mxu0 0.0
        %4289 = vmatpush.msra.mxu0 0.0
        %4290 = vmatpush.msra.mxu0 0.0
        %4291 = vmatpush.msra.mxu0 0.0
        %4292 = vmatpush.msra.mxu0 0.0
        %4293 = vmatpush.msra.mxu0 0.0
        %4294 = vmatpush.msra.mxu0 0.0
        %4295 = vmatpush.msra.mxu0 0.0
        %4296 = vmatpush.msra.mxu0 0.0
        %4297 = vmatpush.msra.mxu0 0.0
        %4298 = vmatpush.msra.mxu0 0.0
        %4299 = vmatpush.msra.mxu0 0.0
        %4300 = vmatpush.msra.mxu0 0.0
        %4301 = vmatpush.msra.mxu0 0.0
        %4302 = vmatpush.msra.mxu0 %v4225
        %4303 = vmatmul.f32.gmra.mxu0 %v4217
        %v4304 = vpop.f32.mrf.mxu0
        %v4305 = vadd.f32 0.0, %v4304
        %4306 = vdwg.mxu0
        %v4307 = vadd.f32 %v4154, %v4245
        %v4308 = vadd.f32 %v4155, %v4265
        %v4309 = vadd.f32 %v4156, %v4285
        %v4310 = vadd.f32 %v4157, %v4305
        %v4311 = vadd.f32 %v4307, %v4308
        %v4312 = vadd.f32 %v4311, %v4309
        %v4313 = vadd.f32 %v4312, %v4310
        %4314 = vadd.xlane.f32.xlu0 %v4313
        %v4315 = vpop.xlane.xlu0 %4314
        %v4316 = vmul.f32 %v4315, 0.001953125
        %v4317 = vmul.f32 %v4307, %v4307
        %v4318 = vmul.f32 %v4308, %v4308
        %v4319 = vmul.f32 %v4309, %v4309
        %v4320 = vmul.f32 %v4310, %v4310
        %v4321 = vadd.f32 %v4317, %v4318
        %v4322 = vadd.f32 %v4321, %v4319
        %v4323 = vadd.f32 %v4322, %v4320
        %4324 = vadd.xlane.f32.xlu0 %v4323
        %v4325 = vpop.xlane.xlu0 %4324
        %v4326 = vmul.f32 %v4325, 0.001953125
        %v4327 = vmul.f32 %v4316, %v4316
        %v4328 = vsub.f32 %v4326, %v4327
        %v4329 = vmax.f32 %v4328, 0.0
        %v4330 = vsub.f32 %v4307, %v4316
        %v4331 = vsub.f32 %v4308, %v4316
        %v4332 = vsub.f32 %v4309, %v4316
        %v4333 = vsub.f32 %v4310, %v4316
        %v4334 = vadd.f32 %v4329, 1e-05
        %v4335 = vrsqrt.pop %v4334
        %v4336 = vmul.f32 %v4335, %v4334
        %v4337 = vmul.f32 %v4336, %v4335
        %v4338 = vmul.f32 0.5, %v4337
        %v4339 = vsub.f32 1.5, %v4338
        %v4340 = vmul.f32 %v4335, %v4339
        %vm4341 = vweird.f32 %v4334
        %vm4342 = vweird.f32 %v4335
        %vm4343 = vmor %vm4341, %vm4342
        %v4344 = vsel %vm4343, %v4335, %v4340
        %v4345 = vmul.f32 %v4330, %v4344
        %v4346 = vmul.f32 %v4331, %v4344
        %v4347 = vmul.f32 %v4332, %v4344
        %v4348 = vmul.f32 %v4333, %v4344
        %v4349 = vmax.f32 %v4345, 0.0
        %v4350 = vmax.f32 %v4346, 0.0
        %v4351 = vmax.f32 %v4347, 0.0
        %v4352 = vmax.f32 %v4348, 0.0
        %4353 = vst [vmem:[#allocation3 + $0x8] sm:$0xff] %v4349
        %4354 = vst [vmem:[#allocation3 + $0x10] sm:$0xff] %v4350
        %4355 = vst [vmem:[#allocation3 + $0x18] sm:$0xff] %v4351
        %4356 = vst [vmem:[#allocation3 + $0x20] sm:$0xff] %v4352
        %v4357 = vld [vmem:[#allocation3] sm:$0xff]
        %v4358 = vld [vmem:[#allocation3 + $0x8] sm:$0xff]
        %v4359 = vld [vmem:[#allocation3 + $0x10] sm:$0xff]
        %v4360 = vld [vmem:[#allocation3 + $0x18] sm:$0xff]
        %v4361 = vld [vmem:[#allocation3 + $0x20] sm:$0xff]
        %v4362 = vld [vmem:[%s3] sm:$0xf]
        %v4364 = vperm.slane %v4362, 0
        %v4365 = vperm.slane %v4362, 1
        %v4366 = vperm.slane %v4362, 2
        %v4367 = vperm.slane %v4362, 3
        %4368 = vrot.lane.b32.xlu0 %v4364, 55
        %v4369 = vpop.permute.xlu0 %4368
        %4370 = vrot.lane.b32.xlu0 %v4365, 55
        %v4371 = vpop.permute.xlu0 %4370
        %4372 = vrot.lane.b32.xlu0 %v4366, 55
        %v4373 = vpop.permute.xlu0 %4372
        %4374 = vrot.lane.b32.xlu0 %v4367, 55
        %v4375 = vpop.permute.xlu0 %4374
        %v4376 = vsel %vm224, %v4369, %v4371
        %v4377 = vsel %vm224, %v4371, %v4373
        %v4378 = vsel %vm224, %v4373, %v4375
        %v4384 = vmul.f32 %v4357, %v4369
        %v4385 = vmul.f32 %v4358, %v4376
        %v4386 = vmul.f32 %v4359, %v4377
        %v4387 = vmul.f32 %v4360, %v4378
        %v4388 = vmul.f32 %v4361, %v4375
        %v4389 = vld [vmem:[%s2] sm:$0xff]
        %v4390 = vld [vmem:[%s235] sm:$0xf]
        %v4392 = vperm.slane %v4390, 0
        %v4393 = vperm.slane %v4390, 1
        %v4394 = vperm.slane %v4390, 2
        %v4395 = vperm.slane %v4390, 3
        %4396 = vrot.lane.b32.xlu0 %v4392, 56
        %v4397 = vpop.permute.xlu0 %4396
        %4398 = vrot.lane.b32.xlu0 %v4393, 56
        %v4399 = vpop.permute.xlu0 %4398
        %4400 = vrot.lane.b32.xlu0 %v4394, 56
        %v4401 = vpop.permute.xlu0 %4400
        %4402 = vrot.lane.b32.xlu0 %v4395, 56
        %v4403 = vpop.permute.xlu0 %4402
        %v4404 = vsel %vm252, %v4397, %v4399
        %v4405 = vsel %vm252, %v4399, %v4401
        %v4406 = vsel %vm252, %v4401, %v4403
        %v4412 = vmul.f32 %v4357, %v4397
        %v4413 = vmul.f32 %v4358, %v4404
        %v4414 = vmul.f32 %v4359, %v4405
        %v4415 = vmul.f32 %v4360, %v4406
        %v4416 = vmul.f32 %v4361, %v4403
        %s4417 = scalar_lea.vmem %s2, 8
        %v4418 = vld [vmem:[%s4417] sm:$0xff]
        %4424 = vrot.lane.b32.xlu0 %v4412, 72
        %v4425 = vpop.permute.xlu0 %4424
        %4426 = vrot.lane.b32.xlu0 %v4413, 72
        %v4427 = vpop.permute.xlu0 %4426
        %4428 = vrot.lane.b32.xlu0 %v4414, 72
        %v4429 = vpop.permute.xlu0 %4428
        %4430 = vrot.lane.b32.xlu0 %v4415, 72
        %v4431 = vpop.permute.xlu0 %4430
        %4432 = vrot.lane.b32.xlu0 %v4416, 72
        %v4433 = vpop.permute.xlu0 %4432
        %v4434 = vsel %vm287, %v4425, %v4427
        %v4435 = vsel %vm287, %v4427, %v4429
        %v4436 = vsel %vm287, %v4429, %v4431
        %v4437 = vsel %vm287, %v4431, %v4433
        %v4443 = vsel %vm1789, %v4418, 0
        %4445 = vmatpush.msra.mxu0 0.0
        %4446 = vmatpush.msra.mxu0 0.0
        %4447 = vmatpush.msra.mxu0 0.0
        %4448 = vmatpush.msra.mxu0 0.0
        %4449 = vmatpush.msra.mxu0 0.0
        %4450 = vmatpush.msra.mxu0 0.0
        %4451 = vmatpush.msra.mxu0 0.0
        %4452 = vmatpush.msra.mxu0 0.0
        %4453 = vmatpush.msra.mxu0 0.0
        %4454 = vmatpush.msra.mxu0 0.0
        %4455 = vmatpush.msra.mxu0 0.0
        %4456 = vmatpush.msra.mxu0 0.0
        %4457 = vmatpush.msra.mxu0 0.0
        %4458 = vmatpush.msra.mxu0 0.0
        %4459 = vmatpush.msra.mxu0 0.0
        %4460 = vmatpush.msra.mxu0 %v4434
        %4461 = vmatmul.f32.gmra.mxu0 %v4443
        %v4462 = vpop.f32.mrf.mxu0
        %v4463 = vadd.f32 0.0, %v4462
        %4464 = vdwg.mxu0
        %4465 = vmatpush.msra.mxu0 0.0
        %4466 = vmatpush.msra.mxu0 0.0
        %4467 = vmatpush.msra.mxu0 0.0
        %4468 = vmatpush.msra.mxu0 0.0
        %4469 = vmatpush.msra.mxu0 0.0
        %4470 = vmatpush.msra.mxu0 0.0
        %4471 = vmatpush.msra.mxu0 0.0
        %4472 = vmatpush.msra.mxu0 0.0
        %4473 = vmatpush.msra.mxu0 0.0
        %4474 = vmatpush.msra.mxu0 0.0
        %4475 = vmatpush.msra.mxu0 0.0
        %4476 = vmatpush.msra.mxu0 0.0
        %4477 = vmatpush.msra.mxu0 0.0
        %4478 = vmatpush.msra.mxu0 0.0
        %4479 = vmatpush.msra.mxu0 0.0
        %4480 = vmatpush.msra.mxu0 %v4435
        %4481 = vmatmul.f32.gmra.mxu0 %v4443
        %v4482 = vpop.f32.mrf.mxu0
        %v4483 = vadd.f32 0.0, %v4482
        %4484 = vdwg.mxu0
        %4485 = vmatpush.msra.mxu0 0.0
        %4486 = vmatpush.msra.mxu0 0.0
        %4487 = vmatpush.msra.mxu0 0.0
        %4488 = vmatpush.msra.mxu0 0.0
        %4489 = vmatpush.msra.mxu0 0.0
        %4490 = vmatpush.msra.mxu0 0.0
        %4491 = vmatpush.msra.mxu0 0.0
        %4492 = vmatpush.msra.mxu0 0.0
        %4493 = vmatpush.msra.mxu0 0.0
        %4494 = vmatpush.msra.mxu0 0.0
        %4495 = vmatpush.msra.mxu0 0.0
        %4496 = vmatpush.msra.mxu0 0.0
        %4497 = vmatpush.msra.mxu0 0.0
        %4498 = vmatpush.msra.mxu0 0.0
        %4499 = vmatpush.msra.mxu0 0.0
        %4500 = vmatpush.msra.mxu0 %v4436
        %4501 = vmatmul.f32.gmra.mxu0 %v4443
        %v4502 = vpop.f32.mrf.mxu0
        %v4503 = vadd.f32 0.0, %v4502
        %4504 = vdwg.mxu0
        %4505 = vmatpush.msra.mxu0 0.0
        %4506 = vmatpush.msra.mxu0 0.0
        %4507 = vmatpush.msra.mxu0 0.0
        %4508 = vmatpush.msra.mxu0 0.0
        %4509 = vmatpush.msra.mxu0 0.0
        %4510 = vmatpush.msra.mxu0 0.0
        %4511 = vmatpush.msra.mxu0 0.0
        %4512 = vmatpush.msra.mxu0 0.0
        %4513 = vmatpush.msra.mxu0 0.0
        %4514 = vmatpush.msra.mxu0 0.0
        %4515 = vmatpush.msra.mxu0 0.0
        %4516 = vmatpush.msra.mxu0 0.0
        %4517 = vmatpush.msra.mxu0 0.0
        %4518 = vmatpush.msra.mxu0 0.0
        %4519 = vmatpush.msra.mxu0 0.0
        %4520 = vmatpush.msra.mxu0 %v4437
        %4521 = vmatmul.f32.gmra.mxu0 %v4443
        %v4522 = vpop.f32.mrf.mxu0
        %v4523 = vadd.f32 0.0, %v4522
        %4524 = vdwg.mxu0
        %4530 = vrot.lane.b32.xlu0 %v4384, 73
        %v4531 = vpop.permute.xlu0 %4530
        %4532 = vrot.lane.b32.xlu0 %v4385, 73
        %v4533 = vpop.permute.xlu0 %4532
        %4534 = vrot.lane.b32.xlu0 %v4386, 73
        %v4535 = vpop.permute.xlu0 %4534
        %4536 = vrot.lane.b32.xlu0 %v4387, 73
        %v4537 = vpop.permute.xlu0 %4536
        %4538 = vrot.lane.b32.xlu0 %v4388, 73
        %v4539 = vpop.permute.xlu0 %4538
        %v4540 = vsel %vm407, %v4531, %v4533
        %v4541 = vsel %vm407, %v4533, %v4535
        %v4542 = vsel %vm407, %v4535, %v4537
        %v4543 = vsel %vm407, %v4537, %v4539
        %v4549 = vsel %vm1789, %v4389, 0
        %4551 = vmatpush.msra.mxu0 0.0
        %4552 = vmatpush.msra.mxu0 0.0
        %4553 = vmatpush.msra.mxu0 0.0
        %4554 = vmatpush.msra.mxu0 0.0
        %4555 = vmatpush.msra.mxu0 0.0
        %4556 = vmatpush.msra.mxu0 0.0
        %4557 = vmatpush.msra.mxu0 0.0
        %4558 = vmatpush.msra.mxu0 0.0
        %4559 = vmatpush.msra.mxu0 0.0
        %4560 = vmatpush.msra.mxu0 0.0
        %4561 = vmatpush.msra.mxu0 0.0
        %4562 = vmatpush.msra.mxu0 0.0
        %4563 = vmatpush.msra.mxu0 0.0
        %4564 = vmatpush.msra.mxu0 0.0
        %4565 = vmatpush.msra.mxu0 0.0
        %4566 = vmatpush.msra.mxu0 %v4540
        %4567 = vmatmul.f32.gmra.mxu0 %v4549
        %v4568 = vpop.f32.mrf.mxu0
        %v4569 = vadd.f32 %v4463, %v4568
        %4570 = vdwg.mxu0
        %4571 = vmatpush.msra.mxu0 0.0
        %4572 = vmatpush.msra.mxu0 0.0
        %4573 = vmatpush.msra.mxu0 0.0
        %4574 = vmatpush.msra.mxu0 0.0
        %4575 = vmatpush.msra.mxu0 0.0
        %4576 = vmatpush.msra.mxu0 0.0
        %4577 = vmatpush.msra.mxu0 0.0
        %4578 = vmatpush.msra.mxu0 0.0
        %4579 = vmatpush.msra.mxu0 0.0
        %4580 = vmatpush.msra.mxu0 0.0
        %4581 = vmatpush.msra.mxu0 0.0
        %4582 = vmatpush.msra.mxu0 0.0
        %4583 = vmatpush.msra.mxu0 0.0
        %4584 = vmatpush.msra.mxu0 0.0
        %4585 = vmatpush.msra.mxu0 0.0
        %4586 = vmatpush.msra.mxu0 %v4541
        %4587 = vmatmul.f32.gmra.mxu0 %v4549
        %v4588 = vpop.f32.mrf.mxu0
        %v4589 = vadd.f32 %v4483, %v4588
        %4590 = vdwg.mxu0
        %4591 = vmatpush.msra.mxu0 0.0
        %4592 = vmatpush.msra.mxu0 0.0
        %4593 = vmatpush.msra.mxu0 0.0
        %4594 = vmatpush.msra.mxu0 0.0
        %4595 = vmatpush.msra.mxu0 0.0
        %4596 = vmatpush.msra.mxu0 0.0
        %4597 = vmatpush.msra.mxu0 0.0
        %4598 = vmatpush.msra.mxu0 0.0
        %4599 = vmatpush.msra.mxu0 0.0
        %4600 = vmatpush.msra.mxu0 0.0
        %4601 = vmatpush.msra.mxu0 0.0
        %4602 = vmatpush.msra.mxu0 0.0
        %4603 = vmatpush.msra.mxu0 0.0
        %4604 = vmatpush.msra.mxu0 0.0
        %4605 = vmatpush.msra.mxu0 0.0
        %4606 = vmatpush.msra.mxu0 %v4542
        %4607 = vmatmul.f32.gmra.mxu0 %v4549
        %v4608 = vpop.f32.mrf.mxu0
        %v4609 = vadd.f32 %v4503, %v4608
        %4610 = vdwg.mxu0
        %4611 = vmatpush.msra.mxu0 0.0
        %4612 = vmatpush.msra.mxu0 0.0
        %4613 = vmatpush.msra.mxu0 0.0
        %4614 = vmatpush.msra.mxu0 0.0
        %4615 = vmatpush.msra.mxu0 0.0
        %4616 = vmatpush.msra.mxu0 0.0
        %4617 = vmatpush.msra.mxu0 0.0
        %4618 = vmatpush.msra.mxu0 0.0
        %4619 = vmatpush.msra.mxu0 0.0
        %4620 = vmatpush.msra.mxu0 0.0
        %4621 = vmatpush.msra.mxu0 0.0
        %4622 = vmatpush.msra.mxu0 0.0
        %4623 = vmatpush.msra.mxu0 0.0
        %4624 = vmatpush.msra.mxu0 0.0
        %4625 = vmatpush.msra.mxu0 0.0
        %4626 = vmatpush.msra.mxu0 %v4543
        %4627 = vmatmul.f32.gmra.mxu0 %v4549
        %v4628 = vpop.f32.mrf.mxu0
        %v4629 = vadd.f32 %v4523, %v4628
        %4630 = vdwg.mxu0
        %v4631 = vld [vmem:[%s506] sm:$0xf]
        %v4633 = vperm.slane %v4631, 0
        %v4634 = vperm.slane %v4631, 1
        %v4635 = vperm.slane %v4631, 2
        %v4636 = vperm.slane %v4631, 3
        %4637 = vrot.lane.b32.xlu0 %v4633, 57
        %v4638 = vpop.permute.xlu0 %4637
        %4639 = vrot.lane.b32.xlu0 %v4634, 57
        %v4640 = vpop.permute.xlu0 %4639
        %4641 = vrot.lane.b32.xlu0 %v4635, 57
        %v4642 = vpop.permute.xlu0 %4641
        %4643 = vrot.lane.b32.xlu0 %v4636, 57
        %v4644 = vpop.permute.xlu0 %4643
        %v4645 = vsel %vm523, %v4638, %v4640
        %v4646 = vsel %vm523, %v4640, %v4642
        %v4647 = vsel %vm523, %v4642, %v4644
        %v4653 = vmul.f32 %v4357, %v4638
        %v4654 = vmul.f32 %v4358, %v4645
        %v4655 = vmul.f32 %v4359, %v4646
        %v4656 = vmul.f32 %v4360, %v4647
        %v4657 = vmul.f32 %v4361, %v4644
        %s4658 = scalar_lea.vmem %s2, 16
        %v4659 = vld [vmem:[%s4658] sm:$0xff]
        %4665 = vrot.lane.b32.xlu0 %v4653, 71
        %v4666 = vpop.permute.xlu0 %4665
        %4667 = vrot.lane.b32.xlu0 %v4654, 71
        %v4668 = vpop.permute.xlu0 %4667
        %4669 = vrot.lane.b32.xlu0 %v4655, 71
        %v4670 = vpop.permute.xlu0 %4669
        %4671 = vrot.lane.b32.xlu0 %v4656, 71
        %v4672 = vpop.permute.xlu0 %4671
        %4673 = vrot.lane.b32.xlu0 %v4657, 71
        %v4674 = vpop.permute.xlu0 %4673
        %v4675 = vsel %vm558, %v4666, %v4668
        %v4676 = vsel %vm558, %v4668, %v4670
        %v4677 = vsel %vm558, %v4670, %v4672
        %v4678 = vsel %vm558, %v4672, %v4674
        %v4684 = vsel %vm1789, %v4659, 0
        %4686 = vmatpush.msra.mxu0 0.0
        %4687 = vmatpush.msra.mxu0 0.0
        %4688 = vmatpush.msra.mxu0 0.0
        %4689 = vmatpush.msra.mxu0 0.0
        %4690 = vmatpush.msra.mxu0 0.0
        %4691 = vmatpush.msra.mxu0 0.0
        %4692 = vmatpush.msra.mxu0 0.0
        %4693 = vmatpush.msra.mxu0 0.0
        %4694 = vmatpush.msra.mxu0 0.0
        %4695 = vmatpush.msra.mxu0 0.0
        %4696 = vmatpush.msra.mxu0 0.0
        %4697 = vmatpush.msra.mxu0 0.0
        %4698 = vmatpush.msra.mxu0 0.0
        %4699 = vmatpush.msra.mxu0 0.0
        %4700 = vmatpush.msra.mxu0 0.0
        %4701 = vmatpush.msra.mxu0 %v4675
        %4702 = vmatmul.f32.gmra.mxu0 %v4684
        %v4703 = vpop.f32.mrf.mxu0
        %v4704 = vadd.f32 0.0, %v4703
        %4705 = vdwg.mxu0
        %4706 = vmatpush.msra.mxu0 0.0
        %4707 = vmatpush.msra.mxu0 0.0
        %4708 = vmatpush.msra.mxu0 0.0
        %4709 = vmatpush.msra.mxu0 0.0
        %4710 = vmatpush.msra.mxu0 0.0
        %4711 = vmatpush.msra.mxu0 0.0
        %4712 = vmatpush.msra.mxu0 0.0
        %4713 = vmatpush.msra.mxu0 0.0
        %4714 = vmatpush.msra.mxu0 0.0
        %4715 = vmatpush.msra.mxu0 0.0
        %4716 = vmatpush.msra.mxu0 0.0
        %4717 = vmatpush.msra.mxu0 0.0
        %4718 = vmatpush.msra.mxu0 0.0
        %4719 = vmatpush.msra.mxu0 0.0
        %4720 = vmatpush.msra.mxu0 0.0
        %4721 = vmatpush.msra.mxu0 %v4676
        %4722 = vmatmul.f32.gmra.mxu0 %v4684
        %v4723 = vpop.f32.mrf.mxu0
        %v4724 = vadd.f32 0.0, %v4723
        %4725 = vdwg.mxu0
        %4726 = vmatpush.msra.mxu0 0.0
        %4727 = vmatpush.msra.mxu0 0.0
        %4728 = vmatpush.msra.mxu0 0.0
        %4729 = vmatpush.msra.mxu0 0.0
        %4730 = vmatpush.msra.mxu0 0.0
        %4731 = vmatpush.msra.mxu0 0.0
        %4732 = vmatpush.msra.mxu0 0.0
        %4733 = vmatpush.msra.mxu0 0.0
        %4734 = vmatpush.msra.mxu0 0.0
        %4735 = vmatpush.msra.mxu0 0.0
        %4736 = vmatpush.msra.mxu0 0.0
        %4737 = vmatpush.msra.mxu0 0.0
        %4738 = vmatpush.msra.mxu0 0.0
        %4739 = vmatpush.msra.mxu0 0.0
        %4740 = vmatpush.msra.mxu0 0.0
        %4741 = vmatpush.msra.mxu0 %v4677
        %4742 = vmatmul.f32.gmra.mxu0 %v4684
        %v4743 = vpop.f32.mrf.mxu0
        %v4744 = vadd.f32 0.0, %v4743
        %4745 = vdwg.mxu0
        %4746 = vmatpush.msra.mxu0 0.0
        %4747 = vmatpush.msra.mxu0 0.0
        %4748 = vmatpush.msra.mxu0 0.0
        %4749 = vmatpush.msra.mxu0 0.0
        %4750 = vmatpush.msra.mxu0 0.0
        %4751 = vmatpush.msra.mxu0 0.0
        %4752 = vmatpush.msra.mxu0 0.0
        %4753 = vmatpush.msra.mxu0 0.0
        %4754 = vmatpush.msra.mxu0 0.0
        %4755 = vmatpush.msra.mxu0 0.0
        %4756 = vmatpush.msra.mxu0 0.0
        %4757 = vmatpush.msra.mxu0 0.0
        %4758 = vmatpush.msra.mxu0 0.0
        %4759 = vmatpush.msra.mxu0 0.0
        %4760 = vmatpush.msra.mxu0 0.0
        %4761 = vmatpush.msra.mxu0 %v4678
        %4762 = vmatmul.f32.gmra.mxu0 %v4684
        %v4763 = vpop.f32.mrf.mxu0
        %v4764 = vadd.f32 0.0, %v4763
        %4765 = vdwg.mxu0
        %v4766 = vadd.f32 %v4569, %v4704
        %v4767 = vadd.f32 %v4589, %v4724
        %v4768 = vadd.f32 %v4609, %v4744
        %v4769 = vadd.f32 %v4629, %v4764
        %v4770 = vld [vmem:[%s661] sm:$0xf]
        %v4772 = vperm.slane %v4770, 0
        %v4773 = vperm.slane %v4770, 1
        %v4774 = vperm.slane %v4770, 2
        %v4775 = vperm.slane %v4770, 3
        %4776 = vrot.lane.b32.xlu0 %v4772, 63
        %v4777 = vpop.permute.xlu0 %4776
        %4778 = vrot.lane.b32.xlu0 %v4773, 63
        %v4779 = vpop.permute.xlu0 %4778
        %4780 = vrot.lane.b32.xlu0 %v4774, 63
        %v4781 = vpop.permute.xlu0 %4780
        %4782 = vrot.lane.b32.xlu0 %v4775, 63
        %v4783 = vpop.permute.xlu0 %4782
        %v4784 = vsel %vm678, %v4777, %v4779
        %v4785 = vsel %vm678, %v4779, %v4781
        %v4786 = vsel %vm678, %v4781, %v4783
        %v4792 = vmul.f32 %v4357, %v4777
        %v4793 = vmul.f32 %v4358, %v4784
        %v4794 = vmul.f32 %v4359, %v4785
        %v4795 = vmul.f32 %v4360, %v4786
        %v4796 = vmul.f32 %v4361, %v4783
        %s4797 = scalar_lea.vmem %s2, 24
        %v4798 = vld [vmem:[%s4797] sm:$0xff]
        %4804 = vrot.lane.b32.xlu0 %v4792, 65
        %v4805 = vpop.permute.xlu0 %4804
        %4806 = vrot.lane.b32.xlu0 %v4793, 65
        %v4807 = vpop.permute.xlu0 %4806
        %4808 = vrot.lane.b32.xlu0 %v4794, 65
        %v4809 = vpop.permute.xlu0 %4808
        %4810 = vrot.lane.b32.xlu0 %v4795, 65
        %v4811 = vpop.permute.xlu0 %4810
        %4812 = vrot.lane.b32.xlu0 %v4796, 65
        %v4813 = vpop.permute.xlu0 %4812
        %v4814 = vsel %vm713, %v4805, %v4807
        %v4815 = vsel %vm713, %v4807, %v4809
        %v4816 = vsel %vm713, %v4809, %v4811
        %v4817 = vsel %vm713, %v4811, %v4813
        %v4823 = vsel %vm1789, %v4798, 0
        %4825 = vmatpush.msra.mxu0 0.0
        %4826 = vmatpush.msra.mxu0 0.0
        %4827 = vmatpush.msra.mxu0 0.0
        %4828 = vmatpush.msra.mxu0 0.0
        %4829 = vmatpush.msra.mxu0 0.0
        %4830 = vmatpush.msra.mxu0 0.0
        %4831 = vmatpush.msra.mxu0 0.0
        %4832 = vmatpush.msra.mxu0 0.0
        %4833 = vmatpush.msra.mxu0 0.0
        %4834 = vmatpush.msra.mxu0 0.0
        %4835 = vmatpush.msra.mxu0 0.0
        %4836 = vmatpush.msra.mxu0 0.0
        %4837 = vmatpush.msra.mxu0 0.0
        %4838 = vmatpush.msra.mxu0 0.0
        %4839 = vmatpush.msra.mxu0 0.0
        %4840 = vmatpush.msra.mxu0 %v4814
        %4841 = vmatmul.f32.gmra.mxu0 %v4823
        %v4842 = vpop.f32.mrf.mxu0
        %v4843 = vadd.f32 0.0, %v4842
        %4844 = vdwg.mxu0
        %4845 = vmatpush.msra.mxu0 0.0
        %4846 = vmatpush.msra.mxu0 0.0
        %4847 = vmatpush.msra.mxu0 0.0
        %4848 = vmatpush.msra.mxu0 0.0
        %4849 = vmatpush.msra.mxu0 0.0
        %4850 = vmatpush.msra.mxu0 0.0
        %4851 = vmatpush.msra.mxu0 0.0
        %4852 = vmatpush.msra.mxu0 0.0
        %4853 = vmatpush.msra.mxu0 0.0
        %4854 = vmatpush.msra.mxu0 0.0
        %4855 = vmatpush.msra.mxu0 0.0
        %4856 = vmatpush.msra.mxu0 0.0
        %4857 = vmatpush.msra.mxu0 0.0
        %4858 = vmatpush.msra.mxu0 0.0
        %4859 = vmatpush.msra.mxu0 0.0
        %4860 = vmatpush.msra.mxu0 %v4815
        %4861 = vmatmul.f32.gmra.mxu0 %v4823
        %v4862 = vpop.f32.mrf.mxu0
        %v4863 = vadd.f32 0.0, %v4862
        %4864 = vdwg.mxu0
        %4865 = vmatpush.msra.mxu0 0.0
        %4866 = vmatpush.msra.mxu0 0.0
        %4867 = vmatpush.msra.mxu0 0.0
        %4868 = vmatpush.msra.mxu0 0.0
        %4869 = vmatpush.msra.mxu0 0.0
        %4870 = vmatpush.msra.mxu0 0.0
        %4871 = vmatpush.msra.mxu0 0.0
        %4872 = vmatpush.msra.mxu0 0.0
        %4873 = vmatpush.msra.mxu0 0.0
        %4874 = vmatpush.msra.mxu0 0.0
        %4875 = vmatpush.msra.mxu0 0.0
        %4876 = vmatpush.msra.mxu0 0.0
        %4877 = vmatpush.msra.mxu0 0.0
        %4878 = vmatpush.msra.mxu0 0.0
        %4879 = vmatpush.msra.mxu0 0.0
        %4880 = vmatpush.msra.mxu0 %v4816
        %4881 = vmatmul.f32.gmra.mxu0 %v4823
        %v4882 = vpop.f32.mrf.mxu0
        %v4883 = vadd.f32 0.0, %v4882
        %4884 = vdwg.mxu0
        %4885 = vmatpush.msra.mxu0 0.0
        %4886 = vmatpush.msra.mxu0 0.0
        %4887 = vmatpush.msra.mxu0 0.0
        %4888 = vmatpush.msra.mxu0 0.0
        %4889 = vmatpush.msra.mxu0 0.0
        %4890 = vmatpush.msra.mxu0 0.0
        %4891 = vmatpush.msra.mxu0 0.0
        %4892 = vmatpush.msra.mxu0 0.0
        %4893 = vmatpush.msra.mxu0 0.0
        %4894 = vmatpush.msra.mxu0 0.0
        %4895 = vmatpush.msra.mxu0 0.0
        %4896 = vmatpush.msra.mxu0 0.0
        %4897 = vmatpush.msra.mxu0 0.0
        %4898 = vmatpush.msra.mxu0 0.0
        %4899 = vmatpush.msra.mxu0 0.0
        %4900 = vmatpush.msra.mxu0 %v4817
        %4901 = vmatmul.f32.gmra.mxu0 %v4823
        %v4902 = vpop.f32.mrf.mxu0
        %v4903 = vadd.f32 0.0, %v4902
        %4904 = vdwg.mxu0
        %v4905 = vadd.f32 %v4766, %v4843
        %v4906 = vadd.f32 %v4767, %v4863
        %v4907 = vadd.f32 %v4768, %v4883
        %v4908 = vadd.f32 %v4769, %v4903
        %v4909 = vld [vmem:[%s816] sm:$0xf]
        %v4911 = vperm.slane %v4909, 0
        %v4912 = vperm.slane %v4909, 1
        %v4913 = vperm.slane %v4909, 2
        %v4914 = vperm.slane %v4909, 3
        %4915 = vrot.lane.b32.xlu0 %v4911, 64
        %v4916 = vpop.permute.xlu0 %4915
        %4917 = vrot.lane.b32.xlu0 %v4912, 64
        %v4918 = vpop.permute.xlu0 %4917
        %4919 = vrot.lane.b32.xlu0 %v4913, 64
        %v4920 = vpop.permute.xlu0 %4919
        %4921 = vrot.lane.b32.xlu0 %v4914, 64
        %v4922 = vpop.permute.xlu0 %4921
        %v4923 = vsel %vm833, %v4916, %v4918
        %v4924 = vsel %vm833, %v4918, %v4920
        %v4925 = vsel %vm833, %v4920, %v4922
        %v4931 = vmul.f32 %v4357, %v4916
        %v4932 = vmul.f32 %v4358, %v4923
        %v4933 = vmul.f32 %v4359, %v4924
        %v4934 = vmul.f32 %v4360, %v4925
        %v4935 = vmul.f32 %v4361, %v4922
        %s4936 = scalar_lea.vmem %s2, 32
        %v4937 = vld [vmem:[%s4936] sm:$0xff]
        %4943 = vrot.lane.b32.xlu0 %v4931, 64
        %v4944 = vpop.permute.xlu0 %4943
        %4945 = vrot.lane.b32.xlu0 %v4932, 64
        %v4946 = vpop.permute.xlu0 %4945
        %4947 = vrot.lane.b32.xlu0 %v4933, 64
        %v4948 = vpop.permute.xlu0 %4947
        %4949 = vrot.lane.b32.xlu0 %v4934, 64
        %v4950 = vpop.permute.xlu0 %4949
        %4951 = vrot.lane.b32.xlu0 %v4935, 64
        %v4952 = vpop.permute.xlu0 %4951
        %v4953 = vsel %vm833, %v4944, %v4946
        %v4954 = vsel %vm833, %v4946, %v4948
        %v4955 = vsel %vm833, %v4948, %v4950
        %v4956 = vsel %vm833, %v4950, %v4952
        %v4962 = vsel %vm1789, %v4937, 0
        %4964 = vmatpush.msra.mxu0 0.0
        %4965 = vmatpush.msra.mxu0 0.0
        %4966 = vmatpush.msra.mxu0 0.0
        %4967 = vmatpush.msra.mxu0 0.0
        %4968 = vmatpush.msra.mxu0 0.0
        %4969 = vmatpush.msra.mxu0 0.0
        %4970 = vmatpush.msra.mxu0 0.0
        %4971 = vmatpush.msra.mxu0 0.0
        %4972 = vmatpush.msra.mxu0 0.0
        %4973 = vmatpush.msra.mxu0 0.0
        %4974 = vmatpush.msra.mxu0 0.0
        %4975 = vmatpush.msra.mxu0 0.0
        %4976 = vmatpush.msra.mxu0 0.0
        %4977 = vmatpush.msra.mxu0 0.0
        %4978 = vmatpush.msra.mxu0 0.0
        %4979 = vmatpush.msra.mxu0 %v4953
        %4980 = vmatmul.f32.gmra.mxu0 %v4962
        %v4981 = vpop.f32.mrf.mxu0
        %v4982 = vadd.f32 0.0, %v4981
        %4983 = vdwg.mxu0
        %4984 = vmatpush.msra.mxu0 0.0
        %4985 = vmatpush.msra.mxu0 0.0
        %4986 = vmatpush.msra.mxu0 0.0
        %4987 = vmatpush.msra.mxu0 0.0
        %4988 = vmatpush.msra.mxu0 0.0
        %4989 = vmatpush.msra.mxu0 0.0
        %4990 = vmatpush.msra.mxu0 0.0
        %4991 = vmatpush.msra.mxu0 0.0
        %4992 = vmatpush.msra.mxu0 0.0
        %4993 = vmatpush.msra.mxu0 0.0
        %4994 = vmatpush.msra.mxu0 0.0
        %4995 = vmatpush.msra.mxu0 0.0
        %4996 = vmatpush.msra.mxu0 0.0
        %4997 = vmatpush.msra.mxu0 0.0
        %4998 = vmatpush.msra.mxu0 0.0
        %4999 = vmatpush.msra.mxu0 %v4954
        %5000 = vmatmul.f32.gmra.mxu0 %v4962
        %v5001 = vpop.f32.mrf.mxu0
        %v5002 = vadd.f32 0.0, %v5001
        %5003 = vdwg.mxu0
        %5004 = vmatpush.msra.mxu0 0.0
        %5005 = vmatpush.msra.mxu0 0.0
        %5006 = vmatpush.msra.mxu0 0.0
        %5007 = vmatpush.msra.mxu0 0.0
        %5008 = vmatpush.msra.mxu0 0.0
        %5009 = vmatpush.msra.mxu0 0.0
        %5010 = vmatpush.msra.mxu0 0.0
        %5011 = vmatpush.msra.mxu0 0.0
        %5012 = vmatpush.msra.mxu0 0.0
        %5013 = vmatpush.msra.mxu0 0.0
        %5014 = vmatpush.msra.mxu0 0.0
        %5015 = vmatpush.msra.mxu0 0.0
        %5016 = vmatpush.msra.mxu0 0.0
        %5017 = vmatpush.msra.mxu0 0.0
        %5018 = vmatpush.msra.mxu0 0.0
        %5019 = vmatpush.msra.mxu0 %v4955
        %5020 = vmatmul.f32.gmra.mxu0 %v4962
        %v5021 = vpop.f32.mrf.mxu0
        %v5022 = vadd.f32 0.0, %v5021
        %5023 = vdwg.mxu0
        %5024 = vmatpush.msra.mxu0 0.0
        %5025 = vmatpush.msra.mxu0 0.0
        %5026 = vmatpush.msra.mxu0 0.0
        %5027 = vmatpush.msra.mxu0 0.0
        %5028 = vmatpush.msra.mxu0 0.0
        %5029 = vmatpush.msra.mxu0 0.0
        %5030 = vmatpush.msra.mxu0 0.0
        %5031 = vmatpush.msra.mxu0 0.0
        %5032 = vmatpush.msra.mxu0 0.0
        %5033 = vmatpush.msra.mxu0 0.0
        %5034 = vmatpush.msra.mxu0 0.0
        %5035 = vmatpush.msra.mxu0 0.0
        %5036 = vmatpush.msra.mxu0 0.0
        %5037 = vmatpush.msra.mxu0 0.0
        %5038 = vmatpush.msra.mxu0 0.0
        %5039 = vmatpush.msra.mxu0 %v4956
        %5040 = vmatmul.f32.gmra.mxu0 %v4962
        %v5041 = vpop.f32.mrf.mxu0
        %v5042 = vadd.f32 0.0, %v5041
        %5043 = vdwg.mxu0
        %v5044 = vadd.f32 %v4905, %v4982
        %v5045 = vadd.f32 %v4906, %v5002
        %v5046 = vadd.f32 %v4907, %v5022
        %v5047 = vadd.f32 %v4908, %v5042
        %v5048 = vld [vmem:[%s970] sm:$0xf]
        %v5050 = vperm.slane %v5048, 0
        %v5051 = vperm.slane %v5048, 1
        %v5052 = vperm.slane %v5048, 2
        %v5053 = vperm.slane %v5048, 3
        %5054 = vrot.lane.b32.xlu0 %v5050, 65
        %v5055 = vpop.permute.xlu0 %5054
        %5056 = vrot.lane.b32.xlu0 %v5051, 65
        %v5057 = vpop.permute.xlu0 %5056
        %5058 = vrot.lane.b32.xlu0 %v5052, 65
        %v5059 = vpop.permute.xlu0 %5058
        %5060 = vrot.lane.b32.xlu0 %v5053, 65
        %v5061 = vpop.permute.xlu0 %5060
        %v5062 = vsel %vm713, %v5055, %v5057
        %v5063 = vsel %vm713, %v5057, %v5059
        %v5064 = vsel %vm713, %v5059, %v5061
        %v5070 = vmul.f32 %v4357, %v5055
        %v5071 = vmul.f32 %v4358, %v5062
        %v5072 = vmul.f32 %v4359, %v5063
        %v5073 = vmul.f32 %v4360, %v5064
        %v5074 = vmul.f32 %v4361, %v5061
        %s5075 = scalar_lea.vmem %s2, 40
        %v5076 = vld [vmem:[%s5075] sm:$0xff]
        %5082 = vrot.lane.b32.xlu0 %v5070, 63
        %v5083 = vpop.permute.xlu0 %5082
        %5084 = vrot.lane.b32.xlu0 %v5071, 63
        %v5085 = vpop.permute.xlu0 %5084
        %5086 = vrot.lane.b32.xlu0 %v5072, 63
        %v5087 = vpop.permute.xlu0 %5086
        %5088 = vrot.lane.b32.xlu0 %v5073, 63
        %v5089 = vpop.permute.xlu0 %5088
        %5090 = vrot.lane.b32.xlu0 %v5074, 63
        %v5091 = vpop.permute.xlu0 %5090
        %v5092 = vsel %vm678, %v5083, %v5085
        %v5093 = vsel %vm678, %v5085, %v5087
        %v5094 = vsel %vm678, %v5087, %v5089
        %v5095 = vsel %vm678, %v5089, %v5091
        %v5101 = vsel %vm1789, %v5076, 0
        %5103 = vmatpush.msra.mxu0 0.0
        %5104 = vmatpush.msra.mxu0 0.0
        %5105 = vmatpush.msra.mxu0 0.0
        %5106 = vmatpush.msra.mxu0 0.0
        %5107 = vmatpush.msra.mxu0 0.0
        %5108 = vmatpush.msra.mxu0 0.0
        %5109 = vmatpush.msra.mxu0 0.0
        %5110 = vmatpush.msra.mxu0 0.0
        %5111 = vmatpush.msra.mxu0 0.0
        %5112 = vmatpush.msra.mxu0 0.0
        %5113 = vmatpush.msra.mxu0 0.0
        %5114 = vmatpush.msra.mxu0 0.0
        %5115 = vmatpush.msra.mxu0 0.0
        %5116 = vmatpush.msra.mxu0 0.0
        %5117 = vmatpush.msra.mxu0 0.0
        %5118 = vmatpush.msra.mxu0 %v5092
        %5119 = vmatmul.f32.gmra.mxu0 %v5101
        %v5120 = vpop.f32.mrf.mxu0
        %v5121 = vadd.f32 0.0, %v5120
        %5122 = vdwg.mxu0
        %5123 = vmatpush.msra.mxu0 0.0
        %5124 = vmatpush.msra.mxu0 0.0
        %5125 = vmatpush.msra.mxu0 0.0
        %5126 = vmatpush.msra.mxu0 0.0
        %5127 = vmatpush.msra.mxu0 0.0
        %5128 = vmatpush.msra.mxu0 0.0
        %5129 = vmatpush.msra.mxu0 0.0
        %5130 = vmatpush.msra.mxu0 0.0
        %5131 = vmatpush.msra.mxu0 0.0
        %5132 = vmatpush.msra.mxu0 0.0
        %5133 = vmatpush.msra.mxu0 0.0
        %5134 = vmatpush.msra.mxu0 0.0
        %5135 = vmatpush.msra.mxu0 0.0
        %5136 = vmatpush.msra.mxu0 0.0
        %5137 = vmatpush.msra.mxu0 0.0
        %5138 = vmatpush.msra.mxu0 %v5093
        %5139 = vmatmul.f32.gmra.mxu0 %v5101
        %v5140 = vpop.f32.mrf.mxu0
        %v5141 = vadd.f32 0.0, %v5140
        %5142 = vdwg.mxu0
        %5143 = vmatpush.msra.mxu0 0.0
        %5144 = vmatpush.msra.mxu0 0.0
        %5145 = vmatpush.msra.mxu0 0.0
        %5146 = vmatpush.msra.mxu0 0.0
        %5147 = vmatpush.msra.mxu0 0.0
        %5148 = vmatpush.msra.mxu0 0.0
        %5149 = vmatpush.msra.mxu0 0.0
        %5150 = vmatpush.msra.mxu0 0.0
        %5151 = vmatpush.msra.mxu0 0.0
        %5152 = vmatpush.msra.mxu0 0.0
        %5153 = vmatpush.msra.mxu0 0.0
        %5154 = vmatpush.msra.mxu0 0.0
        %5155 = vmatpush.msra.mxu0 0.0
        %5156 = vmatpush.msra.mxu0 0.0
        %5157 = vmatpush.msra.mxu0 0.0
        %5158 = vmatpush.msra.mxu0 %v5094
        %5159 = vmatmul.f32.gmra.mxu0 %v5101
        %v5160 = vpop.f32.mrf.mxu0
        %v5161 = vadd.f32 0.0, %v5160
        %5162 = vdwg.mxu0
        %5163 = vmatpush.msra.mxu0 0.0
        %5164 = vmatpush.msra.mxu0 0.0
        %5165 = vmatpush.msra.mxu0 0.0
        %5166 = vmatpush.msra.mxu0 0.0
        %5167 = vmatpush.msra.mxu0 0.0
        %5168 = vmatpush.msra.mxu0 0.0
        %5169 = vmatpush.msra.mxu0 0.0
        %5170 = vmatpush.msra.mxu0 0.0
        %5171 = vmatpush.msra.mxu0 0.0
        %5172 = vmatpush.msra.mxu0 0.0
        %5173 = vmatpush.msra.mxu0 0.0
        %5174 = vmatpush.msra.mxu0 0.0
        %5175 = vmatpush.msra.mxu0 0.0
        %5176 = vmatpush.msra.mxu0 0.0
        %5177 = vmatpush.msra.mxu0 0.0
        %5178 = vmatpush.msra.mxu0 %v5095
        %5179 = vmatmul.f32.gmra.mxu0 %v5101
        %v5180 = vpop.f32.mrf.mxu0
        %v5181 = vadd.f32 0.0, %v5180
        %5182 = vdwg.mxu0
        %v5183 = vadd.f32 %v5044, %v5121
        %v5184 = vadd.f32 %v5045, %v5141
        %v5185 = vadd.f32 %v5046, %v5161
        %v5186 = vadd.f32 %v5047, %v5181
        %v5187 = vld [vmem:[%s1123] sm:$0xf]
        %v5189 = vperm.slane %v5187, 0
        %v5190 = vperm.slane %v5187, 1
        %v5191 = vperm.slane %v5187, 2
        %v5192 = vperm.slane %v5187, 3
        %5193 = vrot.lane.b32.xlu0 %v5189, 71
        %v5194 = vpop.permute.xlu0 %5193
        %5195 = vrot.lane.b32.xlu0 %v5190, 71
        %v5196 = vpop.permute.xlu0 %5195
        %5197 = vrot.lane.b32.xlu0 %v5191, 71
        %v5198 = vpop.permute.xlu0 %5197
        %5199 = vrot.lane.b32.xlu0 %v5192, 71
        %v5200 = vpop.permute.xlu0 %5199
        %v5201 = vsel %vm558, %v5194, %v5196
        %v5202 = vsel %vm558, %v5196, %v5198
        %v5203 = vsel %vm558, %v5198, %v5200
        %v5209 = vmul.f32 %v4357, %v5194
        %v5210 = vmul.f32 %v4358, %v5201
        %v5211 = vmul.f32 %v4359, %v5202
        %v5212 = vmul.f32 %v4360, %v5203
        %v5213 = vmul.f32 %v4361, %v5200
        %s5214 = scalar_lea.vmem %s2, 48
        %v5215 = vld [vmem:[%s5214] sm:$0xff]
        %5221 = vrot.lane.b32.xlu0 %v5209, 57
        %v5222 = vpop.permute.xlu0 %5221
        %5223 = vrot.lane.b32.xlu0 %v5210, 57
        %v5224 = vpop.permute.xlu0 %5223
        %5225 = vrot.lane.b32.xlu0 %v5211, 57
        %v5226 = vpop.permute.xlu0 %5225
        %5227 = vrot.lane.b32.xlu0 %v5212, 57
        %v5228 = vpop.permute.xlu0 %5227
        %5229 = vrot.lane.b32.xlu0 %v5213, 57
        %v5230 = vpop.permute.xlu0 %5229
        %v5231 = vsel %vm523, %v5222, %v5224
        %v5232 = vsel %vm523, %v5224, %v5226
        %v5233 = vsel %vm523, %v5226, %v5228
        %v5234 = vsel %vm523, %v5228, %v5230
        %v5240 = vsel %vm1789, %v5215, 0
        %5242 = vmatpush.msra.mxu0 0.0
        %5243 = vmatpush.msra.mxu0 0.0
        %5244 = vmatpush.msra.mxu0 0.0
        %5245 = vmatpush.msra.mxu0 0.0
        %5246 = vmatpush.msra.mxu0 0.0
        %5247 = vmatpush.msra.mxu0 0.0
        %5248 = vmatpush.msra.mxu0 0.0
        %5249 = vmatpush.msra.mxu0 0.0
        %5250 = vmatpush.msra.mxu0 0.0
        %5251 = vmatpush.msra.mxu0 0.0
        %5252 = vmatpush.msra.mxu0 0.0
        %5253 = vmatpush.msra.mxu0 0.0
        %5254 = vmatpush.msra.mxu0 0.0
        %5255 = vmatpush.msra.mxu0 0.0
        %5256 = vmatpush.msra.mxu0 0.0
        %5257 = vmatpush.msra.mxu0 %v5231
        %5258 = vmatmul.f32.gmra.mxu0 %v5240
        %v5259 = vpop.f32.mrf.mxu0
        %v5260 = vadd.f32 0.0, %v5259
        %5261 = vdwg.mxu0
        %5262 = vmatpush.msra.mxu0 0.0
        %5263 = vmatpush.msra.mxu0 0.0
        %5264 = vmatpush.msra.mxu0 0.0
        %5265 = vmatpush.msra.mxu0 0.0
        %5266 = vmatpush.msra.mxu0 0.0
        %5267 = vmatpush.msra.mxu0 0.0
        %5268 = vmatpush.msra.mxu0 0.0
        %5269 = vmatpush.msra.mxu0 0.0
        %5270 = vmatpush.msra.mxu0 0.0
        %5271 = vmatpush.msra.mxu0 0.0
        %5272 = vmatpush.msra.mxu0 0.0
        %5273 = vmatpush.msra.mxu0 0.0
        %5274 = vmatpush.msra.mxu0 0.0
        %5275 = vmatpush.msra.mxu0 0.0
        %5276 = vmatpush.msra.mxu0 0.0
        %5277 = vmatpush.msra.mxu0 %v5232
        %5278 = vmatmul.f32.gmra.mxu0 %v5240
        %v5279 = vpop.f32.mrf.mxu0
        %v5280 = vadd.f32 0.0, %v5279
        %5281 = vdwg.mxu0
        %5282 = vmatpush.msra.mxu0 0.0
        %5283 = vmatpush.msra.mxu0 0.0
        %5284 = vmatpush.msra.mxu0 0.0
        %5285 = vmatpush.msra.mxu0 0.0
        %5286 = vmatpush.msra.mxu0 0.0
        %5287 = vmatpush.msra.mxu0 0.0
        %5288 = vmatpush.msra.mxu0 0.0
        %5289 = vmatpush.msra.mxu0 0.0
        %5290 = vmatpush.msra.mxu0 0.0
        %5291 = vmatpush.msra.mxu0 0.0
        %5292 = vmatpush.msra.mxu0 0.0
        %5293 = vmatpush.msra.mxu0 0.0
        %5294 = vmatpush.msra.mxu0 0.0
        %5295 = vmatpush.msra.mxu0 0.0
        %5296 = vmatpush.msra.mxu0 0.0
        %5297 = vmatpush.msra.mxu0 %v5233
        %5298 = vmatmul.f32.gmra.mxu0 %v5240
        %v5299 = vpop.f32.mrf.mxu0
        %v5300 = vadd.f32 0.0, %v5299
        %5301 = vdwg.mxu0
        %5302 = vmatpush.msra.mxu0 0.0
        %5303 = vmatpush.msra.mxu0 0.0
        %5304 = vmatpush.msra.mxu0 0.0
        %5305 = vmatpush.msra.mxu0 0.0
        %5306 = vmatpush.msra.mxu0 0.0
        %5307 = vmatpush.msra.mxu0 0.0
        %5308 = vmatpush.msra.mxu0 0.0
        %5309 = vmatpush.msra.mxu0 0.0
        %5310 = vmatpush.msra.mxu0 0.0
        %5311 = vmatpush.msra.mxu0 0.0
        %5312 = vmatpush.msra.mxu0 0.0
        %5313 = vmatpush.msra.mxu0 0.0
        %5314 = vmatpush.msra.mxu0 0.0
        %5315 = vmatpush.msra.mxu0 0.0
        %5316 = vmatpush.msra.mxu0 0.0
        %5317 = vmatpush.msra.mxu0 %v5234
        %5318 = vmatmul.f32.gmra.mxu0 %v5240
        %v5319 = vpop.f32.mrf.mxu0
        %v5320 = vadd.f32 0.0, %v5319
        %5321 = vdwg.mxu0
        %v5322 = vadd.f32 %v5183, %v5260
        %v5323 = vadd.f32 %v5184, %v5280
        %v5324 = vadd.f32 %v5185, %v5300
        %v5325 = vadd.f32 %v5186, %v5320
        %v5326 = vld [vmem:[%s1276] sm:$0xf]
        %v5328 = vperm.slane %v5326, 0
        %v5329 = vperm.slane %v5326, 1
        %v5330 = vperm.slane %v5326, 2
        %v5331 = vperm.slane %v5326, 3
        %5332 = vrot.lane.b32.xlu0 %v5328, 72
        %v5333 = vpop.permute.xlu0 %5332
        %5334 = vrot.lane.b32.xlu0 %v5329, 72
        %v5335 = vpop.permute.xlu0 %5334
        %5336 = vrot.lane.b32.xlu0 %v5330, 72
        %v5337 = vpop.permute.xlu0 %5336
        %5338 = vrot.lane.b32.xlu0 %v5331, 72
        %v5339 = vpop.permute.xlu0 %5338
        %v5340 = vsel %vm287, %v5333, %v5335
        %v5341 = vsel %vm287, %v5335, %v5337
        %v5342 = vsel %vm287, %v5337, %v5339
        %v5348 = vmul.f32 %v4357, %v5333
        %v5349 = vmul.f32 %v4358, %v5340
        %v5350 = vmul.f32 %v4359, %v5341
        %v5351 = vmul.f32 %v4360, %v5342
        %v5352 = vmul.f32 %v4361, %v5339
        %s5353 = scalar_lea.vmem %s2, 56
        %v5354 = vld [vmem:[%s5353] sm:$0xff]
        %5360 = vrot.lane.b32.xlu0 %v5348, 56
        %v5361 = vpop.permute.xlu0 %5360
        %5362 = vrot.lane.b32.xlu0 %v5349, 56
        %v5363 = vpop.permute.xlu0 %5362
        %5364 = vrot.lane.b32.xlu0 %v5350, 56
        %v5365 = vpop.permute.xlu0 %5364
        %5366 = vrot.lane.b32.xlu0 %v5351, 56
        %v5367 = vpop.permute.xlu0 %5366
        %5368 = vrot.lane.b32.xlu0 %v5352, 56
        %v5369 = vpop.permute.xlu0 %5368
        %v5370 = vsel %vm252, %v5361, %v5363
        %v5371 = vsel %vm252, %v5363, %v5365
        %v5372 = vsel %vm252, %v5365, %v5367
        %v5373 = vsel %vm252, %v5367, %v5369
        %v5379 = vsel %vm1789, %v5354, 0
        %5381 = vmatpush.msra.mxu0 0.0
        %5382 = vmatpush.msra.mxu0 0.0
        %5383 = vmatpush.msra.mxu0 0.0
        %5384 = vmatpush.msra.mxu0 0.0
        %5385 = vmatpush.msra.mxu0 0.0
        %5386 = vmatpush.msra.mxu0 0.0
        %5387 = vmatpush.msra.mxu0 0.0
        %5388 = vmatpush.msra.mxu0 0.0
        %5389 = vmatpush.msra.mxu0 0.0
        %5390 = vmatpush.msra.mxu0 0.0
        %5391 = vmatpush.msra.mxu0 0.0
        %5392 = vmatpush.msra.mxu0 0.0
        %5393 = vmatpush.msra.mxu0 0.0
        %5394 = vmatpush.msra.mxu0 0.0
        %5395 = vmatpush.msra.mxu0 0.0
        %5396 = vmatpush.msra.mxu0 %v5370
        %5397 = vmatmul.f32.gmra.mxu0 %v5379
        %v5398 = vpop.f32.mrf.mxu0
        %v5399 = vadd.f32 0.0, %v5398
        %5400 = vdwg.mxu0
        %5401 = vmatpush.msra.mxu0 0.0
        %5402 = vmatpush.msra.mxu0 0.0
        %5403 = vmatpush.msra.mxu0 0.0
        %5404 = vmatpush.msra.mxu0 0.0
        %5405 = vmatpush.msra.mxu0 0.0
        %5406 = vmatpush.msra.mxu0 0.0
        %5407 = vmatpush.msra.mxu0 0.0
        %5408 = vmatpush.msra.mxu0 0.0
        %5409 = vmatpush.msra.mxu0 0.0
        %5410 = vmatpush.msra.mxu0 0.0
        %5411 = vmatpush.msra.mxu0 0.0
        %5412 = vmatpush.msra.mxu0 0.0
        %5413 = vmatpush.msra.mxu0 0.0
        %5414 = vmatpush.msra.mxu0 0.0
        %5415 = vmatpush.msra.mxu0 0.0
        %5416 = vmatpush.msra.mxu0 %v5371
        %5417 = vmatmul.f32.gmra.mxu0 %v5379
        %v5418 = vpop.f32.mrf.mxu0
        %v5419 = vadd.f32 0.0, %v5418
        %5420 = vdwg.mxu0
        %5421 = vmatpush.msra.mxu0 0.0
        %5422 = vmatpush.msra.mxu0 0.0
        %5423 = vmatpush.msra.mxu0 0.0
        %5424 = vmatpush.msra.mxu0 0.0
        %5425 = vmatpush.msra.mxu0 0.0
        %5426 = vmatpush.msra.mxu0 0.0
        %5427 = vmatpush.msra.mxu0 0.0
        %5428 = vmatpush.msra.mxu0 0.0
        %5429 = vmatpush.msra.mxu0 0.0
        %5430 = vmatpush.msra.mxu0 0.0
        %5431 = vmatpush.msra.mxu0 0.0
        %5432 = vmatpush.msra.mxu0 0.0
        %5433 = vmatpush.msra.mxu0 0.0
        %5434 = vmatpush.msra.mxu0 0.0
        %5435 = vmatpush.msra.mxu0 0.0
        %5436 = vmatpush.msra.mxu0 %v5372
        %5437 = vmatmul.f32.gmra.mxu0 %v5379
        %v5438 = vpop.f32.mrf.mxu0
        %v5439 = vadd.f32 0.0, %v5438
        %5440 = vdwg.mxu0
        %5441 = vmatpush.msra.mxu0 0.0
        %5442 = vmatpush.msra.mxu0 0.0
        %5443 = vmatpush.msra.mxu0 0.0
        %5444 = vmatpush.msra.mxu0 0.0
        %5445 = vmatpush.msra.mxu0 0.0
        %5446 = vmatpush.msra.mxu0 0.0
        %5447 = vmatpush.msra.mxu0 0.0
        %5448 = vmatpush.msra.mxu0 0.0
        %5449 = vmatpush.msra.mxu0 0.0
        %5450 = vmatpush.msra.mxu0 0.0
        %5451 = vmatpush.msra.mxu0 0.0
        %5452 = vmatpush.msra.mxu0 0.0
        %5453 = vmatpush.msra.mxu0 0.0
        %5454 = vmatpush.msra.mxu0 0.0
        %5455 = vmatpush.msra.mxu0 0.0
        %5456 = vmatpush.msra.mxu0 %v5373
        %5457 = vmatmul.f32.gmra.mxu0 %v5379
        %v5458 = vpop.f32.mrf.mxu0
        %v5459 = vadd.f32 0.0, %v5458
        %5460 = vdwg.mxu0
        %v5461 = vadd.f32 %v5322, %v5399
        %v5462 = vadd.f32 %v5323, %v5419
        %v5463 = vadd.f32 %v5324, %v5439
        %v5464 = vadd.f32 %v5325, %v5459
        %v5465 = vld [vmem:[%s1429] sm:$0xf]
        %v5467 = vperm.slane %v5465, 0
        %v5468 = vperm.slane %v5465, 1
        %v5469 = vperm.slane %v5465, 2
        %v5470 = vperm.slane %v5465, 3
        %5471 = vrot.lane.b32.xlu0 %v5467, 73
        %v5472 = vpop.permute.xlu0 %5471
        %5473 = vrot.lane.b32.xlu0 %v5468, 73
        %v5474 = vpop.permute.xlu0 %5473
        %5475 = vrot.lane.b32.xlu0 %v5469, 73
        %v5476 = vpop.permute.xlu0 %5475
        %5477 = vrot.lane.b32.xlu0 %v5470, 73
        %v5478 = vpop.permute.xlu0 %5477
        %v5479 = vsel %vm407, %v5472, %v5474
        %v5480 = vsel %vm407, %v5474, %v5476
        %v5481 = vsel %vm407, %v5476, %v5478
        %v5487 = vmul.f32 %v4357, %v5472
        %v5488 = vmul.f32 %v4358, %v5479
        %v5489 = vmul.f32 %v4359, %v5480
        %v5490 = vmul.f32 %v4360, %v5481
        %v5491 = vmul.f32 %v4361, %v5478
        %s5492 = scalar_lea.vmem %s2, 64
        %v5493 = vld [vmem:[%s5492] sm:$0xff]
        %5499 = vrot.lane.b32.xlu0 %v5487, 55
        %v5500 = vpop.permute.xlu0 %5499
        %5501 = vrot.lane.b32.xlu0 %v5488, 55
        %v5502 = vpop.permute.xlu0 %5501
        %5503 = vrot.lane.b32.xlu0 %v5489, 55
        %v5504 = vpop.permute.xlu0 %5503
        %5505 = vrot.lane.b32.xlu0 %v5490, 55
        %v5506 = vpop.permute.xlu0 %5505
        %5507 = vrot.lane.b32.xlu0 %v5491, 55
        %v5508 = vpop.permute.xlu0 %5507
        %v5509 = vsel %vm224, %v5500, %v5502
        %v5510 = vsel %vm224, %v5502, %v5504
        %v5511 = vsel %vm224, %v5504, %v5506
        %v5512 = vsel %vm224, %v5506, %v5508
        %v5518 = vsel %vm1789, %v5493, 0
        %5520 = vmatpush.msra.mxu0 0.0
        %5521 = vmatpush.msra.mxu0 0.0
        %5522 = vmatpush.msra.mxu0 0.0
        %5523 = vmatpush.msra.mxu0 0.0
        %5524 = vmatpush.msra.mxu0 0.0
        %5525 = vmatpush.msra.mxu0 0.0
        %5526 = vmatpush.msra.mxu0 0.0
        %5527 = vmatpush.msra.mxu0 0.0
        %5528 = vmatpush.msra.mxu0 0.0
        %5529 = vmatpush.msra.mxu0 0.0
        %5530 = vmatpush.msra.mxu0 0.0
        %5531 = vmatpush.msra.mxu0 0.0
        %5532 = vmatpush.msra.mxu0 0.0
        %5533 = vmatpush.msra.mxu0 0.0
        %5534 = vmatpush.msra.mxu0 0.0
        %5535 = vmatpush.msra.mxu0 %v5509
        %5536 = vmatmul.f32.gmra.mxu0 %v5518
        %v5537 = vpop.f32.mrf.mxu0
        %v5538 = vadd.f32 0.0, %v5537
        %5539 = vdwg.mxu0
        %5540 = vmatpush.msra.mxu0 0.0
        %5541 = vmatpush.msra.mxu0 0.0
        %5542 = vmatpush.msra.mxu0 0.0
        %5543 = vmatpush.msra.mxu0 0.0
        %5544 = vmatpush.msra.mxu0 0.0
        %5545 = vmatpush.msra.mxu0 0.0
        %5546 = vmatpush.msra.mxu0 0.0
        %5547 = vmatpush.msra.mxu0 0.0
        %5548 = vmatpush.msra.mxu0 0.0
        %5549 = vmatpush.msra.mxu0 0.0
        %5550 = vmatpush.msra.mxu0 0.0
        %5551 = vmatpush.msra.mxu0 0.0
        %5552 = vmatpush.msra.mxu0 0.0
        %5553 = vmatpush.msra.mxu0 0.0
        %5554 = vmatpush.msra.mxu0 0.0
        %5555 = vmatpush.msra.mxu0 %v5510
        %5556 = vmatmul.f32.gmra.mxu0 %v5518
        %v5557 = vpop.f32.mrf.mxu0
        %v5558 = vadd.f32 0.0, %v5557
        %5559 = vdwg.mxu0
        %5560 = vmatpush.msra.mxu0 0.0
        %5561 = vmatpush.msra.mxu0 0.0
        %5562 = vmatpush.msra.mxu0 0.0
        %5563 = vmatpush.msra.mxu0 0.0
        %5564 = vmatpush.msra.mxu0 0.0
        %5565 = vmatpush.msra.mxu0 0.0
        %5566 = vmatpush.msra.mxu0 0.0
        %5567 = vmatpush.msra.mxu0 0.0
        %5568 = vmatpush.msra.mxu0 0.0
        %5569 = vmatpush.msra.mxu0 0.0
        %5570 = vmatpush.msra.mxu0 0.0
        %5571 = vmatpush.msra.mxu0 0.0
        %5572 = vmatpush.msra.mxu0 0.0
        %5573 = vmatpush.msra.mxu0 0.0
        %5574 = vmatpush.msra.mxu0 0.0
        %5575 = vmatpush.msra.mxu0 %v5511
        %5576 = vmatmul.f32.gmra.mxu0 %v5518
        %v5577 = vpop.f32.mrf.mxu0
        %v5578 = vadd.f32 0.0, %v5577
        %5579 = vdwg.mxu0
        %5580 = vmatpush.msra.mxu0 0.0
        %5581 = vmatpush.msra.mxu0 0.0
        %5582 = vmatpush.msra.mxu0 0.0
        %5583 = vmatpush.msra.mxu0 0.0
        %5584 = vmatpush.msra.mxu0 0.0
        %5585 = vmatpush.msra.mxu0 0.0
        %5586 = vmatpush.msra.mxu0 0.0
        %5587 = vmatpush.msra.mxu0 0.0
        %5588 = vmatpush.msra.mxu0 0.0
        %5589 = vmatpush.msra.mxu0 0.0
        %5590 = vmatpush.msra.mxu0 0.0
        %5591 = vmatpush.msra.mxu0 0.0
        %5592 = vmatpush.msra.mxu0 0.0
        %5593 = vmatpush.msra.mxu0 0.0
        %5594 = vmatpush.msra.mxu0 0.0
        %5595 = vmatpush.msra.mxu0 %v5512
        %5596 = vmatmul.f32.gmra.mxu0 %v5518
        %v5597 = vpop.f32.mrf.mxu0
        %v5598 = vadd.f32 0.0, %v5597
        %5599 = vdwg.mxu0
        %v5600 = vadd.f32 %v5461, %v5538
        %v5601 = vadd.f32 %v5462, %v5558
        %v5602 = vadd.f32 %v5463, %v5578
        %v5603 = vadd.f32 %v5464, %v5598
        %v5604 = vld [vmem:[%s1582] sm:$0xf]
        %v5606 = vperm.slane %v5604, 0
        %v5607 = vperm.slane %v5604, 1
        %v5608 = vperm.slane %v5604, 2
        %v5609 = vperm.slane %v5604, 3
        %5610 = vrot.lane.b32.xlu0 %v5606, 119
        %v5611 = vpop.permute.xlu0 %5610
        %5612 = vrot.lane.b32.xlu0 %v5607, 119
        %v5613 = vpop.permute.xlu0 %5612
        %5614 = vrot.lane.b32.xlu0 %v5608, 119
        %v5615 = vpop.permute.xlu0 %5614
        %5616 = vrot.lane.b32.xlu0 %v5609, 119
        %v5617 = vpop.permute.xlu0 %5616
        %v5618 = vsel %vm1599, %v5611, %v5613
        %v5619 = vsel %vm1599, %v5613, %v5615
        %v5620 = vsel %vm1599, %v5615, %v5617
        %v5626 = vmul.f32 %v4357, %v5611
        %v5627 = vmul.f32 %v4358, %v5618
        %v5628 = vmul.f32 %v4359, %v5619
        %v5629 = vmul.f32 %v4360, %v5620
        %v5630 = vmul.f32 %v4361, %v5617
        %s5631 = scalar_lea.vmem %s2, 72
        %v5632 = vld [vmem:[%s5631] sm:$0xff]
        %5638 = vrot.lane.b32.xlu0 %v5626, 9
        %v5639 = vpop.permute.xlu0 %5638
        %5640 = vrot.lane.b32.xlu0 %v5627, 9
        %v5641 = vpop.permute.xlu0 %5640
        %5642 = vrot.lane.b32.xlu0 %v5628, 9
        %v5643 = vpop.permute.xlu0 %5642
        %5644 = vrot.lane.b32.xlu0 %v5629, 9
        %v5645 = vpop.permute.xlu0 %5644
        %5646 = vrot.lane.b32.xlu0 %v5630, 9
        %v5647 = vpop.permute.xlu0 %5646
        %v5648 = vsel %vm1634, %v5639, %v5641
        %v5649 = vsel %vm1634, %v5641, %v5643
        %v5650 = vsel %vm1634, %v5643, %v5645
        %v5651 = vsel %vm1634, %v5645, %v5647
        %v5657 = vsel %vm1789, %v5632, 0
        %5659 = vmatpush.msra.mxu0 0.0
        %5660 = vmatpush.msra.mxu0 0.0
        %5661 = vmatpush.msra.mxu0 0.0
        %5662 = vmatpush.msra.mxu0 0.0
        %5663 = vmatpush.msra.mxu0 0.0
        %5664 = vmatpush.msra.mxu0 0.0
        %5665 = vmatpush.msra.mxu0 0.0
        %5666 = vmatpush.msra.mxu0 0.0
        %5667 = vmatpush.msra.mxu0 0.0
        %5668 = vmatpush.msra.mxu0 0.0
        %5669 = vmatpush.msra.mxu0 0.0
        %5670 = vmatpush.msra.mxu0 0.0
        %5671 = vmatpush.msra.mxu0 0.0
        %5672 = vmatpush.msra.mxu0 0.0
        %5673 = vmatpush.msra.mxu0 0.0
        %5674 = vmatpush.msra.mxu0 %v5648
        %5675 = vmatmul.f32.gmra.mxu0 %v5657
        %v5676 = vpop.f32.mrf.mxu0
        %v5677 = vadd.f32 0.0, %v5676
        %5678 = vdwg.mxu0
        %5679 = vmatpush.msra.mxu0 0.0
        %5680 = vmatpush.msra.mxu0 0.0
        %5681 = vmatpush.msra.mxu0 0.0
        %5682 = vmatpush.msra.mxu0 0.0
        %5683 = vmatpush.msra.mxu0 0.0
        %5684 = vmatpush.msra.mxu0 0.0
        %5685 = vmatpush.msra.mxu0 0.0
        %5686 = vmatpush.msra.mxu0 0.0
        %5687 = vmatpush.msra.mxu0 0.0
        %5688 = vmatpush.msra.mxu0 0.0
        %5689 = vmatpush.msra.mxu0 0.0
        %5690 = vmatpush.msra.mxu0 0.0
        %5691 = vmatpush.msra.mxu0 0.0
        %5692 = vmatpush.msra.mxu0 0.0
        %5693 = vmatpush.msra.mxu0 0.0
        %5694 = vmatpush.msra.mxu0 %v5649
        %5695 = vmatmul.f32.gmra.mxu0 %v5657
        %v5696 = vpop.f32.mrf.mxu0
        %v5697 = vadd.f32 0.0, %v5696
        %5698 = vdwg.mxu0
        %5699 = vmatpush.msra.mxu0 0.0
        %5700 = vmatpush.msra.mxu0 0.0
        %5701 = vmatpush.msra.mxu0 0.0
        %5702 = vmatpush.msra.mxu0 0.0
        %5703 = vmatpush.msra.mxu0 0.0
        %5704 = vmatpush.msra.mxu0 0.0
        %5705 = vmatpush.msra.mxu0 0.0
        %5706 = vmatpush.msra.mxu0 0.0
        %5707 = vmatpush.msra.mxu0 0.0
        %5708 = vmatpush.msra.mxu0 0.0
        %5709 = vmatpush.msra.mxu0 0.0
        %5710 = vmatpush.msra.mxu0 0.0
        %5711 = vmatpush.msra.mxu0 0.0
        %5712 = vmatpush.msra.mxu0 0.0
        %5713 = vmatpush.msra.mxu0 0.0
        %5714 = vmatpush.msra.mxu0 %v5650
        %5715 = vmatmul.f32.gmra.mxu0 %v5657
        %v5716 = vpop.f32.mrf.mxu0
        %v5717 = vadd.f32 0.0, %v5716
        %5718 = vdwg.mxu0
        %5719 = vmatpush.msra.mxu0 0.0
        %5720 = vmatpush.msra.mxu0 0.0
        %5721 = vmatpush.msra.mxu0 0.0
        %5722 = vmatpush.msra.mxu0 0.0
        %5723 = vmatpush.msra.mxu0 0.0
        %5724 = vmatpush.msra.mxu0 0.0
        %5725 = vmatpush.msra.mxu0 0.0
        %5726 = vmatpush.msra.mxu0 0.0
        %5727 = vmatpush.msra.mxu0 0.0
        %5728 = vmatpush.msra.mxu0 0.0
        %5729 = vmatpush.msra.mxu0 0.0
        %5730 = vmatpush.msra.mxu0 0.0
        %5731 = vmatpush.msra.mxu0 0.0
        %5732 = vmatpush.msra.mxu0 0.0
        %5733 = vmatpush.msra.mxu0 0.0
        %5734 = vmatpush.msra.mxu0 %v5651
        %5735 = vmatmul.f32.gmra.mxu0 %v5657
        %v5736 = vpop.f32.mrf.mxu0
        %v5737 = vadd.f32 0.0, %v5736
        %5738 = vdwg.mxu0
        %v5739 = vadd.f32 %v5600, %v5677
        %v5740 = vadd.f32 %v5601, %v5697
        %v5741 = vadd.f32 %v5602, %v5717
        %v5742 = vadd.f32 %v5603, %v5737
        %v5743 = vld [vmem:[%s1737] sm:$0xf]
        %v5745 = vperm.slane %v5743, 0
        %v5746 = vperm.slane %v5743, 1
        %v5747 = vperm.slane %v5743, 2
        %v5748 = vperm.slane %v5743, 3
        %5749 = vrot.lane.b32.xlu0 %v5745, 120
        %v5750 = vpop.permute.xlu0 %5749
        %5751 = vrot.lane.b32.xlu0 %v5746, 120
        %v5752 = vpop.permute.xlu0 %5751
        %5753 = vrot.lane.b32.xlu0 %v5747, 120
        %v5754 = vpop.permute.xlu0 %5753
        %5755 = vrot.lane.b32.xlu0 %v5748, 120
        %v5756 = vpop.permute.xlu0 %5755
        %v5757 = vsel %vm1754, %v5750, %v5752
        %v5758 = vsel %vm1754, %v5752, %v5754
        %v5759 = vsel %vm1754, %v5754, %v5756
        %v5765 = vmul.f32 %v4357, %v5750
        %v5766 = vmul.f32 %v4358, %v5757
        %v5767 = vmul.f32 %v4359, %v5758
        %v5768 = vmul.f32 %v4360, %v5759
        %v5769 = vmul.f32 %v4361, %v5756
        %s5770 = scalar_lea.vmem %s2, 80
        %v5771 = vld [vmem:[%s5770] sm:$0xff]
        %5777 = vrot.lane.b32.xlu0 %v5765, 8
        %v5778 = vpop.permute.xlu0 %5777
        %5779 = vrot.lane.b32.xlu0 %v5766, 8
        %v5780 = vpop.permute.xlu0 %5779
        %5781 = vrot.lane.b32.xlu0 %v5767, 8
        %v5782 = vpop.permute.xlu0 %5781
        %5783 = vrot.lane.b32.xlu0 %v5768, 8
        %v5784 = vpop.permute.xlu0 %5783
        %5785 = vrot.lane.b32.xlu0 %v5769, 8
        %v5786 = vpop.permute.xlu0 %5785
        %v5787 = vsel %vm1789, %v5778, %v5780
        %v5788 = vsel %vm1789, %v5780, %v5782
        %v5789 = vsel %vm1789, %v5782, %v5784
        %v5790 = vsel %vm1789, %v5784, %v5786
        %v5796 = vsel %vm1789, %v5771, 0
        %5798 = vmatpush.msra.mxu0 0.0
        %5799 = vmatpush.msra.mxu0 0.0
        %5800 = vmatpush.msra.mxu0 0.0
        %5801 = vmatpush.msra.mxu0 0.0
        %5802 = vmatpush.msra.mxu0 0.0
        %5803 = vmatpush.msra.mxu0 0.0
        %5804 = vmatpush.msra.mxu0 0.0
        %5805 = vmatpush.msra.mxu0 0.0
        %5806 = vmatpush.msra.mxu0 0.0
        %5807 = vmatpush.msra.mxu0 0.0
        %5808 = vmatpush.msra.mxu0 0.0
        %5809 = vmatpush.msra.mxu0 0.0
        %5810 = vmatpush.msra.mxu0 0.0
        %5811 = vmatpush.msra.mxu0 0.0
        %5812 = vmatpush.msra.mxu0 0.0
        %5813 = vmatpush.msra.mxu0 %v5787
        %5814 = vmatmul.f32.gmra.mxu0 %v5796
        %v5815 = vpop.f32.mrf.mxu0
        %v5816 = vadd.f32 0.0, %v5815
        %5817 = vdwg.mxu0
        %5818 = vmatpush.msra.mxu0 0.0
        %5819 = vmatpush.msra.mxu0 0.0
        %5820 = vmatpush.msra.mxu0 0.0
        %5821 = vmatpush.msra.mxu0 0.0
        %5822 = vmatpush.msra.mxu0 0.0
        %5823 = vmatpush.msra.mxu0 0.0
        %5824 = vmatpush.msra.mxu0 0.0
        %5825 = vmatpush.msra.mxu0 0.0
        %5826 = vmatpush.msra.mxu0 0.0
        %5827 = vmatpush.msra.mxu0 0.0
        %5828 = vmatpush.msra.mxu0 0.0
        %5829 = vmatpush.msra.mxu0 0.0
        %5830 = vmatpush.msra.mxu0 0.0
        %5831 = vmatpush.msra.mxu0 0.0
        %5832 = vmatpush.msra.mxu0 0.0
        %5833 = vmatpush.msra.mxu0 %v5788
        %5834 = vmatmul.f32.gmra.mxu0 %v5796
        %v5835 = vpop.f32.mrf.mxu0
        %v5836 = vadd.f32 0.0, %v5835
        %5837 = vdwg.mxu0
        %5838 = vmatpush.msra.mxu0 0.0
        %5839 = vmatpush.msra.mxu0 0.0
        %5840 = vmatpush.msra.mxu0 0.0
        %5841 = vmatpush.msra.mxu0 0.0
        %5842 = vmatpush.msra.mxu0 0.0
        %5843 = vmatpush.msra.mxu0 0.0
        %5844 = vmatpush.msra.mxu0 0.0
        %5845 = vmatpush.msra.mxu0 0.0
        %5846 = vmatpush.msra.mxu0 0.0
        %5847 = vmatpush.msra.mxu0 0.0
        %5848 = vmatpush.msra.mxu0 0.0
        %5849 = vmatpush.msra.mxu0 0.0
        %5850 = vmatpush.msra.mxu0 0.0
        %5851 = vmatpush.msra.mxu0 0.0
        %5852 = vmatpush.msra.mxu0 0.0
        %5853 = vmatpush.msra.mxu0 %v5789
        %5854 = vmatmul.f32.gmra.mxu0 %v5796
        %v5855 = vpop.f32.mrf.mxu0
        %v5856 = vadd.f32 0.0, %v5855
        %5857 = vdwg.mxu0
        %5858 = vmatpush.msra.mxu0 0.0
        %5859 = vmatpush.msra.mxu0 0.0
        %5860 = vmatpush.msra.mxu0 0.0
        %5861 = vmatpush.msra.mxu0 0.0
        %5862 = vmatpush.msra.mxu0 0.0
        %5863 = vmatpush.msra.mxu0 0.0
        %5864 = vmatpush.msra.mxu0 0.0
        %5865 = vmatpush.msra.mxu0 0.0
        %5866 = vmatpush.msra.mxu0 0.0
        %5867 = vmatpush.msra.mxu0 0.0
        %5868 = vmatpush.msra.mxu0 0.0
        %5869 = vmatpush.msra.mxu0 0.0
        %5870 = vmatpush.msra.mxu0 0.0
        %5871 = vmatpush.msra.mxu0 0.0
        %5872 = vmatpush.msra.mxu0 0.0
        %5873 = vmatpush.msra.mxu0 %v5790
        %5874 = vmatmul.f32.gmra.mxu0 %v5796
        %v5875 = vpop.f32.mrf.mxu0
        %v5876 = vadd.f32 0.0, %v5875
        %5877 = vdwg.mxu0
        %v5878 = vadd.f32 %v5739, %v5816
        %v5879 = vadd.f32 %v5740, %v5836
        %v5880 = vadd.f32 %v5741, %v5856
        %v5881 = vadd.f32 %v5742, %v5876
        %v5882 = vld [vmem:[%s1892] sm:$0xf]
        %v5884 = vperm.slane %v5882, 0
        %v5885 = vperm.slane %v5882, 1
        %v5886 = vperm.slane %v5882, 2
        %v5887 = vperm.slane %v5882, 3
        %5888 = vrot.lane.b32.xlu0 %v5884, 121
        %v5889 = vpop.permute.xlu0 %5888
        %5890 = vrot.lane.b32.xlu0 %v5885, 121
        %v5891 = vpop.permute.xlu0 %5890
        %5892 = vrot.lane.b32.xlu0 %v5886, 121
        %v5893 = vpop.permute.xlu0 %5892
        %5894 = vrot.lane.b32.xlu0 %v5887, 121
        %v5895 = vpop.permute.xlu0 %5894
        %v5896 = vsel %vm1909, %v5889, %v5891
        %v5897 = vsel %vm1909, %v5891, %v5893
        %v5898 = vsel %vm1909, %v5893, %v5895
        %v5904 = vmul.f32 %v4357, %v5889
        %v5905 = vmul.f32 %v4358, %v5896
        %v5906 = vmul.f32 %v4359, %v5897
        %v5907 = vmul.f32 %v4360, %v5898
        %v5908 = vmul.f32 %v4361, %v5895
        %s5909 = scalar_lea.vmem %s2, 88
        %v5910 = vld [vmem:[%s5909] sm:$0xff]
        %5916 = vrot.lane.b32.xlu0 %v5904, 7
        %v5917 = vpop.permute.xlu0 %5916
        %5918 = vrot.lane.b32.xlu0 %v5905, 7
        %v5919 = vpop.permute.xlu0 %5918
        %5920 = vrot.lane.b32.xlu0 %v5906, 7
        %v5921 = vpop.permute.xlu0 %5920
        %5922 = vrot.lane.b32.xlu0 %v5907, 7
        %v5923 = vpop.permute.xlu0 %5922
        %5924 = vrot.lane.b32.xlu0 %v5908, 7
        %v5925 = vpop.permute.xlu0 %5924
        %v5926 = vsel %vm1944, %v5917, %v5919
        %v5927 = vsel %vm1944, %v5919, %v5921
        %v5928 = vsel %vm1944, %v5921, %v5923
        %v5929 = vsel %vm1944, %v5923, %v5925
        %v5935 = vsel %vm1789, %v5910, 0
        %5937 = vmatpush.msra.mxu0 0.0
        %5938 = vmatpush.msra.mxu0 0.0
        %5939 = vmatpush.msra.mxu0 0.0
        %5940 = vmatpush.msra.mxu0 0.0
        %5941 = vmatpush.msra.mxu0 0.0
        %5942 = vmatpush.msra.mxu0 0.0
        %5943 = vmatpush.msra.mxu0 0.0
        %5944 = vmatpush.msra.mxu0 0.0
        %5945 = vmatpush.msra.mxu0 0.0
        %5946 = vmatpush.msra.mxu0 0.0
        %5947 = vmatpush.msra.mxu0 0.0
        %5948 = vmatpush.msra.mxu0 0.0
        %5949 = vmatpush.msra.mxu0 0.0
        %5950 = vmatpush.msra.mxu0 0.0
        %5951 = vmatpush.msra.mxu0 0.0
        %5952 = vmatpush.msra.mxu0 %v5926
        %5953 = vmatmul.f32.gmra.mxu0 %v5935
        %v5954 = vpop.f32.mrf.mxu0
        %v5955 = vadd.f32 0.0, %v5954
        %5956 = vdwg.mxu0
        %5957 = vmatpush.msra.mxu0 0.0
        %5958 = vmatpush.msra.mxu0 0.0
        %5959 = vmatpush.msra.mxu0 0.0
        %5960 = vmatpush.msra.mxu0 0.0
        %5961 = vmatpush.msra.mxu0 0.0
        %5962 = vmatpush.msra.mxu0 0.0
        %5963 = vmatpush.msra.mxu0 0.0
        %5964 = vmatpush.msra.mxu0 0.0
        %5965 = vmatpush.msra.mxu0 0.0
        %5966 = vmatpush.msra.mxu0 0.0
        %5967 = vmatpush.msra.mxu0 0.0
        %5968 = vmatpush.msra.mxu0 0.0
        %5969 = vmatpush.msra.mxu0 0.0
        %5970 = vmatpush.msra.mxu0 0.0
        %5971 = vmatpush.msra.mxu0 0.0
        %5972 = vmatpush.msra.mxu0 %v5927
        %5973 = vmatmul.f32.gmra.mxu0 %v5935
        %v5974 = vpop.f32.mrf.mxu0
        %v5975 = vadd.f32 0.0, %v5974
        %5976 = vdwg.mxu0
        %5977 = vmatpush.msra.mxu0 0.0
        %5978 = vmatpush.msra.mxu0 0.0
        %5979 = vmatpush.msra.mxu0 0.0
        %5980 = vmatpush.msra.mxu0 0.0
        %5981 = vmatpush.msra.mxu0 0.0
        %5982 = vmatpush.msra.mxu0 0.0
        %5983 = vmatpush.msra.mxu0 0.0
        %5984 = vmatpush.msra.mxu0 0.0
        %5985 = vmatpush.msra.mxu0 0.0
        %5986 = vmatpush.msra.mxu0 0.0
        %5987 = vmatpush.msra.mxu0 0.0
        %5988 = vmatpush.msra.mxu0 0.0
        %5989 = vmatpush.msra.mxu0 0.0
        %5990 = vmatpush.msra.mxu0 0.0
        %5991 = vmatpush.msra.mxu0 0.0
        %5992 = vmatpush.msra.mxu0 %v5928
        %5993 = vmatmul.f32.gmra.mxu0 %v5935
        %v5994 = vpop.f32.mrf.mxu0
        %v5995 = vadd.f32 0.0, %v5994
        %5996 = vdwg.mxu0
        %5997 = vmatpush.msra.mxu0 0.0
        %5998 = vmatpush.msra.mxu0 0.0
        %5999 = vmatpush.msra.mxu0 0.0
        %6000 = vmatpush.msra.mxu0 0.0
        %6001 = vmatpush.msra.mxu0 0.0
        %6002 = vmatpush.msra.mxu0 0.0
        %6003 = vmatpush.msra.mxu0 0.0
        %6004 = vmatpush.msra.mxu0 0.0
        %6005 = vmatpush.msra.mxu0 0.0
        %6006 = vmatpush.msra.mxu0 0.0
        %6007 = vmatpush.msra.mxu0 0.0
        %6008 = vmatpush.msra.mxu0 0.0
        %6009 = vmatpush.msra.mxu0 0.0
        %6010 = vmatpush.msra.mxu0 0.0
        %6011 = vmatpush.msra.mxu0 0.0
        %6012 = vmatpush.msra.mxu0 %v5929
        %6013 = vmatmul.f32.gmra.mxu0 %v5935
        %v6014 = vpop.f32.mrf.mxu0
        %v6015 = vadd.f32 0.0, %v6014
        %6016 = vdwg.mxu0
        %v6017 = vadd.f32 %v5878, %v5955
        %v6018 = vadd.f32 %v5879, %v5975
        %v6019 = vadd.f32 %v5880, %v5995
        %v6020 = vadd.f32 %v5881, %v6015
        %v6021 = vld [vmem:[%s2047] sm:$0xf]
        %v6023 = vperm.slane %v6021, 0
        %v6024 = vperm.slane %v6021, 1
        %v6025 = vperm.slane %v6021, 2
        %v6026 = vperm.slane %v6021, 3
        %6027 = vrot.lane.b32.xlu0 %v6023, 127
        %v6028 = vpop.permute.xlu0 %6027
        %6029 = vrot.lane.b32.xlu0 %v6024, 127
        %v6030 = vpop.permute.xlu0 %6029
        %6031 = vrot.lane.b32.xlu0 %v6025, 127
        %v6032 = vpop.permute.xlu0 %6031
        %6033 = vrot.lane.b32.xlu0 %v6026, 127
        %v6034 = vpop.permute.xlu0 %6033
        %v6035 = vsel %vm2064, %v6028, %v6030
        %v6036 = vsel %vm2064, %v6030, %v6032
        %v6037 = vsel %vm2064, %v6032, %v6034
        %v6043 = vmul.f32 %v4357, %v6028
        %v6044 = vmul.f32 %v4358, %v6035
        %v6045 = vmul.f32 %v4359, %v6036
        %v6046 = vmul.f32 %v4360, %v6037
        %v6047 = vmul.f32 %v4361, %v6034
        %s6048 = scalar_lea.vmem %s2, 96
        %v6049 = vld [vmem:[%s6048] sm:$0xff]
        %6055 = vrot.lane.b32.xlu0 %v6043, 1
        %v6056 = vpop.permute.xlu0 %6055
        %6057 = vrot.lane.b32.xlu0 %v6044, 1
        %v6058 = vpop.permute.xlu0 %6057
        %6059 = vrot.lane.b32.xlu0 %v6045, 1
        %v6060 = vpop.permute.xlu0 %6059
        %6061 = vrot.lane.b32.xlu0 %v6046, 1
        %v6062 = vpop.permute.xlu0 %6061
        %6063 = vrot.lane.b32.xlu0 %v6047, 1
        %v6064 = vpop.permute.xlu0 %6063
        %v6065 = vsel %vm2099, %v6056, %v6058
        %v6066 = vsel %vm2099, %v6058, %v6060
        %v6067 = vsel %vm2099, %v6060, %v6062
        %v6068 = vsel %vm2099, %v6062, %v6064
        %v6074 = vsel %vm1789, %v6049, 0
        %6076 = vmatpush.msra.mxu0 0.0
        %6077 = vmatpush.msra.mxu0 0.0
        %6078 = vmatpush.msra.mxu0 0.0
        %6079 = vmatpush.msra.mxu0 0.0
        %6080 = vmatpush.msra.mxu0 0.0
        %6081 = vmatpush.msra.mxu0 0.0
        %6082 = vmatpush.msra.mxu0 0.0
        %6083 = vmatpush.msra.mxu0 0.0
        %6084 = vmatpush.msra.mxu0 0.0
        %6085 = vmatpush.msra.mxu0 0.0
        %6086 = vmatpush.msra.mxu0 0.0
        %6087 = vmatpush.msra.mxu0 0.0
        %6088 = vmatpush.msra.mxu0 0.0
        %6089 = vmatpush.msra.mxu0 0.0
        %6090 = vmatpush.msra.mxu0 0.0
        %6091 = vmatpush.msra.mxu0 %v6065
        %6092 = vmatmul.f32.gmra.mxu0 %v6074
        %v6093 = vpop.f32.mrf.mxu0
        %v6094 = vadd.f32 0.0, %v6093
        %6095 = vdwg.mxu0
        %6096 = vmatpush.msra.mxu0 0.0
        %6097 = vmatpush.msra.mxu0 0.0
        %6098 = vmatpush.msra.mxu0 0.0
        %6099 = vmatpush.msra.mxu0 0.0
        %6100 = vmatpush.msra.mxu0 0.0
        %6101 = vmatpush.msra.mxu0 0.0
        %6102 = vmatpush.msra.mxu0 0.0
        %6103 = vmatpush.msra.mxu0 0.0
        %6104 = vmatpush.msra.mxu0 0.0
        %6105 = vmatpush.msra.mxu0 0.0
        %6106 = vmatpush.msra.mxu0 0.0
        %6107 = vmatpush.msra.mxu0 0.0
        %6108 = vmatpush.msra.mxu0 0.0
        %6109 = vmatpush.msra.mxu0 0.0
        %6110 = vmatpush.msra.mxu0 0.0
        %6111 = vmatpush.msra.mxu0 %v6066
        %6112 = vmatmul.f32.gmra.mxu0 %v6074
        %v6113 = vpop.f32.mrf.mxu0
        %v6114 = vadd.f32 0.0, %v6113
        %6115 = vdwg.mxu0
        %6116 = vmatpush.msra.mxu0 0.0
        %6117 = vmatpush.msra.mxu0 0.0
        %6118 = vmatpush.msra.mxu0 0.0
        %6119 = vmatpush.msra.mxu0 0.0
        %6120 = vmatpush.msra.mxu0 0.0
        %6121 = vmatpush.msra.mxu0 0.0
        %6122 = vmatpush.msra.mxu0 0.0
        %6123 = vmatpush.msra.mxu0 0.0
        %6124 = vmatpush.msra.mxu0 0.0
        %6125 = vmatpush.msra.mxu0 0.0
        %6126 = vmatpush.msra.mxu0 0.0
        %6127 = vmatpush.msra.mxu0 0.0
        %6128 = vmatpush.msra.mxu0 0.0
        %6129 = vmatpush.msra.mxu0 0.0
        %6130 = vmatpush.msra.mxu0 0.0
        %6131 = vmatpush.msra.mxu0 %v6067
        %6132 = vmatmul.f32.gmra.mxu0 %v6074
        %v6133 = vpop.f32.mrf.mxu0
        %v6134 = vadd.f32 0.0, %v6133
        %6135 = vdwg.mxu0
        %6136 = vmatpush.msra.mxu0 0.0
        %6137 = vmatpush.msra.mxu0 0.0
        %6138 = vmatpush.msra.mxu0 0.0
        %6139 = vmatpush.msra.mxu0 0.0
        %6140 = vmatpush.msra.mxu0 0.0
        %6141 = vmatpush.msra.mxu0 0.0
        %6142 = vmatpush.msra.mxu0 0.0
        %6143 = vmatpush.msra.mxu0 0.0
        %6144 = vmatpush.msra.mxu0 0.0
        %6145 = vmatpush.msra.mxu0 0.0
        %6146 = vmatpush.msra.mxu0 0.0
        %6147 = vmatpush.msra.mxu0 0.0
        %6148 = vmatpush.msra.mxu0 0.0
        %6149 = vmatpush.msra.mxu0 0.0
        %6150 = vmatpush.msra.mxu0 0.0
        %6151 = vmatpush.msra.mxu0 %v6068
        %6152 = vmatmul.f32.gmra.mxu0 %v6074
        %v6153 = vpop.f32.mrf.mxu0
        %v6154 = vadd.f32 0.0, %v6153
        %6155 = vdwg.mxu0
        %v6156 = vadd.f32 %v6017, %v6094
        %v6157 = vadd.f32 %v6018, %v6114
        %v6158 = vadd.f32 %v6019, %v6134
        %v6159 = vadd.f32 %v6020, %v6154
        %v6160 = vld [vmem:[%s2201] sm:$0xf]
        %v6162 = vperm.slane %v6160, 0
        %v6163 = vperm.slane %v6160, 1
        %v6164 = vperm.slane %v6160, 2
        %v6165 = vperm.slane %v6160, 3
        %v6170 = vmul.f32 %v4358, %v6162
        %v6171 = vmul.f32 %v4359, %v6163
        %v6172 = vmul.f32 %v4360, %v6164
        %v6173 = vmul.f32 %v4361, %v6165
        %s6174 = scalar_lea.vmem %s2, 104
        %v6175 = vld [vmem:[%s6174] sm:$0xff]
        %v6177 = vsel %vm1789, %v6175, 0
        %6179 = vmatpush.msra.mxu0 0.0
        %6180 = vmatpush.msra.mxu0 0.0
        %6181 = vmatpush.msra.mxu0 0.0
        %6182 = vmatpush.msra.mxu0 0.0
        %6183 = vmatpush.msra.mxu0 0.0
        %6184 = vmatpush.msra.mxu0 0.0
        %6185 = vmatpush.msra.mxu0 0.0
        %6186 = vmatpush.msra.mxu0 0.0
        %6187 = vmatpush.msra.mxu0 0.0
        %6188 = vmatpush.msra.mxu0 0.0
        %6189 = vmatpush.msra.mxu0 0.0
        %6190 = vmatpush.msra.mxu0 0.0
        %6191 = vmatpush.msra.mxu0 0.0
        %6192 = vmatpush.msra.mxu0 0.0
        %6193 = vmatpush.msra.mxu0 0.0
        %6194 = vmatpush.msra.mxu0 %v6170
        %6195 = vmatmul.f32.gmra.mxu0 %v6177
        %v6196 = vpop.f32.mrf.mxu0
        %v6197 = vadd.f32 0.0, %v6196
        %6198 = vdwg.mxu0
        %6199 = vmatpush.msra.mxu0 0.0
        %6200 = vmatpush.msra.mxu0 0.0
        %6201 = vmatpush.msra.mxu0 0.0
        %6202 = vmatpush.msra.mxu0 0.0
        %6203 = vmatpush.msra.mxu0 0.0
        %6204 = vmatpush.msra.mxu0 0.0
        %6205 = vmatpush.msra.mxu0 0.0
        %6206 = vmatpush.msra.mxu0 0.0
        %6207 = vmatpush.msra.mxu0 0.0
        %6208 = vmatpush.msra.mxu0 0.0
        %6209 = vmatpush.msra.mxu0 0.0
        %6210 = vmatpush.msra.mxu0 0.0
        %6211 = vmatpush.msra.mxu0 0.0
        %6212 = vmatpush.msra.mxu0 0.0
        %6213 = vmatpush.msra.mxu0 0.0
        %6214 = vmatpush.msra.mxu0 %v6171
        %6215 = vmatmul.f32.gmra.mxu0 %v6177
        %v6216 = vpop.f32.mrf.mxu0
        %v6217 = vadd.f32 0.0, %v6216
        %6218 = vdwg.mxu0
        %6219 = vmatpush.msra.mxu0 0.0
        %6220 = vmatpush.msra.mxu0 0.0
        %6221 = vmatpush.msra.mxu0 0.0
        %6222 = vmatpush.msra.mxu0 0.0
        %6223 = vmatpush.msra.mxu0 0.0
        %6224 = vmatpush.msra.mxu0 0.0
        %6225 = vmatpush.msra.mxu0 0.0
        %6226 = vmatpush.msra.mxu0 0.0
        %6227 = vmatpush.msra.mxu0 0.0
        %6228 = vmatpush.msra.mxu0 0.0
        %6229 = vmatpush.msra.mxu0 0.0
        %6230 = vmatpush.msra.mxu0 0.0
        %6231 = vmatpush.msra.mxu0 0.0
        %6232 = vmatpush.msra.mxu0 0.0
        %6233 = vmatpush.msra.mxu0 0.0
        %6234 = vmatpush.msra.mxu0 %v6172
        %6235 = vmatmul.f32.gmra.mxu0 %v6177
        %v6236 = vpop.f32.mrf.mxu0
        %v6237 = vadd.f32 0.0, %v6236
        %6238 = vdwg.mxu0
        %6239 = vmatpush.msra.mxu0 0.0
        %6240 = vmatpush.msra.mxu0 0.0
        %6241 = vmatpush.msra.mxu0 0.0
        %6242 = vmatpush.msra.mxu0 0.0
        %6243 = vmatpush.msra.mxu0 0.0
        %6244 = vmatpush.msra.mxu0 0.0
        %6245 = vmatpush.msra.mxu0 0.0
        %6246 = vmatpush.msra.mxu0 0.0
        %6247 = vmatpush.msra.mxu0 0.0
        %6248 = vmatpush.msra.mxu0 0.0
        %6249 = vmatpush.msra.mxu0 0.0
        %6250 = vmatpush.msra.mxu0 0.0
        %6251 = vmatpush.msra.mxu0 0.0
        %6252 = vmatpush.msra.mxu0 0.0
        %6253 = vmatpush.msra.mxu0 0.0
        %6254 = vmatpush.msra.mxu0 %v6173
        %6255 = vmatmul.f32.gmra.mxu0 %v6177
        %v6256 = vpop.f32.mrf.mxu0
        %v6257 = vadd.f32 0.0, %v6256
        %6258 = vdwg.mxu0
        %v6259 = vadd.f32 %v6156, %v6197
        %v6260 = vadd.f32 %v6157, %v6217
        %v6261 = vadd.f32 %v6158, %v6237
        %v6262 = vadd.f32 %v6159, %v6257
        %v6263 = vld [vmem:[#allocation3 + $0x8] sm:$0xff]
        %v6264 = vld [vmem:[#allocation3 + $0x10] sm:$0xff]
        %v6265 = vld [vmem:[#allocation3 + $0x18] sm:$0xff]
        %v6266 = vld [vmem:[#allocation3 + $0x20] sm:$0xff]
        %v6267 = vld [vmem:[#allocation3 + $0x28] sm:$0xff]
        %v6268 = vld [vmem:[%s2325] sm:$0xf]
        %v6270 = vperm.slane %v6268, 0
        %v6271 = vperm.slane %v6268, 1
        %v6272 = vperm.slane %v6268, 2
        %v6273 = vperm.slane %v6268, 3
        %6274 = vrot.lane.b32.xlu0 %v6270, 1
        %v6275 = vpop.permute.xlu0 %6274
        %6276 = vrot.lane.b32.xlu0 %v6271, 1
        %v6277 = vpop.permute.xlu0 %6276
        %6278 = vrot.lane.b32.xlu0 %v6272, 1
        %v6279 = vpop.permute.xlu0 %6278
        %6280 = vrot.lane.b32.xlu0 %v6273, 1
        %v6281 = vpop.permute.xlu0 %6280
        %v6282 = vsel %vm2099, %v6275, %v6277
        %v6283 = vsel %vm2099, %v6277, %v6279
        %v6284 = vsel %vm2099, %v6279, %v6281
        %v6290 = vmul.f32 %v6263, %v6275
        %v6291 = vmul.f32 %v6264, %v6282
        %v6292 = vmul.f32 %v6265, %v6283
        %v6293 = vmul.f32 %v6266, %v6284
        %v6294 = vmul.f32 %v6267, %v6281
        %s6295 = scalar_lea.vmem %s2, 112
        %v6296 = vld [vmem:[%s6295] sm:$0xff]
        %6302 = vrot.lane.b32.xlu0 %v6290, 127
        %v6303 = vpop.permute.xlu0 %6302
        %6304 = vrot.lane.b32.xlu0 %v6291, 127
        %v6305 = vpop.permute.xlu0 %6304
        %6306 = vrot.lane.b32.xlu0 %v6292, 127
        %v6307 = vpop.permute.xlu0 %6306
        %6308 = vrot.lane.b32.xlu0 %v6293, 127
        %v6309 = vpop.permute.xlu0 %6308
        %6310 = vrot.lane.b32.xlu0 %v6294, 127
        %v6311 = vpop.permute.xlu0 %6310
        %v6312 = vsel %vm2064, %v6303, %v6305
        %v6313 = vsel %vm2064, %v6305, %v6307
        %v6314 = vsel %vm2064, %v6307, %v6309
        %v6315 = vsel %vm2064, %v6309, %v6311
        %v6321 = vsel %vm1789, %v6296, 0
        %6323 = vmatpush.msra.mxu0 0.0
        %6324 = vmatpush.msra.mxu0 0.0
        %6325 = vmatpush.msra.mxu0 0.0
        %6326 = vmatpush.msra.mxu0 0.0
        %6327 = vmatpush.msra.mxu0 0.0
        %6328 = vmatpush.msra.mxu0 0.0
        %6329 = vmatpush.msra.mxu0 0.0
        %6330 = vmatpush.msra.mxu0 0.0
        %6331 = vmatpush.msra.mxu0 0.0
        %6332 = vmatpush.msra.mxu0 0.0
        %6333 = vmatpush.msra.mxu0 0.0
        %6334 = vmatpush.msra.mxu0 0.0
        %6335 = vmatpush.msra.mxu0 0.0
        %6336 = vmatpush.msra.mxu0 0.0
        %6337 = vmatpush.msra.mxu0 0.0
        %6338 = vmatpush.msra.mxu0 %v6312
        %6339 = vmatmul.f32.gmra.mxu0 %v6321
        %v6340 = vpop.f32.mrf.mxu0
        %v6341 = vadd.f32 0.0, %v6340
        %6342 = vdwg.mxu0
        %6343 = vmatpush.msra.mxu0 0.0
        %6344 = vmatpush.msra.mxu0 0.0
        %6345 = vmatpush.msra.mxu0 0.0
        %6346 = vmatpush.msra.mxu0 0.0
        %6347 = vmatpush.msra.mxu0 0.0
        %6348 = vmatpush.msra.mxu0 0.0
        %6349 = vmatpush.msra.mxu0 0.0
        %6350 = vmatpush.msra.mxu0 0.0
        %6351 = vmatpush.msra.mxu0 0.0
        %6352 = vmatpush.msra.mxu0 0.0
        %6353 = vmatpush.msra.mxu0 0.0
        %6354 = vmatpush.msra.mxu0 0.0
        %6355 = vmatpush.msra.mxu0 0.0
        %6356 = vmatpush.msra.mxu0 0.0
        %6357 = vmatpush.msra.mxu0 0.0
        %6358 = vmatpush.msra.mxu0 %v6313
        %6359 = vmatmul.f32.gmra.mxu0 %v6321
        %v6360 = vpop.f32.mrf.mxu0
        %v6361 = vadd.f32 0.0, %v6360
        %6362 = vdwg.mxu0
        %6363 = vmatpush.msra.mxu0 0.0
        %6364 = vmatpush.msra.mxu0 0.0
        %6365 = vmatpush.msra.mxu0 0.0
        %6366 = vmatpush.msra.mxu0 0.0
        %6367 = vmatpush.msra.mxu0 0.0
        %6368 = vmatpush.msra.mxu0 0.0
        %6369 = vmatpush.msra.mxu0 0.0
        %6370 = vmatpush.msra.mxu0 0.0
        %6371 = vmatpush.msra.mxu0 0.0
        %6372 = vmatpush.msra.mxu0 0.0
        %6373 = vmatpush.msra.mxu0 0.0
        %6374 = vmatpush.msra.mxu0 0.0
        %6375 = vmatpush.msra.mxu0 0.0
        %6376 = vmatpush.msra.mxu0 0.0
        %6377 = vmatpush.msra.mxu0 0.0
        %6378 = vmatpush.msra.mxu0 %v6314
        %6379 = vmatmul.f32.gmra.mxu0 %v6321
        %v6380 = vpop.f32.mrf.mxu0
        %v6381 = vadd.f32 0.0, %v6380
        %6382 = vdwg.mxu0
        %6383 = vmatpush.msra.mxu0 0.0
        %6384 = vmatpush.msra.mxu0 0.0
        %6385 = vmatpush.msra.mxu0 0.0
        %6386 = vmatpush.msra.mxu0 0.0
        %6387 = vmatpush.msra.mxu0 0.0
        %6388 = vmatpush.msra.mxu0 0.0
        %6389 = vmatpush.msra.mxu0 0.0
        %6390 = vmatpush.msra.mxu0 0.0
        %6391 = vmatpush.msra.mxu0 0.0
        %6392 = vmatpush.msra.mxu0 0.0
        %6393 = vmatpush.msra.mxu0 0.0
        %6394 = vmatpush.msra.mxu0 0.0
        %6395 = vmatpush.msra.mxu0 0.0
        %6396 = vmatpush.msra.mxu0 0.0
        %6397 = vmatpush.msra.mxu0 0.0
        %6398 = vmatpush.msra.mxu0 %v6315
        %6399 = vmatmul.f32.gmra.mxu0 %v6321
        %v6400 = vpop.f32.mrf.mxu0
        %v6401 = vadd.f32 0.0, %v6400
        %6402 = vdwg.mxu0
        %v6403 = vadd.f32 %v6259, %v6341
        %v6404 = vadd.f32 %v6260, %v6361
        %v6405 = vadd.f32 %v6261, %v6381
        %v6406 = vadd.f32 %v6262, %v6401
        %v6407 = vld [vmem:[%s2478] sm:$0xf]
        %v6409 = vperm.slane %v6407, 0
        %v6410 = vperm.slane %v6407, 1
        %v6411 = vperm.slane %v6407, 2
        %v6412 = vperm.slane %v6407, 3
        %6413 = vrot.lane.b32.xlu0 %v6409, 7
        %v6414 = vpop.permute.xlu0 %6413
        %6415 = vrot.lane.b32.xlu0 %v6410, 7
        %v6416 = vpop.permute.xlu0 %6415
        %6417 = vrot.lane.b32.xlu0 %v6411, 7
        %v6418 = vpop.permute.xlu0 %6417
        %6419 = vrot.lane.b32.xlu0 %v6412, 7
        %v6420 = vpop.permute.xlu0 %6419
        %v6421 = vsel %vm1944, %v6414, %v6416
        %v6422 = vsel %vm1944, %v6416, %v6418
        %v6423 = vsel %vm1944, %v6418, %v6420
        %v6429 = vmul.f32 %v6263, %v6414
        %v6430 = vmul.f32 %v6264, %v6421
        %v6431 = vmul.f32 %v6265, %v6422
        %v6432 = vmul.f32 %v6266, %v6423
        %v6433 = vmul.f32 %v6267, %v6420
        %s6434 = scalar_lea.vmem %s2, 120
        %v6435 = vld [vmem:[%s6434] sm:$0xff]
        %6441 = vrot.lane.b32.xlu0 %v6429, 121
        %v6442 = vpop.permute.xlu0 %6441
        %6443 = vrot.lane.b32.xlu0 %v6430, 121
        %v6444 = vpop.permute.xlu0 %6443
        %6445 = vrot.lane.b32.xlu0 %v6431, 121
        %v6446 = vpop.permute.xlu0 %6445
        %6447 = vrot.lane.b32.xlu0 %v6432, 121
        %v6448 = vpop.permute.xlu0 %6447
        %6449 = vrot.lane.b32.xlu0 %v6433, 121
        %v6450 = vpop.permute.xlu0 %6449
        %v6451 = vsel %vm1909, %v6442, %v6444
        %v6452 = vsel %vm1909, %v6444, %v6446
        %v6453 = vsel %vm1909, %v6446, %v6448
        %v6454 = vsel %vm1909, %v6448, %v6450
        %v6460 = vsel %vm1789, %v6435, 0
        %6462 = vmatpush.msra.mxu0 0.0
        %6463 = vmatpush.msra.mxu0 0.0
        %6464 = vmatpush.msra.mxu0 0.0
        %6465 = vmatpush.msra.mxu0 0.0
        %6466 = vmatpush.msra.mxu0 0.0
        %6467 = vmatpush.msra.mxu0 0.0
        %6468 = vmatpush.msra.mxu0 0.0
        %6469 = vmatpush.msra.mxu0 0.0
        %6470 = vmatpush.msra.mxu0 0.0
        %6471 = vmatpush.msra.mxu0 0.0
        %6472 = vmatpush.msra.mxu0 0.0
        %6473 = vmatpush.msra.mxu0 0.0
        %6474 = vmatpush.msra.mxu0 0.0
        %6475 = vmatpush.msra.mxu0 0.0
        %6476 = vmatpush.msra.mxu0 0.0
        %6477 = vmatpush.msra.mxu0 %v6451
        %6478 = vmatmul.f32.gmra.mxu0 %v6460
        %v6479 = vpop.f32.mrf.mxu0
        %v6480 = vadd.f32 0.0, %v6479
        %6481 = vdwg.mxu0
        %6482 = vmatpush.msra.mxu0 0.0
        %6483 = vmatpush.msra.mxu0 0.0
        %6484 = vmatpush.msra.mxu0 0.0
        %6485 = vmatpush.msra.mxu0 0.0
        %6486 = vmatpush.msra.mxu0 0.0
        %6487 = vmatpush.msra.mxu0 0.0
        %6488 = vmatpush.msra.mxu0 0.0
        %6489 = vmatpush.msra.mxu0 0.0
        %6490 = vmatpush.msra.mxu0 0.0
        %6491 = vmatpush.msra.mxu0 0.0
        %6492 = vmatpush.msra.mxu0 0.0
        %6493 = vmatpush.msra.mxu0 0.0
        %6494 = vmatpush.msra.mxu0 0.0
        %6495 = vmatpush.msra.mxu0 0.0
        %6496 = vmatpush.msra.mxu0 0.0
        %6497 = vmatpush.msra.mxu0 %v6452
        %6498 = vmatmul.f32.gmra.mxu0 %v6460
        %v6499 = vpop.f32.mrf.mxu0
        %v6500 = vadd.f32 0.0, %v6499
        %6501 = vdwg.mxu0
        %6502 = vmatpush.msra.mxu0 0.0
        %6503 = vmatpush.msra.mxu0 0.0
        %6504 = vmatpush.msra.mxu0 0.0
        %6505 = vmatpush.msra.mxu0 0.0
        %6506 = vmatpush.msra.mxu0 0.0
        %6507 = vmatpush.msra.mxu0 0.0
        %6508 = vmatpush.msra.mxu0 0.0
        %6509 = vmatpush.msra.mxu0 0.0
        %6510 = vmatpush.msra.mxu0 0.0
        %6511 = vmatpush.msra.mxu0 0.0
        %6512 = vmatpush.msra.mxu0 0.0
        %6513 = vmatpush.msra.mxu0 0.0
        %6514 = vmatpush.msra.mxu0 0.0
        %6515 = vmatpush.msra.mxu0 0.0
        %6516 = vmatpush.msra.mxu0 0.0
        %6517 = vmatpush.msra.mxu0 %v6453
        %6518 = vmatmul.f32.gmra.mxu0 %v6460
        %v6519 = vpop.f32.mrf.mxu0
        %v6520 = vadd.f32 0.0, %v6519
        %6521 = vdwg.mxu0
        %6522 = vmatpush.msra.mxu0 0.0
        %6523 = vmatpush.msra.mxu0 0.0
        %6524 = vmatpush.msra.mxu0 0.0
        %6525 = vmatpush.msra.mxu0 0.0
        %6526 = vmatpush.msra.mxu0 0.0
        %6527 = vmatpush.msra.mxu0 0.0
        %6528 = vmatpush.msra.mxu0 0.0
        %6529 = vmatpush.msra.mxu0 0.0
        %6530 = vmatpush.msra.mxu0 0.0
        %6531 = vmatpush.msra.mxu0 0.0
        %6532 = vmatpush.msra.mxu0 0.0
        %6533 = vmatpush.msra.mxu0 0.0
        %6534 = vmatpush.msra.mxu0 0.0
        %6535 = vmatpush.msra.mxu0 0.0
        %6536 = vmatpush.msra.mxu0 0.0
        %6537 = vmatpush.msra.mxu0 %v6454
        %6538 = vmatmul.f32.gmra.mxu0 %v6460
        %v6539 = vpop.f32.mrf.mxu0
        %v6540 = vadd.f32 0.0, %v6539
        %6541 = vdwg.mxu0
        %v6542 = vadd.f32 %v6403, %v6480
        %v6543 = vadd.f32 %v6404, %v6500
        %v6544 = vadd.f32 %v6405, %v6520
        %v6545 = vadd.f32 %v6406, %v6540
        %v6546 = vld [vmem:[%s2631] sm:$0xf]
        %v6548 = vperm.slane %v6546, 0
        %v6549 = vperm.slane %v6546, 1
        %v6550 = vperm.slane %v6546, 2
        %v6551 = vperm.slane %v6546, 3
        %6552 = vrot.lane.b32.xlu0 %v6548, 8
        %v6553 = vpop.permute.xlu0 %6552
        %6554 = vrot.lane.b32.xlu0 %v6549, 8
        %v6555 = vpop.permute.xlu0 %6554
        %6556 = vrot.lane.b32.xlu0 %v6550, 8
        %v6557 = vpop.permute.xlu0 %6556
        %6558 = vrot.lane.b32.xlu0 %v6551, 8
        %v6559 = vpop.permute.xlu0 %6558
        %v6560 = vsel %vm1789, %v6553, %v6555
        %v6561 = vsel %vm1789, %v6555, %v6557
        %v6562 = vsel %vm1789, %v6557, %v6559
        %v6568 = vmul.f32 %v6263, %v6553
        %v6569 = vmul.f32 %v6264, %v6560
        %v6570 = vmul.f32 %v6265, %v6561
        %v6571 = vmul.f32 %v6266, %v6562
        %v6572 = vmul.f32 %v6267, %v6559
        %s6573 = scalar_lea.vmem %s2, 128
        %v6574 = vld [vmem:[%s6573] sm:$0xff]
        %6580 = vrot.lane.b32.xlu0 %v6568, 120
        %v6581 = vpop.permute.xlu0 %6580
        %6582 = vrot.lane.b32.xlu0 %v6569, 120
        %v6583 = vpop.permute.xlu0 %6582
        %6584 = vrot.lane.b32.xlu0 %v6570, 120
        %v6585 = vpop.permute.xlu0 %6584
        %6586 = vrot.lane.b32.xlu0 %v6571, 120
        %v6587 = vpop.permute.xlu0 %6586
        %6588 = vrot.lane.b32.xlu0 %v6572, 120
        %v6589 = vpop.permute.xlu0 %6588
        %v6590 = vsel %vm1754, %v6581, %v6583
        %v6591 = vsel %vm1754, %v6583, %v6585
        %v6592 = vsel %vm1754, %v6585, %v6587
        %v6593 = vsel %vm1754, %v6587, %v6589
        %v6599 = vsel %vm1789, %v6574, 0
        %6601 = vmatpush.msra.mxu0 0.0
        %6602 = vmatpush.msra.mxu0 0.0
        %6603 = vmatpush.msra.mxu0 0.0
        %6604 = vmatpush.msra.mxu0 0.0
        %6605 = vmatpush.msra.mxu0 0.0
        %6606 = vmatpush.msra.mxu0 0.0
        %6607 = vmatpush.msra.mxu0 0.0
        %6608 = vmatpush.msra.mxu0 0.0
        %6609 = vmatpush.msra.mxu0 0.0
        %6610 = vmatpush.msra.mxu0 0.0
        %6611 = vmatpush.msra.mxu0 0.0
        %6612 = vmatpush.msra.mxu0 0.0
        %6613 = vmatpush.msra.mxu0 0.0
        %6614 = vmatpush.msra.mxu0 0.0
        %6615 = vmatpush.msra.mxu0 0.0
        %6616 = vmatpush.msra.mxu0 %v6590
        %6617 = vmatmul.f32.gmra.mxu0 %v6599
        %v6618 = vpop.f32.mrf.mxu0
        %v6619 = vadd.f32 0.0, %v6618
        %6620 = vdwg.mxu0
        %6621 = vmatpush.msra.mxu0 0.0
        %6622 = vmatpush.msra.mxu0 0.0
        %6623 = vmatpush.msra.mxu0 0.0
        %6624 = vmatpush.msra.mxu0 0.0
        %6625 = vmatpush.msra.mxu0 0.0
        %6626 = vmatpush.msra.mxu0 0.0
        %6627 = vmatpush.msra.mxu0 0.0
        %6628 = vmatpush.msra.mxu0 0.0
        %6629 = vmatpush.msra.mxu0 0.0
        %6630 = vmatpush.msra.mxu0 0.0
        %6631 = vmatpush.msra.mxu0 0.0
        %6632 = vmatpush.msra.mxu0 0.0
        %6633 = vmatpush.msra.mxu0 0.0
        %6634 = vmatpush.msra.mxu0 0.0
        %6635 = vmatpush.msra.mxu0 0.0
        %6636 = vmatpush.msra.mxu0 %v6591
        %6637 = vmatmul.f32.gmra.mxu0 %v6599
        %v6638 = vpop.f32.mrf.mxu0
        %v6639 = vadd.f32 0.0, %v6638
        %6640 = vdwg.mxu0
        %6641 = vmatpush.msra.mxu0 0.0
        %6642 = vmatpush.msra.mxu0 0.0
        %6643 = vmatpush.msra.mxu0 0.0
        %6644 = vmatpush.msra.mxu0 0.0
        %6645 = vmatpush.msra.mxu0 0.0
        %6646 = vmatpush.msra.mxu0 0.0
        %6647 = vmatpush.msra.mxu0 0.0
        %6648 = vmatpush.msra.mxu0 0.0
        %6649 = vmatpush.msra.mxu0 0.0
        %6650 = vmatpush.msra.mxu0 0.0
        %6651 = vmatpush.msra.mxu0 0.0
        %6652 = vmatpush.msra.mxu0 0.0
        %6653 = vmatpush.msra.mxu0 0.0
        %6654 = vmatpush.msra.mxu0 0.0
        %6655 = vmatpush.msra.mxu0 0.0
        %6656 = vmatpush.msra.mxu0 %v6592
        %6657 = vmatmul.f32.gmra.mxu0 %v6599
        %v6658 = vpop.f32.mrf.mxu0
        %v6659 = vadd.f32 0.0, %v6658
        %6660 = vdwg.mxu0
        %6661 = vmatpush.msra.mxu0 0.0
        %6662 = vmatpush.msra.mxu0 0.0
        %6663 = vmatpush.msra.mxu0 0.0
        %6664 = vmatpush.msra.mxu0 0.0
        %6665 = vmatpush.msra.mxu0 0.0
        %6666 = vmatpush.msra.mxu0 0.0
        %6667 = vmatpush.msra.mxu0 0.0
        %6668 = vmatpush.msra.mxu0 0.0
        %6669 = vmatpush.msra.mxu0 0.0
        %6670 = vmatpush.msra.mxu0 0.0
        %6671 = vmatpush.msra.mxu0 0.0
        %6672 = vmatpush.msra.mxu0 0.0
        %6673 = vmatpush.msra.mxu0 0.0
        %6674 = vmatpush.msra.mxu0 0.0
        %6675 = vmatpush.msra.mxu0 0.0
        %6676 = vmatpush.msra.mxu0 %v6593
        %6677 = vmatmul.f32.gmra.mxu0 %v6599
        %v6678 = vpop.f32.mrf.mxu0
        %v6679 = vadd.f32 0.0, %v6678
        %6680 = vdwg.mxu0
        %v6681 = vadd.f32 %v6542, %v6619
        %v6682 = vadd.f32 %v6543, %v6639
        %v6683 = vadd.f32 %v6544, %v6659
        %v6684 = vadd.f32 %v6545, %v6679
        %v6685 = vld [vmem:[%s2784] sm:$0xf]
        %v6687 = vperm.slane %v6685, 0
        %v6688 = vperm.slane %v6685, 1
        %v6689 = vperm.slane %v6685, 2
        %v6690 = vperm.slane %v6685, 3
        %6691 = vrot.lane.b32.xlu0 %v6687, 9
        %v6692 = vpop.permute.xlu0 %6691
        %6693 = vrot.lane.b32.xlu0 %v6688, 9
        %v6694 = vpop.permute.xlu0 %6693
        %6695 = vrot.lane.b32.xlu0 %v6689, 9
        %v6696 = vpop.permute.xlu0 %6695
        %6697 = vrot.lane.b32.xlu0 %v6690, 9
        %v6698 = vpop.permute.xlu0 %6697
        %v6699 = vsel %vm1634, %v6692, %v6694
        %v6700 = vsel %vm1634, %v6694, %v6696
        %v6701 = vsel %vm1634, %v6696, %v6698
        %v6707 = vmul.f32 %v6263, %v6692
        %v6708 = vmul.f32 %v6264, %v6699
        %v6709 = vmul.f32 %v6265, %v6700
        %v6710 = vmul.f32 %v6266, %v6701
        %v6711 = vmul.f32 %v6267, %v6698
        %s6712 = scalar_lea.vmem %s2, 136
        %v6713 = vld [vmem:[%s6712] sm:$0xff]
        %6719 = vrot.lane.b32.xlu0 %v6707, 119
        %v6720 = vpop.permute.xlu0 %6719
        %6721 = vrot.lane.b32.xlu0 %v6708, 119
        %v6722 = vpop.permute.xlu0 %6721
        %6723 = vrot.lane.b32.xlu0 %v6709, 119
        %v6724 = vpop.permute.xlu0 %6723
        %6725 = vrot.lane.b32.xlu0 %v6710, 119
        %v6726 = vpop.permute.xlu0 %6725
        %6727 = vrot.lane.b32.xlu0 %v6711, 119
        %v6728 = vpop.permute.xlu0 %6727
        %v6729 = vsel %vm1599, %v6720, %v6722
        %v6730 = vsel %vm1599, %v6722, %v6724
        %v6731 = vsel %vm1599, %v6724, %v6726
        %v6732 = vsel %vm1599, %v6726, %v6728
        %v6738 = vsel %vm1789, %v6713, 0
        %6740 = vmatpush.msra.mxu0 0.0
        %6741 = vmatpush.msra.mxu0 0.0
        %6742 = vmatpush.msra.mxu0 0.0
        %6743 = vmatpush.msra.mxu0 0.0
        %6744 = vmatpush.msra.mxu0 0.0
        %6745 = vmatpush.msra.mxu0 0.0
        %6746 = vmatpush.msra.mxu0 0.0
        %6747 = vmatpush.msra.mxu0 0.0
        %6748 = vmatpush.msra.mxu0 0.0
        %6749 = vmatpush.msra.mxu0 0.0
        %6750 = vmatpush.msra.mxu0 0.0
        %6751 = vmatpush.msra.mxu0 0.0
        %6752 = vmatpush.msra.mxu0 0.0
        %6753 = vmatpush.msra.mxu0 0.0
        %6754 = vmatpush.msra.mxu0 0.0
        %6755 = vmatpush.msra.mxu0 %v6729
        %6756 = vmatmul.f32.gmra.mxu0 %v6738
        %v6757 = vpop.f32.mrf.mxu0
        %v6758 = vadd.f32 0.0, %v6757
        %6759 = vdwg.mxu0
        %6760 = vmatpush.msra.mxu0 0.0
        %6761 = vmatpush.msra.mxu0 0.0
        %6762 = vmatpush.msra.mxu0 0.0
        %6763 = vmatpush.msra.mxu0 0.0
        %6764 = vmatpush.msra.mxu0 0.0
        %6765 = vmatpush.msra.mxu0 0.0
        %6766 = vmatpush.msra.mxu0 0.0
        %6767 = vmatpush.msra.mxu0 0.0
        %6768 = vmatpush.msra.mxu0 0.0
        %6769 = vmatpush.msra.mxu0 0.0
        %6770 = vmatpush.msra.mxu0 0.0
        %6771 = vmatpush.msra.mxu0 0.0
        %6772 = vmatpush.msra.mxu0 0.0
        %6773 = vmatpush.msra.mxu0 0.0
        %6774 = vmatpush.msra.mxu0 0.0
        %6775 = vmatpush.msra.mxu0 %v6730
        %6776 = vmatmul.f32.gmra.mxu0 %v6738
        %v6777 = vpop.f32.mrf.mxu0
        %v6778 = vadd.f32 0.0, %v6777
        %6779 = vdwg.mxu0
        %6780 = vmatpush.msra.mxu0 0.0
        %6781 = vmatpush.msra.mxu0 0.0
        %6782 = vmatpush.msra.mxu0 0.0
        %6783 = vmatpush.msra.mxu0 0.0
        %6784 = vmatpush.msra.mxu0 0.0
        %6785 = vmatpush.msra.mxu0 0.0
        %6786 = vmatpush.msra.mxu0 0.0
        %6787 = vmatpush.msra.mxu0 0.0
        %6788 = vmatpush.msra.mxu0 0.0
        %6789 = vmatpush.msra.mxu0 0.0
        %6790 = vmatpush.msra.mxu0 0.0
        %6791 = vmatpush.msra.mxu0 0.0
        %6792 = vmatpush.msra.mxu0 0.0
        %6793 = vmatpush.msra.mxu0 0.0
        %6794 = vmatpush.msra.mxu0 0.0
        %6795 = vmatpush.msra.mxu0 %v6731
        %6796 = vmatmul.f32.gmra.mxu0 %v6738
        %v6797 = vpop.f32.mrf.mxu0
        %v6798 = vadd.f32 0.0, %v6797
        %6799 = vdwg.mxu0
        %6800 = vmatpush.msra.mxu0 0.0
        %6801 = vmatpush.msra.mxu0 0.0
        %6802 = vmatpush.msra.mxu0 0.0
        %6803 = vmatpush.msra.mxu0 0.0
        %6804 = vmatpush.msra.mxu0 0.0
        %6805 = vmatpush.msra.mxu0 0.0
        %6806 = vmatpush.msra.mxu0 0.0
        %6807 = vmatpush.msra.mxu0 0.0
        %6808 = vmatpush.msra.mxu0 0.0
        %6809 = vmatpush.msra.mxu0 0.0
        %6810 = vmatpush.msra.mxu0 0.0
        %6811 = vmatpush.msra.mxu0 0.0
        %6812 = vmatpush.msra.mxu0 0.0
        %6813 = vmatpush.msra.mxu0 0.0
        %6814 = vmatpush.msra.mxu0 0.0
        %6815 = vmatpush.msra.mxu0 %v6732
        %6816 = vmatmul.f32.gmra.mxu0 %v6738
        %v6817 = vpop.f32.mrf.mxu0
        %v6818 = vadd.f32 0.0, %v6817
        %6819 = vdwg.mxu0
        %v6820 = vadd.f32 %v6681, %v6758
        %v6821 = vadd.f32 %v6682, %v6778
        %v6822 = vadd.f32 %v6683, %v6798
        %v6823 = vadd.f32 %v6684, %v6818
        %v6824 = vld [vmem:[%s2937] sm:$0xf]
        %v6826 = vperm.slane %v6824, 0
        %v6827 = vperm.slane %v6824, 1
        %v6828 = vperm.slane %v6824, 2
        %v6829 = vperm.slane %v6824, 3
        %6830 = vrot.lane.b32.xlu0 %v6826, 55
        %v6831 = vpop.permute.xlu0 %6830
        %6832 = vrot.lane.b32.xlu0 %v6827, 55
        %v6833 = vpop.permute.xlu0 %6832
        %6834 = vrot.lane.b32.xlu0 %v6828, 55
        %v6835 = vpop.permute.xlu0 %6834
        %6836 = vrot.lane.b32.xlu0 %v6829, 55
        %v6837 = vpop.permute.xlu0 %6836
        %v6838 = vsel %vm224, %v6831, %v6833
        %v6839 = vsel %vm224, %v6833, %v6835
        %v6840 = vsel %vm224, %v6835, %v6837
        %v6846 = vmul.f32 %v6263, %v6831
        %v6847 = vmul.f32 %v6264, %v6838
        %v6848 = vmul.f32 %v6265, %v6839
        %v6849 = vmul.f32 %v6266, %v6840
        %v6850 = vmul.f32 %v6267, %v6837
        %s6851 = scalar_lea.vmem %s2, 144
        %v6852 = vld [vmem:[%s6851] sm:$0xff]
        %6858 = vrot.lane.b32.xlu0 %v6846, 73
        %v6859 = vpop.permute.xlu0 %6858
        %6860 = vrot.lane.b32.xlu0 %v6847, 73
        %v6861 = vpop.permute.xlu0 %6860
        %6862 = vrot.lane.b32.xlu0 %v6848, 73
        %v6863 = vpop.permute.xlu0 %6862
        %6864 = vrot.lane.b32.xlu0 %v6849, 73
        %v6865 = vpop.permute.xlu0 %6864
        %6866 = vrot.lane.b32.xlu0 %v6850, 73
        %v6867 = vpop.permute.xlu0 %6866
        %v6868 = vsel %vm407, %v6859, %v6861
        %v6869 = vsel %vm407, %v6861, %v6863
        %v6870 = vsel %vm407, %v6863, %v6865
        %v6871 = vsel %vm407, %v6865, %v6867
        %v6877 = vsel %vm1789, %v6852, 0
        %6879 = vmatpush.msra.mxu0 0.0
        %6880 = vmatpush.msra.mxu0 0.0
        %6881 = vmatpush.msra.mxu0 0.0
        %6882 = vmatpush.msra.mxu0 0.0
        %6883 = vmatpush.msra.mxu0 0.0
        %6884 = vmatpush.msra.mxu0 0.0
        %6885 = vmatpush.msra.mxu0 0.0
        %6886 = vmatpush.msra.mxu0 0.0
        %6887 = vmatpush.msra.mxu0 0.0
        %6888 = vmatpush.msra.mxu0 0.0
        %6889 = vmatpush.msra.mxu0 0.0
        %6890 = vmatpush.msra.mxu0 0.0
        %6891 = vmatpush.msra.mxu0 0.0
        %6892 = vmatpush.msra.mxu0 0.0
        %6893 = vmatpush.msra.mxu0 0.0
        %6894 = vmatpush.msra.mxu0 %v6868
        %6895 = vmatmul.f32.gmra.mxu0 %v6877
        %v6896 = vpop.f32.mrf.mxu0
        %v6897 = vadd.f32 0.0, %v6896
        %6898 = vdwg.mxu0
        %6899 = vmatpush.msra.mxu0 0.0
        %6900 = vmatpush.msra.mxu0 0.0
        %6901 = vmatpush.msra.mxu0 0.0
        %6902 = vmatpush.msra.mxu0 0.0
        %6903 = vmatpush.msra.mxu0 0.0
        %6904 = vmatpush.msra.mxu0 0.0
        %6905 = vmatpush.msra.mxu0 0.0
        %6906 = vmatpush.msra.mxu0 0.0
        %6907 = vmatpush.msra.mxu0 0.0
        %6908 = vmatpush.msra.mxu0 0.0
        %6909 = vmatpush.msra.mxu0 0.0
        %6910 = vmatpush.msra.mxu0 0.0
        %6911 = vmatpush.msra.mxu0 0.0
        %6912 = vmatpush.msra.mxu0 0.0
        %6913 = vmatpush.msra.mxu0 0.0
        %6914 = vmatpush.msra.mxu0 %v6869
        %6915 = vmatmul.f32.gmra.mxu0 %v6877
        %v6916 = vpop.f32.mrf.mxu0
        %v6917 = vadd.f32 0.0, %v6916
        %6918 = vdwg.mxu0
        %6919 = vmatpush.msra.mxu0 0.0
        %6920 = vmatpush.msra.mxu0 0.0
        %6921 = vmatpush.msra.mxu0 0.0
        %6922 = vmatpush.msra.mxu0 0.0
        %6923 = vmatpush.msra.mxu0 0.0
        %6924 = vmatpush.msra.mxu0 0.0
        %6925 = vmatpush.msra.mxu0 0.0
        %6926 = vmatpush.msra.mxu0 0.0
        %6927 = vmatpush.msra.mxu0 0.0
        %6928 = vmatpush.msra.mxu0 0.0
        %6929 = vmatpush.msra.mxu0 0.0
        %6930 = vmatpush.msra.mxu0 0.0
        %6931 = vmatpush.msra.mxu0 0.0
        %6932 = vmatpush.msra.mxu0 0.0
        %6933 = vmatpush.msra.mxu0 0.0
        %6934 = vmatpush.msra.mxu0 %v6870
        %6935 = vmatmul.f32.gmra.mxu0 %v6877
        %v6936 = vpop.f32.mrf.mxu0
        %v6937 = vadd.f32 0.0, %v6936
        %6938 = vdwg.mxu0
        %6939 = vmatpush.msra.mxu0 0.0
        %6940 = vmatpush.msra.mxu0 0.0
        %6941 = vmatpush.msra.mxu0 0.0
        %6942 = vmatpush.msra.mxu0 0.0
        %6943 = vmatpush.msra.mxu0 0.0
        %6944 = vmatpush.msra.mxu0 0.0
        %6945 = vmatpush.msra.mxu0 0.0
        %6946 = vmatpush.msra.mxu0 0.0
        %6947 = vmatpush.msra.mxu0 0.0
        %6948 = vmatpush.msra.mxu0 0.0
        %6949 = vmatpush.msra.mxu0 0.0
        %6950 = vmatpush.msra.mxu0 0.0
        %6951 = vmatpush.msra.mxu0 0.0
        %6952 = vmatpush.msra.mxu0 0.0
        %6953 = vmatpush.msra.mxu0 0.0
        %6954 = vmatpush.msra.mxu0 %v6871
        %6955 = vmatmul.f32.gmra.mxu0 %v6877
        %v6956 = vpop.f32.mrf.mxu0
        %v6957 = vadd.f32 0.0, %v6956
        %6958 = vdwg.mxu0
        %v6959 = vadd.f32 %v6820, %v6897
        %v6960 = vadd.f32 %v6821, %v6917
        %v6961 = vadd.f32 %v6822, %v6937
        %v6962 = vadd.f32 %v6823, %v6957
        %v6963 = vld [vmem:[%s3090] sm:$0xf]
        %v6965 = vperm.slane %v6963, 0
        %v6966 = vperm.slane %v6963, 1
        %v6967 = vperm.slane %v6963, 2
        %v6968 = vperm.slane %v6963, 3
        %6969 = vrot.lane.b32.xlu0 %v6965, 56
        %v6970 = vpop.permute.xlu0 %6969
        %6971 = vrot.lane.b32.xlu0 %v6966, 56
        %v6972 = vpop.permute.xlu0 %6971
        %6973 = vrot.lane.b32.xlu0 %v6967, 56
        %v6974 = vpop.permute.xlu0 %6973
        %6975 = vrot.lane.b32.xlu0 %v6968, 56
        %v6976 = vpop.permute.xlu0 %6975
        %v6977 = vsel %vm252, %v6970, %v6972
        %v6978 = vsel %vm252, %v6972, %v6974
        %v6979 = vsel %vm252, %v6974, %v6976
        %v6985 = vmul.f32 %v6263, %v6970
        %v6986 = vmul.f32 %v6264, %v6977
        %v6987 = vmul.f32 %v6265, %v6978
        %v6988 = vmul.f32 %v6266, %v6979
        %v6989 = vmul.f32 %v6267, %v6976
        %s6990 = scalar_lea.vmem %s2, 152
        %v6991 = vld [vmem:[%s6990] sm:$0xff]
        %6997 = vrot.lane.b32.xlu0 %v6985, 72
        %v6998 = vpop.permute.xlu0 %6997
        %6999 = vrot.lane.b32.xlu0 %v6986, 72
        %v7000 = vpop.permute.xlu0 %6999
        %7001 = vrot.lane.b32.xlu0 %v6987, 72
        %v7002 = vpop.permute.xlu0 %7001
        %7003 = vrot.lane.b32.xlu0 %v6988, 72
        %v7004 = vpop.permute.xlu0 %7003
        %7005 = vrot.lane.b32.xlu0 %v6989, 72
        %v7006 = vpop.permute.xlu0 %7005
        %v7007 = vsel %vm287, %v6998, %v7000
        %v7008 = vsel %vm287, %v7000, %v7002
        %v7009 = vsel %vm287, %v7002, %v7004
        %v7010 = vsel %vm287, %v7004, %v7006
        %v7016 = vsel %vm1789, %v6991, 0
        %7018 = vmatpush.msra.mxu0 0.0
        %7019 = vmatpush.msra.mxu0 0.0
        %7020 = vmatpush.msra.mxu0 0.0
        %7021 = vmatpush.msra.mxu0 0.0
        %7022 = vmatpush.msra.mxu0 0.0
        %7023 = vmatpush.msra.mxu0 0.0
        %7024 = vmatpush.msra.mxu0 0.0
        %7025 = vmatpush.msra.mxu0 0.0
        %7026 = vmatpush.msra.mxu0 0.0
        %7027 = vmatpush.msra.mxu0 0.0
        %7028 = vmatpush.msra.mxu0 0.0
        %7029 = vmatpush.msra.mxu0 0.0
        %7030 = vmatpush.msra.mxu0 0.0
        %7031 = vmatpush.msra.mxu0 0.0
        %7032 = vmatpush.msra.mxu0 0.0
        %7033 = vmatpush.msra.mxu0 %v7007
        %7034 = vmatmul.f32.gmra.mxu0 %v7016
        %v7035 = vpop.f32.mrf.mxu0
        %v7036 = vadd.f32 0.0, %v7035
        %7037 = vdwg.mxu0
        %7038 = vmatpush.msra.mxu0 0.0
        %7039 = vmatpush.msra.mxu0 0.0
        %7040 = vmatpush.msra.mxu0 0.0
        %7041 = vmatpush.msra.mxu0 0.0
        %7042 = vmatpush.msra.mxu0 0.0
        %7043 = vmatpush.msra.mxu0 0.0
        %7044 = vmatpush.msra.mxu0 0.0
        %7045 = vmatpush.msra.mxu0 0.0
        %7046 = vmatpush.msra.mxu0 0.0
        %7047 = vmatpush.msra.mxu0 0.0
        %7048 = vmatpush.msra.mxu0 0.0
        %7049 = vmatpush.msra.mxu0 0.0
        %7050 = vmatpush.msra.mxu0 0.0
        %7051 = vmatpush.msra.mxu0 0.0
        %7052 = vmatpush.msra.mxu0 0.0
        %7053 = vmatpush.msra.mxu0 %v7008
        %7054 = vmatmul.f32.gmra.mxu0 %v7016
        %v7055 = vpop.f32.mrf.mxu0
        %v7056 = vadd.f32 0.0, %v7055
        %7057 = vdwg.mxu0
        %7058 = vmatpush.msra.mxu0 0.0
        %7059 = vmatpush.msra.mxu0 0.0
        %7060 = vmatpush.msra.mxu0 0.0
        %7061 = vmatpush.msra.mxu0 0.0
        %7062 = vmatpush.msra.mxu0 0.0
        %7063 = vmatpush.msra.mxu0 0.0
        %7064 = vmatpush.msra.mxu0 0.0
        %7065 = vmatpush.msra.mxu0 0.0
        %7066 = vmatpush.msra.mxu0 0.0
        %7067 = vmatpush.msra.mxu0 0.0
        %7068 = vmatpush.msra.mxu0 0.0
        %7069 = vmatpush.msra.mxu0 0.0
        %7070 = vmatpush.msra.mxu0 0.0
        %7071 = vmatpush.msra.mxu0 0.0
        %7072 = vmatpush.msra.mxu0 0.0
        %7073 = vmatpush.msra.mxu0 %v7009
        %7074 = vmatmul.f32.gmra.mxu0 %v7016
        %v7075 = vpop.f32.mrf.mxu0
        %v7076 = vadd.f32 0.0, %v7075
        %7077 = vdwg.mxu0
        %7078 = vmatpush.msra.mxu0 0.0
        %7079 = vmatpush.msra.mxu0 0.0
        %7080 = vmatpush.msra.mxu0 0.0
        %7081 = vmatpush.msra.mxu0 0.0
        %7082 = vmatpush.msra.mxu0 0.0
        %7083 = vmatpush.msra.mxu0 0.0
        %7084 = vmatpush.msra.mxu0 0.0
        %7085 = vmatpush.msra.mxu0 0.0
        %7086 = vmatpush.msra.mxu0 0.0
        %7087 = vmatpush.msra.mxu0 0.0
        %7088 = vmatpush.msra.mxu0 0.0
        %7089 = vmatpush.msra.mxu0 0.0
        %7090 = vmatpush.msra.mxu0 0.0
        %7091 = vmatpush.msra.mxu0 0.0
        %7092 = vmatpush.msra.mxu0 0.0
        %7093 = vmatpush.msra.mxu0 %v7010
        %7094 = vmatmul.f32.gmra.mxu0 %v7016
        %v7095 = vpop.f32.mrf.mxu0
        %v7096 = vadd.f32 0.0, %v7095
        %7097 = vdwg.mxu0
        %v7098 = vadd.f32 %v6959, %v7036
        %v7099 = vadd.f32 %v6960, %v7056
        %v7100 = vadd.f32 %v6961, %v7076
        %v7101 = vadd.f32 %v6962, %v7096
        %v7102 = vld [vmem:[%s3243] sm:$0xf]
        %v7104 = vperm.slane %v7102, 0
        %v7105 = vperm.slane %v7102, 1
        %v7106 = vperm.slane %v7102, 2
        %v7107 = vperm.slane %v7102, 3
        %7108 = vrot.lane.b32.xlu0 %v7104, 57
        %v7109 = vpop.permute.xlu0 %7108
        %7110 = vrot.lane.b32.xlu0 %v7105, 57
        %v7111 = vpop.permute.xlu0 %7110
        %7112 = vrot.lane.b32.xlu0 %v7106, 57
        %v7113 = vpop.permute.xlu0 %7112
        %7114 = vrot.lane.b32.xlu0 %v7107, 57
        %v7115 = vpop.permute.xlu0 %7114
        %v7116 = vsel %vm523, %v7109, %v7111
        %v7117 = vsel %vm523, %v7111, %v7113
        %v7118 = vsel %vm523, %v7113, %v7115
        %v7124 = vmul.f32 %v6263, %v7109
        %v7125 = vmul.f32 %v6264, %v7116
        %v7126 = vmul.f32 %v6265, %v7117
        %v7127 = vmul.f32 %v6266, %v7118
        %v7128 = vmul.f32 %v6267, %v7115
        %s7129 = scalar_lea.vmem %s2, 160
        %v7130 = vld [vmem:[%s7129] sm:$0xff]
        %7136 = vrot.lane.b32.xlu0 %v7124, 71
        %v7137 = vpop.permute.xlu0 %7136
        %7138 = vrot.lane.b32.xlu0 %v7125, 71
        %v7139 = vpop.permute.xlu0 %7138
        %7140 = vrot.lane.b32.xlu0 %v7126, 71
        %v7141 = vpop.permute.xlu0 %7140
        %7142 = vrot.lane.b32.xlu0 %v7127, 71
        %v7143 = vpop.permute.xlu0 %7142
        %7144 = vrot.lane.b32.xlu0 %v7128, 71
        %v7145 = vpop.permute.xlu0 %7144
        %v7146 = vsel %vm558, %v7137, %v7139
        %v7147 = vsel %vm558, %v7139, %v7141
        %v7148 = vsel %vm558, %v7141, %v7143
        %v7149 = vsel %vm558, %v7143, %v7145
        %v7155 = vsel %vm1789, %v7130, 0
        %7157 = vmatpush.msra.mxu0 0.0
        %7158 = vmatpush.msra.mxu0 0.0
        %7159 = vmatpush.msra.mxu0 0.0
        %7160 = vmatpush.msra.mxu0 0.0
        %7161 = vmatpush.msra.mxu0 0.0
        %7162 = vmatpush.msra.mxu0 0.0
        %7163 = vmatpush.msra.mxu0 0.0
        %7164 = vmatpush.msra.mxu0 0.0
        %7165 = vmatpush.msra.mxu0 0.0
        %7166 = vmatpush.msra.mxu0 0.0
        %7167 = vmatpush.msra.mxu0 0.0
        %7168 = vmatpush.msra.mxu0 0.0
        %7169 = vmatpush.msra.mxu0 0.0
        %7170 = vmatpush.msra.mxu0 0.0
        %7171 = vmatpush.msra.mxu0 0.0
        %7172 = vmatpush.msra.mxu0 %v7146
        %7173 = vmatmul.f32.gmra.mxu0 %v7155
        %v7174 = vpop.f32.mrf.mxu0
        %v7175 = vadd.f32 0.0, %v7174
        %7176 = vdwg.mxu0
        %7177 = vmatpush.msra.mxu0 0.0
        %7178 = vmatpush.msra.mxu0 0.0
        %7179 = vmatpush.msra.mxu0 0.0
        %7180 = vmatpush.msra.mxu0 0.0
        %7181 = vmatpush.msra.mxu0 0.0
        %7182 = vmatpush.msra.mxu0 0.0
        %7183 = vmatpush.msra.mxu0 0.0
        %7184 = vmatpush.msra.mxu0 0.0
        %7185 = vmatpush.msra.mxu0 0.0
        %7186 = vmatpush.msra.mxu0 0.0
        %7187 = vmatpush.msra.mxu0 0.0
        %7188 = vmatpush.msra.mxu0 0.0
        %7189 = vmatpush.msra.mxu0 0.0
        %7190 = vmatpush.msra.mxu0 0.0
        %7191 = vmatpush.msra.mxu0 0.0
        %7192 = vmatpush.msra.mxu0 %v7147
        %7193 = vmatmul.f32.gmra.mxu0 %v7155
        %v7194 = vpop.f32.mrf.mxu0
        %v7195 = vadd.f32 0.0, %v7194
        %7196 = vdwg.mxu0
        %7197 = vmatpush.msra.mxu0 0.0
        %7198 = vmatpush.msra.mxu0 0.0
        %7199 = vmatpush.msra.mxu0 0.0
        %7200 = vmatpush.msra.mxu0 0.0
        %7201 = vmatpush.msra.mxu0 0.0
        %7202 = vmatpush.msra.mxu0 0.0
        %7203 = vmatpush.msra.mxu0 0.0
        %7204 = vmatpush.msra.mxu0 0.0
        %7205 = vmatpush.msra.mxu0 0.0
        %7206 = vmatpush.msra.mxu0 0.0
        %7207 = vmatpush.msra.mxu0 0.0
        %7208 = vmatpush.msra.mxu0 0.0
        %7209 = vmatpush.msra.mxu0 0.0
        %7210 = vmatpush.msra.mxu0 0.0
        %7211 = vmatpush.msra.mxu0 0.0
        %7212 = vmatpush.msra.mxu0 %v7148
        %7213 = vmatmul.f32.gmra.mxu0 %v7155
        %v7214 = vpop.f32.mrf.mxu0
        %v7215 = vadd.f32 0.0, %v7214
        %7216 = vdwg.mxu0
        %7217 = vmatpush.msra.mxu0 0.0
        %7218 = vmatpush.msra.mxu0 0.0
        %7219 = vmatpush.msra.mxu0 0.0
        %7220 = vmatpush.msra.mxu0 0.0
        %7221 = vmatpush.msra.mxu0 0.0
        %7222 = vmatpush.msra.mxu0 0.0
        %7223 = vmatpush.msra.mxu0 0.0
        %7224 = vmatpush.msra.mxu0 0.0
        %7225 = vmatpush.msra.mxu0 0.0
        %7226 = vmatpush.msra.mxu0 0.0
        %7227 = vmatpush.msra.mxu0 0.0
        %7228 = vmatpush.msra.mxu0 0.0
        %7229 = vmatpush.msra.mxu0 0.0
        %7230 = vmatpush.msra.mxu0 0.0
        %7231 = vmatpush.msra.mxu0 0.0
        %7232 = vmatpush.msra.mxu0 %v7149
        %7233 = vmatmul.f32.gmra.mxu0 %v7155
        %v7234 = vpop.f32.mrf.mxu0
        %v7235 = vadd.f32 0.0, %v7234
        %7236 = vdwg.mxu0
        %v7237 = vadd.f32 %v7098, %v7175
        %v7238 = vadd.f32 %v7099, %v7195
        %v7239 = vadd.f32 %v7100, %v7215
        %v7240 = vadd.f32 %v7101, %v7235
        %v7241 = vld [vmem:[%s3396] sm:$0xf]
        %v7243 = vperm.slane %v7241, 0
        %v7244 = vperm.slane %v7241, 1
        %v7245 = vperm.slane %v7241, 2
        %v7246 = vperm.slane %v7241, 3
        %7247 = vrot.lane.b32.xlu0 %v7243, 63
        %v7248 = vpop.permute.xlu0 %7247
        %7249 = vrot.lane.b32.xlu0 %v7244, 63
        %v7250 = vpop.permute.xlu0 %7249
        %7251 = vrot.lane.b32.xlu0 %v7245, 63
        %v7252 = vpop.permute.xlu0 %7251
        %7253 = vrot.lane.b32.xlu0 %v7246, 63
        %v7254 = vpop.permute.xlu0 %7253
        %v7255 = vsel %vm678, %v7248, %v7250
        %v7256 = vsel %vm678, %v7250, %v7252
        %v7257 = vsel %vm678, %v7252, %v7254
        %v7263 = vmul.f32 %v6263, %v7248
        %v7264 = vmul.f32 %v6264, %v7255
        %v7265 = vmul.f32 %v6265, %v7256
        %v7266 = vmul.f32 %v6266, %v7257
        %v7267 = vmul.f32 %v6267, %v7254
        %s7268 = scalar_lea.vmem %s2, 168
        %v7269 = vld [vmem:[%s7268] sm:$0xff]
        %7275 = vrot.lane.b32.xlu0 %v7263, 65
        %v7276 = vpop.permute.xlu0 %7275
        %7277 = vrot.lane.b32.xlu0 %v7264, 65
        %v7278 = vpop.permute.xlu0 %7277
        %7279 = vrot.lane.b32.xlu0 %v7265, 65
        %v7280 = vpop.permute.xlu0 %7279
        %7281 = vrot.lane.b32.xlu0 %v7266, 65
        %v7282 = vpop.permute.xlu0 %7281
        %7283 = vrot.lane.b32.xlu0 %v7267, 65
        %v7284 = vpop.permute.xlu0 %7283
        %v7285 = vsel %vm713, %v7276, %v7278
        %v7286 = vsel %vm713, %v7278, %v7280
        %v7287 = vsel %vm713, %v7280, %v7282
        %v7288 = vsel %vm713, %v7282, %v7284
        %v7294 = vsel %vm1789, %v7269, 0
        %7296 = vmatpush.msra.mxu0 0.0
        %7297 = vmatpush.msra.mxu0 0.0
        %7298 = vmatpush.msra.mxu0 0.0
        %7299 = vmatpush.msra.mxu0 0.0
        %7300 = vmatpush.msra.mxu0 0.0
        %7301 = vmatpush.msra.mxu0 0.0
        %7302 = vmatpush.msra.mxu0 0.0
        %7303 = vmatpush.msra.mxu0 0.0
        %7304 = vmatpush.msra.mxu0 0.0
        %7305 = vmatpush.msra.mxu0 0.0
        %7306 = vmatpush.msra.mxu0 0.0
        %7307 = vmatpush.msra.mxu0 0.0
        %7308 = vmatpush.msra.mxu0 0.0
        %7309 = vmatpush.msra.mxu0 0.0
        %7310 = vmatpush.msra.mxu0 0.0
        %7311 = vmatpush.msra.mxu0 %v7285
        %7312 = vmatmul.f32.gmra.mxu0 %v7294
        %v7313 = vpop.f32.mrf.mxu0
        %v7314 = vadd.f32 0.0, %v7313
        %7315 = vdwg.mxu0
        %7316 = vmatpush.msra.mxu0 0.0
        %7317 = vmatpush.msra.mxu0 0.0
        %7318 = vmatpush.msra.mxu0 0.0
        %7319 = vmatpush.msra.mxu0 0.0
        %7320 = vmatpush.msra.mxu0 0.0
        %7321 = vmatpush.msra.mxu0 0.0
        %7322 = vmatpush.msra.mxu0 0.0
        %7323 = vmatpush.msra.mxu0 0.0
        %7324 = vmatpush.msra.mxu0 0.0
        %7325 = vmatpush.msra.mxu0 0.0
        %7326 = vmatpush.msra.mxu0 0.0
        %7327 = vmatpush.msra.mxu0 0.0
        %7328 = vmatpush.msra.mxu0 0.0
        %7329 = vmatpush.msra.mxu0 0.0
        %7330 = vmatpush.msra.mxu0 0.0
        %7331 = vmatpush.msra.mxu0 %v7286
        %7332 = vmatmul.f32.gmra.mxu0 %v7294
        %v7333 = vpop.f32.mrf.mxu0
        %v7334 = vadd.f32 0.0, %v7333
        %7335 = vdwg.mxu0
        %7336 = vmatpush.msra.mxu0 0.0
        %7337 = vmatpush.msra.mxu0 0.0
        %7338 = vmatpush.msra.mxu0 0.0
        %7339 = vmatpush.msra.mxu0 0.0
        %7340 = vmatpush.msra.mxu0 0.0
        %7341 = vmatpush.msra.mxu0 0.0
        %7342 = vmatpush.msra.mxu0 0.0
        %7343 = vmatpush.msra.mxu0 0.0
        %7344 = vmatpush.msra.mxu0 0.0
        %7345 = vmatpush.msra.mxu0 0.0
        %7346 = vmatpush.msra.mxu0 0.0
        %7347 = vmatpush.msra.mxu0 0.0
        %7348 = vmatpush.msra.mxu0 0.0
        %7349 = vmatpush.msra.mxu0 0.0
        %7350 = vmatpush.msra.mxu0 0.0
        %7351 = vmatpush.msra.mxu0 %v7287
        %7352 = vmatmul.f32.gmra.mxu0 %v7294
        %v7353 = vpop.f32.mrf.mxu0
        %v7354 = vadd.f32 0.0, %v7353
        %7355 = vdwg.mxu0
        %7356 = vmatpush.msra.mxu0 0.0
        %7357 = vmatpush.msra.mxu0 0.0
        %7358 = vmatpush.msra.mxu0 0.0
        %7359 = vmatpush.msra.mxu0 0.0
        %7360 = vmatpush.msra.mxu0 0.0
        %7361 = vmatpush.msra.mxu0 0.0
        %7362 = vmatpush.msra.mxu0 0.0
        %7363 = vmatpush.msra.mxu0 0.0
        %7364 = vmatpush.msra.mxu0 0.0
        %7365 = vmatpush.msra.mxu0 0.0
        %7366 = vmatpush.msra.mxu0 0.0
        %7367 = vmatpush.msra.mxu0 0.0
        %7368 = vmatpush.msra.mxu0 0.0
        %7369 = vmatpush.msra.mxu0 0.0
        %7370 = vmatpush.msra.mxu0 0.0
        %7371 = vmatpush.msra.mxu0 %v7288
        %7372 = vmatmul.f32.gmra.mxu0 %v7294
        %v7373 = vpop.f32.mrf.mxu0
        %v7374 = vadd.f32 0.0, %v7373
        %7375 = vdwg.mxu0
        %v7376 = vadd.f32 %v7237, %v7314
        %v7377 = vadd.f32 %v7238, %v7334
        %v7378 = vadd.f32 %v7239, %v7354
        %v7379 = vadd.f32 %v7240, %v7374
        %v7380 = vld [vmem:[%s3549] sm:$0xf]
        %v7382 = vperm.slane %v7380, 0
        %v7383 = vperm.slane %v7380, 1
        %v7384 = vperm.slane %v7380, 2
        %v7385 = vperm.slane %v7380, 3
        %7386 = vrot.lane.b32.xlu0 %v7382, 64
        %v7387 = vpop.permute.xlu0 %7386
        %7388 = vrot.lane.b32.xlu0 %v7383, 64
        %v7389 = vpop.permute.xlu0 %7388
        %7390 = vrot.lane.b32.xlu0 %v7384, 64
        %v7391 = vpop.permute.xlu0 %7390
        %7392 = vrot.lane.b32.xlu0 %v7385, 64
        %v7393 = vpop.permute.xlu0 %7392
        %v7394 = vsel %vm833, %v7387, %v7389
        %v7395 = vsel %vm833, %v7389, %v7391
        %v7396 = vsel %vm833, %v7391, %v7393
        %v7402 = vmul.f32 %v6263, %v7387
        %v7403 = vmul.f32 %v6264, %v7394
        %v7404 = vmul.f32 %v6265, %v7395
        %v7405 = vmul.f32 %v6266, %v7396
        %v7406 = vmul.f32 %v6267, %v7393
        %s7407 = scalar_lea.vmem %s2, 176
        %v7408 = vld [vmem:[%s7407] sm:$0xff]
        %7414 = vrot.lane.b32.xlu0 %v7402, 64
        %v7415 = vpop.permute.xlu0 %7414
        %7416 = vrot.lane.b32.xlu0 %v7403, 64
        %v7417 = vpop.permute.xlu0 %7416
        %7418 = vrot.lane.b32.xlu0 %v7404, 64
        %v7419 = vpop.permute.xlu0 %7418
        %7420 = vrot.lane.b32.xlu0 %v7405, 64
        %v7421 = vpop.permute.xlu0 %7420
        %7422 = vrot.lane.b32.xlu0 %v7406, 64
        %v7423 = vpop.permute.xlu0 %7422
        %v7424 = vsel %vm833, %v7415, %v7417
        %v7425 = vsel %vm833, %v7417, %v7419
        %v7426 = vsel %vm833, %v7419, %v7421
        %v7427 = vsel %vm833, %v7421, %v7423
        %v7433 = vsel %vm1789, %v7408, 0
        %7435 = vmatpush.msra.mxu0 0.0
        %7436 = vmatpush.msra.mxu0 0.0
        %7437 = vmatpush.msra.mxu0 0.0
        %7438 = vmatpush.msra.mxu0 0.0
        %7439 = vmatpush.msra.mxu0 0.0
        %7440 = vmatpush.msra.mxu0 0.0
        %7441 = vmatpush.msra.mxu0 0.0
        %7442 = vmatpush.msra.mxu0 0.0
        %7443 = vmatpush.msra.mxu0 0.0
        %7444 = vmatpush.msra.mxu0 0.0
        %7445 = vmatpush.msra.mxu0 0.0
        %7446 = vmatpush.msra.mxu0 0.0
        %7447 = vmatpush.msra.mxu0 0.0
        %7448 = vmatpush.msra.mxu0 0.0
        %7449 = vmatpush.msra.mxu0 0.0
        %7450 = vmatpush.msra.mxu0 %v7424
        %7451 = vmatmul.f32.gmra.mxu0 %v7433
        %v7452 = vpop.f32.mrf.mxu0
        %v7453 = vadd.f32 0.0, %v7452
        %7454 = vdwg.mxu0
        %7455 = vmatpush.msra.mxu0 0.0
        %7456 = vmatpush.msra.mxu0 0.0
        %7457 = vmatpush.msra.mxu0 0.0
        %7458 = vmatpush.msra.mxu0 0.0
        %7459 = vmatpush.msra.mxu0 0.0
        %7460 = vmatpush.msra.mxu0 0.0
        %7461 = vmatpush.msra.mxu0 0.0
        %7462 = vmatpush.msra.mxu0 0.0
        %7463 = vmatpush.msra.mxu0 0.0
        %7464 = vmatpush.msra.mxu0 0.0
        %7465 = vmatpush.msra.mxu0 0.0
        %7466 = vmatpush.msra.mxu0 0.0
        %7467 = vmatpush.msra.mxu0 0.0
        %7468 = vmatpush.msra.mxu0 0.0
        %7469 = vmatpush.msra.mxu0 0.0
        %7470 = vmatpush.msra.mxu0 %v7425
        %7471 = vmatmul.f32.gmra.mxu0 %v7433
        %v7472 = vpop.f32.mrf.mxu0
        %v7473 = vadd.f32 0.0, %v7472
        %7474 = vdwg.mxu0
        %7475 = vmatpush.msra.mxu0 0.0
        %7476 = vmatpush.msra.mxu0 0.0
        %7477 = vmatpush.msra.mxu0 0.0
        %7478 = vmatpush.msra.mxu0 0.0
        %7479 = vmatpush.msra.mxu0 0.0
        %7480 = vmatpush.msra.mxu0 0.0
        %7481 = vmatpush.msra.mxu0 0.0
        %7482 = vmatpush.msra.mxu0 0.0
        %7483 = vmatpush.msra.mxu0 0.0
        %7484 = vmatpush.msra.mxu0 0.0
        %7485 = vmatpush.msra.mxu0 0.0
        %7486 = vmatpush.msra.mxu0 0.0
        %7487 = vmatpush.msra.mxu0 0.0
        %7488 = vmatpush.msra.mxu0 0.0
        %7489 = vmatpush.msra.mxu0 0.0
        %7490 = vmatpush.msra.mxu0 %v7426
        %7491 = vmatmul.f32.gmra.mxu0 %v7433
        %v7492 = vpop.f32.mrf.mxu0
        %v7493 = vadd.f32 0.0, %v7492
        %7494 = vdwg.mxu0
        %7495 = vmatpush.msra.mxu0 0.0
        %7496 = vmatpush.msra.mxu0 0.0
        %7497 = vmatpush.msra.mxu0 0.0
        %7498 = vmatpush.msra.mxu0 0.0
        %7499 = vmatpush.msra.mxu0 0.0
        %7500 = vmatpush.msra.mxu0 0.0
        %7501 = vmatpush.msra.mxu0 0.0
        %7502 = vmatpush.msra.mxu0 0.0
        %7503 = vmatpush.msra.mxu0 0.0
        %7504 = vmatpush.msra.mxu0 0.0
        %7505 = vmatpush.msra.mxu0 0.0
        %7506 = vmatpush.msra.mxu0 0.0
        %7507 = vmatpush.msra.mxu0 0.0
        %7508 = vmatpush.msra.mxu0 0.0
        %7509 = vmatpush.msra.mxu0 0.0
        %7510 = vmatpush.msra.mxu0 %v7427
        %7511 = vmatmul.f32.gmra.mxu0 %v7433
        %v7512 = vpop.f32.mrf.mxu0
        %v7513 = vadd.f32 0.0, %v7512
        %7514 = vdwg.mxu0
        %v7515 = vadd.f32 %v7376, %v7453
        %v7516 = vadd.f32 %v7377, %v7473
        %v7517 = vadd.f32 %v7378, %v7493
        %v7518 = vadd.f32 %v7379, %v7513
        %v7519 = vld [vmem:[%s3702] sm:$0xf]
        %v7521 = vperm.slane %v7519, 0
        %v7522 = vperm.slane %v7519, 1
        %v7523 = vperm.slane %v7519, 2
        %v7524 = vperm.slane %v7519, 3
        %7525 = vrot.lane.b32.xlu0 %v7521, 65
        %v7526 = vpop.permute.xlu0 %7525
        %7527 = vrot.lane.b32.xlu0 %v7522, 65
        %v7528 = vpop.permute.xlu0 %7527
        %7529 = vrot.lane.b32.xlu0 %v7523, 65
        %v7530 = vpop.permute.xlu0 %7529
        %7531 = vrot.lane.b32.xlu0 %v7524, 65
        %v7532 = vpop.permute.xlu0 %7531
        %v7533 = vsel %vm713, %v7526, %v7528
        %v7534 = vsel %vm713, %v7528, %v7530
        %v7535 = vsel %vm713, %v7530, %v7532
        %v7541 = vmul.f32 %v6263, %v7526
        %v7542 = vmul.f32 %v6264, %v7533
        %v7543 = vmul.f32 %v6265, %v7534
        %v7544 = vmul.f32 %v6266, %v7535
        %v7545 = vmul.f32 %v6267, %v7532
        %s7546 = scalar_lea.vmem %s2, 184
        %v7547 = vld [vmem:[%s7546] sm:$0xff]
        %7553 = vrot.lane.b32.xlu0 %v7541, 63
        %v7554 = vpop.permute.xlu0 %7553
        %7555 = vrot.lane.b32.xlu0 %v7542, 63
        %v7556 = vpop.permute.xlu0 %7555
        %7557 = vrot.lane.b32.xlu0 %v7543, 63
        %v7558 = vpop.permute.xlu0 %7557
        %7559 = vrot.lane.b32.xlu0 %v7544, 63
        %v7560 = vpop.permute.xlu0 %7559
        %7561 = vrot.lane.b32.xlu0 %v7545, 63
        %v7562 = vpop.permute.xlu0 %7561
        %v7563 = vsel %vm678, %v7554, %v7556
        %v7564 = vsel %vm678, %v7556, %v7558
        %v7565 = vsel %vm678, %v7558, %v7560
        %v7566 = vsel %vm678, %v7560, %v7562
        %v7572 = vsel %vm1789, %v7547, 0
        %7574 = vmatpush.msra.mxu0 0.0
        %7575 = vmatpush.msra.mxu0 0.0
        %7576 = vmatpush.msra.mxu0 0.0
        %7577 = vmatpush.msra.mxu0 0.0
        %7578 = vmatpush.msra.mxu0 0.0
        %7579 = vmatpush.msra.mxu0 0.0
        %7580 = vmatpush.msra.mxu0 0.0
        %7581 = vmatpush.msra.mxu0 0.0
        %7582 = vmatpush.msra.mxu0 0.0
        %7583 = vmatpush.msra.mxu0 0.0
        %7584 = vmatpush.msra.mxu0 0.0
        %7585 = vmatpush.msra.mxu0 0.0
        %7586 = vmatpush.msra.mxu0 0.0
        %7587 = vmatpush.msra.mxu0 0.0
        %7588 = vmatpush.msra.mxu0 0.0
        %7589 = vmatpush.msra.mxu0 %v7563
        %7590 = vmatmul.f32.gmra.mxu0 %v7572
        %v7591 = vpop.f32.mrf.mxu0
        %v7592 = vadd.f32 0.0, %v7591
        %7593 = vdwg.mxu0
        %7594 = vmatpush.msra.mxu0 0.0
        %7595 = vmatpush.msra.mxu0 0.0
        %7596 = vmatpush.msra.mxu0 0.0
        %7597 = vmatpush.msra.mxu0 0.0
        %7598 = vmatpush.msra.mxu0 0.0
        %7599 = vmatpush.msra.mxu0 0.0
        %7600 = vmatpush.msra.mxu0 0.0
        %7601 = vmatpush.msra.mxu0 0.0
        %7602 = vmatpush.msra.mxu0 0.0
        %7603 = vmatpush.msra.mxu0 0.0
        %7604 = vmatpush.msra.mxu0 0.0
        %7605 = vmatpush.msra.mxu0 0.0
        %7606 = vmatpush.msra.mxu0 0.0
        %7607 = vmatpush.msra.mxu0 0.0
        %7608 = vmatpush.msra.mxu0 0.0
        %7609 = vmatpush.msra.mxu0 %v7564
        %7610 = vmatmul.f32.gmra.mxu0 %v7572
        %v7611 = vpop.f32.mrf.mxu0
        %v7612 = vadd.f32 0.0, %v7611
        %7613 = vdwg.mxu0
        %7614 = vmatpush.msra.mxu0 0.0
        %7615 = vmatpush.msra.mxu0 0.0
        %7616 = vmatpush.msra.mxu0 0.0
        %7617 = vmatpush.msra.mxu0 0.0
        %7618 = vmatpush.msra.mxu0 0.0
        %7619 = vmatpush.msra.mxu0 0.0
        %7620 = vmatpush.msra.mxu0 0.0
        %7621 = vmatpush.msra.mxu0 0.0
        %7622 = vmatpush.msra.mxu0 0.0
        %7623 = vmatpush.msra.mxu0 0.0
        %7624 = vmatpush.msra.mxu0 0.0
        %7625 = vmatpush.msra.mxu0 0.0
        %7626 = vmatpush.msra.mxu0 0.0
        %7627 = vmatpush.msra.mxu0 0.0
        %7628 = vmatpush.msra.mxu0 0.0
        %7629 = vmatpush.msra.mxu0 %v7565
        %7630 = vmatmul.f32.gmra.mxu0 %v7572
        %v7631 = vpop.f32.mrf.mxu0
        %v7632 = vadd.f32 0.0, %v7631
        %7633 = vdwg.mxu0
        %7634 = vmatpush.msra.mxu0 0.0
        %7635 = vmatpush.msra.mxu0 0.0
        %7636 = vmatpush.msra.mxu0 0.0
        %7637 = vmatpush.msra.mxu0 0.0
        %7638 = vmatpush.msra.mxu0 0.0
        %7639 = vmatpush.msra.mxu0 0.0
        %7640 = vmatpush.msra.mxu0 0.0
        %7641 = vmatpush.msra.mxu0 0.0
        %7642 = vmatpush.msra.mxu0 0.0
        %7643 = vmatpush.msra.mxu0 0.0
        %7644 = vmatpush.msra.mxu0 0.0
        %7645 = vmatpush.msra.mxu0 0.0
        %7646 = vmatpush.msra.mxu0 0.0
        %7647 = vmatpush.msra.mxu0 0.0
        %7648 = vmatpush.msra.mxu0 0.0
        %7649 = vmatpush.msra.mxu0 %v7566
        %7650 = vmatmul.f32.gmra.mxu0 %v7572
        %v7651 = vpop.f32.mrf.mxu0
        %v7652 = vadd.f32 0.0, %v7651
        %7653 = vdwg.mxu0
        %v7654 = vadd.f32 %v7515, %v7592
        %v7655 = vadd.f32 %v7516, %v7612
        %v7656 = vadd.f32 %v7517, %v7632
        %v7657 = vadd.f32 %v7518, %v7652
        %v7658 = vld [vmem:[%s3855] sm:$0xf]
        %v7660 = vperm.slane %v7658, 0
        %v7661 = vperm.slane %v7658, 1
        %v7662 = vperm.slane %v7658, 2
        %v7663 = vperm.slane %v7658, 3
        %7664 = vrot.lane.b32.xlu0 %v7660, 71
        %v7665 = vpop.permute.xlu0 %7664
        %7666 = vrot.lane.b32.xlu0 %v7661, 71
        %v7667 = vpop.permute.xlu0 %7666
        %7668 = vrot.lane.b32.xlu0 %v7662, 71
        %v7669 = vpop.permute.xlu0 %7668
        %7670 = vrot.lane.b32.xlu0 %v7663, 71
        %v7671 = vpop.permute.xlu0 %7670
        %v7672 = vsel %vm558, %v7665, %v7667
        %v7673 = vsel %vm558, %v7667, %v7669
        %v7674 = vsel %vm558, %v7669, %v7671
        %v7680 = vmul.f32 %v6263, %v7665
        %v7681 = vmul.f32 %v6264, %v7672
        %v7682 = vmul.f32 %v6265, %v7673
        %v7683 = vmul.f32 %v6266, %v7674
        %v7684 = vmul.f32 %v6267, %v7671
        %s7685 = scalar_lea.vmem %s2, 192
        %v7686 = vld [vmem:[%s7685] sm:$0xff]
        %7692 = vrot.lane.b32.xlu0 %v7680, 57
        %v7693 = vpop.permute.xlu0 %7692
        %7694 = vrot.lane.b32.xlu0 %v7681, 57
        %v7695 = vpop.permute.xlu0 %7694
        %7696 = vrot.lane.b32.xlu0 %v7682, 57
        %v7697 = vpop.permute.xlu0 %7696
        %7698 = vrot.lane.b32.xlu0 %v7683, 57
        %v7699 = vpop.permute.xlu0 %7698
        %7700 = vrot.lane.b32.xlu0 %v7684, 57
        %v7701 = vpop.permute.xlu0 %7700
        %v7702 = vsel %vm523, %v7693, %v7695
        %v7703 = vsel %vm523, %v7695, %v7697
        %v7704 = vsel %vm523, %v7697, %v7699
        %v7705 = vsel %vm523, %v7699, %v7701
        %v7711 = vsel %vm1789, %v7686, 0
        %7713 = vmatpush.msra.mxu0 0.0
        %7714 = vmatpush.msra.mxu0 0.0
        %7715 = vmatpush.msra.mxu0 0.0
        %7716 = vmatpush.msra.mxu0 0.0
        %7717 = vmatpush.msra.mxu0 0.0
        %7718 = vmatpush.msra.mxu0 0.0
        %7719 = vmatpush.msra.mxu0 0.0
        %7720 = vmatpush.msra.mxu0 0.0
        %7721 = vmatpush.msra.mxu0 0.0
        %7722 = vmatpush.msra.mxu0 0.0
        %7723 = vmatpush.msra.mxu0 0.0
        %7724 = vmatpush.msra.mxu0 0.0
        %7725 = vmatpush.msra.mxu0 0.0
        %7726 = vmatpush.msra.mxu0 0.0
        %7727 = vmatpush.msra.mxu0 0.0
        %7728 = vmatpush.msra.mxu0 %v7702
        %7729 = vmatmul.f32.gmra.mxu0 %v7711
        %v7730 = vpop.f32.mrf.mxu0
        %v7731 = vadd.f32 0.0, %v7730
        %7732 = vdwg.mxu0
        %7733 = vmatpush.msra.mxu0 0.0
        %7734 = vmatpush.msra.mxu0 0.0
        %7735 = vmatpush.msra.mxu0 0.0
        %7736 = vmatpush.msra.mxu0 0.0
        %7737 = vmatpush.msra.mxu0 0.0
        %7738 = vmatpush.msra.mxu0 0.0
        %7739 = vmatpush.msra.mxu0 0.0
        %7740 = vmatpush.msra.mxu0 0.0
        %7741 = vmatpush.msra.mxu0 0.0
        %7742 = vmatpush.msra.mxu0 0.0
        %7743 = vmatpush.msra.mxu0 0.0
        %7744 = vmatpush.msra.mxu0 0.0
        %7745 = vmatpush.msra.mxu0 0.0
        %7746 = vmatpush.msra.mxu0 0.0
        %7747 = vmatpush.msra.mxu0 0.0
        %7748 = vmatpush.msra.mxu0 %v7703
        %7749 = vmatmul.f32.gmra.mxu0 %v7711
        %v7750 = vpop.f32.mrf.mxu0
        %v7751 = vadd.f32 0.0, %v7750
        %7752 = vdwg.mxu0
        %7753 = vmatpush.msra.mxu0 0.0
        %7754 = vmatpush.msra.mxu0 0.0
        %7755 = vmatpush.msra.mxu0 0.0
        %7756 = vmatpush.msra.mxu0 0.0
        %7757 = vmatpush.msra.mxu0 0.0
        %7758 = vmatpush.msra.mxu0 0.0
        %7759 = vmatpush.msra.mxu0 0.0
        %7760 = vmatpush.msra.mxu0 0.0
        %7761 = vmatpush.msra.mxu0 0.0
        %7762 = vmatpush.msra.mxu0 0.0
        %7763 = vmatpush.msra.mxu0 0.0
        %7764 = vmatpush.msra.mxu0 0.0
        %7765 = vmatpush.msra.mxu0 0.0
        %7766 = vmatpush.msra.mxu0 0.0
        %7767 = vmatpush.msra.mxu0 0.0
        %7768 = vmatpush.msra.mxu0 %v7704
        %7769 = vmatmul.f32.gmra.mxu0 %v7711
        %v7770 = vpop.f32.mrf.mxu0
        %v7771 = vadd.f32 0.0, %v7770
        %7772 = vdwg.mxu0
        %7773 = vmatpush.msra.mxu0 0.0
        %7774 = vmatpush.msra.mxu0 0.0
        %7775 = vmatpush.msra.mxu0 0.0
        %7776 = vmatpush.msra.mxu0 0.0
        %7777 = vmatpush.msra.mxu0 0.0
        %7778 = vmatpush.msra.mxu0 0.0
        %7779 = vmatpush.msra.mxu0 0.0
        %7780 = vmatpush.msra.mxu0 0.0
        %7781 = vmatpush.msra.mxu0 0.0
        %7782 = vmatpush.msra.mxu0 0.0
        %7783 = vmatpush.msra.mxu0 0.0
        %7784 = vmatpush.msra.mxu0 0.0
        %7785 = vmatpush.msra.mxu0 0.0
        %7786 = vmatpush.msra.mxu0 0.0
        %7787 = vmatpush.msra.mxu0 0.0
        %7788 = vmatpush.msra.mxu0 %v7705
        %7789 = vmatmul.f32.gmra.mxu0 %v7711
        %v7790 = vpop.f32.mrf.mxu0
        %v7791 = vadd.f32 0.0, %v7790
        %7792 = vdwg.mxu0
        %v7793 = vadd.f32 %v7654, %v7731
        %v7794 = vadd.f32 %v7655, %v7751
        %v7795 = vadd.f32 %v7656, %v7771
        %v7796 = vadd.f32 %v7657, %v7791
        %v7797 = vld [vmem:[%s4008] sm:$0xf]
        %v7799 = vperm.slane %v7797, 0
        %v7800 = vperm.slane %v7797, 1
        %v7801 = vperm.slane %v7797, 2
        %v7802 = vperm.slane %v7797, 3
        %7803 = vrot.lane.b32.xlu0 %v7799, 72
        %v7804 = vpop.permute.xlu0 %7803
        %7805 = vrot.lane.b32.xlu0 %v7800, 72
        %v7806 = vpop.permute.xlu0 %7805
        %7807 = vrot.lane.b32.xlu0 %v7801, 72
        %v7808 = vpop.permute.xlu0 %7807
        %7809 = vrot.lane.b32.xlu0 %v7802, 72
        %v7810 = vpop.permute.xlu0 %7809
        %v7811 = vsel %vm287, %v7804, %v7806
        %v7812 = vsel %vm287, %v7806, %v7808
        %v7813 = vsel %vm287, %v7808, %v7810
        %v7819 = vmul.f32 %v6263, %v7804
        %v7820 = vmul.f32 %v6264, %v7811
        %v7821 = vmul.f32 %v6265, %v7812
        %v7822 = vmul.f32 %v6266, %v7813
        %v7823 = vmul.f32 %v6267, %v7810
        %s7824 = scalar_lea.vmem %s2, 200
        %v7825 = vld [vmem:[%s7824] sm:$0xff]
        %7831 = vrot.lane.b32.xlu0 %v7819, 56
        %v7832 = vpop.permute.xlu0 %7831
        %7833 = vrot.lane.b32.xlu0 %v7820, 56
        %v7834 = vpop.permute.xlu0 %7833
        %7835 = vrot.lane.b32.xlu0 %v7821, 56
        %v7836 = vpop.permute.xlu0 %7835
        %7837 = vrot.lane.b32.xlu0 %v7822, 56
        %v7838 = vpop.permute.xlu0 %7837
        %7839 = vrot.lane.b32.xlu0 %v7823, 56
        %v7840 = vpop.permute.xlu0 %7839
        %v7841 = vsel %vm252, %v7832, %v7834
        %v7842 = vsel %vm252, %v7834, %v7836
        %v7843 = vsel %vm252, %v7836, %v7838
        %v7844 = vsel %vm252, %v7838, %v7840
        %v7850 = vsel %vm1789, %v7825, 0
        %7852 = vmatpush.msra.mxu0 0.0
        %7853 = vmatpush.msra.mxu0 0.0
        %7854 = vmatpush.msra.mxu0 0.0
        %7855 = vmatpush.msra.mxu0 0.0
        %7856 = vmatpush.msra.mxu0 0.0
        %7857 = vmatpush.msra.mxu0 0.0
        %7858 = vmatpush.msra.mxu0 0.0
        %7859 = vmatpush.msra.mxu0 0.0
        %7860 = vmatpush.msra.mxu0 0.0
        %7861 = vmatpush.msra.mxu0 0.0
        %7862 = vmatpush.msra.mxu0 0.0
        %7863 = vmatpush.msra.mxu0 0.0
        %7864 = vmatpush.msra.mxu0 0.0
        %7865 = vmatpush.msra.mxu0 0.0
        %7866 = vmatpush.msra.mxu0 0.0
        %7867 = vmatpush.msra.mxu0 %v7841
        %7868 = vmatmul.f32.gmra.mxu0 %v7850
        %v7869 = vpop.f32.mrf.mxu0
        %v7870 = vadd.f32 0.0, %v7869
        %7871 = vdwg.mxu0
        %7872 = vmatpush.msra.mxu0 0.0
        %7873 = vmatpush.msra.mxu0 0.0
        %7874 = vmatpush.msra.mxu0 0.0
        %7875 = vmatpush.msra.mxu0 0.0
        %7876 = vmatpush.msra.mxu0 0.0
        %7877 = vmatpush.msra.mxu0 0.0
        %7878 = vmatpush.msra.mxu0 0.0
        %7879 = vmatpush.msra.mxu0 0.0
        %7880 = vmatpush.msra.mxu0 0.0
        %7881 = vmatpush.msra.mxu0 0.0
        %7882 = vmatpush.msra.mxu0 0.0
        %7883 = vmatpush.msra.mxu0 0.0
        %7884 = vmatpush.msra.mxu0 0.0
        %7885 = vmatpush.msra.mxu0 0.0
        %7886 = vmatpush.msra.mxu0 0.0
        %7887 = vmatpush.msra.mxu0 %v7842
        %7888 = vmatmul.f32.gmra.mxu0 %v7850
        %v7889 = vpop.f32.mrf.mxu0
        %v7890 = vadd.f32 0.0, %v7889
        %7891 = vdwg.mxu0
        %7892 = vmatpush.msra.mxu0 0.0
        %7893 = vmatpush.msra.mxu0 0.0
        %7894 = vmatpush.msra.mxu0 0.0
        %7895 = vmatpush.msra.mxu0 0.0
        %7896 = vmatpush.msra.mxu0 0.0
        %7897 = vmatpush.msra.mxu0 0.0
        %7898 = vmatpush.msra.mxu0 0.0
        %7899 = vmatpush.msra.mxu0 0.0
        %7900 = vmatpush.msra.mxu0 0.0
        %7901 = vmatpush.msra.mxu0 0.0
        %7902 = vmatpush.msra.mxu0 0.0
        %7903 = vmatpush.msra.mxu0 0.0
        %7904 = vmatpush.msra.mxu0 0.0
        %7905 = vmatpush.msra.mxu0 0.0
        %7906 = vmatpush.msra.mxu0 0.0
        %7907 = vmatpush.msra.mxu0 %v7843
        %7908 = vmatmul.f32.gmra.mxu0 %v7850
        %v7909 = vpop.f32.mrf.mxu0
        %v7910 = vadd.f32 0.0, %v7909
        %7911 = vdwg.mxu0
        %7912 = vmatpush.msra.mxu0 0.0
        %7913 = vmatpush.msra.mxu0 0.0
        %7914 = vmatpush.msra.mxu0 0.0
        %7915 = vmatpush.msra.mxu0 0.0
        %7916 = vmatpush.msra.mxu0 0.0
        %7917 = vmatpush.msra.mxu0 0.0
        %7918 = vmatpush.msra.mxu0 0.0
        %7919 = vmatpush.msra.mxu0 0.0
        %7920 = vmatpush.msra.mxu0 0.0
        %7921 = vmatpush.msra.mxu0 0.0
        %7922 = vmatpush.msra.mxu0 0.0
        %7923 = vmatpush.msra.mxu0 0.0
        %7924 = vmatpush.msra.mxu0 0.0
        %7925 = vmatpush.msra.mxu0 0.0
        %7926 = vmatpush.msra.mxu0 0.0
        %7927 = vmatpush.msra.mxu0 %v7844
        %7928 = vmatmul.f32.gmra.mxu0 %v7850
        %v7929 = vpop.f32.mrf.mxu0
        %v7930 = vadd.f32 0.0, %v7929
        %7931 = vdwg.mxu0
        %v7932 = vadd.f32 %v7793, %v7870
        %v7933 = vadd.f32 %v7794, %v7890
        %v7934 = vadd.f32 %v7795, %v7910
        %v7935 = vadd.f32 %v7796, %v7930
        %v7936 = vld [vmem:[%s4161] sm:$0xf]
        %v7938 = vperm.slane %v7936, 0
        %v7939 = vperm.slane %v7936, 1
        %v7940 = vperm.slane %v7936, 2
        %v7941 = vperm.slane %v7936, 3
        %7942 = vrot.lane.b32.xlu0 %v7938, 73
        %v7943 = vpop.permute.xlu0 %7942
        %7944 = vrot.lane.b32.xlu0 %v7939, 73
        %v7945 = vpop.permute.xlu0 %7944
        %7946 = vrot.lane.b32.xlu0 %v7940, 73
        %v7947 = vpop.permute.xlu0 %7946
        %7948 = vrot.lane.b32.xlu0 %v7941, 73
        %v7949 = vpop.permute.xlu0 %7948
        %v7950 = vsel %vm407, %v7943, %v7945
        %v7951 = vsel %vm407, %v7945, %v7947
        %v7952 = vsel %vm407, %v7947, %v7949
        %v7958 = vmul.f32 %v6263, %v7943
        %v7959 = vmul.f32 %v6264, %v7950
        %v7960 = vmul.f32 %v6265, %v7951
        %v7961 = vmul.f32 %v6266, %v7952
        %v7962 = vmul.f32 %v6267, %v7949
        %s7963 = scalar_lea.vmem %s2, 208
        %v7964 = vld [vmem:[%s7963] sm:$0xff]
        %7970 = vrot.lane.b32.xlu0 %v7958, 55
        %v7971 = vpop.permute.xlu0 %7970
        %7972 = vrot.lane.b32.xlu0 %v7959, 55
        %v7973 = vpop.permute.xlu0 %7972
        %7974 = vrot.lane.b32.xlu0 %v7960, 55
        %v7975 = vpop.permute.xlu0 %7974
        %7976 = vrot.lane.b32.xlu0 %v7961, 55
        %v7977 = vpop.permute.xlu0 %7976
        %7978 = vrot.lane.b32.xlu0 %v7962, 55
        %v7979 = vpop.permute.xlu0 %7978
        %v7980 = vsel %vm224, %v7971, %v7973
        %v7981 = vsel %vm224, %v7973, %v7975
        %v7982 = vsel %vm224, %v7975, %v7977
        %v7983 = vsel %vm224, %v7977, %v7979
        %v7989 = vsel %vm1789, %v7964, 0
        %7991 = vmatpush.msra.mxu0 0.0
        %7992 = vmatpush.msra.mxu0 0.0
        %7993 = vmatpush.msra.mxu0 0.0
        %7994 = vmatpush.msra.mxu0 0.0
        %7995 = vmatpush.msra.mxu0 0.0
        %7996 = vmatpush.msra.mxu0 0.0
        %7997 = vmatpush.msra.mxu0 0.0
        %7998 = vmatpush.msra.mxu0 0.0
        %7999 = vmatpush.msra.mxu0 0.0
        %8000 = vmatpush.msra.mxu0 0.0
        %8001 = vmatpush.msra.mxu0 0.0
        %8002 = vmatpush.msra.mxu0 0.0
        %8003 = vmatpush.msra.mxu0 0.0
        %8004 = vmatpush.msra.mxu0 0.0
        %8005 = vmatpush.msra.mxu0 0.0
        %8006 = vmatpush.msra.mxu0 %v7980
        %8007 = vmatmul.f32.gmra.mxu0 %v7989
        %v8008 = vpop.f32.mrf.mxu0
        %v8009 = vadd.f32 0.0, %v8008
        %8010 = vdwg.mxu0
        %8011 = vmatpush.msra.mxu0 0.0
        %8012 = vmatpush.msra.mxu0 0.0
        %8013 = vmatpush.msra.mxu0 0.0
        %8014 = vmatpush.msra.mxu0 0.0
        %8015 = vmatpush.msra.mxu0 0.0
        %8016 = vmatpush.msra.mxu0 0.0
        %8017 = vmatpush.msra.mxu0 0.0
        %8018 = vmatpush.msra.mxu0 0.0
        %8019 = vmatpush.msra.mxu0 0.0
        %8020 = vmatpush.msra.mxu0 0.0
        %8021 = vmatpush.msra.mxu0 0.0
        %8022 = vmatpush.msra.mxu0 0.0
        %8023 = vmatpush.msra.mxu0 0.0
        %8024 = vmatpush.msra.mxu0 0.0
        %8025 = vmatpush.msra.mxu0 0.0
        %8026 = vmatpush.msra.mxu0 %v7981
        %8027 = vmatmul.f32.gmra.mxu0 %v7989
        %v8028 = vpop.f32.mrf.mxu0
        %v8029 = vadd.f32 0.0, %v8028
        %8030 = vdwg.mxu0
        %8031 = vmatpush.msra.mxu0 0.0
        %8032 = vmatpush.msra.mxu0 0.0
        %8033 = vmatpush.msra.mxu0 0.0
        %8034 = vmatpush.msra.mxu0 0.0
        %8035 = vmatpush.msra.mxu0 0.0
        %8036 = vmatpush.msra.mxu0 0.0
        %8037 = vmatpush.msra.mxu0 0.0
        %8038 = vmatpush.msra.mxu0 0.0
        %8039 = vmatpush.msra.mxu0 0.0
        %8040 = vmatpush.msra.mxu0 0.0
        %8041 = vmatpush.msra.mxu0 0.0
        %8042 = vmatpush.msra.mxu0 0.0
        %8043 = vmatpush.msra.mxu0 0.0
        %8044 = vmatpush.msra.mxu0 0.0
        %8045 = vmatpush.msra.mxu0 0.0
        %8046 = vmatpush.msra.mxu0 %v7982
        %8047 = vmatmul.f32.gmra.mxu0 %v7989
        %v8048 = vpop.f32.mrf.mxu0
        %v8049 = vadd.f32 0.0, %v8048
        %8050 = vdwg.mxu0
        %8051 = vmatpush.msra.mxu0 0.0
        %8052 = vmatpush.msra.mxu0 0.0
        %8053 = vmatpush.msra.mxu0 0.0
        %8054 = vmatpush.msra.mxu0 0.0
        %8055 = vmatpush.msra.mxu0 0.0
        %8056 = vmatpush.msra.mxu0 0.0
        %8057 = vmatpush.msra.mxu0 0.0
        %8058 = vmatpush.msra.mxu0 0.0
        %8059 = vmatpush.msra.mxu0 0.0
        %8060 = vmatpush.msra.mxu0 0.0
        %8061 = vmatpush.msra.mxu0 0.0
        %8062 = vmatpush.msra.mxu0 0.0
        %8063 = vmatpush.msra.mxu0 0.0
        %8064 = vmatpush.msra.mxu0 0.0
        %8065 = vmatpush.msra.mxu0 0.0
        %8066 = vmatpush.msra.mxu0 %v7983
        %8067 = vmatmul.f32.gmra.mxu0 %v7989
        %v8068 = vpop.f32.mrf.mxu0
        %v8069 = vadd.f32 0.0, %v8068
        %8070 = vdwg.mxu0
        %v8071 = vadd.f32 %v7932, %v8009
        %v8072 = vadd.f32 %v7933, %v8029
        %v8073 = vadd.f32 %v7934, %v8049
        %v8074 = vadd.f32 %v7935, %v8069
        %v8075 = vadd.f32 %v8071, %v8072
        %v8076 = vadd.f32 %v8075, %v8073
        %v8077 = vadd.f32 %v8076, %v8074
        %8078 = vadd.xlane.f32.xlu0 %v8077
        %v8079 = vpop.xlane.xlu0 %8078
        %v8080 = vmul.f32 %v8079, 0.001953125
        %v8081 = vmul.f32 %v8071, %v8071
        %v8082 = vmul.f32 %v8072, %v8072
        %v8083 = vmul.f32 %v8073, %v8073
        %v8084 = vmul.f32 %v8074, %v8074
        %v8085 = vadd.f32 %v8081, %v8082
        %v8086 = vadd.f32 %v8085, %v8083
        %v8087 = vadd.f32 %v8086, %v8084
        %8088 = vadd.xlane.f32.xlu0 %v8087
        %v8089 = vpop.xlane.xlu0 %8088
        %v8090 = vmul.f32 %v8089, 0.001953125
        %v8091 = vmul.f32 %v8080, %v8080
        %v8092 = vsub.f32 %v8090, %v8091
        %v8093 = vmax.f32 %v8092, 0.0
        %v8094 = vsub.f32 %v8071, %v8080
        %v8095 = vsub.f32 %v8072, %v8080
        %v8096 = vsub.f32 %v8073, %v8080
        %v8097 = vsub.f32 %v8074, %v8080
        %v8098 = vadd.f32 %v8093, 1e-05
        %v8099 = vrsqrt.pop %v8098
        %v8100 = vmul.f32 %v8099, %v8098
        %v8101 = vmul.f32 %v8100, %v8099
        %v8102 = vmul.f32 0.5, %v8101
        %v8103 = vsub.f32 1.5, %v8102
        %v8104 = vmul.f32 %v8099, %v8103
        %vm8105 = vweird.f32 %v8098
        %vm8106 = vweird.f32 %v8099
        %vm8107 = vmor %vm8105, %vm8106
        %v8108 = vsel %vm8107, %v8099, %v8104
        %v8109 = vmul.f32 %v8094, %v8108
        %v8110 = vmul.f32 %v8095, %v8108
        %v8111 = vmul.f32 %v8096, %v8108
        %v8112 = vmul.f32 %v8097, %v8108
        %v8113 = vmax.f32 %v8109, 0.0
        %v8114 = vmax.f32 %v8110, 0.0
        %v8115 = vmax.f32 %v8111, 0.0
        %v8116 = vmax.f32 %v8112, 0.0
        %8117 = vst [vmem:[%s190] sm:$0xff] %v8113
        %8118 = vst [vmem:[%s190 + $0x8] sm:$0xff] %v8114
        %8119 = vst [vmem:[%s190 + $0x10] sm:$0xff] %v8115
        %8120 = vst [vmem:[%s190 + $0x18] sm:$0xff] %v8116
        %s8121 = sand.u32 %s115, 1
        %s8122 = scalar_lea.sflag [#allocation5], %s8121
        %s8123 = sand.u32 %s115, 1
        %s8124 = smul.addr %s8123, 32
        %s8125 = scalar_lea.vmem [#allocation4], %s8124
        // Predicated region
        $region37: #{tpu_custom_call.1} parent=35 // pred_check
          %p8126 = pneg %p125
        $region38: #{tpu_custom_call.1} parent=35 // pred_check_branch
          %8128 = sbr.rel (%p8126) target = $region40
        $region39: #{tpu_custom_call.1} parent=35 // pred_region
          %8130 = vsyncadd %s8122, 0
          %s8131 = smul.addr %s18, 4
          %s8132 = smul.addr %s8131, 8
          %s8133 = scalar_lea.hbm %s4, %s8132
          %s8135 = sshll.u32 %s8125, 4
          %s8136 = int_to_ptr.vmem [resolvable:$true] %s8135
          %s8137 = sshll.u32 %s8133, 4
          %s8138 = int_to_ptr.hbm [resolvable:$true] %s8137
          %8140 = dma.vmem_to_hbm [thread:$0]  %s8136, 512, %s8138, %s8122
        $region40: #{tpu_custom_call.1} parent=35 // pred_fallthru
          _
      $region36: #{tpu_custom_call.1} parent=5 // pred_fallthru
        _
      %p8141 = scmp.le.s32.totalorder 2, %s13
      // Predicated region
      $region41: #{tpu_custom_call.1} parent=5 // pred_check
        %p8142 = pneg %p8141
      $region42: #{tpu_custom_call.1} parent=5 // pred_check_branch
        %8144 = sbr.rel (%p8142) target = $region44
      $region43: #{tpu_custom_call.1} parent=5 // pred_region
        %s8145 = ssub.s32 %s13, 2
        // Predicated region
        $region45: #{tpu_custom_call.1} parent=43 // pred_check
          %p8146 = pneg %p131
        $region46: #{tpu_custom_call.1} parent=43 // pred_check_branch
          %8148 = sbr.rel (%p8146) target = $region48
        $region47: #{tpu_custom_call.1} parent=43 // pred_region
          %s8149 = sand.u32 %s116, 1
          %s8150 = scalar_lea.sflag [#allocation5], %s8149
          %s8151 = sand.u32 %s116, 1
          %s8152 = smul.addr %s8151, 32
          %s8153 = scalar_lea.vmem [#allocation4], %s8152
          %8155 = dma.done %s8150, 512
        $region48: #{tpu_custom_call.1} parent=43 // pred_fallthru
          _
      $region44: #{tpu_custom_call.1} parent=5 // pred_fallthru
        _
    $region6: #{tpu_custom_call.1} parent=1 // loop_footer
      %s17 = sadd.s32 1, %s13
    $region7: #{tpu_custom_call.1} parent=1 // loop_footer_branch
      %12 = sbr.rel target = $region3
    $region8: #{tpu_custom_call.1} parent=1 // loop_exit
      _
    %8156 = vsyncpa [#allocation5], 1
    %s8157 = scalar_lea.sflag [#allocation5], 1
    %8158 = vsyncpa %s8157, 1

</llo_original>
